<compile_context>
chip_gen: v6e
topology: v6e:2x2x1
jax: 0.10.0
libtpu: 0.0.40
codegen_flags: <defaults>
</compile_context>

<pallas_src>
import functools

import jax
import jax.numpy as jnp
import numpy as np
from jax.experimental import pallas as pl
from jax.experimental.pallas import tpu as pltpu

EPS = 1e-5  # fairseq LayerNorm default


def _encoder_layer_kernel(
    xf_ref,                    # (1, S, D)  f32   full (padded) sequence, this batch
    bias_ref,                  # (1, 1, S) or (1, TQ, S) f32 additive attention bias
    wq_ref, bq_ref,            # (H, D, hd) bf16 / (H, 1, hd) f32  (q scaling folded in)
    wk_ref, bk_ref,
    wv_ref, bv_ref,
    wo_ref, bo_ref,            # (H, hd, D) bf16 / (1, D) f32
    ln1w_ref, ln1b_ref, ln2w_ref, ln2b_ref,   # (1, D) f32
    w1_ref, b1_ref,            # (D, F) bf16 / (1, F) f32
    w2_ref, b2_ref,            # (F, D) bf16 / (1, D) f32
    out_ref,                   # (1, TQ, D) f32
    xn_scr,                    # (S, D)  bf16   LN1(x), full sequence
    k_scr, v_scr,              # (H, S, hd) bf16
    *, eps, num_heads):
  qt = pl.program_id(1)
  tq = out_ref.shape[1]
  d = out_ref.shape[2]
  cdt = xn_scr.dtype
  q_start = pl.multiple_of(qt * tq, tq)

  # ---- once per batch: self_attn_layer_norm over the full sequence + K/V ----
  @pl.when(qt == 0)
  def _():
    xf = xf_ref[0]                                           # (S, D) f32
    mu = jnp.mean(xf, axis=-1, keepdims=True)
    var = jnp.mean(jnp.square(xf - mu), axis=-1, keepdims=True)
    xn = (xf - mu) * jax.lax.rsqrt(var + eps) * ln1w_ref[...] + ln1b_ref[...]
    xn_c = xn.astype(cdt)
    xn_scr[...] = xn_c
    for h in range(num_heads):                               # full-D contraction per head
      k_scr[h] = (jnp.dot(xn_c, wk_ref[h], preferred_element_type=jnp.float32)
                  + bk_ref[h]).astype(cdt)
      v_scr[h] = (jnp.dot(xn_c, wv_ref[h], preferred_element_type=jnp.float32)
                  + bv_ref[h]).astype(cdt)

  # ---- attention for this query tile (all heads inside one grid step) ----
  xn_q = xn_scr[pl.ds(q_start, tq), :]                       # (TQ, D) bf16
  bias = bias_ref[0]                                         # (1, S) or (TQ, S) f32

  attn = jnp.zeros((tq, d), jnp.float32)
  for h in range(num_heads):
    q = (jnp.dot(xn_q, wq_ref[h], preferred_element_type=jnp.float32)
         + bq_ref[h]).astype(cdt)                            # (TQ, hd), scaling folded in
    s = jax.lax.dot_general(q, k_scr[h], (((1,), (1,)), ((), ())),
                            preferred_element_type=jnp.float32)   # (TQ, S)
    s = s + bias
    m = jnp.max(s, axis=-1, keepdims=True)
    p = jnp.exp(s - m)
    denom = jnp.sum(p, axis=-1, keepdims=True)
    o = jnp.dot(p.astype(cdt), v_scr[h],
                preferred_element_type=jnp.float32)          # (TQ, hd)
    o = o * pl.reciprocal(denom, approx=True)                # normalize after PV
    attn = attn + jnp.dot(o.astype(cdt), wo_ref[h],
                          preferred_element_type=jnp.float32)  # (TQ, D)

  # ---- residual rows come straight from the resident full-sequence block ----
  x_q = xf_ref[0, pl.ds(q_start, tq), :]                     # (TQ, D) f32
  x1 = x_q + attn + bo_ref[...]

  # ---- final LayerNorm + FFN + residual ----
  mu2 = jnp.mean(x1, axis=-1, keepdims=True)
  var2 = jnp.mean(jnp.square(x1 - mu2), axis=-1, keepdims=True)
  x1n = (x1 - mu2) * jax.lax.rsqrt(var2 + eps) * ln2w_ref[...] + ln2b_ref[...]
  # TODO(synk): tile this over F for very large FFN widths (v7x VMEM budget).
  hid = jnp.maximum(
      jnp.dot(x1n.astype(cdt), w1_ref[...], preferred_element_type=jnp.float32)
      + b1_ref[...], 0.0)
  ffn = jnp.dot(hid.astype(cdt), w2_ref[...],
                preferred_element_type=jnp.float32) + b2_ref[...]
  out_ref[0] = (x1 + ffn).astype(out_ref.dtype)


def transformer_encoder_layer(x, key_padding_mask, attn_mask, params, *,
                              num_heads, attn_scale_factor=2.0,
                              q_tile=256, compute_dtype=jnp.bfloat16,
                              vmem_limit_bytes=48 * 1024 * 1024):
  """x: (S, B, D) f32; key_padding_mask: (B, S) {0,1}; attn_mask: (S, S) or None."""
  S, B, D = x.shape
  H = num_heads
  hd = D // H
  F = params["w1"].shape[0]                      # torch Linear weight is (out, in)
  # OFA unify_multihead_attention: scaling = (head_dim * attn_scale_factor) ** -0.5
  scaling = float(hd * attn_scale_factor) ** -0.5
  assert q_tile % 8 == 0

  # query-row tile + padded sequence length (keeps every block (8,128)-aligned;
  # padded keys are masked out via the additive bias, padded query rows sliced off)
  tq = q_tile if S > q_tile else S
  S_pad = -(-S // tq) * tq
  pad_len = S_pad - S
  nq = S_pad // tq

  f32 = jnp.float32
  cd = compute_dtype

  x_bsd = jnp.transpose(x, (1, 0, 2)).astype(f32)             # (B, S, D)
  kpm = key_padding_mask.astype(f32)
  if pad_len:
    x_bsd = jnp.pad(x_bsd, ((0, 0), (0, pad_len), (0, 0)))
    kpm = jnp.pad(kpm, ((0, 0), (0, pad_len)), constant_values=1.0)

  # additive attention bias, built once in the wrapper
  key_bias = jnp.where(kpm > 0.5, jnp.float32(-1e30), jnp.float32(0.0))   # (B, S_pad)
  if attn_mask is not None:
    # torch: attn_mask.masked_fill(attn_mask.bool(), -1e8) added to the logits
    mb = jnp.where(attn_mask.astype(bool), jnp.float32(-1e8), jnp.float32(0.0))
    if pad_len:
      mb = jnp.pad(mb, ((0, pad_len), (0, pad_len)))
    bias = key_bias[:, None, :] + mb[None]                    # (B, S_pad, S_pad)
    bias_block = (1, tq, S_pad)
    bias_index = lambda b, q: (b, q, 0)
  else:
    bias = key_bias[:, None, :]                               # (B, 1, S_pad)
    bias_block = (1, 1, S_pad)
    bias_index = lambda b, q: (b, 0, 0)

  # per-head weight slabs, head axis leading (split once outside the kernel)
  def per_head_in(w):            # torch (out, in) -> (H, D, hd), for x @ W^T
    return jnp.transpose(w.reshape(H, hd, D), (0, 2, 1))

  wq = (per_head_in(params["wq"]) * scaling).astype(cd)       # q scaling folded in
  bq = (params["bq"] * scaling).reshape(H, 1, hd).astype(f32)
  wk = per_head_in(params["wk"]).astype(cd)
  bk = params["bk"].reshape(H, 1, hd).astype(f32)
  wv = per_head_in(params["wv"]).astype(cd)
  bv = params["bv"].reshape(H, 1, hd).astype(f32)
  wo = jnp.transpose(params["wo"]).reshape(H, hd, D).astype(cd)
  bo = params["bo"].reshape(1, D).astype(f32)
  w1 = jnp.transpose(params["w1"]).astype(cd)                 # (D, F)
  b1 = params["b1"].reshape(1, F).astype(f32)
  w2 = jnp.transpose(params["w2"]).astype(cd)                 # (F, D)
  b2 = params["b2"].reshape(1, D).astype(f32)
  ln1w = params["ln1_w"].reshape(1, D).astype(f32)
  ln1b = params["ln1_b"].reshape(1, D).astype(f32)
  ln2w = params["ln2_w"].reshape(1, D).astype(f32)
  ln2b = params["ln2_b"].reshape(1, D).astype(f32)

  inputs = (x_bsd, bias, wq, bq, wk, bk, wv, bv, wo, bo,
            ln1w, ln1b, ln2w, ln2b, w1, b1, w2, b2)

  kernel = functools.partial(_encoder_layer_kernel, eps=EPS, num_heads=H)

  def build(single_buffer_weights):
    if single_buffer_weights:
      # grid-invariant operands: one VMEM copy, never re-DMA'd, no double buffer
      def const(shape):
        n = len(shape)
        return pl.BlockSpec(shape, lambda b, q, _n=n: (0,) * _n,
                            pipeline_mode=pl.Buffered(1))
    else:
      def const(shape):
        n = len(shape)
        return pl.BlockSpec(shape, lambda b, q, _n=n: (0,) * _n)

    in_specs = [
        pl.BlockSpec((1, S_pad, D), lambda b, q: (b, 0, 0)),   # full sequence (per batch)
        pl.BlockSpec(bias_block, bias_index),                  # attention bias
        const((H, D, hd)), const((H, 1, hd)),                  # Wq, bq
        const((H, D, hd)), const((H, 1, hd)),                  # Wk, bk
        const((H, D, hd)), const((H, 1, hd)),                  # Wv, bv
        const((H, hd, D)), const((1, D)),                      # Wo slab, bo
        const((1, D)), const((1, D)),                          # ln1 w, b
        const((1, D)), const((1, D)),                          # ln2 w, b
        const((D, F)), const((1, F)),                          # fc1
        const((F, D)), const((1, D)),                          # fc2
    ]
    return pl.pallas_call(
        kernel,
        out_shape=jax.ShapeDtypeStruct((B, S_pad, D), jnp.float32),
        grid=(B, nq),
        in_specs=in_specs,
        out_specs=pl.BlockSpec((1, tq, D), lambda b, q: (b, q, 0)),
        scratch_shapes=[
            pltpu.VMEM((S_pad, D), cd),            # LN1(x), full sequence
            pltpu.VMEM((H, S_pad, hd), cd),        # K (all heads)
            pltpu.VMEM((H, S_pad, hd), cd),        # V (all heads)
        ],
        compiler_params=pltpu.CompilerParams(
            dimension_semantics=("parallel", "arbitrary"),
            vmem_limit_bytes=vmem_limit_bytes),
    )

  try:
    out = build(single_buffer_weights=True)(*inputs)
  except Exception:
    # feature-detect fallback if this jax/libtpu build rejects pl.Buffered(1)
    out = build(single_buffer_weights=False)(*inputs)

  if pad_len:
    out = out[:, :S, :]
  return jnp.transpose(out, (1, 0, 2))                         # back to (S, B, D)


# ---------------- pure-JAX reference (for correctness check) ----------------
def reference(x, key_padding_mask, attn_mask, params, num_heads,
              attn_scale_factor=2.0):
  S, B, D = x.shape
  hd = D // num_heads
  scaling = float(hd * attn_scale_factor) ** -0.5

  def ln(v, w, b):
    mu = v.mean(-1, keepdims=True)
    var = ((v - mu) ** 2).mean(-1, keepdims=True)
    return (v - mu) / jnp.sqrt(var + EPS) * w + b

  residual = x
  xn = ln(x, params["ln1_w"], params["ln1_b"])
  q = (xn @ params["wq"].T + params["bq"]) * scaling
  k = xn @ params["wk"].T + params["bk"]
  v = xn @ params["wv"].T + params["bv"]
  shp = lambda t: t.reshape(S, B, num_heads, hd).transpose(1, 2, 0, 3)
  qh, kh, vh = shp(q), shp(k), shp(v)
  s = jnp.einsum("bhqd,bhkd->bhqk", qh, kh)
  if attn_mask is not None:
    s = s + jnp.where(attn_mask.astype(bool), -1e8, 0.0)
  pad = key_padding_mask.astype(bool)
  s = jnp.where(pad[:, None, None, :], -jnp.inf, s)
  p = jax.nn.softmax(s, axis=-1)
  o = jnp.einsum("bhqk,bhkd->bhqd", p, vh).transpose(2, 0, 1, 3).reshape(S, B, D)
  x1 = residual + (o @ params["wo"].T + params["bo"])
  residual = x1
  xn2 = ln(x1, params["ln2_w"], params["ln2_b"])
  h = jax.nn.relu(xn2 @ params["w1"].T + params["b1"])
  return residual + (h @ params["w2"].T + params["b2"])


if __name__ == "__main__":
  # small shapes consistent with the module: seq=8, batch=2, embed=32, heads=4, ffn=64
  S, B, D, H, F = 8, 2, 32, 4, 64
  key = jax.random.PRNGKey(0)
  ks = jax.random.split(key, 16)

  def lin_w(k, dout, din):   # torch nn.Linear weight layout (out, in)
    return 0.02 * jax.random.normal(k, (dout, din), jnp.float32)

  def vec(k, n, scale=0.02):
    return scale * jax.random.normal(k, (n,), jnp.float32)

  params = dict(
      wq=lin_w(ks[0], D, D), bq=vec(ks[7], D),
      wk=lin_w(ks[1], D, D), bk=vec(ks[8], D),
      wv=lin_w(ks[2], D, D), bv=vec(ks[9], D),
      wo=lin_w(ks[3], D, D), bo=vec(ks[10], D),
      w1=lin_w(ks[4], F, D), b1=vec(ks[11], F),
      w2=lin_w(ks[5], D, F), b2=vec(ks[12], D),
      ln1_w=1.0 + vec(ks[13], D, 0.1), ln1_b=vec(ks[14], D, 0.1),
      ln2_w=1.0 + vec(ks[15], D, 0.1), ln2_b=vec(ks[6], D, 0.1),
  )

  x = jax.random.normal(jax.random.PRNGKey(1), (S, B, D), jnp.float32)  # (seq, batch, embed)
  pad_mask = jnp.zeros((B, S), jnp.int32).at[1, -2:].set(1)             # last 2 keys of batch 1 padded

  # TODO(synk): prompt_kv / self_attn_bias / adapter / scale_attn / scale_fc /
  # scale_resids paths are disabled by default in the module config and not modeled.

  # 1) no attn_mask (only a (B,1,S) key-padding bias is built in this path)
  out = jax.block_until_ready(
      transformer_encoder_layer(x, pad_mask, None, params, num_heads=H))
  ref = reference(x, pad_mask, None, params, H)
  np.testing.assert_allclose(np.asarray(out), np.asarray(ref), rtol=2e-2, atol=2e-2)

  # 2) with an explicit (strided-attention style) attn_mask, folded into the bias
  attn_mask = (jnp.arange(S)[None, :] > jnp.arange(S)[:, None]).astype(jnp.int32)
  out2 = jax.block_until_ready(
      transformer_encoder_layer(x, pad_mask, attn_mask, params, num_heads=H))
  ref2 = reference(x, pad_mask, attn_mask, params, H)
  np.testing.assert_allclose(np.asarray(out2), np.asarray(ref2), rtol=2e-2, atol=2e-2)

  # 3) multi-tile + sequence-padding path (S not a multiple of the query tile)
  S3 = 40
  x3 = jax.random.normal(jax.random.PRNGKey(2), (S3, B, D), jnp.float32)
  pad3 = jnp.zeros((B, S3), jnp.int32).at[1, -3:].set(1)
  out3 = jax.block_until_ready(
      transformer_encoder_layer(x3, pad3, None, params, num_heads=H, q_tile=16))
  ref3 = reference(x3, pad3, None, params, H)
  np.testing.assert_allclose(np.asarray(out3), np.asarray(ref3), rtol=2e-2, atol=2e-2)

  print("KERNEL_OK")
</pallas_src>

<mosaic_0001>
module attributes {stable_mosaic.version = 11 : i64} {
  func.func @_encoder_layer_kernel(%arg0: i32, %arg1: i32, %arg2: memref<1x8x32xf32, #tpu.memory_space<vmem>>, %arg3: memref<1x1x8xf32, #tpu.memory_space<vmem>>, %arg4: memref<4x32x8xbf16, #tpu.memory_space<vmem>>, %arg5: memref<4x1x8xf32, #tpu.memory_space<vmem>>, %arg6: memref<4x32x8xbf16, #tpu.memory_space<vmem>>, %arg7: memref<4x1x8xf32, #tpu.memory_space<vmem>>, %arg8: memref<4x32x8xbf16, #tpu.memory_space<vmem>>, %arg9: memref<4x1x8xf32, #tpu.memory_space<vmem>>, %arg10: memref<4x8x32xbf16, #tpu.memory_space<vmem>>, %arg11: memref<1x32xf32, #tpu.memory_space<vmem>>, %arg12: memref<1x32xf32, #tpu.memory_space<vmem>>, %arg13: memref<1x32xf32, #tpu.memory_space<vmem>>, %arg14: memref<1x32xf32, #tpu.memory_space<vmem>>, %arg15: memref<1x32xf32, #tpu.memory_space<vmem>>, %arg16: memref<32x64xbf16, #tpu.memory_space<vmem>>, %arg17: memref<1x64xf32, #tpu.memory_space<vmem>>, %arg18: memref<64x32xbf16, #tpu.memory_space<vmem>>, %arg19: memref<1x32xf32, #tpu.memory_space<vmem>>, %arg20: memref<1x8x32xf32, #tpu.memory_space<vmem>>, %arg21: memref<8x32xbf16, #tpu.memory_space<vmem>>, %arg22: memref<4x8x8xbf16, #tpu.memory_space<vmem>>, %arg23: memref<4x8x8xbf16, #tpu.memory_space<vmem>>) attributes {dimension_semantics = [#tpu.dimension_semantics<parallel>, #tpu.dimension_semantics<arbitrary>], iteration_bounds = array<i64: 2, 1>, scalar_prefetch = 0 : i64, scratch_operands = 3 : i64, tpu.core_type = #tpu.core_type<tc>, window_params = [{transform_indices = @transform_0, window_bounds = array<i64: 1, 8, 32>}, {transform_indices = @transform_1, window_bounds = array<i64: 1, 1, 8>}, {pipeline_mode = #tpu.pipeline_mode<synchronous>, transform_indices = @transform_2, window_bounds = array<i64: 4, 32, 8>}, {pipeline_mode = #tpu.pipeline_mode<synchronous>, transform_indices = @transform_3, window_bounds = array<i64: 4, 1, 8>}, {pipeline_mode = #tpu.pipeline_mode<synchronous>, transform_indices = @transform_4, window_bounds = array<i64: 4, 32, 8>}, {pipeline_mode = #tpu.pipeline_mode<synchronous>, transform_indices = @transform_5, window_bounds = array<i64: 4, 1, 8>}, {pipeline_mode = #tpu.pipeline_mode<synchronous>, transform_indices = @transform_6, window_bounds = array<i64: 4, 32, 8>}, {pipeline_mode = #tpu.pipeline_mode<synchronous>, transform_indices = @transform_7, window_bounds = array<i64: 4, 1, 8>}, {pipeline_mode = #tpu.pipeline_mode<synchronous>, transform_indices = @transform_8, window_bounds = array<i64: 4, 8, 32>}, {pipeline_mode = #tpu.pipeline_mode<synchronous>, transform_indices = @transform_9, window_bounds = array<i64: 1, 32>}, {pipeline_mode = #tpu.pipeline_mode<synchronous>, transform_indices = @transform_10, window_bounds = array<i64: 1, 32>}, {pipeline_mode = #tpu.pipeline_mode<synchronous>, transform_indices = @transform_11, window_bounds = array<i64: 1, 32>}, {pipeline_mode = #tpu.pipeline_mode<synchronous>, transform_indices = @transform_12, window_bounds = array<i64: 1, 32>}, {pipeline_mode = #tpu.pipeline_mode<synchronous>, transform_indices = @transform_13, window_bounds = array<i64: 1, 32>}, {pipeline_mode = #tpu.pipeline_mode<synchronous>, transform_indices = @transform_14, window_bounds = array<i64: 32, 64>}, {pipeline_mode = #tpu.pipeline_mode<synchronous>, transform_indices = @transform_15, window_bounds = array<i64: 1, 64>}, {pipeline_mode = #tpu.pipeline_mode<synchronous>, transform_indices = @transform_16, window_bounds = array<i64: 64, 32>}, {pipeline_mode = #tpu.pipeline_mode<synchronous>, transform_indices = @transform_17, window_bounds = array<i64: 1, 32>}, {transform_indices = @transform_18, window_bounds = array<i64: 1, 8, 32>}]} {
    %c8_i32 = arith.constant 8 : i32
    %0 = arith.muli %arg1, %c8_i32 : i32
    %1 = tpu.assume_multiple %0, 8 : i32
    %c0_i32 = arith.constant 0 : i32
    %2 = arith.cmpi eq, %arg1, %c0_i32 : i32
    %3 = arith.extui %2 : i1 to i32
    %c0_i32_0 = arith.constant 0 : i32
    %4 = arith.cmpi ne, %3, %c0_i32_0 : i32
    scf.if %4 {
      %c0_112 = arith.constant 0 : index
      %c0_113 = arith.constant 0 : index
      %c0_114 = arith.constant 0 : index
      %187 = vector.load %arg2[%c0_112, %c0_113, %c0_114] : memref<1x8x32xf32, #tpu.memory_space<vmem>>, vector<1x8x32xf32>
      %188 = vector.shape_cast %187 : vector<1x8x32xf32> to vector<8x32xf32>
      %cst_115 = arith.constant dense<0.000000e+00> : vector<8xf32>
      %189 = vector.multi_reduction <add>, %188, %cst_115 [1] : vector<8x32xf32> to vector<8xf32>
      %190 = vector.shape_cast %189 : vector<8xf32> to vector<8x1xf32>
      %cst_116 = arith.constant 3.200000e+01 : f32
      %191 = vector.broadcast %cst_116 : f32 to vector<8x1xf32>
      %192 = arith.divf %190, %191 : vector<8x1xf32>
      %193 = vector.broadcast %192 : vector<8x1xf32> to vector<8x32xf32>
      %194 = arith.subf %188, %193 : vector<8x32xf32>
      %195 = arith.mulf %194, %194 : vector<8x32xf32>
      %cst_117 = arith.constant dense<0.000000e+00> : vector<8xf32>
      %196 = vector.multi_reduction <add>, %195, %cst_117 [1] : vector<8x32xf32> to vector<8xf32>
      %197 = vector.shape_cast %196 : vector<8xf32> to vector<8x1xf32>
      %cst_118 = arith.constant 3.200000e+01 : f32
      %198 = vector.broadcast %cst_118 : f32 to vector<8x1xf32>
      %199 = arith.divf %197, %198 : vector<8x1xf32>
      %200 = vector.broadcast %192 : vector<8x1xf32> to vector<8x32xf32>
      %201 = arith.subf %188, %200 : vector<8x32xf32>
      %cst_119 = arith.constant 9.99999974E-6 : f32
      %202 = vector.broadcast %cst_119 : f32 to vector<8x1xf32>
      %203 = arith.addf %199, %202 : vector<8x1xf32>
      %204 = math.rsqrt %203 : vector<8x1xf32>
      %205 = vector.broadcast %204 : vector<8x1xf32> to vector<8x32xf32>
      %206 = arith.mulf %201, %205 : vector<8x32xf32>
      %c0_120 = arith.constant 0 : index
      %c0_121 = arith.constant 0 : index
      %207 = vector.load %arg12[%c0_120, %c0_121] : memref<1x32xf32, #tpu.memory_space<vmem>>, vector<1x32xf32>
      %208 = vector.broadcast %207 : vector<1x32xf32> to vector<8x32xf32>
      %209 = arith.mulf %206, %208 : vector<8x32xf32>
      %c0_122 = arith.constant 0 : index
      %c0_123 = arith.constant 0 : index
      %210 = vector.load %arg13[%c0_122, %c0_123] : memref<1x32xf32, #tpu.memory_space<vmem>>, vector<1x32xf32>
      %211 = vector.broadcast %210 : vector<1x32xf32> to vector<8x32xf32>
      %212 = arith.addf %209, %211 : vector<8x32xf32>
      %213 = arith.truncf %212 : vector<8x32xf32> to vector<8x32xbf16>
      %c0_124 = arith.constant 0 : index
      %c0_125 = arith.constant 0 : index
      %214 = vector.load %arg21[%c0_124, %c0_125] : memref<8x32xbf16, #tpu.memory_space<vmem>>, vector<8x32xbf16>
      tpu.vector_store %arg21[%c0_124, %c0_125], %213 {strides = array<i32>} : memref<8x32xbf16, #tpu.memory_space<vmem>>, vector<8x32xbf16>,
      %c0_126 = arith.constant 0 : index
      %c0_127 = arith.constant 0 : index
      %c0_128 = arith.constant 0 : index
      %215 = vector.load %arg6[%c0_126, %c0_127, %c0_128] : memref<4x32x8xbf16, #tpu.memory_space<vmem>>, vector<1x32x8xbf16>
      %216 = vector.shape_cast %215 : vector<1x32x8xbf16> to vector<32x8xbf16>
      %cst_129 = arith.constant dense<0.000000e+00> : vector<8x8xf32>
      %217 = tpu.matmul %213, %216, %cst_129 {dimension_numbers = #tpu.dot_dimension_numbers<[1], [0], [0], [1], [0, 0, 1, 1], [], []>} : vector<8x32xbf16>, vector<32x8xbf16>, vector<8x8xf32> -> vector<8x8xf32>
      %c0_130 = arith.constant 0 : index
      %c0_131 = arith.constant 0 : index
      %c0_132 = arith.constant 0 : index
      %218 = vector.load %arg7[%c0_130, %c0_131, %c0_132] : memref<4x1x8xf32, #tpu.memory_space<vmem>>, vector<1x1x8xf32>
      %219 = vector.shape_cast %218 : vector<1x1x8xf32> to vector<1x8xf32>
      %220 = vector.broadcast %219 : vector<1x8xf32> to vector<8x8xf32>
      %221 = arith.addf %217, %220 : vector<8x8xf32>
      %222 = arith.truncf %221 : vector<8x8xf32> to vector<8x8xbf16>
      %c0_133 = arith.constant 0 : index
      %c0_134 = arith.constant 0 : index
      %c0_135 = arith.constant 0 : index
      %223 = vector.load %arg22[%c0_133, %c0_134, %c0_135] : memref<4x8x8xbf16, #tpu.memory_space<vmem>>, vector<1x8x8xbf16>
      %224 = vector.shape_cast %223 : vector<1x8x8xbf16> to vector<8x8xbf16>
      %225 = vector.shape_cast %222 : vector<8x8xbf16> to vector<1x8x8xbf16>
      tpu.vector_store %arg22[%c0_133, %c0_134, %c0_135], %225 {strides = array<i32>} : memref<4x8x8xbf16, #tpu.memory_space<vmem>>, vector<1x8x8xbf16>,
      %c0_136 = arith.constant 0 : index
      %c0_137 = arith.constant 0 : index
      %c0_138 = arith.constant 0 : index
      %226 = vector.load %arg8[%c0_136, %c0_137, %c0_138] : memref<4x32x8xbf16, #tpu.memory_space<vmem>>, vector<1x32x8xbf16>
      %227 = vector.shape_cast %226 : vector<1x32x8xbf16> to vector<32x8xbf16>
      %cst_139 = arith.constant dense<0.000000e+00> : vector<8x8xf32>
      %228 = tpu.matmul %213, %227, %cst_139 {dimension_numbers = #tpu.dot_dimension_numbers<[1], [0], [0], [1], [0, 0, 1, 1], [], []>} : vector<8x32xbf16>, vector<32x8xbf16>, vector<8x8xf32> -> vector<8x8xf32>
      %c0_140 = arith.constant 0 : index
      %c0_141 = arith.constant 0 : index
      %c0_142 = arith.constant 0 : index
      %229 = vector.load %arg9[%c0_140, %c0_141, %c0_142] : memref<4x1x8xf32, #tpu.memory_space<vmem>>, vector<1x1x8xf32>
      %230 = vector.shape_cast %229 : vector<1x1x8xf32> to vector<1x8xf32>
      %231 = vector.broadcast %230 : vector<1x8xf32> to vector<8x8xf32>
      %232 = arith.addf %228, %231 : vector<8x8xf32>
      %233 = arith.truncf %232 : vector<8x8xf32> to vector<8x8xbf16>
      %c0_143 = arith.constant 0 : index
      %c0_144 = arith.constant 0 : index
      %c0_145 = arith.constant 0 : index
      %234 = vector.load %arg23[%c0_143, %c0_144, %c0_145] : memref<4x8x8xbf16, #tpu.memory_space<vmem>>, vector<1x8x8xbf16>
      %235 = vector.shape_cast %234 : vector<1x8x8xbf16> to vector<8x8xbf16>
      %236 = vector.shape_cast %233 : vector<8x8xbf16> to vector<1x8x8xbf16>
      tpu.vector_store %arg23[%c0_143, %c0_144, %c0_145], %236 {strides = array<i32>} : memref<4x8x8xbf16, #tpu.memory_space<vmem>>, vector<1x8x8xbf16>,
      %c1_146 = arith.constant 1 : index
      %c0_147 = arith.constant 0 : index
      %c0_148 = arith.constant 0 : index
      %237 = vector.load %arg6[%c1_146, %c0_147, %c0_148] : memref<4x32x8xbf16, #tpu.memory_space<vmem>>, vector<1x32x8xbf16>
      %238 = vector.shape_cast %237 : vector<1x32x8xbf16> to vector<32x8xbf16>
      %cst_149 = arith.constant dense<0.000000e+00> : vector<8x8xf32>
      %239 = tpu.matmul %213, %238, %cst_149 {dimension_numbers = #tpu.dot_dimension_numbers<[1], [0], [0], [1], [0, 0, 1, 1], [], []>} : vector<8x32xbf16>, vector<32x8xbf16>, vector<8x8xf32> -> vector<8x8xf32>
      %c1_150 = arith.constant 1 : index
      %c0_151 = arith.constant 0 : index
      %c0_152 = arith.constant 0 : index
      %240 = vector.load %arg7[%c1_150, %c0_151, %c0_152] : memref<4x1x8xf32, #tpu.memory_space<vmem>>, vector<1x1x8xf32>
      %241 = vector.shape_cast %240 : vector<1x1x8xf32> to vector<1x8xf32>
      %242 = vector.broadcast %241 : vector<1x8xf32> to vector<8x8xf32>
      %243 = arith.addf %239, %242 : vector<8x8xf32>
      %244 = arith.truncf %243 : vector<8x8xf32> to vector<8x8xbf16>
      %c1_153 = arith.constant 1 : index
      %c0_154 = arith.constant 0 : index
      %c0_155 = arith.constant 0 : index
      %245 = vector.load %arg22[%c1_153, %c0_154, %c0_155] : memref<4x8x8xbf16, #tpu.memory_space<vmem>>, vector<1x8x8xbf16>
      %246 = vector.shape_cast %245 : vector<1x8x8xbf16> to vector<8x8xbf16>
      %247 = vector.shape_cast %244 : vector<8x8xbf16> to vector<1x8x8xbf16>
      tpu.vector_store %arg22[%c1_153, %c0_154, %c0_155], %247 {strides = array<i32>} : memref<4x8x8xbf16, #tpu.memory_space<vmem>>, vector<1x8x8xbf16>,
      %c1_156 = arith.constant 1 : index
      %c0_157 = arith.constant 0 : index
      %c0_158 = arith.constant 0 : index
      %248 = vector.load %arg8[%c1_156, %c0_157, %c0_158] : memref<4x32x8xbf16, #tpu.memory_space<vmem>>, vector<1x32x8xbf16>
      %249 = vector.shape_cast %248 : vector<1x32x8xbf16> to vector<32x8xbf16>
      %cst_159 = arith.constant dense<0.000000e+00> : vector<8x8xf32>
      %250 = tpu.matmul %213, %249, %cst_159 {dimension_numbers = #tpu.dot_dimension_numbers<[1], [0], [0], [1], [0, 0, 1, 1], [], []>} : vector<8x32xbf16>, vector<32x8xbf16>, vector<8x8xf32> -> vector<8x8xf32>
      %c1_160 = arith.constant 1 : index
      %c0_161 = arith.constant 0 : index
      %c0_162 = arith.constant 0 : index
      %251 = vector.load %arg9[%c1_160, %c0_161, %c0_162] : memref<4x1x8xf32, #tpu.memory_space<vmem>>, vector<1x1x8xf32>
      %252 = vector.shape_cast %251 : vector<1x1x8xf32> to vector<1x8xf32>
      %253 = vector.broadcast %252 : vector<1x8xf32> to vector<8x8xf32>
      %254 = arith.addf %250, %253 : vector<8x8xf32>
      %255 = arith.truncf %254 : vector<8x8xf32> to vector<8x8xbf16>
      %c1_163 = arith.constant 1 : index
      %c0_164 = arith.constant 0 : index
      %c0_165 = arith.constant 0 : index
      %256 = vector.load %arg23[%c1_163, %c0_164, %c0_165] : memref<4x8x8xbf16, #tpu.memory_space<vmem>>, vector<1x8x8xbf16>
      %257 = vector.shape_cast %256 : vector<1x8x8xbf16> to vector<8x8xbf16>
      %258 = vector.shape_cast %255 : vector<8x8xbf16> to vector<1x8x8xbf16>
      tpu.vector_store %arg23[%c1_163, %c0_164, %c0_165], %258 {strides = array<i32>} : memref<4x8x8xbf16, #tpu.memory_space<vmem>>, vector<1x8x8xbf16>,
      %c2_166 = arith.constant 2 : index
      %c0_167 = arith.constant 0 : index
      %c0_168 = arith.constant 0 : index
      %259 = vector.load %arg6[%c2_166, %c0_167, %c0_168] : memref<4x32x8xbf16, #tpu.memory_space<vmem>>, vector<1x32x8xbf16>
      %260 = vector.shape_cast %259 : vector<1x32x8xbf16> to vector<32x8xbf16>
      %cst_169 = arith.constant dense<0.000000e+00> : vector<8x8xf32>
      %261 = tpu.matmul %213, %260, %cst_169 {dimension_numbers = #tpu.dot_dimension_numbers<[1], [0], [0], [1], [0, 0, 1, 1], [], []>} : vector<8x32xbf16>, vector<32x8xbf16>, vector<8x8xf32> -> vector<8x8xf32>
      %c2_170 = arith.constant 2 : index
      %c0_171 = arith.constant 0 : index
      %c0_172 = arith.constant 0 : index
      %262 = vector.load %arg7[%c2_170, %c0_171, %c0_172] : memref<4x1x8xf32, #tpu.memory_space<vmem>>, vector<1x1x8xf32>
      %263 = vector.shape_cast %262 : vector<1x1x8xf32> to vector<1x8xf32>
      %264 = vector.broadcast %263 : vector<1x8xf32> to vector<8x8xf32>
      %265 = arith.addf %261, %264 : vector<8x8xf32>
      %266 = arith.truncf %265 : vector<8x8xf32> to vector<8x8xbf16>
      %c2_173 = arith.constant 2 : index
      %c0_174 = arith.constant 0 : index
      %c0_175 = arith.constant 0 : index
      %267 = vector.load %arg22[%c2_173, %c0_174, %c0_175] : memref<4x8x8xbf16, #tpu.memory_space<vmem>>, vector<1x8x8xbf16>
      %268 = vector.shape_cast %267 : vector<1x8x8xbf16> to vector<8x8xbf16>
      %269 = vector.shape_cast %266 : vector<8x8xbf16> to vector<1x8x8xbf16>
      tpu.vector_store %arg22[%c2_173, %c0_174, %c0_175], %269 {strides = array<i32>} : memref<4x8x8xbf16, #tpu.memory_space<vmem>>, vector<1x8x8xbf16>,
      %c2_176 = arith.constant 2 : index
      %c0_177 = arith.constant 0 : index
      %c0_178 = arith.constant 0 : index
      %270 = vector.load %arg8[%c2_176, %c0_177, %c0_178] : memref<4x32x8xbf16, #tpu.memory_space<vmem>>, vector<1x32x8xbf16>
      %271 = vector.shape_cast %270 : vector<1x32x8xbf16> to vector<32x8xbf16>
      %cst_179 = arith.constant dense<0.000000e+00> : vector<8x8xf32>
      %272 = tpu.matmul %213, %271, %cst_179 {dimension_numbers = #tpu.dot_dimension_numbers<[1], [0], [0], [1], [0, 0, 1, 1], [], []>} : vector<8x32xbf16>, vector<32x8xbf16>, vector<8x8xf32> -> vector<8x8xf32>
      %c2_180 = arith.constant 2 : index
      %c0_181 = arith.constant 0 : index
      %c0_182 = arith.constant 0 : index
      %273 = vector.load %arg9[%c2_180, %c0_181, %c0_182] : memref<4x1x8xf32, #tpu.memory_space<vmem>>, vector<1x1x8xf32>
      %274 = vector.shape_cast %273 : vector<1x1x8xf32> to vector<1x8xf32>
      %275 = vector.broadcast %274 : vector<1x8xf32> to vector<8x8xf32>
      %276 = arith.addf %272, %275 : vector<8x8xf32>
      %277 = arith.truncf %276 : vector<8x8xf32> to vector<8x8xbf16>
      %c2_183 = arith.constant 2 : index
      %c0_184 = arith.constant 0 : index
      %c0_185 = arith.constant 0 : index
      %278 = vector.load %arg23[%c2_183, %c0_184, %c0_185] : memref<4x8x8xbf16, #tpu.memory_space<vmem>>, vector<1x8x8xbf16>
      %279 = vector.shape_cast %278 : vector<1x8x8xbf16> to vector<8x8xbf16>
      %280 = vector.shape_cast %277 : vector<8x8xbf16> to vector<1x8x8xbf16>
      tpu.vector_store %arg23[%c2_183, %c0_184, %c0_185], %280 {strides = array<i32>} : memref<4x8x8xbf16, #tpu.memory_space<vmem>>, vector<1x8x8xbf16>,
      %c3_186 = arith.constant 3 : index
      %c0_187 = arith.constant 0 : index
      %c0_188 = arith.constant 0 : index
      %281 = vector.load %arg6[%c3_186, %c0_187, %c0_188] : memref<4x32x8xbf16, #tpu.memory_space<vmem>>, vector<1x32x8xbf16>
      %282 = vector.shape_cast %281 : vector<1x32x8xbf16> to vector<32x8xbf16>
      %cst_189 = arith.constant dense<0.000000e+00> : vector<8x8xf32>
      %283 = tpu.matmul %213, %282, %cst_189 {dimension_numbers = #tpu.dot_dimension_numbers<[1], [0], [0], [1], [0, 0, 1, 1], [], []>} : vector<8x32xbf16>, vector<32x8xbf16>, vector<8x8xf32> -> vector<8x8xf32>
      %c3_190 = arith.constant 3 : index
      %c0_191 = arith.constant 0 : index
      %c0_192 = arith.constant 0 : index
      %284 = vector.load %arg7[%c3_190, %c0_191, %c0_192] : memref<4x1x8xf32, #tpu.memory_space<vmem>>, vector<1x1x8xf32>
      %285 = vector.shape_cast %284 : vector<1x1x8xf32> to vector<1x8xf32>
      %286 = vector.broadcast %285 : vector<1x8xf32> to vector<8x8xf32>
      %287 = arith.addf %283, %286 : vector<8x8xf32>
      %288 = arith.truncf %287 : vector<8x8xf32> to vector<8x8xbf16>
      %c3_193 = arith.constant 3 : index
      %c0_194 = arith.constant 0 : index
      %c0_195 = arith.constant 0 : index
      %289 = vector.load %arg22[%c3_193, %c0_194, %c0_195] : memref<4x8x8xbf16, #tpu.memory_space<vmem>>, vector<1x8x8xbf16>
      %290 = vector.shape_cast %289 : vector<1x8x8xbf16> to vector<8x8xbf16>
      %291 = vector.shape_cast %288 : vector<8x8xbf16> to vector<1x8x8xbf16>
      tpu.vector_store %arg22[%c3_193, %c0_194, %c0_195], %291 {strides = array<i32>} : memref<4x8x8xbf16, #tpu.memory_space<vmem>>, vector<1x8x8xbf16>,
      %c3_196 = arith.constant 3 : index
      %c0_197 = arith.constant 0 : index
      %c0_198 = arith.constant 0 : index
      %292 = vector.load %arg8[%c3_196, %c0_197, %c0_198] : memref<4x32x8xbf16, #tpu.memory_space<vmem>>, vector<1x32x8xbf16>
      %293 = vector.shape_cast %292 : vector<1x32x8xbf16> to vector<32x8xbf16>
      %cst_199 = arith.constant dense<0.000000e+00> : vector<8x8xf32>
      %294 = tpu.matmul %213, %293, %cst_199 {dimension_numbers = #tpu.dot_dimension_numbers<[1], [0], [0], [1], [0, 0, 1, 1], [], []>} : vector<8x32xbf16>, vector<32x8xbf16>, vector<8x8xf32> -> vector<8x8xf32>
      %c3_200 = arith.constant 3 : index
      %c0_201 = arith.constant 0 : index
      %c0_202 = arith.constant 0 : index
      %295 = vector.load %arg9[%c3_200, %c0_201, %c0_202] : memref<4x1x8xf32, #tpu.memory_space<vmem>>, vector<1x1x8xf32>
      %296 = vector.shape_cast %295 : vector<1x1x8xf32> to vector<1x8xf32>
      %297 = vector.broadcast %296 : vector<1x8xf32> to vector<8x8xf32>
      %298 = arith.addf %294, %297 : vector<8x8xf32>
      %299 = arith.truncf %298 : vector<8x8xf32> to vector<8x8xbf16>
      %c3_203 = arith.constant 3 : index
      %c0_204 = arith.constant 0 : index
      %c0_205 = arith.constant 0 : index
      %300 = vector.load %arg23[%c3_203, %c0_204, %c0_205] : memref<4x8x8xbf16, #tpu.memory_space<vmem>>, vector<1x8x8xbf16>
      %301 = vector.shape_cast %300 : vector<1x8x8xbf16> to vector<8x8xbf16>
      %302 = vector.shape_cast %299 : vector<8x8xbf16> to vector<1x8x8xbf16>
      tpu.vector_store %arg23[%c3_203, %c0_204, %c0_205], %302 {strides = array<i32>} : memref<4x8x8xbf16, #tpu.memory_space<vmem>>, vector<1x8x8xbf16>,
    } else {
    }
    %5 = arith.index_cast %1 : i32 to index
    %c0 = arith.constant 0 : index
    %6 = vector.load %arg21[%5, %c0] : memref<8x32xbf16, #tpu.memory_space<vmem>>, vector<8x32xbf16>
    %c0_1 = arith.constant 0 : index
    %c0_2 = arith.constant 0 : index
    %c0_3 = arith.constant 0 : index
    %7 = vector.load %arg3[%c0_1, %c0_2, %c0_3] : memref<1x1x8xf32, #tpu.memory_space<vmem>>, vector<1x1x8xf32>
    %8 = vector.shape_cast %7 : vector<1x1x8xf32> to vector<1x8xf32>
    %cst = arith.constant 0.000000e+00 : f32
    %9 = vector.broadcast %cst : f32 to vector<8x32xf32>
    %c0_4 = arith.constant 0 : index
    %c0_5 = arith.constant 0 : index
    %c0_6 = arith.constant 0 : index
    %10 = vector.load %arg4[%c0_4, %c0_5, %c0_6] : memref<4x32x8xbf16, #tpu.memory_space<vmem>>, vector<1x32x8xbf16>
    %11 = vector.shape_cast %10 : vector<1x32x8xbf16> to vector<32x8xbf16>
    %cst_7 = arith.constant dense<0.000000e+00> : vector<8x8xf32>
    %12 = tpu.matmul %6, %11, %cst_7 {dimension_numbers = #tpu.dot_dimension_numbers<[1], [0], [0], [1], [0, 0, 1, 1], [], []>} : vector<8x32xbf16>, vector<32x8xbf16>, vector<8x8xf32> -> vector<8x8xf32>
    %c0_8 = arith.constant 0 : index
    %c0_9 = arith.constant 0 : index
    %c0_10 = arith.constant 0 : index
    %13 = vector.load %arg5[%c0_8, %c0_9, %c0_10] : memref<4x1x8xf32, #tpu.memory_space<vmem>>, vector<1x1x8xf32>
    %14 = vector.shape_cast %13 : vector<1x1x8xf32> to vector<1x8xf32>
    %15 = vector.broadcast %14 : vector<1x8xf32> to vector<8x8xf32>
    %16 = arith.addf %12, %15 : vector<8x8xf32>
    %17 = arith.truncf %16 : vector<8x8xf32> to vector<8x8xbf16>
    %c0_11 = arith.constant 0 : index
    %c0_12 = arith.constant 0 : index
    %c0_13 = arith.constant 0 : index
    %18 = vector.load %arg22[%c0_11, %c0_12, %c0_13] : memref<4x8x8xbf16, #tpu.memory_space<vmem>>, vector<1x8x8xbf16>
    %19 = vector.shape_cast %18 : vector<1x8x8xbf16> to vector<8x8xbf16>
    %cst_14 = arith.constant dense<0.000000e+00> : vector<8x8xf32>
    %20 = tpu.matmul %17, %19, %cst_14 {dimension_numbers = #tpu.dot_dimension_numbers<[1], [1], [0], [0], [0, 0, 1, 0], [], []>} : vector<8x8xbf16>, vector<8x8xbf16>, vector<8x8xf32> -> vector<8x8xf32>
    %21 = vector.broadcast %8 : vector<1x8xf32> to vector<8x8xf32>
    %22 = arith.addf %20, %21 : vector<8x8xf32>
    %cst_15 = arith.constant dense<0xFF800000> : vector<8xf32>
    %23 = vector.multi_reduction <maximumf>, %22, %cst_15 [1] : vector<8x8xf32> to vector<8xf32>
    %24 = vector.shape_cast %23 : vector<8xf32> to vector<8x1xf32>
    %25 = vector.broadcast %24 : vector<8x1xf32> to vector<8x8xf32>
    %26 = arith.subf %22, %25 : vector<8x8xf32>
    %27 = math.exp %26 : vector<8x8xf32>
    %cst_16 = arith.constant dense<0.000000e+00> : vector<8xf32>
    %28 = vector.multi_reduction <add>, %27, %cst_16 [1] : vector<8x8xf32> to vector<8xf32>
    %29 = vector.shape_cast %28 : vector<8xf32> to vector<8x1xf32>
    %30 = arith.truncf %27 : vector<8x8xf32> to vector<8x8xbf16>
    %c0_17 = arith.constant 0 : index
    %c0_18 = arith.constant 0 : index
    %c0_19 = arith.constant 0 : index
    %31 = vector.load %arg23[%c0_17, %c0_18, %c0_19] : memref<4x8x8xbf16, #tpu.memory_space<vmem>>, vector<1x8x8xbf16>
    %32 = vector.shape_cast %31 : vector<1x8x8xbf16> to vector<8x8xbf16>
    %cst_20 = arith.constant dense<0.000000e+00> : vector<8x8xf32>
    %33 = tpu.matmul %30, %32, %cst_20 {dimension_numbers = #tpu.dot_dimension_numbers<[1], [0], [0], [1], [0, 0, 1, 1], [], []>} : vector<8x8xbf16>, vector<8x8xbf16>, vector<8x8xf32> -> vector<8x8xf32>
    %34 = tpu.reciprocal %29 {approx = true} : vector<8x1xf32> -> vector<8x1xf32>
    %35 = vector.broadcast %34 : vector<8x1xf32> to vector<8x8xf32>
    %36 = arith.mulf %33, %35 : vector<8x8xf32>
    %37 = arith.truncf %36 : vector<8x8xf32> to vector<8x8xbf16>
    %c0_21 = arith.constant 0 : index
    %c0_22 = arith.constant 0 : index
    %c0_23 = arith.constant 0 : index
    %38 = vector.load %arg10[%c0_21, %c0_22, %c0_23] : memref<4x8x32xbf16, #tpu.memory_space<vmem>>, vector<1x8x32xbf16>
    %39 = vector.shape_cast %38 : vector<1x8x32xbf16> to vector<8x32xbf16>
    %cst_24 = arith.constant dense<0.000000e+00> : vector<8x32xf32>
    %40 = tpu.matmul %37, %39, %cst_24 {dimension_numbers = #tpu.dot_dimension_numbers<[1], [0], [0], [1], [0, 0, 1, 1], [], []>} : vector<8x8xbf16>, vector<8x32xbf16>, vector<8x32xf32> -> vector<8x32xf32>
    %41 = arith.addf %9, %40 : vector<8x32xf32>
    %c1 = arith.constant 1 : index
    %c0_25 = arith.constant 0 : index
    %c0_26 = arith.constant 0 : index
    %42 = vector.load %arg4[%c1, %c0_25, %c0_26] : memref<4x32x8xbf16, #tpu.memory_space<vmem>>, vector<1x32x8xbf16>
    %43 = vector.shape_cast %42 : vector<1x32x8xbf16> to vector<32x8xbf16>
    %cst_27 = arith.constant dense<0.000000e+00> : vector<8x8xf32>
    %44 = tpu.matmul %6, %43, %cst_27 {dimension_numbers = #tpu.dot_dimension_numbers<[1], [0], [0], [1], [0, 0, 1, 1], [], []>} : vector<8x32xbf16>, vector<32x8xbf16>, vector<8x8xf32> -> vector<8x8xf32>
    %c1_28 = arith.constant 1 : index
    %c0_29 = arith.constant 0 : index
    %c0_30 = arith.constant 0 : index
    %45 = vector.load %arg5[%c1_28, %c0_29, %c0_30] : memref<4x1x8xf32, #tpu.memory_space<vmem>>, vector<1x1x8xf32>
    %46 = vector.shape_cast %45 : vector<1x1x8xf32> to vector<1x8xf32>
    %47 = vector.broadcast %46 : vector<1x8xf32> to vector<8x8xf32>
    %48 = arith.addf %44, %47 : vector<8x8xf32>
    %49 = arith.truncf %48 : vector<8x8xf32> to vector<8x8xbf16>
    %c1_31 = arith.constant 1 : index
    %c0_32 = arith.constant 0 : index
    %c0_33 = arith.constant 0 : index
    %50 = vector.load %arg22[%c1_31, %c0_32, %c0_33] : memref<4x8x8xbf16, #tpu.memory_space<vmem>>, vector<1x8x8xbf16>
    %51 = vector.shape_cast %50 : vector<1x8x8xbf16> to vector<8x8xbf16>
    %cst_34 = arith.constant dense<0.000000e+00> : vector<8x8xf32>
    %52 = tpu.matmul %49, %51, %cst_34 {dimension_numbers = #tpu.dot_dimension_numbers<[1], [1], [0], [0], [0, 0, 1, 0], [], []>} : vector<8x8xbf16>, vector<8x8xbf16>, vector<8x8xf32> -> vector<8x8xf32>
    %53 = vector.broadcast %8 : vector<1x8xf32> to vector<8x8xf32>
    %54 = arith.addf %52, %53 : vector<8x8xf32>
    %cst_35 = arith.constant dense<0xFF800000> : vector<8xf32>
    %55 = vector.multi_reduction <maximumf>, %54, %cst_35 [1] : vector<8x8xf32> to vector<8xf32>
    %56 = vector.shape_cast %55 : vector<8xf32> to vector<8x1xf32>
    %57 = vector.broadcast %56 : vector<8x1xf32> to vector<8x8xf32>
    %58 = arith.subf %54, %57 : vector<8x8xf32>
    %59 = math.exp %58 : vector<8x8xf32>
    %cst_36 = arith.constant dense<0.000000e+00> : vector<8xf32>
    %60 = vector.multi_reduction <add>, %59, %cst_36 [1] : vector<8x8xf32> to vector<8xf32>
    %61 = vector.shape_cast %60 : vector<8xf32> to vector<8x1xf32>
    %62 = arith.truncf %59 : vector<8x8xf32> to vector<8x8xbf16>
    %c1_37 = arith.constant 1 : index
    %c0_38 = arith.constant 0 : index
    %c0_39 = arith.constant 0 : index
    %63 = vector.load %arg23[%c1_37, %c0_38, %c0_39] : memref<4x8x8xbf16, #tpu.memory_space<vmem>>, vector<1x8x8xbf16>
    %64 = vector.shape_cast %63 : vector<1x8x8xbf16> to vector<8x8xbf16>
    %cst_40 = arith.constant dense<0.000000e+00> : vector<8x8xf32>
    %65 = tpu.matmul %62, %64, %cst_40 {dimension_numbers = #tpu.dot_dimension_numbers<[1], [0], [0], [1], [0, 0, 1, 1], [], []>} : vector<8x8xbf16>, vector<8x8xbf16>, vector<8x8xf32> -> vector<8x8xf32>
    %66 = tpu.reciprocal %61 {approx = true} : vector<8x1xf32> -> vector<8x1xf32>
    %67 = vector.broadcast %66 : vector<8x1xf32> to vector<8x8xf32>
    %68 = arith.mulf %65, %67 : vector<8x8xf32>
    %69 = arith.truncf %68 : vector<8x8xf32> to vector<8x8xbf16>
    %c1_41 = arith.constant 1 : index
    %c0_42 = arith.constant 0 : index
    %c0_43 = arith.constant 0 : index
    %70 = vector.load %arg10[%c1_41, %c0_42, %c0_43] : memref<4x8x32xbf16, #tpu.memory_space<vmem>>, vector<1x8x32xbf16>
    %71 = vector.shape_cast %70 : vector<1x8x32xbf16> to vector<8x32xbf16>
    %cst_44 = arith.constant dense<0.000000e+00> : vector<8x32xf32>
    %72 = tpu.matmul %69, %71, %cst_44 {dimension_numbers = #tpu.dot_dimension_numbers<[1], [0], [0], [1], [0, 0, 1, 1], [], []>} : vector<8x8xbf16>, vector<8x32xbf16>, vector<8x32xf32> -> vector<8x32xf32>
    %73 = arith.addf %41, %72 : vector<8x32xf32>
    %c2 = arith.constant 2 : index
    %c0_45 = arith.constant 0 : index
    %c0_46 = arith.constant 0 : index
    %74 = vector.load %arg4[%c2, %c0_45, %c0_46] : memref<4x32x8xbf16, #tpu.memory_space<vmem>>, vector<1x32x8xbf16>
    %75 = vector.shape_cast %74 : vector<1x32x8xbf16> to vector<32x8xbf16>
    %cst_47 = arith.constant dense<0.000000e+00> : vector<8x8xf32>
    %76 = tpu.matmul %6, %75, %cst_47 {dimension_numbers = #tpu.dot_dimension_numbers<[1], [0], [0], [1], [0, 0, 1, 1], [], []>} : vector<8x32xbf16>, vector<32x8xbf16>, vector<8x8xf32> -> vector<8x8xf32>
    %c2_48 = arith.constant 2 : index
    %c0_49 = arith.constant 0 : index
    %c0_50 = arith.constant 0 : index
    %77 = vector.load %arg5[%c2_48, %c0_49, %c0_50] : memref<4x1x8xf32, #tpu.memory_space<vmem>>, vector<1x1x8xf32>
    %78 = vector.shape_cast %77 : vector<1x1x8xf32> to vector<1x8xf32>
    %79 = vector.broadcast %78 : vector<1x8xf32> to vector<8x8xf32>
    %80 = arith.addf %76, %79 : vector<8x8xf32>
    %81 = arith.truncf %80 : vector<8x8xf32> to vector<8x8xbf16>
    %c2_51 = arith.constant 2 : index
    %c0_52 = arith.constant 0 : index
    %c0_53 = arith.constant 0 : index
    %82 = vector.load %arg22[%c2_51, %c0_52, %c0_53] : memref<4x8x8xbf16, #tpu.memory_space<vmem>>, vector<1x8x8xbf16>
    %83 = vector.shape_cast %82 : vector<1x8x8xbf16> to vector<8x8xbf16>
    %cst_54 = arith.constant dense<0.000000e+00> : vector<8x8xf32>
    %84 = tpu.matmul %81, %83, %cst_54 {dimension_numbers = #tpu.dot_dimension_numbers<[1], [1], [0], [0], [0, 0, 1, 0], [], []>} : vector<8x8xbf16>, vector<8x8xbf16>, vector<8x8xf32> -> vector<8x8xf32>
    %85 = vector.broadcast %8 : vector<1x8xf32> to vector<8x8xf32>
    %86 = arith.addf %84, %85 : vector<8x8xf32>
    %cst_55 = arith.constant dense<0xFF800000> : vector<8xf32>
    %87 = vector.multi_reduction <maximumf>, %86, %cst_55 [1] : vector<8x8xf32> to vector<8xf32>
    %88 = vector.shape_cast %87 : vector<8xf32> to vector<8x1xf32>
    %89 = vector.broadcast %88 : vector<8x1xf32> to vector<8x8xf32>
    %90 = arith.subf %86, %89 : vector<8x8xf32>
    %91 = math.exp %90 : vector<8x8xf32>
    %cst_56 = arith.constant dense<0.000000e+00> : vector<8xf32>
    %92 = vector.multi_reduction <add>, %91, %cst_56 [1] : vector<8x8xf32> to vector<8xf32>
    %93 = vector.shape_cast %92 : vector<8xf32> to vector<8x1xf32>
    %94 = arith.truncf %91 : vector<8x8xf32> to vector<8x8xbf16>
    %c2_57 = arith.constant 2 : index
    %c0_58 = arith.constant 0 : index
    %c0_59 = arith.constant 0 : index
    %95 = vector.load %arg23[%c2_57, %c0_58, %c0_59] : memref<4x8x8xbf16, #tpu.memory_space<vmem>>, vector<1x8x8xbf16>
    %96 = vector.shape_cast %95 : vector<1x8x8xbf16> to vector<8x8xbf16>
    %cst_60 = arith.constant dense<0.000000e+00> : vector<8x8xf32>
    %97 = tpu.matmul %94, %96, %cst_60 {dimension_numbers = #tpu.dot_dimension_numbers<[1], [0], [0], [1], [0, 0, 1, 1], [], []>} : vector<8x8xbf16>, vector<8x8xbf16>, vector<8x8xf32> -> vector<8x8xf32>
    %98 = tpu.reciprocal %93 {approx = true} : vector<8x1xf32> -> vector<8x1xf32>
    %99 = vector.broadcast %98 : vector<8x1xf32> to vector<8x8xf32>
    %100 = arith.mulf %97, %99 : vector<8x8xf32>
    %101 = arith.truncf %100 : vector<8x8xf32> to vector<8x8xbf16>
    %c2_61 = arith.constant 2 : index
    %c0_62 = arith.constant 0 : index
    %c0_63 = arith.constant 0 : index
    %102 = vector.load %arg10[%c2_61, %c0_62, %c0_63] : memref<4x8x32xbf16, #tpu.memory_space<vmem>>, vector<1x8x32xbf16>
    %103 = vector.shape_cast %102 : vector<1x8x32xbf16> to vector<8x32xbf16>
    %cst_64 = arith.constant dense<0.000000e+00> : vector<8x32xf32>
    %104 = tpu.matmul %101, %103, %cst_64 {dimension_numbers = #tpu.dot_dimension_numbers<[1], [0], [0], [1], [0, 0, 1, 1], [], []>} : vector<8x8xbf16>, vector<8x32xbf16>, vector<8x32xf32> -> vector<8x32xf32>
    %105 = arith.addf %73, %104 : vector<8x32xf32>
    %c3 = arith.constant 3 : index
    %c0_65 = arith.constant 0 : index
    %c0_66 = arith.constant 0 : index
    %106 = vector.load %arg4[%c3, %c0_65, %c0_66] : memref<4x32x8xbf16, #tpu.memory_space<vmem>>, vector<1x32x8xbf16>
    %107 = vector.shape_cast %106 : vector<1x32x8xbf16> to vector<32x8xbf16>
    %cst_67 = arith.constant dense<0.000000e+00> : vector<8x8xf32>
    %108 = tpu.matmul %6, %107, %cst_67 {dimension_numbers = #tpu.dot_dimension_numbers<[1], [0], [0], [1], [0, 0, 1, 1], [], []>} : vector<8x32xbf16>, vector<32x8xbf16>, vector<8x8xf32> -> vector<8x8xf32>
    %c3_68 = arith.constant 3 : index
    %c0_69 = arith.constant 0 : index
    %c0_70 = arith.constant 0 : index
    %109 = vector.load %arg5[%c3_68, %c0_69, %c0_70] : memref<4x1x8xf32, #tpu.memory_space<vmem>>, vector<1x1x8xf32>
    %110 = vector.shape_cast %109 : vector<1x1x8xf32> to vector<1x8xf32>
    %111 = vector.broadcast %110 : vector<1x8xf32> to vector<8x8xf32>
    %112 = arith.addf %108, %111 : vector<8x8xf32>
    %113 = arith.truncf %112 : vector<8x8xf32> to vector<8x8xbf16>
    %c3_71 = arith.constant 3 : index
    %c0_72 = arith.constant 0 : index
    %c0_73 = arith.constant 0 : index
    %114 = vector.load %arg22[%c3_71, %c0_72, %c0_73] : memref<4x8x8xbf16, #tpu.memory_space<vmem>>, vector<1x8x8xbf16>
    %115 = vector.shape_cast %114 : vector<1x8x8xbf16> to vector<8x8xbf16>
    %cst_74 = arith.constant dense<0.000000e+00> : vector<8x8xf32>
    %116 = tpu.matmul %113, %115, %cst_74 {dimension_numbers = #tpu.dot_dimension_numbers<[1], [1], [0], [0], [0, 0, 1, 0], [], []>} : vector<8x8xbf16>, vector<8x8xbf16>, vector<8x8xf32> -> vector<8x8xf32>
    %117 = vector.broadcast %8 : vector<1x8xf32> to vector<8x8xf32>
    %118 = arith.addf %116, %117 : vector<8x8xf32>
    %cst_75 = arith.constant dense<0xFF800000> : vector<8xf32>
    %119 = vector.multi_reduction <maximumf>, %118, %cst_75 [1] : vector<8x8xf32> to vector<8xf32>
    %120 = vector.shape_cast %119 : vector<8xf32> to vector<8x1xf32>
    %121 = vector.broadcast %120 : vector<8x1xf32> to vector<8x8xf32>
    %122 = arith.subf %118, %121 : vector<8x8xf32>
    %123 = math.exp %122 : vector<8x8xf32>
    %cst_76 = arith.constant dense<0.000000e+00> : vector<8xf32>
    %124 = vector.multi_reduction <add>, %123, %cst_76 [1] : vector<8x8xf32> to vector<8xf32>
    %125 = vector.shape_cast %124 : vector<8xf32> to vector<8x1xf32>
    %126 = arith.truncf %123 : vector<8x8xf32> to vector<8x8xbf16>
    %c3_77 = arith.constant 3 : index
    %c0_78 = arith.constant 0 : index
    %c0_79 = arith.constant 0 : index
    %127 = vector.load %arg23[%c3_77, %c0_78, %c0_79] : memref<4x8x8xbf16, #tpu.memory_space<vmem>>, vector<1x8x8xbf16>
    %128 = vector.shape_cast %127 : vector<1x8x8xbf16> to vector<8x8xbf16>
    %cst_80 = arith.constant dense<0.000000e+00> : vector<8x8xf32>
    %129 = tpu.matmul %126, %128, %cst_80 {dimension_numbers = #tpu.dot_dimension_numbers<[1], [0], [0], [1], [0, 0, 1, 1], [], []>} : vector<8x8xbf16>, vector<8x8xbf16>, vector<8x8xf32> -> vector<8x8xf32>
    %130 = tpu.reciprocal %125 {approx = true} : vector<8x1xf32> -> vector<8x1xf32>
    %131 = vector.broadcast %130 : vector<8x1xf32> to vector<8x8xf32>
    %132 = arith.mulf %129, %131 : vector<8x8xf32>
    %133 = arith.truncf %132 : vector<8x8xf32> to vector<8x8xbf16>
    %c3_81 = arith.constant 3 : index
    %c0_82 = arith.constant 0 : index
    %c0_83 = arith.constant 0 : index
    %134 = vector.load %arg10[%c3_81, %c0_82, %c0_83] : memref<4x8x32xbf16, #tpu.memory_space<vmem>>, vector<1x8x32xbf16>
    %135 = vector.shape_cast %134 : vector<1x8x32xbf16> to vector<8x32xbf16>
    %cst_84 = arith.constant dense<0.000000e+00> : vector<8x32xf32>
    %136 = tpu.matmul %133, %135, %cst_84 {dimension_numbers = #tpu.dot_dimension_numbers<[1], [0], [0], [1], [0, 0, 1, 1], [], []>} : vector<8x8xbf16>, vector<8x32xbf16>, vector<8x32xf32> -> vector<8x32xf32>
    %137 = arith.addf %105, %136 : vector<8x32xf32>
    %c0_85 = arith.constant 0 : index
    %138 = arith.index_cast %1 : i32 to index
    %c0_86 = arith.constant 0 : index
    %139 = vector.load %arg2[%c0_85, %138, %c0_86] : memref<1x8x32xf32, #tpu.memory_space<vmem>>, vector<1x8x32xf32>
    %140 = vector.shape_cast %139 : vector<1x8x32xf32> to vector<8x32xf32>
    %141 = arith.addf %140, %137 : vector<8x32xf32>
    %c0_87 = arith.constant 0 : index
    %c0_88 = arith.constant 0 : index
    %142 = vector.load %arg11[%c0_87, %c0_88] : memref<1x32xf32, #tpu.memory_space<vmem>>, vector<1x32xf32>
    %143 = vector.broadcast %142 : vector<1x32xf32> to vector<8x32xf32>
    %144 = arith.addf %141, %143 : vector<8x32xf32>
    %cst_89 = arith.constant dense<0.000000e+00> : vector<8xf32>
    %145 = vector.multi_reduction <add>, %144, %cst_89 [1] : vector<8x32xf32> to vector<8xf32>
    %146 = vector.shape_cast %145 : vector<8xf32> to vector<8x1xf32>
    %cst_90 = arith.constant 3.200000e+01 : f32
    %147 = vector.broadcast %cst_90 : f32 to vector<8x1xf32>
    %148 = arith.divf %146, %147 : vector<8x1xf32>
    %149 = vector.broadcast %148 : vector<8x1xf32> to vector<8x32xf32>
    %150 = arith.subf %144, %149 : vector<8x32xf32>
    %151 = arith.mulf %150, %150 : vector<8x32xf32>
    %cst_91 = arith.constant dense<0.000000e+00> : vector<8xf32>
    %152 = vector.multi_reduction <add>, %151, %cst_91 [1] : vector<8x32xf32> to vector<8xf32>
    %153 = vector.shape_cast %152 : vector<8xf32> to vector<8x1xf32>
    %cst_92 = arith.constant 3.200000e+01 : f32
    %154 = vector.broadcast %cst_92 : f32 to vector<8x1xf32>
    %155 = arith.divf %153, %154 : vector<8x1xf32>
    %156 = vector.broadcast %148 : vector<8x1xf32> to vector<8x32xf32>
    %157 = arith.subf %144, %156 : vector<8x32xf32>
    %cst_93 = arith.constant 9.99999974E-6 : f32
    %158 = vector.broadcast %cst_93 : f32 to vector<8x1xf32>
    %159 = arith.addf %155, %158 : vector<8x1xf32>
    %160 = math.rsqrt %159 : vector<8x1xf32>
    %161 = vector.broadcast %160 : vector<8x1xf32> to vector<8x32xf32>
    %162 = arith.mulf %157, %161 : vector<8x32xf32>
    %c0_94 = arith.constant 0 : index
    %c0_95 = arith.constant 0 : index
    %163 = vector.load %arg14[%c0_94, %c0_95] : memref<1x32xf32, #tpu.memory_space<vmem>>, vector<1x32xf32>
    %164 = vector.broadcast %163 : vector<1x32xf32> to vector<8x32xf32>
    %165 = arith.mulf %162, %164 : vector<8x32xf32>
    %c0_96 = arith.constant 0 : index
    %c0_97 = arith.constant 0 : index
    %166 = vector.load %arg15[%c0_96, %c0_97] : memref<1x32xf32, #tpu.memory_space<vmem>>, vector<1x32xf32>
    %167 = vector.broadcast %166 : vector<1x32xf32> to vector<8x32xf32>
    %168 = arith.addf %165, %167 : vector<8x32xf32>
    %169 = arith.truncf %168 : vector<8x32xf32> to vector<8x32xbf16>
    %c0_98 = arith.constant 0 : index
    %c0_99 = arith.constant 0 : index
    %170 = vector.load %arg16[%c0_98, %c0_99] : memref<32x64xbf16, #tpu.memory_space<vmem>>, vector<32x64xbf16>
    %cst_100 = arith.constant dense<0.000000e+00> : vector<8x64xf32>
    %171 = tpu.matmul %169, %170, %cst_100 {dimension_numbers = #tpu.dot_dimension_numbers<[1], [0], [0], [1], [0, 0, 1, 1], [], []>} : vector<8x32xbf16>, vector<32x64xbf16>, vector<8x64xf32> -> vector<8x64xf32>
    %c0_101 = arith.constant 0 : index
    %c0_102 = arith.constant 0 : index
    %172 = vector.load %arg17[%c0_101, %c0_102] : memref<1x64xf32, #tpu.memory_space<vmem>>, vector<1x64xf32>
    %173 = vector.broadcast %172 : vector<1x64xf32> to vector<8x64xf32>
    %174 = arith.addf %171, %173 : vector<8x64xf32>
    %cst_103 = arith.constant 0.000000e+00 : f32
    %175 = vector.broadcast %cst_103 : f32 to vector<8x64xf32>
    %176 = arith.maximumf %174, %175 : vector<8x64xf32>
    %177 = arith.truncf %176 : vector<8x64xf32> to vector<8x64xbf16>
    %c0_104 = arith.constant 0 : index
    %c0_105 = arith.constant 0 : index
    %178 = vector.load %arg18[%c0_104, %c0_105] : memref<64x32xbf16, #tpu.memory_space<vmem>>, vector<64x32xbf16>
    %cst_106 = arith.constant dense<0.000000e+00> : vector<8x32xf32>
    %179 = tpu.matmul %177, %178, %cst_106 {dimension_numbers = #tpu.dot_dimension_numbers<[1], [0], [0], [1], [0, 0, 1, 1], [], []>} : vector<8x64xbf16>, vector<64x32xbf16>, vector<8x32xf32> -> vector<8x32xf32>
    %c0_107 = arith.constant 0 : index
    %c0_108 = arith.constant 0 : index
    %180 = vector.load %arg19[%c0_107, %c0_108] : memref<1x32xf32, #tpu.memory_space<vmem>>, vector<1x32xf32>
    %181 = vector.broadcast %180 : vector<1x32xf32> to vector<8x32xf32>
    %182 = arith.addf %179, %181 : vector<8x32xf32>
    %183 = arith.addf %144, %182 : vector<8x32xf32>
    %c0_109 = arith.constant 0 : index
    %c0_110 = arith.constant 0 : index
    %c0_111 = arith.constant 0 : index
    %184 = vector.load %arg20[%c0_109, %c0_110, %c0_111] : memref<1x8x32xf32, #tpu.memory_space<vmem>>, vector<1x8x32xf32>
    %185 = vector.shape_cast %184 : vector<1x8x32xf32> to vector<8x32xf32>
    %186 = vector.shape_cast %183 : vector<8x32xf32> to vector<1x8x32xf32>
    tpu.vector_store %arg20[%c0_109, %c0_110, %c0_111], %186 {strides = array<i32>} : memref<1x8x32xf32, #tpu.memory_space<vmem>>, vector<1x8x32xf32>,
    return
  }
  func.func @transform_0(%arg0: i32, %arg1: i32) -> (i32, i32, i32) {
    %c0_i32 = arith.constant 0 : i32
    %c0_i32_0 = arith.constant 0 : i32
    %c0_i32_1 = arith.constant 0 : i32
    return %arg0, %c0_i32, %c0_i32_0 : i32, i32, i32
  }
  func.func @transform_1(%arg0: i32, %arg1: i32) -> (i32, i32, i32) {
    %c0_i32 = arith.constant 0 : i32
    %c0_i32_0 = arith.constant 0 : i32
    %c0_i32_1 = arith.constant 0 : i32
    return %arg0, %c0_i32, %c0_i32_0 : i32, i32, i32
  }
  func.func @transform_2(%arg0: i32, %arg1: i32) -> (i32, i32, i32) {
    %c0_i32 = arith.constant 0 : i32
    %c0_i32_0 = arith.constant 0 : i32
    %c0_i32_1 = arith.constant 0 : i32
    %c0_i32_2 = arith.constant 0 : i32
    return %c0_i32, %c0_i32_0, %c0_i32_1 : i32, i32, i32
  }
  func.func @transform_3(%arg0: i32, %arg1: i32) -> (i32, i32, i32) {
    %c0_i32 = arith.constant 0 : i32
    %c0_i32_0 = arith.constant 0 : i32
    %c0_i32_1 = arith.constant 0 : i32
    %c0_i32_2 = arith.constant 0 : i32
    return %c0_i32, %c0_i32_0, %c0_i32_1 : i32, i32, i32
  }
  func.func @transform_4(%arg0: i32, %arg1: i32) -> (i32, i32, i32) {
    %c0_i32 = arith.constant 0 : i32
    %c0_i32_0 = arith.constant 0 : i32
    %c0_i32_1 = arith.constant 0 : i32
    %c0_i32_2 = arith.constant 0 : i32
    return %c0_i32, %c0_i32_0, %c0_i32_1 : i32, i32, i32
  }
  func.func @transform_5(%arg0: i32, %arg1: i32) -> (i32, i32, i32) {
    %c0_i32 = arith.constant 0 : i32
    %c0_i32_0 = arith.constant 0 : i32
    %c0_i32_1 = arith.constant 0 : i32
    %c0_i32_2 = arith.constant 0 : i32
    return %c0_i32, %c0_i32_0, %c0_i32_1 : i32, i32, i32
  }
  func.func @transform_6(%arg0: i32, %arg1: i32) -> (i32, i32, i32) {
    %c0_i32 = arith.constant 0 : i32
    %c0_i32_0 = arith.constant 0 : i32
    %c0_i32_1 = arith.constant 0 : i32
    %c0_i32_2 = arith.constant 0 : i32
    return %c0_i32, %c0_i32_0, %c0_i32_1 : i32, i32, i32
  }
  func.func @transform_7(%arg0: i32, %arg1: i32) -> (i32, i32, i32) {
    %c0_i32 = arith.constant 0 : i32
    %c0_i32_0 = arith.constant 0 : i32
    %c0_i32_1 = arith.constant 0 : i32
    %c0_i32_2 = arith.constant 0 : i32
    return %c0_i32, %c0_i32_0, %c0_i32_1 : i32, i32, i32
  }
  func.func @transform_8(%arg0: i32, %arg1: i32) -> (i32, i32, i32) {
    %c0_i32 = arith.constant 0 : i32
    %c0_i32_0 = arith.constant 0 : i32
    %c0_i32_1 = arith.constant 0 : i32
    %c0_i32_2 = arith.constant 0 : i32
    return %c0_i32, %c0_i32_0, %c0_i32_1 : i32, i32, i32
  }
  func.func @transform_9(%arg0: i32, %arg1: i32) -> (i32, i32) {
    %c0_i32 = arith.constant 0 : i32
    %c0_i32_0 = arith.constant 0 : i32
    %c0_i32_1 = arith.constant 0 : i32
    return %c0_i32, %c0_i32_0 : i32, i32
  }
  func.func @transform_10(%arg0: i32, %arg1: i32) -> (i32, i32) {
    %c0_i32 = arith.constant 0 : i32
    %c0_i32_0 = arith.constant 0 : i32
    %c0_i32_1 = arith.constant 0 : i32
    return %c0_i32, %c0_i32_0 : i32, i32
  }
  func.func @transform_11(%arg0: i32, %arg1: i32) -> (i32, i32) {
    %c0_i32 = arith.constant 0 : i32
    %c0_i32_0 = arith.constant 0 : i32
    %c0_i32_1 = arith.constant 0 : i32
    return %c0_i32, %c0_i32_0 : i32, i32
  }
  func.func @transform_12(%arg0: i32, %arg1: i32) -> (i32, i32) {
    %c0_i32 = arith.constant 0 : i32
    %c0_i32_0 = arith.constant 0 : i32
    %c0_i32_1 = arith.constant 0 : i32
    return %c0_i32, %c0_i32_0 : i32, i32
  }
  func.func @transform_13(%arg0: i32, %arg1: i32) -> (i32, i32) {
    %c0_i32 = arith.constant 0 : i32
    %c0_i32_0 = arith.constant 0 : i32
    %c0_i32_1 = arith.constant 0 : i32
    return %c0_i32, %c0_i32_0 : i32, i32
  }
  func.func @transform_14(%arg0: i32, %arg1: i32) -> (i32, i32) {
    %c0_i32 = arith.constant 0 : i32
    %c0_i32_0 = arith.constant 0 : i32
    %c0_i32_1 = arith.constant 0 : i32
    return %c0_i32, %c0_i32_0 : i32, i32
  }
  func.func @transform_15(%arg0: i32, %arg1: i32) -> (i32, i32) {
    %c0_i32 = arith.constant 0 : i32
    %c0_i32_0 = arith.constant 0 : i32
    %c0_i32_1 = arith.constant 0 : i32
    return %c0_i32, %c0_i32_0 : i32, i32
  }
  func.func @transform_16(%arg0: i32, %arg1: i32) -> (i32, i32) {
    %c0_i32 = arith.constant 0 : i32
    %c0_i32_0 = arith.constant 0 : i32
    %c0_i32_1 = arith.constant 0 : i32
    return %c0_i32, %c0_i32_0 : i32, i32
  }
  func.func @transform_17(%arg0: i32, %arg1: i32) -> (i32, i32) {
    %c0_i32 = arith.constant 0 : i32
    %c0_i32_0 = arith.constant 0 : i32
    %c0_i32_1 = arith.constant 0 : i32
    return %c0_i32, %c0_i32_0 : i32, i32
  }
  func.func @transform_18(%arg0: i32, %arg1: i32) -> (i32, i32, i32) {
    %c0_i32 = arith.constant 0 : i32
    %c0_i32_0 = arith.constant 0 : i32
    return %arg0, %arg1, %c0_i32 : i32, i32, i32
  }
}

module attributes {stable_mosaic.version = 11 : i64} {
  func.func @_encoder_layer_kernel(%arg0: i32, %arg1: i32, %arg2: memref<1x8x32xf32, #tpu.memory_space<vmem>>, %arg3: memref<1x1x8xf32, #tpu.memory_space<vmem>>, %arg4: memref<4x32x8xbf16, #tpu.memory_space<vmem>>, %arg5: memref<4x1x8xf32, #tpu.memory_space<vmem>>, %arg6: memref<4x32x8xbf16, #tpu.memory_space<vmem>>, %arg7: memref<4x1x8xf32, #tpu.memory_space<vmem>>, %arg8: memref<4x32x8xbf16, #tpu.memory_space<vmem>>, %arg9: memref<4x1x8xf32, #tpu.memory_space<vmem>>, %arg10: memref<4x8x32xbf16, #tpu.memory_space<vmem>>, %arg11: memref<1x32xf32, #tpu.memory_space<vmem>>, %arg12: memref<1x32xf32, #tpu.memory_space<vmem>>, %arg13: memref<1x32xf32, #tpu.memory_space<vmem>>, %arg14: memref<1x32xf32, #tpu.memory_space<vmem>>, %arg15: memref<1x32xf32, #tpu.memory_space<vmem>>, %arg16: memref<32x64xbf16, #tpu.memory_space<vmem>>, %arg17: memref<1x64xf32, #tpu.memory_space<vmem>>, %arg18: memref<64x32xbf16, #tpu.memory_space<vmem>>, %arg19: memref<1x32xf32, #tpu.memory_space<vmem>>, %arg20: memref<1x8x32xf32, #tpu.memory_space<vmem>>, %arg21: memref<8x32xbf16, #tpu.memory_space<vmem>>, %arg22: memref<4x8x8xbf16, #tpu.memory_space<vmem>>, %arg23: memref<4x8x8xbf16, #tpu.memory_space<vmem>>) attributes {dimension_semantics = [#tpu.dimension_semantics<parallel>, #tpu.dimension_semantics<arbitrary>], iteration_bounds = array<i64: 2, 1>, scalar_prefetch = 0 : i64, scratch_operands = 3 : i64, tpu.core_type = #tpu.core_type<tc>, window_params = [{transform_indices = @transform_0, window_bounds = array<i64: 1, 8, 32>}, {transform_indices = @transform_1, window_bounds = array<i64: 1, 1, 8>}, {pipeline_mode = #tpu.pipeline_mode<synchronous>, transform_indices = @transform_2, window_bounds = array<i64: 4, 32, 8>}, {pipeline_mode = #tpu.pipeline_mode<synchronous>, transform_indices = @transform_3, window_bounds = array<i64: 4, 1, 8>}, {pipeline_mode = #tpu.pipeline_mode<synchronous>, transform_indices = @transform_4, window_bounds = array<i64: 4, 32, 8>}, {pipeline_mode = #tpu.pipeline_mode<synchronous>, transform_indices = @transform_5, window_bounds = array<i64: 4, 1, 8>}, {pipeline_mode = #tpu.pipeline_mode<synchronous>, transform_indices = @transform_6, window_bounds = array<i64: 4, 32, 8>}, {pipeline_mode = #tpu.pipeline_mode<synchronous>, transform_indices = @transform_7, window_bounds = array<i64: 4, 1, 8>}, {pipeline_mode = #tpu.pipeline_mode<synchronous>, transform_indices = @transform_8, window_bounds = array<i64: 4, 8, 32>}, {pipeline_mode = #tpu.pipeline_mode<synchronous>, transform_indices = @transform_9, window_bounds = array<i64: 1, 32>}, {pipeline_mode = #tpu.pipeline_mode<synchronous>, transform_indices = @transform_10, window_bounds = array<i64: 1, 32>}, {pipeline_mode = #tpu.pipeline_mode<synchronous>, transform_indices = @transform_11, window_bounds = array<i64: 1, 32>}, {pipeline_mode = #tpu.pipeline_mode<synchronous>, transform_indices = @transform_12, window_bounds = array<i64: 1, 32>}, {pipeline_mode = #tpu.pipeline_mode<synchronous>, transform_indices = @transform_13, window_bounds = array<i64: 1, 32>}, {pipeline_mode = #tpu.pipeline_mode<synchronous>, transform_indices = @transform_14, window_bounds = array<i64: 32, 64>}, {pipeline_mode = #tpu.pipeline_mode<synchronous>, transform_indices = @transform_15, window_bounds = array<i64: 1, 64>}, {pipeline_mode = #tpu.pipeline_mode<synchronous>, transform_indices = @transform_16, window_bounds = array<i64: 64, 32>}, {pipeline_mode = #tpu.pipeline_mode<synchronous>, transform_indices = @transform_17, window_bounds = array<i64: 1, 32>}, {transform_indices = @transform_18, window_bounds = array<i64: 1, 8, 32>}]} {
    %c8_i32 = arith.constant 8 : i32
    %0 = arith.muli %arg1, %c8_i32 : i32
    %1 = tpu.assume_multiple %0, 8 : i32
    %c0_i32 = arith.constant 0 : i32
    %2 = arith.cmpi eq, %arg1, %c0_i32 : i32
    %3 = arith.extui %2 : i1 to i32
    %c0_i32_0 = arith.constant 0 : i32
    %4 = arith.cmpi ne, %3, %c0_i32_0 : i32
    scf.if %4 {
      %c0_112 = arith.constant 0 : index
      %c0_113 = arith.constant 0 : index
      %c0_114 = arith.constant 0 : index
      %187 = vector.load %arg2[%c0_112, %c0_113, %c0_114] : memref<1x8x32xf32, #tpu.memory_space<vmem>>, vector<1x8x32xf32>
      %188 = vector.shape_cast %187 : vector<1x8x32xf32> to vector<8x32xf32>
      %cst_115 = arith.constant dense<0.000000e+00> : vector<8xf32>
      %189 = vector.multi_reduction <add>, %188, %cst_115 [1] : vector<8x32xf32> to vector<8xf32>
      %190 = vector.shape_cast %189 : vector<8xf32> to vector<8x1xf32>
      %cst_116 = arith.constant 3.200000e+01 : f32
      %191 = vector.broadcast %cst_116 : f32 to vector<8x1xf32>
      %192 = arith.divf %190, %191 : vector<8x1xf32>
      %193 = vector.broadcast %192 : vector<8x1xf32> to vector<8x32xf32>
      %194 = arith.subf %188, %193 : vector<8x32xf32>
      %195 = arith.mulf %194, %194 : vector<8x32xf32>
      %cst_117 = arith.constant dense<0.000000e+00> : vector<8xf32>
      %196 = vector.multi_reduction <add>, %195, %cst_117 [1] : vector<8x32xf32> to vector<8xf32>
      %197 = vector.shape_cast %196 : vector<8xf32> to vector<8x1xf32>
      %cst_118 = arith.constant 3.200000e+01 : f32
      %198 = vector.broadcast %cst_118 : f32 to vector<8x1xf32>
      %199 = arith.divf %197, %198 : vector<8x1xf32>
      %200 = vector.broadcast %192 : vector<8x1xf32> to vector<8x32xf32>
      %201 = arith.subf %188, %200 : vector<8x32xf32>
      %cst_119 = arith.constant 9.99999974E-6 : f32
      %202 = vector.broadcast %cst_119 : f32 to vector<8x1xf32>
      %203 = arith.addf %199, %202 : vector<8x1xf32>
      %204 = math.rsqrt %203 : vector<8x1xf32>
      %205 = vector.broadcast %204 : vector<8x1xf32> to vector<8x32xf32>
      %206 = arith.mulf %201, %205 : vector<8x32xf32>
      %c0_120 = arith.constant 0 : index
      %c0_121 = arith.constant 0 : index
      %207 = vector.load %arg12[%c0_120, %c0_121] : memref<1x32xf32, #tpu.memory_space<vmem>>, vector<1x32xf32>
      %208 = vector.broadcast %207 : vector<1x32xf32> to vector<8x32xf32>
      %209 = arith.mulf %206, %208 : vector<8x32xf32>
      %c0_122 = arith.constant 0 : index
      %c0_123 = arith.constant 0 : index
      %210 = vector.load %arg13[%c0_122, %c0_123] : memref<1x32xf32, #tpu.memory_space<vmem>>, vector<1x32xf32>
      %211 = vector.broadcast %210 : vector<1x32xf32> to vector<8x32xf32>
      %212 = arith.addf %209, %211 : vector<8x32xf32>
      %213 = arith.truncf %212 : vector<8x32xf32> to vector<8x32xbf16>
      %c0_124 = arith.constant 0 : index
      %c0_125 = arith.constant 0 : index
      %214 = vector.load %arg21[%c0_124, %c0_125] : memref<8x32xbf16, #tpu.memory_space<vmem>>, vector<8x32xbf16>
      tpu.vector_store %arg21[%c0_124, %c0_125], %213 {strides = array<i32>} : memref<8x32xbf16, #tpu.memory_space<vmem>>, vector<8x32xbf16>,
      %c0_126 = arith.constant 0 : index
      %c0_127 = arith.constant 0 : index
      %c0_128 = arith.constant 0 : index
      %215 = vector.load %arg6[%c0_126, %c0_127, %c0_128] : memref<4x32x8xbf16, #tpu.memory_space<vmem>>, vector<1x32x8xbf16>
      %216 = vector.shape_cast %215 : vector<1x32x8xbf16> to vector<32x8xbf16>
      %cst_129 = arith.constant dense<0.000000e+00> : vector<8x8xf32>
      %217 = tpu.matmul %213, %216, %cst_129 {dimension_numbers = #tpu.dot_dimension_numbers<[1], [0], [0], [1], [0, 0, 1, 1], [], []>} : vector<8x32xbf16>, vector<32x8xbf16>, vector<8x8xf32> -> vector<8x8xf32>
      %c0_130 = arith.constant 0 : index
      %c0_131 = arith.constant 0 : index
      %c0_132 = arith.constant 0 : index
      %218 = vector.load %arg7[%c0_130, %c0_131, %c0_132] : memref<4x1x8xf32, #tpu.memory_space<vmem>>, vector<1x1x8xf32>
      %219 = vector.shape_cast %218 : vector<1x1x8xf32> to vector<1x8xf32>
      %220 = vector.broadcast %219 : vector<1x8xf32> to vector<8x8xf32>
      %221 = arith.addf %217, %220 : vector<8x8xf32>
      %222 = arith.truncf %221 : vector<8x8xf32> to vector<8x8xbf16>
      %c0_133 = arith.constant 0 : index
      %c0_134 = arith.constant 0 : index
      %c0_135 = arith.constant 0 : index
      %223 = vector.load %arg22[%c0_133, %c0_134, %c0_135] : memref<4x8x8xbf16, #tpu.memory_space<vmem>>, vector<1x8x8xbf16>
      %224 = vector.shape_cast %223 : vector<1x8x8xbf16> to vector<8x8xbf16>
      %225 = vector.shape_cast %222 : vector<8x8xbf16> to vector<1x8x8xbf16>
      tpu.vector_store %arg22[%c0_133, %c0_134, %c0_135], %225 {strides = array<i32>} : memref<4x8x8xbf16, #tpu.memory_space<vmem>>, vector<1x8x8xbf16>,
      %c0_136 = arith.constant 0 : index
      %c0_137 = arith.constant 0 : index
      %c0_138 = arith.constant 0 : index
      %226 = vector.load %arg8[%c0_136, %c0_137, %c0_138] : memref<4x32x8xbf16, #tpu.memory_space<vmem>>, vector<1x32x8xbf16>
      %227 = vector.shape_cast %226 : vector<1x32x8xbf16> to vector<32x8xbf16>
      %cst_139 = arith.constant dense<0.000000e+00> : vector<8x8xf32>
      %228 = tpu.matmul %213, %227, %cst_139 {dimension_numbers = #tpu.dot_dimension_numbers<[1], [0], [0], [1], [0, 0, 1, 1], [], []>} : vector<8x32xbf16>, vector<32x8xbf16>, vector<8x8xf32> -> vector<8x8xf32>
      %c0_140 = arith.constant 0 : index
      %c0_141 = arith.constant 0 : index
      %c0_142 = arith.constant 0 : index
      %229 = vector.load %arg9[%c0_140, %c0_141, %c0_142] : memref<4x1x8xf32, #tpu.memory_space<vmem>>, vector<1x1x8xf32>
      %230 = vector.shape_cast %229 : vector<1x1x8xf32> to vector<1x8xf32>
      %231 = vector.broadcast %230 : vector<1x8xf32> to vector<8x8xf32>
      %232 = arith.addf %228, %231 : vector<8x8xf32>
      %233 = arith.truncf %232 : vector<8x8xf32> to vector<8x8xbf16>
      %c0_143 = arith.constant 0 : index
      %c0_144 = arith.constant 0 : index
      %c0_145 = arith.constant 0 : index
      %234 = vector.load %arg23[%c0_143, %c0_144, %c0_145] : memref<4x8x8xbf16, #tpu.memory_space<vmem>>, vector<1x8x8xbf16>
      %235 = vector.shape_cast %234 : vector<1x8x8xbf16> to vector<8x8xbf16>
      %236 = vector.shape_cast %233 : vector<8x8xbf16> to vector<1x8x8xbf16>
      tpu.vector_store %arg23[%c0_143, %c0_144, %c0_145], %236 {strides = array<i32>} : memref<4x8x8xbf16, #tpu.memory_space<vmem>>, vector<1x8x8xbf16>,
      %c1_146 = arith.constant 1 : index
      %c0_147 = arith.constant 0 : index
      %c0_148 = arith.constant 0 : index
      %237 = vector.load %arg6[%c1_146, %c0_147, %c0_148] : memref<4x32x8xbf16, #tpu.memory_space<vmem>>, vector<1x32x8xbf16>
      %238 = vector.shape_cast %237 : vector<1x32x8xbf16> to vector<32x8xbf16>
      %cst_149 = arith.constant dense<0.000000e+00> : vector<8x8xf32>
      %239 = tpu.matmul %213, %238, %cst_149 {dimension_numbers = #tpu.dot_dimension_numbers<[1], [0], [0], [1], [0, 0, 1, 1], [], []>} : vector<8x32xbf16>, vector<32x8xbf16>, vector<8x8xf32> -> vector<8x8xf32>
      %c1_150 = arith.constant 1 : index
      %c0_151 = arith.constant 0 : index
      %c0_152 = arith.constant 0 : index
      %240 = vector.load %arg7[%c1_150, %c0_151, %c0_152] : memref<4x1x8xf32, #tpu.memory_space<vmem>>, vector<1x1x8xf32>
      %241 = vector.shape_cast %240 : vector<1x1x8xf32> to vector<1x8xf32>
      %242 = vector.broadcast %241 : vector<1x8xf32> to vector<8x8xf32>
      %243 = arith.addf %239, %242 : vector<8x8xf32>
      %244 = arith.truncf %243 : vector<8x8xf32> to vector<8x8xbf16>
      %c1_153 = arith.constant 1 : index
      %c0_154 = arith.constant 0 : index
      %c0_155 = arith.constant 0 : index
      %245 = vector.load %arg22[%c1_153, %c0_154, %c0_155] : memref<4x8x8xbf16, #tpu.memory_space<vmem>>, vector<1x8x8xbf16>
      %246 = vector.shape_cast %245 : vector<1x8x8xbf16> to vector<8x8xbf16>
      %247 = vector.shape_cast %244 : vector<8x8xbf16> to vector<1x8x8xbf16>
      tpu.vector_store %arg22[%c1_153, %c0_154, %c0_155], %247 {strides = array<i32>} : memref<4x8x8xbf16, #tpu.memory_space<vmem>>, vector<1x8x8xbf16>,
      %c1_156 = arith.constant 1 : index
      %c0_157 = arith.constant 0 : index
      %c0_158 = arith.constant 0 : index
      %248 = vector.load %arg8[%c1_156, %c0_157, %c0_158] : memref<4x32x8xbf16, #tpu.memory_space<vmem>>, vector<1x32x8xbf16>
      %249 = vector.shape_cast %248 : vector<1x32x8xbf16> to vector<32x8xbf16>
      %cst_159 = arith.constant dense<0.000000e+00> : vector<8x8xf32>
      %250 = tpu.matmul %213, %249, %cst_159 {dimension_numbers = #tpu.dot_dimension_numbers<[1], [0], [0], [1], [0, 0, 1, 1], [], []>} : vector<8x32xbf16>, vector<32x8xbf16>, vector<8x8xf32> -> vector<8x8xf32>
      %c1_160 = arith.constant 1 : index
      %c0_161 = arith.constant 0 : index
      %c0_162 = arith.constant 0 : index
      %251 = vector.load %arg9[%c1_160, %c0_161, %c0_162] : memref<4x1x8xf32, #tpu.memory_space<vmem>>, vector<1x1x8xf32>
      %252 = vector.shape_cast %251 : vector<1x1x8xf32> to vector<1x8xf32>
      %253 = vector.broadcast %252 : vector<1x8xf32> to vector<8x8xf32>
      %254 = arith.addf %250, %253 : vector<8x8xf32>
      %255 = arith.truncf %254 : vector<8x8xf32> to vector<8x8xbf16>
      %c1_163 = arith.constant 1 : index
      %c0_164 = arith.constant 0 : index
      %c0_165 = arith.constant 0 : index
      %256 = vector.load %arg23[%c1_163, %c0_164, %c0_165] : memref<4x8x8xbf16, #tpu.memory_space<vmem>>, vector<1x8x8xbf16>
      %257 = vector.shape_cast %256 : vector<1x8x8xbf16> to vector<8x8xbf16>
      %258 = vector.shape_cast %255 : vector<8x8xbf16> to vector<1x8x8xbf16>
      tpu.vector_store %arg23[%c1_163, %c0_164, %c0_165], %258 {strides = array<i32>} : memref<4x8x8xbf16, #tpu.memory_space<vmem>>, vector<1x8x8xbf16>,
      %c2_166 = arith.constant 2 : index
      %c0_167 = arith.constant 0 : index
      %c0_168 = arith.constant 0 : index
      %259 = vector.load %arg6[%c2_166, %c0_167, %c0_168] : memref<4x32x8xbf16, #tpu.memory_space<vmem>>, vector<1x32x8xbf16>
      %260 = vector.shape_cast %259 : vector<1x32x8xbf16> to vector<32x8xbf16>
      %cst_169 = arith.constant dense<0.000000e+00> : vector<8x8xf32>
      %261 = tpu.matmul %213, %260, %cst_169 {dimension_numbers = #tpu.dot_dimension_numbers<[1], [0], [0], [1], [0, 0, 1, 1], [], []>} : vector<8x32xbf16>, vector<32x8xbf16>, vector<8x8xf32> -> vector<8x8xf32>
      %c2_170 = arith.constant 2 : index
      %c0_171 = arith.constant 0 : index
      %c0_172 = arith.constant 0 : index
      %262 = vector.load %arg7[%c2_170, %c0_171, %c0_172] : memref<4x1x8xf32, #tpu.memory_space<vmem>>, vector<1x1x8xf32>
      %263 = vector.shape_cast %262 : vector<1x1x8xf32> to vector<1x8xf32>
      %264 = vector.broadcast %263 : vector<1x8xf32> to vector<8x8xf32>
      %265 = arith.addf %261, %264 : vector<8x8xf32>
      %266 = arith.truncf %265 : vector<8x8xf32> to vector<8x8xbf16>
      %c2_173 = arith.constant 2 : index
      %c0_174 = arith.constant 0 : index
      %c0_175 = arith.constant 0 : index
      %267 = vector.load %arg22[%c2_173, %c0_174, %c0_175] : memref<4x8x8xbf16, #tpu.memory_space<vmem>>, vector<1x8x8xbf16>
      %268 = vector.shape_cast %267 : vector<1x8x8xbf16> to vector<8x8xbf16>
      %269 = vector.shape_cast %266 : vector<8x8xbf16> to vector<1x8x8xbf16>
      tpu.vector_store %arg22[%c2_173, %c0_174, %c0_175], %269 {strides = array<i32>} : memref<4x8x8xbf16, #tpu.memory_space<vmem>>, vector<1x8x8xbf16>,
      %c2_176 = arith.constant 2 : index
      %c0_177 = arith.constant 0 : index
      %c0_178 = arith.constant 0 : index
      %270 = vector.load %arg8[%c2_176, %c0_177, %c0_178] : memref<4x32x8xbf16, #tpu.memory_space<vmem>>, vector<1x32x8xbf16>
      %271 = vector.shape_cast %270 : vector<1x32x8xbf16> to vector<32x8xbf16>
      %cst_179 = arith.constant dense<0.000000e+00> : vector<8x8xf32>
      %272 = tpu.matmul %213, %271, %cst_179 {dimension_numbers = #tpu.dot_dimension_numbers<[1], [0], [0], [1], [0, 0, 1, 1], [], []>} : vector<8x32xbf16>, vector<32x8xbf16>, vector<8x8xf32> -> vector<8x8xf32>
      %c2_180 = arith.constant 2 : index
      %c0_181 = arith.constant 0 : index
      %c0_182 = arith.constant 0 : index
      %273 = vector.load %arg9[%c2_180, %c0_181, %c0_182] : memref<4x1x8xf32, #tpu.memory_space<vmem>>, vector<1x1x8xf32>
      %274 = vector.shape_cast %273 : vector<1x1x8xf32> to vector<1x8xf32>
      %275 = vector.broadcast %274 : vector<1x8xf32> to vector<8x8xf32>
      %276 = arith.addf %272, %275 : vector<8x8xf32>
      %277 = arith.truncf %276 : vector<8x8xf32> to vector<8x8xbf16>
      %c2_183 = arith.constant 2 : index
      %c0_184 = arith.constant 0 : index
      %c0_185 = arith.constant 0 : index
      %278 = vector.load %arg23[%c2_183, %c0_184, %c0_185] : memref<4x8x8xbf16, #tpu.memory_space<vmem>>, vector<1x8x8xbf16>
      %279 = vector.shape_cast %278 : vector<1x8x8xbf16> to vector<8x8xbf16>
      %280 = vector.shape_cast %277 : vector<8x8xbf16> to vector<1x8x8xbf16>
      tpu.vector_store %arg23[%c2_183, %c0_184, %c0_185], %280 {strides = array<i32>} : memref<4x8x8xbf16, #tpu.memory_space<vmem>>, vector<1x8x8xbf16>,
      %c3_186 = arith.constant 3 : index
      %c0_187 = arith.constant 0 : index
      %c0_188 = arith.constant 0 : index
      %281 = vector.load %arg6[%c3_186, %c0_187, %c0_188] : memref<4x32x8xbf16, #tpu.memory_space<vmem>>, vector<1x32x8xbf16>
      %282 = vector.shape_cast %281 : vector<1x32x8xbf16> to vector<32x8xbf16>
      %cst_189 = arith.constant dense<0.000000e+00> : vector<8x8xf32>
      %283 = tpu.matmul %213, %282, %cst_189 {dimension_numbers = #tpu.dot_dimension_numbers<[1], [0], [0], [1], [0, 0, 1, 1], [], []>} : vector<8x32xbf16>, vector<32x8xbf16>, vector<8x8xf32> -> vector<8x8xf32>
      %c3_190 = arith.constant 3 : index
      %c0_191 = arith.constant 0 : index
      %c0_192 = arith.constant 0 : index
      %284 = vector.load %arg7[%c3_190, %c0_191, %c0_192] : memref<4x1x8xf32, #tpu.memory_space<vmem>>, vector<1x1x8xf32>
      %285 = vector.shape_cast %284 : vector<1x1x8xf32> to vector<1x8xf32>
      %286 = vector.broadcast %285 : vector<1x8xf32> to vector<8x8xf32>
      %287 = arith.addf %283, %286 : vector<8x8xf32>
      %288 = arith.truncf %287 : vector<8x8xf32> to vector<8x8xbf16>
      %c3_193 = arith.constant 3 : index
      %c0_194 = arith.constant 0 : index
      %c0_195 = arith.constant 0 : index
      %289 = vector.load %arg22[%c3_193, %c0_194, %c0_195] : memref<4x8x8xbf16, #tpu.memory_space<vmem>>, vector<1x8x8xbf16>
      %290 = vector.shape_cast %289 : vector<1x8x8xbf16> to vector<8x8xbf16>
      %291 = vector.shape_cast %288 : vector<8x8xbf16> to vector<1x8x8xbf16>
      tpu.vector_store %arg22[%c3_193, %c0_194, %c0_195], %291 {strides = array<i32>} : memref<4x8x8xbf16, #tpu.memory_space<vmem>>, vector<1x8x8xbf16>,
      %c3_196 = arith.constant 3 : index
      %c0_197 = arith.constant 0 : index
      %c0_198 = arith.constant 0 : index
      %292 = vector.load %arg8[%c3_196, %c0_197, %c0_198] : memref<4x32x8xbf16, #tpu.memory_space<vmem>>, vector<1x32x8xbf16>
      %293 = vector.shape_cast %292 : vector<1x32x8xbf16> to vector<32x8xbf16>
      %cst_199 = arith.constant dense<0.000000e+00> : vector<8x8xf32>
      %294 = tpu.matmul %213, %293, %cst_199 {dimension_numbers = #tpu.dot_dimension_numbers<[1], [0], [0], [1], [0, 0, 1, 1], [], []>} : vector<8x32xbf16>, vector<32x8xbf16>, vector<8x8xf32> -> vector<8x8xf32>
      %c3_200 = arith.constant 3 : index
      %c0_201 = arith.constant 0 : index
      %c0_202 = arith.constant 0 : index
      %295 = vector.load %arg9[%c3_200, %c0_201, %c0_202] : memref<4x1x8xf32, #tpu.memory_space<vmem>>, vector<1x1x8xf32>
      %296 = vector.shape_cast %295 : vector<1x1x8xf32> to vector<1x8xf32>
      %297 = vector.broadcast %296 : vector<1x8xf32> to vector<8x8xf32>
      %298 = arith.addf %294, %297 : vector<8x8xf32>
      %299 = arith.truncf %298 : vector<8x8xf32> to vector<8x8xbf16>
      %c3_203 = arith.constant 3 : index
      %c0_204 = arith.constant 0 : index
      %c0_205 = arith.constant 0 : index
      %300 = vector.load %arg23[%c3_203, %c0_204, %c0_205] : memref<4x8x8xbf16, #tpu.memory_space<vmem>>, vector<1x8x8xbf16>
      %301 = vector.shape_cast %300 : vector<1x8x8xbf16> to vector<8x8xbf16>
      %302 = vector.shape_cast %299 : vector<8x8xbf16> to vector<1x8x8xbf16>
      tpu.vector_store %arg23[%c3_203, %c0_204, %c0_205], %302 {strides = array<i32>} : memref<4x8x8xbf16, #tpu.memory_space<vmem>>, vector<1x8x8xbf16>,
    } else {
    }
    %5 = arith.index_cast %1 : i32 to index
    %c0 = arith.constant 0 : index
    %6 = vector.load %arg21[%5, %c0] : memref<8x32xbf16, #tpu.memory_space<vmem>>, vector<8x32xbf16>
    %c0_1 = arith.constant 0 : index
    %c0_2 = arith.constant 0 : index
    %c0_3 = arith.constant 0 : index
    %7 = vector.load %arg3[%c0_1, %c0_2, %c0_3] : memref<1x1x8xf32, #tpu.memory_space<vmem>>, vector<1x1x8xf32>
    %8 = vector.shape_cast %7 : vector<1x1x8xf32> to vector<1x8xf32>
    %cst = arith.constant 0.000000e+00 : f32
    %9 = vector.broadcast %cst : f32 to vector<8x32xf32>
    %c0_4 = arith.constant 0 : index
    %c0_5 = arith.constant 0 : index
    %c0_6 = arith.constant 0 : index
    %10 = vector.load %arg4[%c0_4, %c0_5, %c0_6] : memref<4x32x8xbf16, #tpu.memory_space<vmem>>, vector<1x32x8xbf16>
    %11 = vector.shape_cast %10 : vector<1x32x8xbf16> to vector<32x8xbf16>
    %cst_7 = arith.constant dense<0.000000e+00> : vector<8x8xf32>
    %12 = tpu.matmul %6, %11, %cst_7 {dimension_numbers = #tpu.dot_dimension_numbers<[1], [0], [0], [1], [0, 0, 1, 1], [], []>} : vector<8x32xbf16>, vector<32x8xbf16>, vector<8x8xf32> -> vector<8x8xf32>
    %c0_8 = arith.constant 0 : index
    %c0_9 = arith.constant 0 : index
    %c0_10 = arith.constant 0 : index
    %13 = vector.load %arg5[%c0_8, %c0_9, %c0_10] : memref<4x1x8xf32, #tpu.memory_space<vmem>>, vector<1x1x8xf32>
    %14 = vector.shape_cast %13 : vector<1x1x8xf32> to vector<1x8xf32>
    %15 = vector.broadcast %14 : vector<1x8xf32> to vector<8x8xf32>
    %16 = arith.addf %12, %15 : vector<8x8xf32>
    %17 = arith.truncf %16 : vector<8x8xf32> to vector<8x8xbf16>
    %c0_11 = arith.constant 0 : index
    %c0_12 = arith.constant 0 : index
    %c0_13 = arith.constant 0 : index
    %18 = vector.load %arg22[%c0_11, %c0_12, %c0_13] : memref<4x8x8xbf16, #tpu.memory_space<vmem>>, vector<1x8x8xbf16>
    %19 = vector.shape_cast %18 : vector<1x8x8xbf16> to vector<8x8xbf16>
    %cst_14 = arith.constant dense<0.000000e+00> : vector<8x8xf32>
    %20 = tpu.matmul %17, %19, %cst_14 {dimension_numbers = #tpu.dot_dimension_numbers<[1], [1], [0], [0], [0, 0, 1, 0], [], []>} : vector<8x8xbf16>, vector<8x8xbf16>, vector<8x8xf32> -> vector<8x8xf32>
    %21 = vector.broadcast %8 : vector<1x8xf32> to vector<8x8xf32>
    %22 = arith.addf %20, %21 : vector<8x8xf32>
    %cst_15 = arith.constant dense<0xFF800000> : vector<8xf32>
    %23 = vector.multi_reduction <maximumf>, %22, %cst_15 [1] : vector<8x8xf32> to vector<8xf32>
    %24 = vector.shape_cast %23 : vector<8xf32> to vector<8x1xf32>
    %25 = vector.broadcast %24 : vector<8x1xf32> to vector<8x8xf32>
    %26 = arith.subf %22, %25 : vector<8x8xf32>
    %27 = math.exp %26 : vector<8x8xf32>
    %cst_16 = arith.constant dense<0.000000e+00> : vector<8xf32>
    %28 = vector.multi_reduction <add>, %27, %cst_16 [1] : vector<8x8xf32> to vector<8xf32>
    %29 = vector.shape_cast %28 : vector<8xf32> to vector<8x1xf32>
    %30 = arith.truncf %27 : vector<8x8xf32> to vector<8x8xbf16>
    %c0_17 = arith.constant 0 : index
    %c0_18 = arith.constant 0 : index
    %c0_19 = arith.constant 0 : index
    %31 = vector.load %arg23[%c0_17, %c0_18, %c0_19] : memref<4x8x8xbf16, #tpu.memory_space<vmem>>, vector<1x8x8xbf16>
    %32 = vector.shape_cast %31 : vector<1x8x8xbf16> to vector<8x8xbf16>
    %cst_20 = arith.constant dense<0.000000e+00> : vector<8x8xf32>
    %33 = tpu.matmul %30, %32, %cst_20 {dimension_numbers = #tpu.dot_dimension_numbers<[1], [0], [0], [1], [0, 0, 1, 1], [], []>} : vector<8x8xbf16>, vector<8x8xbf16>, vector<8x8xf32> -> vector<8x8xf32>
    %34 = tpu.reciprocal %29 {approx = true} : vector<8x1xf32> -> vector<8x1xf32>
    %35 = vector.broadcast %34 : vector<8x1xf32> to vector<8x8xf32>
    %36 = arith.mulf %33, %35 : vector<8x8xf32>
    %37 = arith.truncf %36 : vector<8x8xf32> to vector<8x8xbf16>
    %c0_21 = arith.constant 0 : index
    %c0_22 = arith.constant 0 : index
    %c0_23 = arith.constant 0 : index
    %38 = vector.load %arg10[%c0_21, %c0_22, %c0_23] : memref<4x8x32xbf16, #tpu.memory_space<vmem>>, vector<1x8x32xbf16>
    %39 = vector.shape_cast %38 : vector<1x8x32xbf16> to vector<8x32xbf16>
    %cst_24 = arith.constant dense<0.000000e+00> : vector<8x32xf32>
    %40 = tpu.matmul %37, %39, %cst_24 {dimension_numbers = #tpu.dot_dimension_numbers<[1], [0], [0], [1], [0, 0, 1, 1], [], []>} : vector<8x8xbf16>, vector<8x32xbf16>, vector<8x32xf32> -> vector<8x32xf32>
    %41 = arith.addf %9, %40 : vector<8x32xf32>
    %c1 = arith.constant 1 : index
    %c0_25 = arith.constant 0 : index
    %c0_26 = arith.constant 0 : index
    %42 = vector.load %arg4[%c1, %c0_25, %c0_26] : memref<4x32x8xbf16, #tpu.memory_space<vmem>>, vector<1x32x8xbf16>
    %43 = vector.shape_cast %42 : vector<1x32x8xbf16> to vector<32x8xbf16>
    %cst_27 = arith.constant dense<0.000000e+00> : vector<8x8xf32>
    %44 = tpu.matmul %6, %43, %cst_27 {dimension_numbers = #tpu.dot_dimension_numbers<[1], [0], [0], [1], [0, 0, 1, 1], [], []>} : vector<8x32xbf16>, vector<32x8xbf16>, vector<8x8xf32> -> vector<8x8xf32>
    %c1_28 = arith.constant 1 : index
    %c0_29 = arith.constant 0 : index
    %c0_30 = arith.constant 0 : index
    %45 = vector.load %arg5[%c1_28, %c0_29, %c0_30] : memref<4x1x8xf32, #tpu.memory_space<vmem>>, vector<1x1x8xf32>
    %46 = vector.shape_cast %45 : vector<1x1x8xf32> to vector<1x8xf32>
    %47 = vector.broadcast %46 : vector<1x8xf32> to vector<8x8xf32>
    %48 = arith.addf %44, %47 : vector<8x8xf32>
    %49 = arith.truncf %48 : vector<8x8xf32> to vector<8x8xbf16>
    %c1_31 = arith.constant 1 : index
    %c0_32 = arith.constant 0 : index
    %c0_33 = arith.constant 0 : index
    %50 = vector.load %arg22[%c1_31, %c0_32, %c0_33] : memref<4x8x8xbf16, #tpu.memory_space<vmem>>, vector<1x8x8xbf16>
    %51 = vector.shape_cast %50 : vector<1x8x8xbf16> to vector<8x8xbf16>
    %cst_34 = arith.constant dense<0.000000e+00> : vector<8x8xf32>
    %52 = tpu.matmul %49, %51, %cst_34 {dimension_numbers = #tpu.dot_dimension_numbers<[1], [1], [0], [0], [0, 0, 1, 0], [], []>} : vector<8x8xbf16>, vector<8x8xbf16>, vector<8x8xf32> -> vector<8x8xf32>
    %53 = vector.broadcast %8 : vector<1x8xf32> to vector<8x8xf32>
    %54 = arith.addf %52, %53 : vector<8x8xf32>
    %cst_35 = arith.constant dense<0xFF800000> : vector<8xf32>
    %55 = vector.multi_reduction <maximumf>, %54, %cst_35 [1] : vector<8x8xf32> to vector<8xf32>
    %56 = vector.shape_cast %55 : vector<8xf32> to vector<8x1xf32>
    %57 = vector.broadcast %56 : vector<8x1xf32> to vector<8x8xf32>
    %58 = arith.subf %54, %57 : vector<8x8xf32>
    %59 = math.exp %58 : vector<8x8xf32>
    %cst_36 = arith.constant dense<0.000000e+00> : vector<8xf32>
    %60 = vector.multi_reduction <add>, %59, %cst_36 [1] : vector<8x8xf32> to vector<8xf32>
    %61 = vector.shape_cast %60 : vector<8xf32> to vector<8x1xf32>
    %62 = arith.truncf %59 : vector<8x8xf32> to vector<8x8xbf16>
    %c1_37 = arith.constant 1 : index
    %c0_38 = arith.constant 0 : index
    %c0_39 = arith.constant 0 : index
    %63 = vector.load %arg23[%c1_37, %c0_38, %c0_39] : memref<4x8x8xbf16, #tpu.memory_space<vmem>>, vector<1x8x8xbf16>
    %64 = vector.shape_cast %63 : vector<1x8x8xbf16> to vector<8x8xbf16>
    %cst_40 = arith.constant dense<0.000000e+00> : vector<8x8xf32>
    %65 = tpu.matmul %62, %64, %cst_40 {dimension_numbers = #tpu.dot_dimension_numbers<[1], [0], [0], [1], [0, 0, 1, 1], [], []>} : vector<8x8xbf16>, vector<8x8xbf16>, vector<8x8xf32> -> vector<8x8xf32>
    %66 = tpu.reciprocal %61 {approx = true} : vector<8x1xf32> -> vector<8x1xf32>
    %67 = vector.broadcast %66 : vector<8x1xf32> to vector<8x8xf32>
    %68 = arith.mulf %65, %67 : vector<8x8xf32>
    %69 = arith.truncf %68 : vector<8x8xf32> to vector<8x8xbf16>
    %c1_41 = arith.constant 1 : index
    %c0_42 = arith.constant 0 : index
    %c0_43 = arith.constant 0 : index
    %70 = vector.load %arg10[%c1_41, %c0_42, %c0_43] : memref<4x8x32xbf16, #tpu.memory_space<vmem>>, vector<1x8x32xbf16>
    %71 = vector.shape_cast %70 : vector<1x8x32xbf16> to vector<8x32xbf16>
    %cst_44 = arith.constant dense<0.000000e+00> : vector<8x32xf32>
    %72 = tpu.matmul %69, %71, %cst_44 {dimension_numbers = #tpu.dot_dimension_numbers<[1], [0], [0], [1], [0, 0, 1, 1], [], []>} : vector<8x8xbf16>, vector<8x32xbf16>, vector<8x32xf32> -> vector<8x32xf32>
    %73 = arith.addf %41, %72 : vector<8x32xf32>
    %c2 = arith.constant 2 : index
    %c0_45 = arith.constant 0 : index
    %c0_46 = arith.constant 0 : index
    %74 = vector.load %arg4[%c2, %c0_45, %c0_46] : memref<4x32x8xbf16, #tpu.memory_space<vmem>>, vector<1x32x8xbf16>
    %75 = vector.shape_cast %74 : vector<1x32x8xbf16> to vector<32x8xbf16>
    %cst_47 = arith.constant dense<0.000000e+00> : vector<8x8xf32>
    %76 = tpu.matmul %6, %75, %cst_47 {dimension_numbers = #tpu.dot_dimension_numbers<[1], [0], [0], [1], [0, 0, 1, 1], [], []>} : vector<8x32xbf16>, vector<32x8xbf16>, vector<8x8xf32> -> vector<8x8xf32>
    %c2_48 = arith.constant 2 : index
    %c0_49 = arith.constant 0 : index
    %c0_50 = arith.constant 0 : index
    %77 = vector.load %arg5[%c2_48, %c0_49, %c0_50] : memref<4x1x8xf32, #tpu.memory_space<vmem>>, vector<1x1x8xf32>
    %78 = vector.shape_cast %77 : vector<1x1x8xf32> to vector<1x8xf32>
    %79 = vector.broadcast %78 : vector<1x8xf32> to vector<8x8xf32>
    %80 = arith.addf %76, %79 : vector<8x8xf32>
    %81 = arith.truncf %80 : vector<8x8xf32> to vector<8x8xbf16>
    %c2_51 = arith.constant 2 : index
    %c0_52 = arith.constant 0 : index
    %c0_53 = arith.constant 0 : index
    %82 = vector.load %arg22[%c2_51, %c0_52, %c0_53] : memref<4x8x8xbf16, #tpu.memory_space<vmem>>, vector<1x8x8xbf16>
    %83 = vector.shape_cast %82 : vector<1x8x8xbf16> to vector<8x8xbf16>
    %cst_54 = arith.constant dense<0.000000e+00> : vector<8x8xf32>
    %84 = tpu.matmul %81, %83, %cst_54 {dimension_numbers = #tpu.dot_dimension_numbers<[1], [1], [0], [0], [0, 0, 1, 0], [], []>} : vector<8x8xbf16>, vector<8x8xbf16>, vector<8x8xf32> -> vector<8x8xf32>
    %85 = vector.broadcast %8 : vector<1x8xf32> to vector<8x8xf32>
    %86 = arith.addf %84, %85 : vector<8x8xf32>
    %cst_55 = arith.constant dense<0xFF800000> : vector<8xf32>
    %87 = vector.multi_reduction <maximumf>, %86, %cst_55 [1] : vector<8x8xf32> to vector<8xf32>
    %88 = vector.shape_cast %87 : vector<8xf32> to vector<8x1xf32>
    %89 = vector.broadcast %88 : vector<8x1xf32> to vector<8x8xf32>
    %90 = arith.subf %86, %89 : vector<8x8xf32>
    %91 = math.exp %90 : vector<8x8xf32>
    %cst_56 = arith.constant dense<0.000000e+00> : vector<8xf32>
    %92 = vector.multi_reduction <add>, %91, %cst_56 [1] : vector<8x8xf32> to vector<8xf32>
    %93 = vector.shape_cast %92 : vector<8xf32> to vector<8x1xf32>
    %94 = arith.truncf %91 : vector<8x8xf32> to vector<8x8xbf16>
    %c2_57 = arith.constant 2 : index
    %c0_58 = arith.constant 0 : index
    %c0_59 = arith.constant 0 : index
    %95 = vector.load %arg23[%c2_57, %c0_58, %c0_59] : memref<4x8x8xbf16, #tpu.memory_space<vmem>>, vector<1x8x8xbf16>
    %96 = vector.shape_cast %95 : vector<1x8x8xbf16> to vector<8x8xbf16>
    %cst_60 = arith.constant dense<0.000000e+00> : vector<8x8xf32>
    %97 = tpu.matmul %94, %96, %cst_60 {dimension_numbers = #tpu.dot_dimension_numbers<[1], [0], [0], [1], [0, 0, 1, 1], [], []>} : vector<8x8xbf16>, vector<8x8xbf16>, vector<8x8xf32> -> vector<8x8xf32>
    %98 = tpu.reciprocal %93 {approx = true} : vector<8x1xf32> -> vector<8x1xf32>
    %99 = vector.broadcast %98 : vector<8x1xf32> to vector<8x8xf32>
    %100 = arith.mulf %97, %99 : vector<8x8xf32>
    %101 = arith.truncf %100 : vector<8x8xf32> to vector<8x8xbf16>
    %c2_61 = arith.constant 2 : index
    %c0_62 = arith.constant 0 : index
    %c0_63 = arith.constant 0 : index
    %102 = vector.load %arg10[%c2_61, %c0_62, %c0_63] : memref<4x8x32xbf16, #tpu.memory_space<vmem>>, vector<1x8x32xbf16>
    %103 = vector.shape_cast %102 : vector<1x8x32xbf16> to vector<8x32xbf16>
    %cst_64 = arith.constant dense<0.000000e+00> : vector<8x32xf32>
    %104 = tpu.matmul %101, %103, %cst_64 {dimension_numbers = #tpu.dot_dimension_numbers<[1], [0], [0], [1], [0, 0, 1, 1], [], []>} : vector<8x8xbf16>, vector<8x32xbf16>, vector<8x32xf32> -> vector<8x32xf32>
    %105 = arith.addf %73, %104 : vector<8x32xf32>
    %c3 = arith.constant 3 : index
    %c0_65 = arith.constant 0 : index
    %c0_66 = arith.constant 0 : index
    %106 = vector.load %arg4[%c3, %c0_65, %c0_66] : memref<4x32x8xbf16, #tpu.memory_space<vmem>>, vector<1x32x8xbf16>
    %107 = vector.shape_cast %106 : vector<1x32x8xbf16> to vector<32x8xbf16>
    %cst_67 = arith.constant dense<0.000000e+00> : vector<8x8xf32>
    %108 = tpu.matmul %6, %107, %cst_67 {dimension_numbers = #tpu.dot_dimension_numbers<[1], [0], [0], [1], [0, 0, 1, 1], [], []>} : vector<8x32xbf16>, vector<32x8xbf16>, vector<8x8xf32> -> vector<8x8xf32>
    %c3_68 = arith.constant 3 : index
    %c0_69 = arith.constant 0 : index
    %c0_70 = arith.constant 0 : index
    %109 = vector.load %arg5[%c3_68, %c0_69, %c0_70] : memref<4x1x8xf32, #tpu.memory_space<vmem>>, vector<1x1x8xf32>
    %110 = vector.shape_cast %109 : vector<1x1x8xf32> to vector<1x8xf32>
    %111 = vector.broadcast %110 : vector<1x8xf32> to vector<8x8xf32>
    %112 = arith.addf %108, %111 : vector<8x8xf32>
    %113 = arith.truncf %112 : vector<8x8xf32> to vector<8x8xbf16>
    %c3_71 = arith.constant 3 : index
    %c0_72 = arith.constant 0 : index
    %c0_73 = arith.constant 0 : index
    %114 = vector.load %arg22[%c3_71, %c0_72, %c0_73] : memref<4x8x8xbf16, #tpu.memory_space<vmem>>, vector<1x8x8xbf16>
    %115 = vector.shape_cast %114 : vector<1x8x8xbf16> to vector<8x8xbf16>
    %cst_74 = arith.constant dense<0.000000e+00> : vector<8x8xf32>
    %116 = tpu.matmul %113, %115, %cst_74 {dimension_numbers = #tpu.dot_dimension_numbers<[1], [1], [0], [0], [0, 0, 1, 0], [], []>} : vector<8x8xbf16>, vector<8x8xbf16>, vector<8x8xf32> -> vector<8x8xf32>
    %117 = vector.broadcast %8 : vector<1x8xf32> to vector<8x8xf32>
    %118 = arith.addf %116, %117 : vector<8x8xf32>
    %cst_75 = arith.constant dense<0xFF800000> : vector<8xf32>
    %119 = vector.multi_reduction <maximumf>, %118, %cst_75 [1] : vector<8x8xf32> to vector<8xf32>
    %120 = vector.shape_cast %119 : vector<8xf32> to vector<8x1xf32>
    %121 = vector.broadcast %120 : vector<8x1xf32> to vector<8x8xf32>
    %122 = arith.subf %118, %121 : vector<8x8xf32>
    %123 = math.exp %122 : vector<8x8xf32>
    %cst_76 = arith.constant dense<0.000000e+00> : vector<8xf32>
    %124 = vector.multi_reduction <add>, %123, %cst_76 [1] : vector<8x8xf32> to vector<8xf32>
    %125 = vector.shape_cast %124 : vector<8xf32> to vector<8x1xf32>
    %126 = arith.truncf %123 : vector<8x8xf32> to vector<8x8xbf16>
    %c3_77 = arith.constant 3 : index
    %c0_78 = arith.constant 0 : index
    %c0_79 = arith.constant 0 : index
    %127 = vector.load %arg23[%c3_77, %c0_78, %c0_79] : memref<4x8x8xbf16, #tpu.memory_space<vmem>>, vector<1x8x8xbf16>
    %128 = vector.shape_cast %127 : vector<1x8x8xbf16> to vector<8x8xbf16>
    %cst_80 = arith.constant dense<0.000000e+00> : vector<8x8xf32>
    %129 = tpu.matmul %126, %128, %cst_80 {dimension_numbers = #tpu.dot_dimension_numbers<[1], [0], [0], [1], [0, 0, 1, 1], [], []>} : vector<8x8xbf16>, vector<8x8xbf16>, vector<8x8xf32> -> vector<8x8xf32>
    %130 = tpu.reciprocal %125 {approx = true} : vector<8x1xf32> -> vector<8x1xf32>
    %131 = vector.broadcast %130 : vector<8x1xf32> to vector<8x8xf32>
    %132 = arith.mulf %129, %131 : vector<8x8xf32>
    %133 = arith.truncf %132 : vector<8x8xf32> to vector<8x8xbf16>
    %c3_81 = arith.constant 3 : index
    %c0_82 = arith.constant 0 : index
    %c0_83 = arith.constant 0 : index
    %134 = vector.load %arg10[%c3_81, %c0_82, %c0_83] : memref<4x8x32xbf16, #tpu.memory_space<vmem>>, vector<1x8x32xbf16>
    %135 = vector.shape_cast %134 : vector<1x8x32xbf16> to vector<8x32xbf16>
    %cst_84 = arith.constant dense<0.000000e+00> : vector<8x32xf32>
    %136 = tpu.matmul %133, %135, %cst_84 {dimension_numbers = #tpu.dot_dimension_numbers<[1], [0], [0], [1], [0, 0, 1, 1], [], []>} : vector<8x8xbf16>, vector<8x32xbf16>, vector<8x32xf32> -> vector<8x32xf32>
    %137 = arith.addf %105, %136 : vector<8x32xf32>
    %c0_85 = arith.constant 0 : index
    %138 = arith.index_cast %1 : i32 to index
    %c0_86 = arith.constant 0 : index
    %139 = vector.load %arg2[%c0_85, %138, %c0_86] : memref<1x8x32xf32, #tpu.memory_space<vmem>>, vector<1x8x32xf32>
    %140 = vector.shape_cast %139 : vector<1x8x32xf32> to vector<8x32xf32>
    %141 = arith.addf %140, %137 : vector<8x32xf32>
    %c0_87 = arith.constant 0 : index
    %c0_88 = arith.constant 0 : index
    %142 = vector.load %arg11[%c0_87, %c0_88] : memref<1x32xf32, #tpu.memory_space<vmem>>, vector<1x32xf32>
    %143 = vector.broadcast %142 : vector<1x32xf32> to vector<8x32xf32>
    %144 = arith.addf %141, %143 : vector<8x32xf32>
    %cst_89 = arith.constant dense<0.000000e+00> : vector<8xf32>
    %145 = vector.multi_reduction <add>, %144, %cst_89 [1] : vector<8x32xf32> to vector<8xf32>
    %146 = vector.shape_cast %145 : vector<8xf32> to vector<8x1xf32>
    %cst_90 = arith.constant 3.200000e+01 : f32
    %147 = vector.broadcast %cst_90 : f32 to vector<8x1xf32>
    %148 = arith.divf %146, %147 : vector<8x1xf32>
    %149 = vector.broadcast %148 : vector<8x1xf32> to vector<8x32xf32>
    %150 = arith.subf %144, %149 : vector<8x32xf32>
    %151 = arith.mulf %150, %150 : vector<8x32xf32>
    %cst_91 = arith.constant dense<0.000000e+00> : vector<8xf32>
    %152 = vector.multi_reduction <add>, %151, %cst_91 [1] : vector<8x32xf32> to vector<8xf32>
    %153 = vector.shape_cast %152 : vector<8xf32> to vector<8x1xf32>
    %cst_92 = arith.constant 3.200000e+01 : f32
    %154 = vector.broadcast %cst_92 : f32 to vector<8x1xf32>
    %155 = arith.divf %153, %154 : vector<8x1xf32>
    %156 = vector.broadcast %148 : vector<8x1xf32> to vector<8x32xf32>
    %157 = arith.subf %144, %156 : vector<8x32xf32>
    %cst_93 = arith.constant 9.99999974E-6 : f32
    %158 = vector.broadcast %cst_93 : f32 to vector<8x1xf32>
    %159 = arith.addf %155, %158 : vector<8x1xf32>
    %160 = math.rsqrt %159 : vector<8x1xf32>
    %161 = vector.broadcast %160 : vector<8x1xf32> to vector<8x32xf32>
    %162 = arith.mulf %157, %161 : vector<8x32xf32>
    %c0_94 = arith.constant 0 : index
    %c0_95 = arith.constant 0 : index
    %163 = vector.load %arg14[%c0_94, %c0_95] : memref<1x32xf32, #tpu.memory_space<vmem>>, vector<1x32xf32>
    %164 = vector.broadcast %163 : vector<1x32xf32> to vector<8x32xf32>
    %165 = arith.mulf %162, %164 : vector<8x32xf32>
    %c0_96 = arith.constant 0 : index
    %c0_97 = arith.constant 0 : index
    %166 = vector.load %arg15[%c0_96, %c0_97] : memref<1x32xf32, #tpu.memory_space<vmem>>, vector<1x32xf32>
    %167 = vector.broadcast %166 : vector<1x32xf32> to vector<8x32xf32>
    %168 = arith.addf %165, %167 : vector<8x32xf32>
    %169 = arith.truncf %168 : vector<8x32xf32> to vector<8x32xbf16>
    %c0_98 = arith.constant 0 : index
    %c0_99 = arith.constant 0 : index
    %170 = vector.load %arg16[%c0_98, %c0_99] : memref<32x64xbf16, #tpu.memory_space<vmem>>, vector<32x64xbf16>
    %cst_100 = arith.constant dense<0.000000e+00> : vector<8x64xf32>
    %171 = tpu.matmul %169, %170, %cst_100 {dimension_numbers = #tpu.dot_dimension_numbers<[1], [0], [0], [1], [0, 0, 1, 1], [], []>} : vector<8x32xbf16>, vector<32x64xbf16>, vector<8x64xf32> -> vector<8x64xf32>
    %c0_101 = arith.constant 0 : index
    %c0_102 = arith.constant 0 : index
    %172 = vector.load %arg17[%c0_101, %c0_102] : memref<1x64xf32, #tpu.memory_space<vmem>>, vector<1x64xf32>
    %173 = vector.broadcast %172 : vector<1x64xf32> to vector<8x64xf32>
    %174 = arith.addf %171, %173 : vector<8x64xf32>
    %cst_103 = arith.constant 0.000000e+00 : f32
    %175 = vector.broadcast %cst_103 : f32 to vector<8x64xf32>
    %176 = arith.maximumf %174, %175 : vector<8x64xf32>
    %177 = arith.truncf %176 : vector<8x64xf32> to vector<8x64xbf16>
    %c0_104 = arith.constant 0 : index
    %c0_105 = arith.constant 0 : index
    %178 = vector.load %arg18[%c0_104, %c0_105] : memref<64x32xbf16, #tpu.memory_space<vmem>>, vector<64x32xbf16>
    %cst_106 = arith.constant dense<0.000000e+00> : vector<8x32xf32>
    %179 = tpu.matmul %177, %178, %cst_106 {dimension_numbers = #tpu.dot_dimension_numbers<[1], [0], [0], [1], [0, 0, 1, 1], [], []>} : vector<8x64xbf16>, vector<64x32xbf16>, vector<8x32xf32> -> vector<8x32xf32>
    %c0_107 = arith.constant 0 : index
    %c0_108 = arith.constant 0 : index
    %180 = vector.load %arg19[%c0_107, %c0_108] : memref<1x32xf32, #tpu.memory_space<vmem>>, vector<1x32xf32>
    %181 = vector.broadcast %180 : vector<1x32xf32> to vector<8x32xf32>
    %182 = arith.addf %179, %181 : vector<8x32xf32>
    %183 = arith.addf %144, %182 : vector<8x32xf32>
    %c0_109 = arith.constant 0 : index
    %c0_110 = arith.constant 0 : index
    %c0_111 = arith.constant 0 : index
    %184 = vector.load %arg20[%c0_109, %c0_110, %c0_111] : memref<1x8x32xf32, #tpu.memory_space<vmem>>, vector<1x8x32xf32>
    %185 = vector.shape_cast %184 : vector<1x8x32xf32> to vector<8x32xf32>
    %186 = vector.shape_cast %183 : vector<8x32xf32> to vector<1x8x32xf32>
    tpu.vector_store %arg20[%c0_109, %c0_110, %c0_111], %186 {strides = array<i32>} : memref<1x8x32xf32, #tpu.memory_space<vmem>>, vector<1x8x32xf32>,
    return
  }
  func.func @transform_0(%arg0: i32, %arg1: i32) -> (i32, i32, i32) {
    %c0_i32 = arith.constant 0 : i32
    %c0_i32_0 = arith.constant 0 : i32
    %c0_i32_1 = arith.constant 0 : i32
    return %arg0, %c0_i32, %c0_i32_0 : i32, i32, i32
  }
  func.func @transform_1(%arg0: i32, %arg1: i32) -> (i32, i32, i32) {
    %c0_i32 = arith.constant 0 : i32
    %c0_i32_0 = arith.constant 0 : i32
    %c0_i32_1 = arith.constant 0 : i32
    return %arg0, %c0_i32, %c0_i32_0 : i32, i32, i32
  }
  func.func @transform_2(%arg0: i32, %arg1: i32) -> (i32, i32, i32) {
    %c0_i32 = arith.constant 0 : i32
    %c0_i32_0 = arith.constant 0 : i32
    %c0_i32_1 = arith.constant 0 : i32
    %c0_i32_2 = arith.constant 0 : i32
    return %c0_i32, %c0_i32_0, %c0_i32_1 : i32, i32, i32
  }
  func.func @transform_3(%arg0: i32, %arg1: i32) -> (i32, i32, i32) {
    %c0_i32 = arith.constant 0 : i32
    %c0_i32_0 = arith.constant 0 : i32
    %c0_i32_1 = arith.constant 0 : i32
    %c0_i32_2 = arith.constant 0 : i32
    return %c0_i32, %c0_i32_0, %c0_i32_1 : i32, i32, i32
  }
  func.func @transform_4(%arg0: i32, %arg1: i32) -> (i32, i32, i32) {
    %c0_i32 = arith.constant 0 : i32
    %c0_i32_0 = arith.constant 0 : i32
    %c0_i32_1 = arith.constant 0 : i32
    %c0_i32_2 = arith.constant 0 : i32
    return %c0_i32, %c0_i32_0, %c0_i32_1 : i32, i32, i32
  }
  func.func @transform_5(%arg0: i32, %arg1: i32) -> (i32, i32, i32) {
    %c0_i32 = arith.constant 0 : i32
    %c0_i32_0 = arith.constant 0 : i32
    %c0_i32_1 = arith.constant 0 : i32
    %c0_i32_2 = arith.constant 0 : i32
    return %c0_i32, %c0_i32_0, %c0_i32_1 : i32, i32, i32
  }
  func.func @transform_6(%arg0: i32, %arg1: i32) -> (i32, i32, i32) {
    %c0_i32 = arith.constant 0 : i32
    %c0_i32_0 = arith.constant 0 : i32
    %c0_i32_1 = arith.constant 0 : i32
    %c0_i32_2 = arith.constant 0 : i32
    return %c0_i32, %c0_i32_0, %c0_i32_1 : i32, i32, i32
  }
  func.func @transform_7(%arg0: i32, %arg1: i32) -> (i32, i32, i32) {
    %c0_i32 = arith.constant 0 : i32
    %c0_i32_0 = arith.constant 0 : i32
    %c0_i32_1 = arith.constant 0 : i32
    %c0_i32_2 = arith.constant 0 : i32
    return %c0_i32, %c0_i32_0, %c0_i32_1 : i32, i32, i32
  }
  func.func @transform_8(%arg0: i32, %arg1: i32) -> (i32, i32, i32) {
    %c0_i32 = arith.constant 0 : i32
    %c0_i32_0 = arith.constant 0 : i32
    %c0_i32_1 = arith.constant 0 : i32
    %c0_i32_2 = arith.constant 0 : i32
    return %c0_i32, %c0_i32_0, %c0_i32_1 : i32, i32, i32
  }
  func.func @transform_9(%arg0: i32, %arg1: i32) -> (i32, i32) {
    %c0_i32 = arith.constant 0 : i32
    %c0_i32_0 = arith.constant 0 : i32
    %c0_i32_1 = arith.constant 0 : i32
    return %c0_i32, %c0_i32_0 : i32, i32
  }
  func.func @transform_10(%arg0: i32, %arg1: i32) -> (i32, i32) {
    %c0_i32 = arith.constant 0 : i32
    %c0_i32_0 = arith.constant 0 : i32
    %c0_i32_1 = arith.constant 0 : i32
    return %c0_i32, %c0_i32_0 : i32, i32
  }
  func.func @transform_11(%arg0: i32, %arg1: i32) -> (i32, i32) {
    %c0_i32 = arith.constant 0 : i32
    %c0_i32_0 = arith.constant 0 : i32
    %c0_i32_1 = arith.constant 0 : i32
    return %c0_i32, %c0_i32_0 : i32, i32
  }
  func.func @transform_12(%arg0: i32, %arg1: i32) -> (i32, i32) {
    %c0_i32 = arith.constant 0 : i32
    %c0_i32_0 = arith.constant 0 : i32
    %c0_i32_1 = arith.constant 0 : i32
    return %c0_i32, %c0_i32_0 : i32, i32
  }
  func.func @transform_13(%arg0: i32, %arg1: i32) -> (i32, i32) {
    %c0_i32 = arith.constant 0 : i32
    %c0_i32_0 = arith.constant 0 : i32
    %c0_i32_1 = arith.constant 0 : i32
    return %c0_i32, %c0_i32_0 : i32, i32
  }
  func.func @transform_14(%arg0: i32, %arg1: i32) -> (i32, i32) {
    %c0_i32 = arith.constant 0 : i32
    %c0_i32_0 = arith.constant 0 : i32
    %c0_i32_1 = arith.constant 0 : i32
    return %c0_i32, %c0_i32_0 : i32, i32
  }
  func.func @transform_15(%arg0: i32, %arg1: i32) -> (i32, i32) {
    %c0_i32 = arith.constant 0 : i32
    %c0_i32_0 = arith.constant 0 : i32
    %c0_i32_1 = arith.constant 0 : i32
    return %c0_i32, %c0_i32_0 : i32, i32
  }
  func.func @transform_16(%arg0: i32, %arg1: i32) -> (i32, i32) {
    %c0_i32 = arith.constant 0 : i32
    %c0_i32_0 = arith.constant 0 : i32
    %c0_i32_1 = arith.constant 0 : i32
    return %c0_i32, %c0_i32_0 : i32, i32
  }
  func.func @transform_17(%arg0: i32, %arg1: i32) -> (i32, i32) {
    %c0_i32 = arith.constant 0 : i32
    %c0_i32_0 = arith.constant 0 : i32
    %c0_i32_1 = arith.constant 0 : i32
    return %c0_i32, %c0_i32_0 : i32, i32
  }
  func.func @transform_18(%arg0: i32, %arg1: i32) -> (i32, i32, i32) {
    %c0_i32 = arith.constant 0 : i32
    %c0_i32_0 = arith.constant 0 : i32
    return %arg0, %arg1, %c0_i32 : i32, i32, i32
  }
}

</mosaic_0001>

<llo_original>
// kernel: tpu_custom_call.1
$region0: #{tpu_custom_call.1}
  #allocation0 [shape = 'u32[]', space=smem, size = 0x4, offset = 0x4, fixed_abs, tag = 'smem constant byte address 0x4 - core index']
  #allocation1 [shape = 'u32[144,128]{1,0:T(1,128)}', space=vmem, size = 0x12000, scoped, tag = 'internal scratch']
  #allocation2 [shape = 'bf16[8,32]{1,0:T(8,128)(2,1)}', space=vmem, size = 0x800, scoped, tag = 'scratch operand']
  #allocation3 [shape = 'bf16[4,8,8]{2,1,0:T(8,128)(2,1)}', space=vmem, size = 0x2000, scoped, tag = 'scratch operand']
  #allocation4 [shape = 'bf16[4,8,8]{2,1,0:T(8,128)(2,1)}', space=vmem, size = 0x2000, scoped, tag = 'scratch operand']
  %s0 = inlined_call_operand.vmem [shape: f32[2,8,32], index: 0, kind: input, shape index: {}]
  %s1 = inlined_call_operand.vmem [shape: f32[2,1,8], index: 1, kind: input, shape index: {}]
  %s2 = inlined_call_operand.vmem [shape: bf16[4,32,8], index: 2, kind: input, shape index: {}]
  %s3 = inlined_call_operand.vmem [shape: f32[4,1,8], index: 3, kind: input, shape index: {}]
  %s4 = inlined_call_operand.vmem [shape: bf16[4,32,8], index: 4, kind: input, shape index: {}]
  %s5 = inlined_call_operand.vmem [shape: f32[4,1,8], index: 5, kind: input, shape index: {}]
  %s6 = inlined_call_operand.vmem [shape: bf16[4,32,8], index: 6, kind: input, shape index: {}]
  %s7 = inlined_call_operand.vmem [shape: f32[4,1,8], index: 7, kind: input, shape index: {}]
  %s8 = inlined_call_operand.vmem [shape: bf16[4,8,32], index: 8, kind: input, shape index: {}]
  %s9 = inlined_call_operand.vmem [shape: f32[1,32], index: 9, kind: input, shape index: {}]
  %s10 = inlined_call_operand.vmem [shape: f32[1,32], index: 10, kind: input, shape index: {}]
  %s11 = inlined_call_operand.vmem [shape: f32[1,32], index: 11, kind: input, shape index: {}]
  %s12 = inlined_call_operand.vmem [shape: f32[1,32], index: 12, kind: input, shape index: {}]
  %s13 = inlined_call_operand.vmem [shape: f32[1,32], index: 13, kind: input, shape index: {}]
  %s14 = inlined_call_operand.vmem [shape: bf16[32,64], index: 14, kind: input, shape index: {}]
  %s15 = inlined_call_operand.vmem [shape: f32[1,64], index: 15, kind: input, shape index: {}]
  %s16 = inlined_call_operand.vmem [shape: bf16[64,32], index: 16, kind: input, shape index: {}]
  %s17 = inlined_call_operand.vmem [shape: f32[1,32], index: 17, kind: input, shape index: {}]
  %s18 = inlined_call_operand.hbm [shape: f32[2,8,32], index: 18, kind: output, shape index: {}]
  %s19 = sld [smem:[#allocation0]]
  $region109: #{tpu_custom_call.1} parent=0
    _
  %s21 = ssub.s32 1, %s19
  %s22 = scalar_select 0, %s21, %s19
  $region1: #{tpu_custom_call.1} parent=0
    #allocation5 [shape = 'u8[8192]{0}', space=vmem, size = 0x2000, scoped, tag = 'output window, operand 0']
    #allocation6 [shape = 's32[2]{0}', space=sflag, size = 0x8, scoped, tag = 'scoped memory for tpu_custom_call.1']
    %23 = vsyncpa [#allocation6], 0
    %s24 = scalar_lea.sflag [#allocation6], 1
    %25 = vsyncpa %s24, 0
    loop: start=0, step=1, limit=4
    $region2: #{tpu_custom_call.1} parent=1 // loop_pre_header
      _
    $region3: #{tpu_custom_call.1} parent=1 // loop_header
      %s27 = sphi 0, %s31
      %p28 = scmp.ge.s32.totalorder %s27, 4
      %s34 = sphi 0, %s46
      %s35 = sphi 0, %s42
      %s36 = sphi 0, %s34
      %s37 = sphi 0, %s35
      %s38 = sphi 0, %s36
      %s39 = sphi 0, %s37
      %s49 = sphi 0, %s51
      %s52 = sphi 0, %s49
      %s53 = sphi 0, %s52
      %s69 = sphi 0, %s53
      %s75 = sphi 0, %s77
      %s78 = sphi 0, %s75
      %s79 = sphi 0, %s78
      %s95 = sphi 0, %s79
      %s99 = sphi 0, %s99
      %s101 = sphi 0, %s99
      %s102 = sphi 0, %s101
      %s116 = sphi 0, %s102
      %s120 = sphi 0, %s120
      %s122 = sphi 0, %s120
      %s123 = sphi 0, %s122
      %s137 = sphi 0, %s123
      %s141 = sphi 0, %s141
      %s143 = sphi 0, %s141
      %s144 = sphi 0, %s143
      %s158 = sphi 0, %s144
      %s162 = sphi 0, %s162
      %s164 = sphi 0, %s162
      %s165 = sphi 0, %s164
      %s179 = sphi 0, %s165
      %s183 = sphi 0, %s183
      %s185 = sphi 0, %s183
      %s186 = sphi 0, %s185
      %s200 = sphi 0, %s186
      %s204 = sphi 0, %s204
      %s206 = sphi 0, %s204
      %s207 = sphi 0, %s206
      %s221 = sphi 0, %s207
      %s225 = sphi 0, %s225
      %s227 = sphi 0, %s225
      %s228 = sphi 0, %s227
      %s242 = sphi 0, %s228
      %s246 = sphi 0, %s246
      %s248 = sphi 0, %s246
      %s249 = sphi 0, %s248
      %s263 = sphi 0, %s249
      %s267 = sphi 0, %s267
      %s269 = sphi 0, %s267
      %s270 = sphi 0, %s269
      %s284 = sphi 0, %s270
      %s288 = sphi 0, %s288
      %s290 = sphi 0, %s288
      %s291 = sphi 0, %s290
      %s305 = sphi 0, %s291
      %s309 = sphi 0, %s309
      %s311 = sphi 0, %s309
      %s312 = sphi 0, %s311
      %s326 = sphi 0, %s312
      %s330 = sphi 0, %s330
      %s332 = sphi 0, %s330
      %s333 = sphi 0, %s332
      %s347 = sphi 0, %s333
      %s351 = sphi 0, %s351
      %s353 = sphi 0, %s351
      %s354 = sphi 0, %s353
      %s368 = sphi 0, %s354
      %s372 = sphi 0, %s372
      %s374 = sphi 0, %s372
      %s375 = sphi 0, %s374
      %s389 = sphi 0, %s375
      %s393 = sphi 0, %s393
      %s395 = sphi 0, %s393
      %s396 = sphi 0, %s395
      %s410 = sphi 0, %s396
      %s414 = sphi 0, %s414
      %s416 = sphi 0, %s414
      %s417 = sphi 0, %s416
      %s431 = sphi 0, %s417
      %s439 = sphi 0, %s441
      %s442 = sphi 0, %s439
      %s443 = sphi 0, %s442
      %s459 = sphi 0, %s443
    $region4: #{tpu_custom_call.1} parent=1 // loop_header_branch
      %30 = sbr.rel (%p28) target = $region8
    $region5: #{tpu_custom_call.1} parent=1 // loop_body
      %s32 = ssub.s32 %s27, 1
      %s33 = ssub.s32 %s27, 2
      %s40 = sadd.s32 1, %s35
      %p41 = scmp.ge.s32.totalorder %s40, 1
      %s42 = scalar_select %p41, 0, %s40
      %s43 = sadd.s32 1, %s34
      %s44 = scalar_select %p41, %s43, %s34
      %p45 = scmp.ge.s32.totalorder %s44, 2
      %s46 = scalar_select %p45, 0, %s44
      %s47 = ssub.s32 %s34, %s46
      %p48 = scmp.eq.s32.totalorder %s47, 0
      %s50 = sadd.s32 %s49, 1
      %s51 = scalar_select %p48, %s49, %s50
      %p54 = pneg %p48
      %p55 = scmp.eq.s32.totalorder %s27, 1
      %p56 = por %p54, %p55
      %p57 = scmp.ne.s32.totalorder %s49, %s52
      %p58 = scmp.eq.s32.totalorder %s27, 0
      %p59 = por %p57, %p58
      %p60 = scmp.ne.s32.totalorder %s49, %s52
      %p61 = scmp.eq.s32.totalorder %s32, 1
      %p62 = por %p60, %p61
      %p63 = scmp.ne.s32.totalorder %s52, %s53
      %p64 = scmp.eq.s32.totalorder %s32, 0
      %p65 = por %p63, %p64
      %p66 = scmp.ne.s32.totalorder %s52, %s53
      %p67 = scmp.eq.s32.totalorder %s33, 1
      %p68 = por %p66, %p67
      %p70 = scmp.ne.s32.totalorder %s53, %s69
      %p71 = scmp.eq.s32.totalorder %s33, 0
      %p72 = por %p70, %p71
      %s73 = ssub.s32 %s34, %s46
      %p74 = scmp.eq.s32.totalorder %s73, 0
      %s76 = sadd.s32 %s75, 1
      %s77 = scalar_select %p74, %s75, %s76
      %p80 = pneg %p74
      %p81 = scmp.eq.s32.totalorder %s27, 1
      %p82 = por %p80, %p81
      %p83 = scmp.ne.s32.totalorder %s75, %s78
      %p84 = scmp.eq.s32.totalorder %s27, 0
      %p85 = por %p83, %p84
      %p86 = scmp.ne.s32.totalorder %s75, %s78
      %p87 = scmp.eq.s32.totalorder %s32, 1
      %p88 = por %p86, %p87
      %p89 = scmp.ne.s32.totalorder %s78, %s79
      %p90 = scmp.eq.s32.totalorder %s32, 0
      %p91 = por %p89, %p90
      %p92 = scmp.ne.s32.totalorder %s78, %s79
      %p93 = scmp.eq.s32.totalorder %s33, 1
      %p94 = por %p92, %p93
      %p96 = scmp.ne.s32.totalorder %s79, %s95
      %p97 = scmp.eq.s32.totalorder %s33, 0
      %p98 = por %p96, %p97
      %s100 = sadd.s32 %s99, 1
      %p103 = scmp.eq.s32.totalorder %s27, 1
      %p104 = scmp.ne.s32.totalorder %s99, %s101
      %p105 = scmp.eq.s32.totalorder %s27, 0
      %p106 = por %p104, %p105
      %p107 = scmp.ne.s32.totalorder %s99, %s101
      %p108 = scmp.eq.s32.totalorder %s32, 1
      %p109 = por %p107, %p108
      %p110 = scmp.ne.s32.totalorder %s101, %s102
      %p111 = scmp.eq.s32.totalorder %s32, 0
      %p112 = por %p110, %p111
      %p113 = scmp.ne.s32.totalorder %s101, %s102
      %p114 = scmp.eq.s32.totalorder %s33, 1
      %p115 = por %p113, %p114
      %p117 = scmp.ne.s32.totalorder %s102, %s116
      %p118 = scmp.eq.s32.totalorder %s33, 0
      %p119 = por %p117, %p118
      %s121 = sadd.s32 %s120, 1
      %p124 = scmp.eq.s32.totalorder %s27, 1
      %p125 = scmp.ne.s32.totalorder %s120, %s122
      %p126 = scmp.eq.s32.totalorder %s27, 0
      %p127 = por %p125, %p126
      %p128 = scmp.ne.s32.totalorder %s120, %s122
      %p129 = scmp.eq.s32.totalorder %s32, 1
      %p130 = por %p128, %p129
      %p131 = scmp.ne.s32.totalorder %s122, %s123
      %p132 = scmp.eq.s32.totalorder %s32, 0
      %p133 = por %p131, %p132
      %p134 = scmp.ne.s32.totalorder %s122, %s123
      %p135 = scmp.eq.s32.totalorder %s33, 1
      %p136 = por %p134, %p135
      %p138 = scmp.ne.s32.totalorder %s123, %s137
      %p139 = scmp.eq.s32.totalorder %s33, 0
      %p140 = por %p138, %p139
      %s142 = sadd.s32 %s141, 1
      %p145 = scmp.eq.s32.totalorder %s27, 1
      %p146 = scmp.ne.s32.totalorder %s141, %s143
      %p147 = scmp.eq.s32.totalorder %s27, 0
      %p148 = por %p146, %p147
      %p149 = scmp.ne.s32.totalorder %s141, %s143
      %p150 = scmp.eq.s32.totalorder %s32, 1
      %p151 = por %p149, %p150
      %p152 = scmp.ne.s32.totalorder %s143, %s144
      %p153 = scmp.eq.s32.totalorder %s32, 0
      %p154 = por %p152, %p153
      %p155 = scmp.ne.s32.totalorder %s143, %s144
      %p156 = scmp.eq.s32.totalorder %s33, 1
      %p157 = por %p155, %p156
      %p159 = scmp.ne.s32.totalorder %s144, %s158
      %p160 = scmp.eq.s32.totalorder %s33, 0
      %p161 = por %p159, %p160
      %s163 = sadd.s32 %s162, 1
      %p166 = scmp.eq.s32.totalorder %s27, 1
      %p167 = scmp.ne.s32.totalorder %s162, %s164
      %p168 = scmp.eq.s32.totalorder %s27, 0
      %p169 = por %p167, %p168
      %p170 = scmp.ne.s32.totalorder %s162, %s164
      %p171 = scmp.eq.s32.totalorder %s32, 1
      %p172 = por %p170, %p171
      %p173 = scmp.ne.s32.totalorder %s164, %s165
      %p174 = scmp.eq.s32.totalorder %s32, 0
      %p175 = por %p173, %p174
      %p176 = scmp.ne.s32.totalorder %s164, %s165
      %p177 = scmp.eq.s32.totalorder %s33, 1
      %p178 = por %p176, %p177
      %p180 = scmp.ne.s32.totalorder %s165, %s179
      %p181 = scmp.eq.s32.totalorder %s33, 0
      %p182 = por %p180, %p181
      %s184 = sadd.s32 %s183, 1
      %p187 = scmp.eq.s32.totalorder %s27, 1
      %p188 = scmp.ne.s32.totalorder %s183, %s185
      %p189 = scmp.eq.s32.totalorder %s27, 0
      %p190 = por %p188, %p189
      %p191 = scmp.ne.s32.totalorder %s183, %s185
      %p192 = scmp.eq.s32.totalorder %s32, 1
      %p193 = por %p191, %p192
      %p194 = scmp.ne.s32.totalorder %s185, %s186
      %p195 = scmp.eq.s32.totalorder %s32, 0
      %p196 = por %p194, %p195
      %p197 = scmp.ne.s32.totalorder %s185, %s186
      %p198 = scmp.eq.s32.totalorder %s33, 1
      %p199 = por %p197, %p198
      %p201 = scmp.ne.s32.totalorder %s186, %s200
      %p202 = scmp.eq.s32.totalorder %s33, 0
      %p203 = por %p201, %p202
      %s205 = sadd.s32 %s204, 1
      %p208 = scmp.eq.s32.totalorder %s27, 1
      %p209 = scmp.ne.s32.totalorder %s204, %s206
      %p210 = scmp.eq.s32.totalorder %s27, 0
      %p211 = por %p209, %p210
      %p212 = scmp.ne.s32.totalorder %s204, %s206
      %p213 = scmp.eq.s32.totalorder %s32, 1
      %p214 = por %p212, %p213
      %p215 = scmp.ne.s32.totalorder %s206, %s207
      %p216 = scmp.eq.s32.totalorder %s32, 0
      %p217 = por %p215, %p216
      %p218 = scmp.ne.s32.totalorder %s206, %s207
      %p219 = scmp.eq.s32.totalorder %s33, 1
      %p220 = por %p218, %p219
      %p222 = scmp.ne.s32.totalorder %s207, %s221
      %p223 = scmp.eq.s32.totalorder %s33, 0
      %p224 = por %p222, %p223
      %s226 = sadd.s32 %s225, 1
      %p229 = scmp.eq.s32.totalorder %s27, 1
      %p230 = scmp.ne.s32.totalorder %s225, %s227
      %p231 = scmp.eq.s32.totalorder %s27, 0
      %p232 = por %p230, %p231
      %p233 = scmp.ne.s32.totalorder %s225, %s227
      %p234 = scmp.eq.s32.totalorder %s32, 1
      %p235 = por %p233, %p234
      %p236 = scmp.ne.s32.totalorder %s227, %s228
      %p237 = scmp.eq.s32.totalorder %s32, 0
      %p238 = por %p236, %p237
      %p239 = scmp.ne.s32.totalorder %s227, %s228
      %p240 = scmp.eq.s32.totalorder %s33, 1
      %p241 = por %p239, %p240
      %p243 = scmp.ne.s32.totalorder %s228, %s242
      %p244 = scmp.eq.s32.totalorder %s33, 0
      %p245 = por %p243, %p244
      %s247 = sadd.s32 %s246, 1
      %p250 = scmp.eq.s32.totalorder %s27, 1
      %p251 = scmp.ne.s32.totalorder %s246, %s248
      %p252 = scmp.eq.s32.totalorder %s27, 0
      %p253 = por %p251, %p252
      %p254 = scmp.ne.s32.totalorder %s246, %s248
      %p255 = scmp.eq.s32.totalorder %s32, 1
      %p256 = por %p254, %p255
      %p257 = scmp.ne.s32.totalorder %s248, %s249
      %p258 = scmp.eq.s32.totalorder %s32, 0
      %p259 = por %p257, %p258
      %p260 = scmp.ne.s32.totalorder %s248, %s249
      %p261 = scmp.eq.s32.totalorder %s33, 1
      %p262 = por %p260, %p261
      %p264 = scmp.ne.s32.totalorder %s249, %s263
      %p265 = scmp.eq.s32.totalorder %s33, 0
      %p266 = por %p264, %p265
      %s268 = sadd.s32 %s267, 1
      %p271 = scmp.eq.s32.totalorder %s27, 1
      %p272 = scmp.ne.s32.totalorder %s267, %s269
      %p273 = scmp.eq.s32.totalorder %s27, 0
      %p274 = por %p272, %p273
      %p275 = scmp.ne.s32.totalorder %s267, %s269
      %p276 = scmp.eq.s32.totalorder %s32, 1
      %p277 = por %p275, %p276
      %p278 = scmp.ne.s32.totalorder %s269, %s270
      %p279 = scmp.eq.s32.totalorder %s32, 0
      %p280 = por %p278, %p279
      %p281 = scmp.ne.s32.totalorder %s269, %s270
      %p282 = scmp.eq.s32.totalorder %s33, 1
      %p283 = por %p281, %p282
      %p285 = scmp.ne.s32.totalorder %s270, %s284
      %p286 = scmp.eq.s32.totalorder %s33, 0
      %p287 = por %p285, %p286
      %s289 = sadd.s32 %s288, 1
      %p292 = scmp.eq.s32.totalorder %s27, 1
      %p293 = scmp.ne.s32.totalorder %s288, %s290
      %p294 = scmp.eq.s32.totalorder %s27, 0
      %p295 = por %p293, %p294
      %p296 = scmp.ne.s32.totalorder %s288, %s290
      %p297 = scmp.eq.s32.totalorder %s32, 1
      %p298 = por %p296, %p297
      %p299 = scmp.ne.s32.totalorder %s290, %s291
      %p300 = scmp.eq.s32.totalorder %s32, 0
      %p301 = por %p299, %p300
      %p302 = scmp.ne.s32.totalorder %s290, %s291
      %p303 = scmp.eq.s32.totalorder %s33, 1
      %p304 = por %p302, %p303
      %p306 = scmp.ne.s32.totalorder %s291, %s305
      %p307 = scmp.eq.s32.totalorder %s33, 0
      %p308 = por %p306, %p307
      %s310 = sadd.s32 %s309, 1
      %p313 = scmp.eq.s32.totalorder %s27, 1
      %p314 = scmp.ne.s32.totalorder %s309, %s311
      %p315 = scmp.eq.s32.totalorder %s27, 0
      %p316 = por %p314, %p315
      %p317 = scmp.ne.s32.totalorder %s309, %s311
      %p318 = scmp.eq.s32.totalorder %s32, 1
      %p319 = por %p317, %p318
      %p320 = scmp.ne.s32.totalorder %s311, %s312
      %p321 = scmp.eq.s32.totalorder %s32, 0
      %p322 = por %p320, %p321
      %p323 = scmp.ne.s32.totalorder %s311, %s312
      %p324 = scmp.eq.s32.totalorder %s33, 1
      %p325 = por %p323, %p324
      %p327 = scmp.ne.s32.totalorder %s312, %s326
      %p328 = scmp.eq.s32.totalorder %s33, 0
      %p329 = por %p327, %p328
      %s331 = sadd.s32 %s330, 1
      %p334 = scmp.eq.s32.totalorder %s27, 1
      %p335 = scmp.ne.s32.totalorder %s330, %s332
      %p336 = scmp.eq.s32.totalorder %s27, 0
      %p337 = por %p335, %p336
      %p338 = scmp.ne.s32.totalorder %s330, %s332
      %p339 = scmp.eq.s32.totalorder %s32, 1
      %p340 = por %p338, %p339
      %p341 = scmp.ne.s32.totalorder %s332, %s333
      %p342 = scmp.eq.s32.totalorder %s32, 0
      %p343 = por %p341, %p342
      %p344 = scmp.ne.s32.totalorder %s332, %s333
      %p345 = scmp.eq.s32.totalorder %s33, 1
      %p346 = por %p344, %p345
      %p348 = scmp.ne.s32.totalorder %s333, %s347
      %p349 = scmp.eq.s32.totalorder %s33, 0
      %p350 = por %p348, %p349
      %s352 = sadd.s32 %s351, 1
      %p355 = scmp.eq.s32.totalorder %s27, 1
      %p356 = scmp.ne.s32.totalorder %s351, %s353
      %p357 = scmp.eq.s32.totalorder %s27, 0
      %p358 = por %p356, %p357
      %p359 = scmp.ne.s32.totalorder %s351, %s353
      %p360 = scmp.eq.s32.totalorder %s32, 1
      %p361 = por %p359, %p360
      %p362 = scmp.ne.s32.totalorder %s353, %s354
      %p363 = scmp.eq.s32.totalorder %s32, 0
      %p364 = por %p362, %p363
      %p365 = scmp.ne.s32.totalorder %s353, %s354
      %p366 = scmp.eq.s32.totalorder %s33, 1
      %p367 = por %p365, %p366
      %p369 = scmp.ne.s32.totalorder %s354, %s368
      %p370 = scmp.eq.s32.totalorder %s33, 0
      %p371 = por %p369, %p370
      %s373 = sadd.s32 %s372, 1
      %p376 = scmp.eq.s32.totalorder %s27, 1
      %p377 = scmp.ne.s32.totalorder %s372, %s374
      %p378 = scmp.eq.s32.totalorder %s27, 0
      %p379 = por %p377, %p378
      %p380 = scmp.ne.s32.totalorder %s372, %s374
      %p381 = scmp.eq.s32.totalorder %s32, 1
      %p382 = por %p380, %p381
      %p383 = scmp.ne.s32.totalorder %s374, %s375
      %p384 = scmp.eq.s32.totalorder %s32, 0
      %p385 = por %p383, %p384
      %p386 = scmp.ne.s32.totalorder %s374, %s375
      %p387 = scmp.eq.s32.totalorder %s33, 1
      %p388 = por %p386, %p387
      %p390 = scmp.ne.s32.totalorder %s375, %s389
      %p391 = scmp.eq.s32.totalorder %s33, 0
      %p392 = por %p390, %p391
      %s394 = sadd.s32 %s393, 1
      %p397 = scmp.eq.s32.totalorder %s27, 1
      %p398 = scmp.ne.s32.totalorder %s393, %s395
      %p399 = scmp.eq.s32.totalorder %s27, 0
      %p400 = por %p398, %p399
      %p401 = scmp.ne.s32.totalorder %s393, %s395
      %p402 = scmp.eq.s32.totalorder %s32, 1
      %p403 = por %p401, %p402
      %p404 = scmp.ne.s32.totalorder %s395, %s396
      %p405 = scmp.eq.s32.totalorder %s32, 0
      %p406 = por %p404, %p405
      %p407 = scmp.ne.s32.totalorder %s395, %s396
      %p408 = scmp.eq.s32.totalorder %s33, 1
      %p409 = por %p407, %p408
      %p411 = scmp.ne.s32.totalorder %s396, %s410
      %p412 = scmp.eq.s32.totalorder %s33, 0
      %p413 = por %p411, %p412
      %s415 = sadd.s32 %s414, 1
      %p418 = scmp.eq.s32.totalorder %s27, 1
      %p419 = scmp.ne.s32.totalorder %s414, %s416
      %p420 = scmp.eq.s32.totalorder %s27, 0
      %p421 = por %p419, %p420
      %p422 = scmp.ne.s32.totalorder %s414, %s416
      %p423 = scmp.eq.s32.totalorder %s32, 1
      %p424 = por %p422, %p423
      %p425 = scmp.ne.s32.totalorder %s416, %s417
      %p426 = scmp.eq.s32.totalorder %s32, 0
      %p427 = por %p425, %p426
      %p428 = scmp.ne.s32.totalorder %s416, %s417
      %p429 = scmp.eq.s32.totalorder %s33, 1
      %p430 = por %p428, %p429
      %p432 = scmp.ne.s32.totalorder %s417, %s431
      %p433 = scmp.eq.s32.totalorder %s33, 0
      %p434 = por %p432, %p433
      %s435 = ssub.s32 %s34, %s46
      %s436 = ssub.s32 %s35, %s42
      %s437 = sor.u32 %s435, %s436
      %p438 = scmp.eq.s32.totalorder %s437, 0
      %s440 = sadd.s32 %s439, 1
      %s441 = scalar_select %p438, %s439, %s440
      %p444 = pneg %p438
      %p445 = scmp.eq.s32.totalorder %s27, 1
      %p446 = por %p444, %p445
      %p447 = scmp.ne.s32.totalorder %s439, %s442
      %p448 = scmp.eq.s32.totalorder %s27, 0
      %p449 = por %p447, %p448
      %p450 = scmp.ne.s32.totalorder %s439, %s442
      %p451 = scmp.eq.s32.totalorder %s32, 1
      %p452 = por %p450, %p451
      %p453 = scmp.ne.s32.totalorder %s442, %s443
      %p454 = scmp.eq.s32.totalorder %s32, 0
      %p455 = por %p453, %p454
      %p456 = scmp.ne.s32.totalorder %s442, %s443
      %p457 = scmp.eq.s32.totalorder %s33, 1
      %p458 = por %p456, %p457
      %p460 = scmp.ne.s32.totalorder %s443, %s459
      %p461 = scmp.eq.s32.totalorder %s33, 0
      %p462 = por %p460, %p461
      %p463 = scmp.le.s32.totalorder 1, %s27
      %p464 = scmp.lt.s32.totalorder %s27, 3
      %p465 = pnand %p463, %p464
      %p466 = pneg %p465
      // Predicated region
      $region9: #{tpu_custom_call.1} parent=5 // pred_check
        _
      $region10: #{tpu_custom_call.1} parent=5 // pred_check_branch
        %468 = sbr.rel (%p465) target = $region12
      $region11: #{tpu_custom_call.1} parent=5 // pred_region
        %s469 = ssub.s32 %s27, 1
        // Predicated region
        $region13: #{tpu_custom_call.1} parent=11 // pred_check
          %p470 = pneg %p112
        $region14: #{tpu_custom_call.1} parent=11 // pred_check_branch
          %472 = sbr.rel (%p470) target = $region16
        $region15: #{tpu_custom_call.1} parent=11 // pred_region
          _
        $region16: #{tpu_custom_call.1} parent=11 // pred_fallthru
          _
        // Predicated region
        $region17: #{tpu_custom_call.1} parent=11 // pred_check
          %p473 = pneg %p133
        $region18: #{tpu_custom_call.1} parent=11 // pred_check_branch
          %475 = sbr.rel (%p473) target = $region20
        $region19: #{tpu_custom_call.1} parent=11 // pred_region
          _
        $region20: #{tpu_custom_call.1} parent=11 // pred_fallthru
          _
        // Predicated region
        $region21: #{tpu_custom_call.1} parent=11 // pred_check
          %p476 = pneg %p154
        $region22: #{tpu_custom_call.1} parent=11 // pred_check_branch
          %478 = sbr.rel (%p476) target = $region24
        $region23: #{tpu_custom_call.1} parent=11 // pred_region
          _
        $region24: #{tpu_custom_call.1} parent=11 // pred_fallthru
          _
        // Predicated region
        $region25: #{tpu_custom_call.1} parent=11 // pred_check
          %p479 = pneg %p175
        $region26: #{tpu_custom_call.1} parent=11 // pred_check_branch
          %481 = sbr.rel (%p479) target = $region28
        $region27: #{tpu_custom_call.1} parent=11 // pred_region
          _
        $region28: #{tpu_custom_call.1} parent=11 // pred_fallthru
          _
        // Predicated region
        $region29: #{tpu_custom_call.1} parent=11 // pred_check
          %p482 = pneg %p196
        $region30: #{tpu_custom_call.1} parent=11 // pred_check_branch
          %484 = sbr.rel (%p482) target = $region32
        $region31: #{tpu_custom_call.1} parent=11 // pred_region
          _
        $region32: #{tpu_custom_call.1} parent=11 // pred_fallthru
          _
        // Predicated region
        $region33: #{tpu_custom_call.1} parent=11 // pred_check
          %p485 = pneg %p217
        $region34: #{tpu_custom_call.1} parent=11 // pred_check_branch
          %487 = sbr.rel (%p485) target = $region36
        $region35: #{tpu_custom_call.1} parent=11 // pred_region
          _
        $region36: #{tpu_custom_call.1} parent=11 // pred_fallthru
          _
        // Predicated region
        $region37: #{tpu_custom_call.1} parent=11 // pred_check
          %p488 = pneg %p238
        $region38: #{tpu_custom_call.1} parent=11 // pred_check_branch
          %490 = sbr.rel (%p488) target = $region40
        $region39: #{tpu_custom_call.1} parent=11 // pred_region
          _
        $region40: #{tpu_custom_call.1} parent=11 // pred_fallthru
          _
        // Predicated region
        $region41: #{tpu_custom_call.1} parent=11 // pred_check
          %p491 = pneg %p259
        $region42: #{tpu_custom_call.1} parent=11 // pred_check_branch
          %493 = sbr.rel (%p491) target = $region44
        $region43: #{tpu_custom_call.1} parent=11 // pred_region
          _
        $region44: #{tpu_custom_call.1} parent=11 // pred_fallthru
          _
        // Predicated region
        $region45: #{tpu_custom_call.1} parent=11 // pred_check
          %p494 = pneg %p280
        $region46: #{tpu_custom_call.1} parent=11 // pred_check_branch
          %496 = sbr.rel (%p494) target = $region48
        $region47: #{tpu_custom_call.1} parent=11 // pred_region
          _
        $region48: #{tpu_custom_call.1} parent=11 // pred_fallthru
          _
        // Predicated region
        $region49: #{tpu_custom_call.1} parent=11 // pred_check
          %p497 = pneg %p301
        $region50: #{tpu_custom_call.1} parent=11 // pred_check_branch
          %499 = sbr.rel (%p497) target = $region52
        $region51: #{tpu_custom_call.1} parent=11 // pred_region
          _
        $region52: #{tpu_custom_call.1} parent=11 // pred_fallthru
          _
        // Predicated region
        $region53: #{tpu_custom_call.1} parent=11 // pred_check
          %p500 = pneg %p322
        $region54: #{tpu_custom_call.1} parent=11 // pred_check_branch
          %502 = sbr.rel (%p500) target = $region56
        $region55: #{tpu_custom_call.1} parent=11 // pred_region
          _
        $region56: #{tpu_custom_call.1} parent=11 // pred_fallthru
          _
        // Predicated region
        $region57: #{tpu_custom_call.1} parent=11 // pred_check
          %p503 = pneg %p343
        $region58: #{tpu_custom_call.1} parent=11 // pred_check_branch
          %505 = sbr.rel (%p503) target = $region60
        $region59: #{tpu_custom_call.1} parent=11 // pred_region
          _
        $region60: #{tpu_custom_call.1} parent=11 // pred_fallthru
          _
        // Predicated region
        $region61: #{tpu_custom_call.1} parent=11 // pred_check
          %p506 = pneg %p364
        $region62: #{tpu_custom_call.1} parent=11 // pred_check_branch
          %508 = sbr.rel (%p506) target = $region64
        $region63: #{tpu_custom_call.1} parent=11 // pred_region
          _
        $region64: #{tpu_custom_call.1} parent=11 // pred_fallthru
          _
        // Predicated region
        $region65: #{tpu_custom_call.1} parent=11 // pred_check
          %p509 = pneg %p385
        $region66: #{tpu_custom_call.1} parent=11 // pred_check_branch
          %511 = sbr.rel (%p509) target = $region68
        $region67: #{tpu_custom_call.1} parent=11 // pred_region
          _
        $region68: #{tpu_custom_call.1} parent=11 // pred_fallthru
          _
        // Predicated region
        $region69: #{tpu_custom_call.1} parent=11 // pred_check
          %p512 = pneg %p406
        $region70: #{tpu_custom_call.1} parent=11 // pred_check_branch
          %514 = sbr.rel (%p512) target = $region72
        $region71: #{tpu_custom_call.1} parent=11 // pred_region
          _
        $region72: #{tpu_custom_call.1} parent=11 // pred_fallthru
          _
        // Predicated region
        $region73: #{tpu_custom_call.1} parent=11 // pred_check
          %p515 = pneg %p427
        $region74: #{tpu_custom_call.1} parent=11 // pred_check_branch
          %517 = sbr.rel (%p515) target = $region76
        $region75: #{tpu_custom_call.1} parent=11 // pred_region
          _
        $region76: #{tpu_custom_call.1} parent=11 // pred_fallthru
          _
      $region12: #{tpu_custom_call.1} parent=5 // pred_fallthru
        _
      %p518 = scmp.lt.s32.totalorder %s27, 2
      // Predicated region
      $region77: #{tpu_custom_call.1} parent=5 // pred_check
        %p519 = pneg %p518
      $region78: #{tpu_custom_call.1} parent=5 // pred_check_branch
        %521 = sbr.rel (%p519) target = $region80
      $region79: #{tpu_custom_call.1} parent=5 // pred_region
        // Predicated region
        $region81: #{tpu_custom_call.1} parent=79 // pred_check
          %p522 = pneg %p59
        $region82: #{tpu_custom_call.1} parent=79 // pred_check_branch
          %524 = sbr.rel (%p522) target = $region84
        $region83: #{tpu_custom_call.1} parent=79 // pred_region
          %p525 = scmp.lt.s32.totalorder %s34, 1
          %s526 = scalar_select %p525, %s34, 1
          %s527 = smul.addr %s526, 8
          %s528 = scalar_lea.vmem %s0, %s527
        $region84: #{tpu_custom_call.1} parent=79 // pred_fallthru
          _
        // Predicated region
        $region85: #{tpu_custom_call.1} parent=79 // pred_check
          %p529 = pneg %p85
        $region86: #{tpu_custom_call.1} parent=79 // pred_check_branch
          %531 = sbr.rel (%p529) target = $region88
        $region87: #{tpu_custom_call.1} parent=79 // pred_region
          %p532 = scmp.lt.s32.totalorder %s34, 1
          %s533 = scalar_select %p532, %s34, 1
          %s534 = scalar_lea.vmem %s1, %s533
        $region88: #{tpu_custom_call.1} parent=79 // pred_fallthru
          _
      $region80: #{tpu_custom_call.1} parent=5 // pred_fallthru
        _
      %p535 = scmp.le.s32.totalorder 1, %s27
      %p536 = scmp.lt.s32.totalorder %s27, 3
      %p537 = pnand %p535, %p536
      %p538 = pneg %p537
      // Predicated region
      $region89: #{tpu_custom_call.1} parent=5 // pred_check
        _
      $region90: #{tpu_custom_call.1} parent=5 // pred_check_branch
        %540 = sbr.rel (%p537) target = $region92
      $region91: #{tpu_custom_call.1} parent=5 // pred_region
        %s541 = ssub.s32 %s27, 1
        %p542 = scmp.lt.s32.totalorder %s36, 1
        %s543 = scalar_select %p542, %s36, 1
        %s544 = smul.addr %s543, 8
        %s545 = scalar_lea.vmem %s0, %s544
        %p546 = pneg %p65
        %p547 = pneg %p62
        %p548 = scmp.lt.s32.totalorder %s36, 1
        %s549 = scalar_select %p548, %s36, 1
        %s550 = scalar_lea.vmem %s1, %s549
        %p551 = pneg %p91
        %p552 = pneg %p88
        %p553 = pneg %p112
        %p554 = pneg %p109
        %p555 = pneg %p133
        %p556 = pneg %p130
        %p557 = pneg %p154
        %p558 = pneg %p151
        %p559 = pneg %p175
        %p560 = pneg %p172
        %p561 = pneg %p196
        %p562 = pneg %p193
        %p563 = pneg %p217
        %p564 = pneg %p214
        %p565 = pneg %p238
        %p566 = pneg %p235
        %p567 = pneg %p259
        %p568 = pneg %p256
        %p569 = pneg %p280
        %p570 = pneg %p277
        %p571 = pneg %p301
        %p572 = pneg %p298
        %p573 = pneg %p322
        %p574 = pneg %p319
        %p575 = pneg %p343
        %p576 = pneg %p340
        %p577 = pneg %p364
        %p578 = pneg %p361
        %p579 = pneg %p385
        %p580 = pneg %p382
        %p581 = pneg %p406
        %p582 = pneg %p403
        %p583 = pneg %p427
        %p584 = pneg %p424
        %p585 = pneg %p455
        %p586 = pneg %p452
        %s587 = sand.u32 %s442, 1
        %s588 = scalar_lea.sflag [#allocation6], %s587
        %s589 = sand.u32 %s442, 1
        %s590 = smul.addr %s589, 8
        %s591 = scalar_lea.vmem [#allocation5], %s590
        %p592 = scmp.lt.s32.totalorder %s36, 1
        %s593 = scalar_select %p592, %s36, 1
        %s594 = smul.addr %s593, 8
        %s595 = scalar_lea.vmem %s0, %s594
        %p596 = scmp.lt.s32.totalorder %s36, 1
        %s597 = scalar_select %p596, %s36, 1
        %s598 = scalar_lea.vmem %s1, %s597
        %s600 = smul.u32 %s37, 8
        %p601 = scmp.eq.s32.totalorder %s37, 0
        // Predicated region
        $region93: #{tpu_custom_call.1} parent=91 // pred_check
          %p602 = pneg %p601
        $region94: #{tpu_custom_call.1} parent=91 // pred_check_branch
          %604 = sbr.rel (%p602) target = $region96
        $region95: #{tpu_custom_call.1} parent=91 // pred_region
          %v605 = vld [vmem:[%s595] sm:$0xff]
          %vm606 = vcmask 261120
          %v607 = vsel %vm606, %v605, 0.0
          %608 = vadd.xlane.f32.xlu0 %v607
          %v609 = vpop.xlane.xlu0 %608
          %v610 = vrcp.pop 32.0
          %v611 = vmul.f32 %v609, %v610
          %v612 = vsub.f32 %v605, %v611
          %v613 = vmul.f32 %v612, %v612
          %v614 = vsel %vm606, %v613, 0.0
          %615 = vadd.xlane.f32.xlu0 %v614
          %v616 = vpop.xlane.xlu0 %615
          %v617 = vmul.f32 %v616, %v610
          %v618 = vadd.f32 %v617, 1e-05
          %v619 = vrsqrt.pop %v618
          %v620 = vmul.f32 %v612, %v619
          %v621 = vld [vmem:[%s10] sm:$0x1]
          %v623 = vlaneseq
          %v624 = vshrl.u32 %v623, 7
          %v625 = vsub.s32 0, %v624
          %v626 = vrot.slane %v621, %v625
          %v628 = vmul.f32 %v620, %v626
          %v629 = vld [vmem:[%s11] sm:$0x1]
          %v631 = vlaneseq
          %v632 = vshrl.u32 %v631, 7
          %v633 = vsub.s32 0, %v632
          %v634 = vrot.slane %v629, %v633
          %v636 = vadd.f32 %v628, %v634
          %v637 = vpack.c.bf16 %v636, %v636
          %vm638 = vcmask 257024
          %639 = vst.msk [vmem:[#allocation2] sm:$0xf] %vm638, %v637
          %v640 = vld [vmem:[%s4] sm:$0xf]
          %v641 = vld [vmem:[%s4 + $0x4] sm:$0xf]
          %v642 = vld [vmem:[%s4 + $0x8] sm:$0xf]
          %v643 = vld [vmem:[%s4 + $0xc] sm:$0xf]
          %v644 = vld [vmem:[%s5] sm:$0x1]
          %v646 = vlaneseq
          %v647 = vshrl.u32 %v646, 7
          %v648 = vsub.s32 0, %v647
          %v649 = vrot.slane %v644, %v648
          %v655 = vunpack.c.l.b16 %v640
          %v656 = vunpack.c.l.b16 %v641
          %v657 = vunpack.c.l.b16 %v642
          %v658 = vunpack.c.l.b16 %v643
          %v659 = vpack.c.b16 %v656, %v655
          %v660 = vpack.c.b16 %v658, %v657
          %v664 = vsel %vm606, %v637, 0
          %666 = vmatprep.subr.bf16.mxu0 0
          %667 = vmatpush1.bf16.msra.mxu0 0
          %668 = vmatprep.subr.bf16.mxu0 0
          %669 = vmatpush1.bf16.msra.mxu0 0
          %670 = vmatprep.subr.bf16.mxu0 0
          %671 = vmatpush1.bf16.msra.mxu0 0
          %672 = vmatprep.subr.bf16.mxu0 0
          %673 = vmatpush1.bf16.msra.mxu0 0
          %674 = vmatprep.subr.bf16.mxu0 0
          %675 = vmatpush1.bf16.msra.mxu0 0
          %676 = vmatprep.subr.bf16.mxu0 0
          %677 = vmatpush1.bf16.msra.mxu0 0
          %678 = vmatprep.subr.bf16.mxu0 0
          %679 = vmatpush1.bf16.msra.mxu0 %v660
          %680 = vmatprep.subr.bf16.mxu0 0
          %681 = vmatpush1.bf16.msra.mxu0 %v659
          %682 = vmatprep.subr.bf16.mxu0 0
          %683 = vmatpush2.bf16.msra.mxu0 0
          %684 = vmatprep.subr.bf16.mxu0 0
          %685 = vmatpush2.bf16.msra.mxu0 0
          %686 = vmatprep.subr.bf16.mxu0 0
          %687 = vmatpush2.bf16.msra.mxu0 0
          %688 = vmatprep.subr.bf16.mxu0 0
          %689 = vmatpush2.bf16.msra.mxu0 0
          %690 = vmatprep.subr.bf16.mxu0 0
          %691 = vmatpush2.bf16.msra.mxu0 0
          %692 = vmatprep.subr.bf16.mxu0 0
          %693 = vmatpush2.bf16.msra.mxu0 0
          %694 = vmatprep.subr.bf16.mxu0 0
          %695 = vmatpush2.bf16.msra.mxu0 0
          %696 = vmatprep.subr.bf16.mxu0 0
          %697 = vmatpush2.bf16.msra.mxu0 0
          %698 = vmatprep.mubr.bf16.mxu0 0
          %699 = vmatmul.mubr.bf16.gmra.mxu0 %v664
          %v700 = vpop.f32.mrf.mxu0
          %v701 = vadd.f32 %v649, %v700
          %v702 = vpop.f32.mrf.mxu0
          %v703 = vpop.f32.mrf.mxu0
          %v704 = vpop.f32.mrf.mxu0
          %705 = vdwg.mxu0
          %v706 = vpack.c.bf16 %v701, %v701
          %vm707 = vcmask 60416
          %708 = vst.msk [vmem:[#allocation3] sm:$0xf] %vm707, %v706
          %v709 = vld [vmem:[%s6] sm:$0xf]
          %v710 = vld [vmem:[%s6 + $0x4] sm:$0xf]
          %v711 = vld [vmem:[%s6 + $0x8] sm:$0xf]
          %v712 = vld [vmem:[%s6 + $0xc] sm:$0xf]
          %v713 = vld [vmem:[%s7] sm:$0x1]
          %v715 = vlaneseq
          %v716 = vshrl.u32 %v715, 7
          %v717 = vsub.s32 0, %v716
          %v718 = vrot.slane %v713, %v717
          %v724 = vunpack.c.l.b16 %v709
          %v725 = vunpack.c.l.b16 %v710
          %v726 = vunpack.c.l.b16 %v711
          %v727 = vunpack.c.l.b16 %v712
          %v728 = vpack.c.b16 %v725, %v724
          %v729 = vpack.c.b16 %v727, %v726
          %732 = vmatprep.subr.bf16.mxu0 0
          %733 = vmatpush1.bf16.msra.mxu0 0
          %734 = vmatprep.subr.bf16.mxu0 0
          %735 = vmatpush1.bf16.msra.mxu0 0
          %736 = vmatprep.subr.bf16.mxu0 0
          %737 = vmatpush1.bf16.msra.mxu0 0
          %738 = vmatprep.subr.bf16.mxu0 0
          %739 = vmatpush1.bf16.msra.mxu0 0
          %740 = vmatprep.subr.bf16.mxu0 0
          %741 = vmatpush1.bf16.msra.mxu0 0
          %742 = vmatprep.subr.bf16.mxu0 0
          %743 = vmatpush1.bf16.msra.mxu0 0
          %744 = vmatprep.subr.bf16.mxu0 0
          %745 = vmatpush1.bf16.msra.mxu0 %v729
          %746 = vmatprep.subr.bf16.mxu0 0
          %747 = vmatpush1.bf16.msra.mxu0 %v728
          %748 = vmatprep.subr.bf16.mxu0 0
          %749 = vmatpush2.bf16.msra.mxu0 0
          %750 = vmatprep.subr.bf16.mxu0 0
          %751 = vmatpush2.bf16.msra.mxu0 0
          %752 = vmatprep.subr.bf16.mxu0 0
          %753 = vmatpush2.bf16.msra.mxu0 0
          %754 = vmatprep.subr.bf16.mxu0 0
          %755 = vmatpush2.bf16.msra.mxu0 0
          %756 = vmatprep.subr.bf16.mxu0 0
          %757 = vmatpush2.bf16.msra.mxu0 0
          %758 = vmatprep.subr.bf16.mxu0 0
          %759 = vmatpush2.bf16.msra.mxu0 0
          %760 = vmatprep.subr.bf16.mxu0 0
          %761 = vmatpush2.bf16.msra.mxu0 0
          %762 = vmatprep.subr.bf16.mxu0 0
          %763 = vmatpush2.bf16.msra.mxu0 0
          %764 = vmatprep.mubr.bf16.mxu0 0
          %765 = vmatmul.mubr.bf16.gmra.mxu0 %v664
          %v766 = vpop.f32.mrf.mxu0
          %v767 = vadd.f32 %v718, %v766
          %v768 = vpop.f32.mrf.mxu0
          %v769 = vpop.f32.mrf.mxu0
          %v770 = vpop.f32.mrf.mxu0
          %771 = vdwg.mxu0
          %v772 = vpack.c.bf16 %v767, %v767
          %773 = vst.msk [vmem:[#allocation4] sm:$0xf] %vm707, %v772
          %s774 = scalar_lea.vmem %s4, 16
          %v775 = vld [vmem:[%s774] sm:$0xf]
          %v776 = vld [vmem:[%s774 + $0x4] sm:$0xf]
          %v777 = vld [vmem:[%s774 + $0x8] sm:$0xf]
          %v778 = vld [vmem:[%s774 + $0xc] sm:$0xf]
          %s779 = scalar_lea.vmem %s5, 1
          %v780 = vld [vmem:[%s779] sm:$0x1]
          %v782 = vlaneseq
          %v783 = vshrl.u32 %v782, 7
          %v784 = vsub.s32 0, %v783
          %v785 = vrot.slane %v780, %v784
          %v791 = vunpack.c.l.b16 %v775
          %v792 = vunpack.c.l.b16 %v776
          %v793 = vunpack.c.l.b16 %v777
          %v794 = vunpack.c.l.b16 %v778
          %v795 = vpack.c.b16 %v792, %v791
          %v796 = vpack.c.b16 %v794, %v793
          %799 = vmatprep.subr.bf16.mxu0 0
          %800 = vmatpush1.bf16.msra.mxu0 0
          %801 = vmatprep.subr.bf16.mxu0 0
          %802 = vmatpush1.bf16.msra.mxu0 0
          %803 = vmatprep.subr.bf16.mxu0 0
          %804 = vmatpush1.bf16.msra.mxu0 0
          %805 = vmatprep.subr.bf16.mxu0 0
          %806 = vmatpush1.bf16.msra.mxu0 0
          %807 = vmatprep.subr.bf16.mxu0 0
          %808 = vmatpush1.bf16.msra.mxu0 0
          %809 = vmatprep.subr.bf16.mxu0 0
          %810 = vmatpush1.bf16.msra.mxu0 0
          %811 = vmatprep.subr.bf16.mxu0 0
          %812 = vmatpush1.bf16.msra.mxu0 %v796
          %813 = vmatprep.subr.bf16.mxu0 0
          %814 = vmatpush1.bf16.msra.mxu0 %v795
          %815 = vmatprep.subr.bf16.mxu0 0
          %816 = vmatpush2.bf16.msra.mxu0 0
          %817 = vmatprep.subr.bf16.mxu0 0
          %818 = vmatpush2.bf16.msra.mxu0 0
          %819 = vmatprep.subr.bf16.mxu0 0
          %820 = vmatpush2.bf16.msra.mxu0 0
          %821 = vmatprep.subr.bf16.mxu0 0
          %822 = vmatpush2.bf16.msra.mxu0 0
          %823 = vmatprep.subr.bf16.mxu0 0
          %824 = vmatpush2.bf16.msra.mxu0 0
          %825 = vmatprep.subr.bf16.mxu0 0
          %826 = vmatpush2.bf16.msra.mxu0 0
          %827 = vmatprep.subr.bf16.mxu0 0
          %828 = vmatpush2.bf16.msra.mxu0 0
          %829 = vmatprep.subr.bf16.mxu0 0
          %830 = vmatpush2.bf16.msra.mxu0 0
          %831 = vmatprep.mubr.bf16.mxu0 0
          %832 = vmatmul.mubr.bf16.gmra.mxu0 %v664
          %v833 = vpop.f32.mrf.mxu0
          %v834 = vadd.f32 %v785, %v833
          %v835 = vpop.f32.mrf.mxu0
          %v836 = vpop.f32.mrf.mxu0
          %v837 = vpop.f32.mrf.mxu0
          %838 = vdwg.mxu0
          %v839 = vpack.c.bf16 %v834, %v834
          %s840 = scalar_lea.vmem [#allocation3], 4
          %841 = vst.msk [vmem:[%s840] sm:$0xf] %vm707, %v839
          %s842 = scalar_lea.vmem %s6, 16
          %v843 = vld [vmem:[%s842] sm:$0xf]
          %v844 = vld [vmem:[%s842 + $0x4] sm:$0xf]
          %v845 = vld [vmem:[%s842 + $0x8] sm:$0xf]
          %v846 = vld [vmem:[%s842 + $0xc] sm:$0xf]
          %s847 = scalar_lea.vmem %s7, 1
          %v848 = vld [vmem:[%s847] sm:$0x1]
          %v850 = vlaneseq
          %v851 = vshrl.u32 %v850, 7
          %v852 = vsub.s32 0, %v851
          %v853 = vrot.slane %v848, %v852
          %v859 = vunpack.c.l.b16 %v843
          %v860 = vunpack.c.l.b16 %v844
          %v861 = vunpack.c.l.b16 %v845
          %v862 = vunpack.c.l.b16 %v846
          %v863 = vpack.c.b16 %v860, %v859
          %v864 = vpack.c.b16 %v862, %v861
          %867 = vmatprep.subr.bf16.mxu0 0
          %868 = vmatpush1.bf16.msra.mxu0 0
          %869 = vmatprep.subr.bf16.mxu0 0
          %870 = vmatpush1.bf16.msra.mxu0 0
          %871 = vmatprep.subr.bf16.mxu0 0
          %872 = vmatpush1.bf16.msra.mxu0 0
          %873 = vmatprep.subr.bf16.mxu0 0
          %874 = vmatpush1.bf16.msra.mxu0 0
          %875 = vmatprep.subr.bf16.mxu0 0
          %876 = vmatpush1.bf16.msra.mxu0 0
          %877 = vmatprep.subr.bf16.mxu0 0
          %878 = vmatpush1.bf16.msra.mxu0 0
          %879 = vmatprep.subr.bf16.mxu0 0
          %880 = vmatpush1.bf16.msra.mxu0 %v864
          %881 = vmatprep.subr.bf16.mxu0 0
          %882 = vmatpush1.bf16.msra.mxu0 %v863
          %883 = vmatprep.subr.bf16.mxu0 0
          %884 = vmatpush2.bf16.msra.mxu0 0
          %885 = vmatprep.subr.bf16.mxu0 0
          %886 = vmatpush2.bf16.msra.mxu0 0
          %887 = vmatprep.subr.bf16.mxu0 0
          %888 = vmatpush2.bf16.msra.mxu0 0
          %889 = vmatprep.subr.bf16.mxu0 0
          %890 = vmatpush2.bf16.msra.mxu0 0
          %891 = vmatprep.subr.bf16.mxu0 0
          %892 = vmatpush2.bf16.msra.mxu0 0
          %893 = vmatprep.subr.bf16.mxu0 0
          %894 = vmatpush2.bf16.msra.mxu0 0
          %895 = vmatprep.subr.bf16.mxu0 0
          %896 = vmatpush2.bf16.msra.mxu0 0
          %897 = vmatprep.subr.bf16.mxu0 0
          %898 = vmatpush2.bf16.msra.mxu0 0
          %899 = vmatprep.mubr.bf16.mxu0 0
          %900 = vmatmul.mubr.bf16.gmra.mxu0 %v664
          %v901 = vpop.f32.mrf.mxu0
          %v902 = vadd.f32 %v853, %v901
          %v903 = vpop.f32.mrf.mxu0
          %v904 = vpop.f32.mrf.mxu0
          %v905 = vpop.f32.mrf.mxu0
          %906 = vdwg.mxu0
          %v907 = vpack.c.bf16 %v902, %v902
          %s908 = scalar_lea.vmem [#allocation4], 4
          %909 = vst.msk [vmem:[%s908] sm:$0xf] %vm707, %v907
          %s910 = scalar_lea.vmem %s4, 32
          %v911 = vld [vmem:[%s910] sm:$0xf]
          %v912 = vld [vmem:[%s910 + $0x4] sm:$0xf]
          %v913 = vld [vmem:[%s910 + $0x8] sm:$0xf]
          %v914 = vld [vmem:[%s910 + $0xc] sm:$0xf]
          %s915 = scalar_lea.vmem %s5, 2
          %v916 = vld [vmem:[%s915] sm:$0x1]
          %v918 = vlaneseq
          %v919 = vshrl.u32 %v918, 7
          %v920 = vsub.s32 0, %v919
          %v921 = vrot.slane %v916, %v920
          %v927 = vunpack.c.l.b16 %v911
          %v928 = vunpack.c.l.b16 %v912
          %v929 = vunpack.c.l.b16 %v913
          %v930 = vunpack.c.l.b16 %v914
          %v931 = vpack.c.b16 %v928, %v927
          %v932 = vpack.c.b16 %v930, %v929
          %935 = vmatprep.subr.bf16.mxu0 0
          %936 = vmatpush1.bf16.msra.mxu0 0
          %937 = vmatprep.subr.bf16.mxu0 0
          %938 = vmatpush1.bf16.msra.mxu0 0
          %939 = vmatprep.subr.bf16.mxu0 0
          %940 = vmatpush1.bf16.msra.mxu0 0
          %941 = vmatprep.subr.bf16.mxu0 0
          %942 = vmatpush1.bf16.msra.mxu0 0
          %943 = vmatprep.subr.bf16.mxu0 0
          %944 = vmatpush1.bf16.msra.mxu0 0
          %945 = vmatprep.subr.bf16.mxu0 0
          %946 = vmatpush1.bf16.msra.mxu0 0
          %947 = vmatprep.subr.bf16.mxu0 0
          %948 = vmatpush1.bf16.msra.mxu0 %v932
          %949 = vmatprep.subr.bf16.mxu0 0
          %950 = vmatpush1.bf16.msra.mxu0 %v931
          %951 = vmatprep.subr.bf16.mxu0 0
          %952 = vmatpush2.bf16.msra.mxu0 0
          %953 = vmatprep.subr.bf16.mxu0 0
          %954 = vmatpush2.bf16.msra.mxu0 0
          %955 = vmatprep.subr.bf16.mxu0 0
          %956 = vmatpush2.bf16.msra.mxu0 0
          %957 = vmatprep.subr.bf16.mxu0 0
          %958 = vmatpush2.bf16.msra.mxu0 0
          %959 = vmatprep.subr.bf16.mxu0 0
          %960 = vmatpush2.bf16.msra.mxu0 0
          %961 = vmatprep.subr.bf16.mxu0 0
          %962 = vmatpush2.bf16.msra.mxu0 0
          %963 = vmatprep.subr.bf16.mxu0 0
          %964 = vmatpush2.bf16.msra.mxu0 0
          %965 = vmatprep.subr.bf16.mxu0 0
          %966 = vmatpush2.bf16.msra.mxu0 0
          %967 = vmatprep.mubr.bf16.mxu0 0
          %968 = vmatmul.mubr.bf16.gmra.mxu0 %v664
          %v969 = vpop.f32.mrf.mxu0
          %v970 = vadd.f32 %v921, %v969
          %v971 = vpop.f32.mrf.mxu0
          %v972 = vpop.f32.mrf.mxu0
          %v973 = vpop.f32.mrf.mxu0
          %974 = vdwg.mxu0
          %v975 = vpack.c.bf16 %v970, %v970
          %s976 = scalar_lea.vmem [#allocation3], 8
          %977 = vst.msk [vmem:[%s976] sm:$0xf] %vm707, %v975
          %s978 = scalar_lea.vmem %s6, 32
          %v979 = vld [vmem:[%s978] sm:$0xf]
          %v980 = vld [vmem:[%s978 + $0x4] sm:$0xf]
          %v981 = vld [vmem:[%s978 + $0x8] sm:$0xf]
          %v982 = vld [vmem:[%s978 + $0xc] sm:$0xf]
          %s983 = scalar_lea.vmem %s7, 2
          %v984 = vld [vmem:[%s983] sm:$0x1]
          %v986 = vlaneseq
          %v987 = vshrl.u32 %v986, 7
          %v988 = vsub.s32 0, %v987
          %v989 = vrot.slane %v984, %v988
          %v995 = vunpack.c.l.b16 %v979
          %v996 = vunpack.c.l.b16 %v980
          %v997 = vunpack.c.l.b16 %v981
          %v998 = vunpack.c.l.b16 %v982
          %v999 = vpack.c.b16 %v996, %v995
          %v1000 = vpack.c.b16 %v998, %v997
          %1003 = vmatprep.subr.bf16.mxu0 0
          %1004 = vmatpush1.bf16.msra.mxu0 0
          %1005 = vmatprep.subr.bf16.mxu0 0
          %1006 = vmatpush1.bf16.msra.mxu0 0
          %1007 = vmatprep.subr.bf16.mxu0 0
          %1008 = vmatpush1.bf16.msra.mxu0 0
          %1009 = vmatprep.subr.bf16.mxu0 0
          %1010 = vmatpush1.bf16.msra.mxu0 0
          %1011 = vmatprep.subr.bf16.mxu0 0
          %1012 = vmatpush1.bf16.msra.mxu0 0
          %1013 = vmatprep.subr.bf16.mxu0 0
          %1014 = vmatpush1.bf16.msra.mxu0 0
          %1015 = vmatprep.subr.bf16.mxu0 0
          %1016 = vmatpush1.bf16.msra.mxu0 %v1000
          %1017 = vmatprep.subr.bf16.mxu0 0
          %1018 = vmatpush1.bf16.msra.mxu0 %v999
          %1019 = vmatprep.subr.bf16.mxu0 0
          %1020 = vmatpush2.bf16.msra.mxu0 0
          %1021 = vmatprep.subr.bf16.mxu0 0
          %1022 = vmatpush2.bf16.msra.mxu0 0
          %1023 = vmatprep.subr.bf16.mxu0 0
          %1024 = vmatpush2.bf16.msra.mxu0 0
          %1025 = vmatprep.subr.bf16.mxu0 0
          %1026 = vmatpush2.bf16.msra.mxu0 0
          %1027 = vmatprep.subr.bf16.mxu0 0
          %1028 = vmatpush2.bf16.msra.mxu0 0
          %1029 = vmatprep.subr.bf16.mxu0 0
          %1030 = vmatpush2.bf16.msra.mxu0 0
          %1031 = vmatprep.subr.bf16.mxu0 0
          %1032 = vmatpush2.bf16.msra.mxu0 0
          %1033 = vmatprep.subr.bf16.mxu0 0
          %1034 = vmatpush2.bf16.msra.mxu0 0
          %1035 = vmatprep.mubr.bf16.mxu0 0
          %1036 = vmatmul.mubr.bf16.gmra.mxu0 %v664
          %v1037 = vpop.f32.mrf.mxu0
          %v1038 = vadd.f32 %v989, %v1037
          %v1039 = vpop.f32.mrf.mxu0
          %v1040 = vpop.f32.mrf.mxu0
          %v1041 = vpop.f32.mrf.mxu0
          %1042 = vdwg.mxu0
          %v1043 = vpack.c.bf16 %v1038, %v1038
          %s1044 = scalar_lea.vmem [#allocation4], 8
          %1045 = vst.msk [vmem:[%s1044] sm:$0xf] %vm707, %v1043
          %s1046 = scalar_lea.vmem %s4, 48
          %v1047 = vld [vmem:[%s1046] sm:$0xf]
          %v1048 = vld [vmem:[%s1046 + $0x4] sm:$0xf]
          %v1049 = vld [vmem:[%s1046 + $0x8] sm:$0xf]
          %v1050 = vld [vmem:[%s1046 + $0xc] sm:$0xf]
          %s1051 = scalar_lea.vmem %s5, 3
          %v1052 = vld [vmem:[%s1051] sm:$0x1]
          %v1054 = vlaneseq
          %v1055 = vshrl.u32 %v1054, 7
          %v1056 = vsub.s32 0, %v1055
          %v1057 = vrot.slane %v1052, %v1056
          %v1063 = vunpack.c.l.b16 %v1047
          %v1064 = vunpack.c.l.b16 %v1048
          %v1065 = vunpack.c.l.b16 %v1049
          %v1066 = vunpack.c.l.b16 %v1050
          %v1067 = vpack.c.b16 %v1064, %v1063
          %v1068 = vpack.c.b16 %v1066, %v1065
          %1071 = vmatprep.subr.bf16.mxu0 0
          %1072 = vmatpush1.bf16.msra.mxu0 0
          %1073 = vmatprep.subr.bf16.mxu0 0
          %1074 = vmatpush1.bf16.msra.mxu0 0
          %1075 = vmatprep.subr.bf16.mxu0 0
          %1076 = vmatpush1.bf16.msra.mxu0 0
          %1077 = vmatprep.subr.bf16.mxu0 0
          %1078 = vmatpush1.bf16.msra.mxu0 0
          %1079 = vmatprep.subr.bf16.mxu0 0
          %1080 = vmatpush1.bf16.msra.mxu0 0
          %1081 = vmatprep.subr.bf16.mxu0 0
          %1082 = vmatpush1.bf16.msra.mxu0 0
          %1083 = vmatprep.subr.bf16.mxu0 0
          %1084 = vmatpush1.bf16.msra.mxu0 %v1068
          %1085 = vmatprep.subr.bf16.mxu0 0
          %1086 = vmatpush1.bf16.msra.mxu0 %v1067
          %1087 = vmatprep.subr.bf16.mxu0 0
          %1088 = vmatpush2.bf16.msra.mxu0 0
          %1089 = vmatprep.subr.bf16.mxu0 0
          %1090 = vmatpush2.bf16.msra.mxu0 0
          %1091 = vmatprep.subr.bf16.mxu0 0
          %1092 = vmatpush2.bf16.msra.mxu0 0
          %1093 = vmatprep.subr.bf16.mxu0 0
          %1094 = vmatpush2.bf16.msra.mxu0 0
          %1095 = vmatprep.subr.bf16.mxu0 0
          %1096 = vmatpush2.bf16.msra.mxu0 0
          %1097 = vmatprep.subr.bf16.mxu0 0
          %1098 = vmatpush2.bf16.msra.mxu0 0
          %1099 = vmatprep.subr.bf16.mxu0 0
          %1100 = vmatpush2.bf16.msra.mxu0 0
          %1101 = vmatprep.subr.bf16.mxu0 0
          %1102 = vmatpush2.bf16.msra.mxu0 0
          %1103 = vmatprep.mubr.bf16.mxu0 0
          %1104 = vmatmul.mubr.bf16.gmra.mxu0 %v664
          %v1105 = vpop.f32.mrf.mxu0
          %v1106 = vadd.f32 %v1057, %v1105
          %v1107 = vpop.f32.mrf.mxu0
          %v1108 = vpop.f32.mrf.mxu0
          %v1109 = vpop.f32.mrf.mxu0
          %1110 = vdwg.mxu0
          %v1111 = vpack.c.bf16 %v1106, %v1106
          %s1112 = scalar_lea.vmem [#allocation3], 12
          %1113 = vst.msk [vmem:[%s1112] sm:$0xf] %vm707, %v1111
          %s1114 = scalar_lea.vmem %s6, 48
          %v1115 = vld [vmem:[%s1114] sm:$0xf]
          %v1116 = vld [vmem:[%s1114 + $0x4] sm:$0xf]
          %v1117 = vld [vmem:[%s1114 + $0x8] sm:$0xf]
          %v1118 = vld [vmem:[%s1114 + $0xc] sm:$0xf]
          %s1119 = scalar_lea.vmem %s7, 3
          %v1120 = vld [vmem:[%s1119] sm:$0x1]
          %v1122 = vlaneseq
          %v1123 = vshrl.u32 %v1122, 7
          %v1124 = vsub.s32 0, %v1123
          %v1125 = vrot.slane %v1120, %v1124
          %v1131 = vunpack.c.l.b16 %v1115
          %v1132 = vunpack.c.l.b16 %v1116
          %v1133 = vunpack.c.l.b16 %v1117
          %v1134 = vunpack.c.l.b16 %v1118
          %v1135 = vpack.c.b16 %v1132, %v1131
          %v1136 = vpack.c.b16 %v1134, %v1133
          %1139 = vmatprep.subr.bf16.mxu0 0
          %1140 = vmatpush1.bf16.msra.mxu0 0
          %1141 = vmatprep.subr.bf16.mxu0 0
          %1142 = vmatpush1.bf16.msra.mxu0 0
          %1143 = vmatprep.subr.bf16.mxu0 0
          %1144 = vmatpush1.bf16.msra.mxu0 0
          %1145 = vmatprep.subr.bf16.mxu0 0
          %1146 = vmatpush1.bf16.msra.mxu0 0
          %1147 = vmatprep.subr.bf16.mxu0 0
          %1148 = vmatpush1.bf16.msra.mxu0 0
          %1149 = vmatprep.subr.bf16.mxu0 0
          %1150 = vmatpush1.bf16.msra.mxu0 0
          %1151 = vmatprep.subr.bf16.mxu0 0
          %1152 = vmatpush1.bf16.msra.mxu0 %v1136
          %1153 = vmatprep.subr.bf16.mxu0 0
          %1154 = vmatpush1.bf16.msra.mxu0 %v1135
          %1155 = vmatprep.subr.bf16.mxu0 0
          %1156 = vmatpush2.bf16.msra.mxu0 0
          %1157 = vmatprep.subr.bf16.mxu0 0
          %1158 = vmatpush2.bf16.msra.mxu0 0
          %1159 = vmatprep.subr.bf16.mxu0 0
          %1160 = vmatpush2.bf16.msra.mxu0 0
          %1161 = vmatprep.subr.bf16.mxu0 0
          %1162 = vmatpush2.bf16.msra.mxu0 0
          %1163 = vmatprep.subr.bf16.mxu0 0
          %1164 = vmatpush2.bf16.msra.mxu0 0
          %1165 = vmatprep.subr.bf16.mxu0 0
          %1166 = vmatpush2.bf16.msra.mxu0 0
          %1167 = vmatprep.subr.bf16.mxu0 0
          %1168 = vmatpush2.bf16.msra.mxu0 0
          %1169 = vmatprep.subr.bf16.mxu0 0
          %1170 = vmatpush2.bf16.msra.mxu0 0
          %1171 = vmatprep.mubr.bf16.mxu0 0
          %1172 = vmatmul.mubr.bf16.gmra.mxu0 %v664
          %v1173 = vpop.f32.mrf.mxu0
          %v1174 = vadd.f32 %v1125, %v1173
          %v1175 = vpop.f32.mrf.mxu0
          %v1176 = vpop.f32.mrf.mxu0
          %v1177 = vpop.f32.mrf.mxu0
          %1178 = vdwg.mxu0
          %v1179 = vpack.c.bf16 %v1174, %v1174
          %s1180 = scalar_lea.vmem [#allocation4], 12
          %1181 = vst.msk [vmem:[%s1180] sm:$0xf] %vm707, %v1179
        $region96: #{tpu_custom_call.1} parent=91 // pred_fallthru
          _
        %s1182 = sshra.s32 %s600, 3
        %s1183 = sand.u32 %s600, 7
        %s1184 = smul.addr %s1182, 4
        %s1185 = scalar_lea.vmem [#allocation2], %s1184
        %v1186 = vld [vmem:[%s1185] sm:$0xf]
        %v1187 = vld [vmem:[%s598] sm:$0x1]
        %v1188 = vld [vmem:[%s2] sm:$0xf]
        %v1189 = vld [vmem:[%s2 + $0x4] sm:$0xf]
        %v1190 = vld [vmem:[%s2 + $0x8] sm:$0xf]
        %v1191 = vld [vmem:[%s2 + $0xc] sm:$0xf]
        %v1192 = vld [vmem:[%s3] sm:$0x1]
        %v1194 = vlaneseq
        %v1195 = vshrl.u32 %v1194, 7
        %v1196 = vsub.s32 0, %v1195
        %v1197 = vrot.slane %v1192, %v1196
        %v1203 = vunpack.c.l.b16 %v1188
        %v1204 = vunpack.c.l.b16 %v1189
        %v1205 = vunpack.c.l.b16 %v1190
        %v1206 = vunpack.c.l.b16 %v1191
        %v1207 = vpack.c.b16 %v1204, %v1203
        %v1208 = vpack.c.b16 %v1206, %v1205
        %vm1211 = vcmask 261120
        %v1213 = vsel %vm1211, %v1186, 0
        %1215 = vmatprep.subr.bf16.mxu0 0
        %1216 = vmatpush1.bf16.msra.mxu0 0
        %1217 = vmatprep.subr.bf16.mxu0 0
        %1218 = vmatpush1.bf16.msra.mxu0 0
        %1219 = vmatprep.subr.bf16.mxu0 0
        %1220 = vmatpush1.bf16.msra.mxu0 0
        %1221 = vmatprep.subr.bf16.mxu0 0
        %1222 = vmatpush1.bf16.msra.mxu0 0
        %1223 = vmatprep.subr.bf16.mxu0 0
        %1224 = vmatpush1.bf16.msra.mxu0 0
        %1225 = vmatprep.subr.bf16.mxu0 0
        %1226 = vmatpush1.bf16.msra.mxu0 0
        %1227 = vmatprep.subr.bf16.mxu0 0
        %1228 = vmatpush1.bf16.msra.mxu0 %v1208
        %1229 = vmatprep.subr.bf16.mxu0 0
        %1230 = vmatpush1.bf16.msra.mxu0 %v1207
        %1231 = vmatprep.subr.bf16.mxu0 0
        %1232 = vmatpush2.bf16.msra.mxu0 0
        %1233 = vmatprep.subr.bf16.mxu0 0
        %1234 = vmatpush2.bf16.msra.mxu0 0
        %1235 = vmatprep.subr.bf16.mxu0 0
        %1236 = vmatpush2.bf16.msra.mxu0 0
        %1237 = vmatprep.subr.bf16.mxu0 0
        %1238 = vmatpush2.bf16.msra.mxu0 0
        %1239 = vmatprep.subr.bf16.mxu0 0
        %1240 = vmatpush2.bf16.msra.mxu0 0
        %1241 = vmatprep.subr.bf16.mxu0 0
        %1242 = vmatpush2.bf16.msra.mxu0 0
        %1243 = vmatprep.subr.bf16.mxu0 0
        %1244 = vmatpush2.bf16.msra.mxu0 0
        %1245 = vmatprep.subr.bf16.mxu0 0
        %1246 = vmatpush2.bf16.msra.mxu0 0
        %1247 = vmatprep.mubr.bf16.mxu0 0
        %1248 = vmatmul.mubr.bf16.gmra.mxu0 %v1213
        %v1249 = vpop.f32.mrf.mxu0
        %v1250 = vadd.f32 %v1197, %v1249
        %v1251 = vpop.f32.mrf.mxu0
        %v1252 = vpop.f32.mrf.mxu0
        %v1253 = vpop.f32.mrf.mxu0
        %1254 = vdwg.mxu0
        %v1255 = vpack.c.bf16 %v1250, %v1250
        %v1256 = vld [vmem:[#allocation3] sm:$0xf]
        %v1258 = vlaneseq
        %v1259 = vshrl.u32 %v1258, 7
        %v1260 = vsub.s32 0, %v1259
        %v1261 = vrot.slane %v1187, %v1260
        %vm1263 = vcmask 64512
        %v1265 = vsel %vm1263, %v1255, 0
        %v1268 = vsel %vm1263, %v1256, 0
        %1270 = vmatprep.subr.bf16.mxu0 0
        %1271 = vmatpush1.bf16.xpose.msra.mxu0 0
        %1272 = vmatprep.subr.bf16.mxu0 0
        %1273 = vmatpush1.bf16.xpose.msra.mxu0 0
        %1274 = vmatprep.subr.bf16.mxu0 0
        %1275 = vmatpush1.bf16.xpose.msra.mxu0 0
        %1276 = vmatprep.subr.bf16.mxu0 0
        %1277 = vmatpush1.bf16.xpose.msra.mxu0 0
        %1278 = vmatprep.subr.bf16.mxu0 0
        %1279 = vmatpush1.bf16.xpose.msra.mxu0 0
        %1280 = vmatprep.subr.bf16.mxu0 0
        %1281 = vmatpush1.bf16.xpose.msra.mxu0 0
        %1282 = vmatprep.subr.bf16.mxu0 0
        %1283 = vmatpush1.bf16.xpose.msra.mxu0 0
        %1284 = vmatprep.subr.bf16.mxu0 0
        %1285 = vmatpush1.bf16.xpose.msra.mxu0 %v1268
        %1286 = vmatprep.subr.bf16.mxu0 0
        %1287 = vmatpush2.bf16.xpose.msra.mxu0 0
        %1288 = vmatprep.subr.bf16.mxu0 0
        %1289 = vmatpush2.bf16.xpose.msra.mxu0 0
        %1290 = vmatprep.subr.bf16.mxu0 0
        %1291 = vmatpush2.bf16.xpose.msra.mxu0 0
        %1292 = vmatprep.subr.bf16.mxu0 0
        %1293 = vmatpush2.bf16.xpose.msra.mxu0 0
        %1294 = vmatprep.subr.bf16.mxu0 0
        %1295 = vmatpush2.bf16.xpose.msra.mxu0 0
        %1296 = vmatprep.subr.bf16.mxu0 0
        %1297 = vmatpush2.bf16.xpose.msra.mxu0 0
        %1298 = vmatprep.subr.bf16.mxu0 0
        %1299 = vmatpush2.bf16.xpose.msra.mxu0 0
        %1300 = vmatprep.subr.bf16.mxu0 0
        %1301 = vmatpush2.bf16.xpose.msra.mxu0 0
        %1302 = vmatprep.mubr.bf16.mxu0 0
        %1303 = vmatmul.mubr.bf16.gmra.mxu0 %v1265
        %v1304 = vpop.f32.mrf.mxu0
        %v1305 = vadd.f32 %v1261, %v1304
        %v1306 = vpop.f32.mrf.mxu0
        %v1307 = vpop.f32.mrf.mxu0
        %v1308 = vpop.f32.mrf.mxu0
        %1309 = vdwg.mxu0
        %v1310 = vsel %vm1263, %v1305, -inf
        %1311 = vmax.xlane.f32.xlu0 %v1310
        %v1312 = vpop.xlane.xlu0 %1311
        %v1313 = vsub.f32 %v1305, %v1312
        %v1314 = vmul.f32 %v1313, 1.442695
        %v1315 = vpow.pop %v1314
        %v1316 = vsel %vm1263, %v1315, 0.0
        %1317 = vadd.xlane.f32.xlu0 %v1316
        %v1318 = vpop.xlane.xlu0 %1317
        %v1319 = vpack.c.bf16 %v1315, %v1315
        %v1320 = vld [vmem:[#allocation4] sm:$0xf]
        %v1322 = vsel %vm1263, %v1319, 0
        %vm1324 = vcmask 1043456
        %v1326 = vsel %vm1324, %v1320, 0
        %1328 = vmatprep.subr.bf16.mxu0 0
        %1329 = vmatpush1.bf16.msra.mxu0 0
        %1330 = vmatprep.subr.bf16.mxu0 0
        %1331 = vmatpush1.bf16.msra.mxu0 0
        %1332 = vmatprep.subr.bf16.mxu0 0
        %1333 = vmatpush1.bf16.msra.mxu0 0
        %1334 = vmatprep.subr.bf16.mxu0 0
        %1335 = vmatpush1.bf16.msra.mxu0 0
        %1336 = vmatprep.subr.bf16.mxu0 0
        %1337 = vmatpush1.bf16.msra.mxu0 0
        %1338 = vmatprep.subr.bf16.mxu0 0
        %1339 = vmatpush1.bf16.msra.mxu0 0
        %1340 = vmatprep.subr.bf16.mxu0 0
        %1341 = vmatpush1.bf16.msra.mxu0 0
        %1342 = vmatprep.subr.bf16.mxu0 0
        %1343 = vmatpush1.bf16.msra.mxu0 %v1326
        %1344 = vmatprep.subr.bf16.mxu0 0
        %1345 = vmatpush2.bf16.msra.mxu0 0
        %1346 = vmatprep.subr.bf16.mxu0 0
        %1347 = vmatpush2.bf16.msra.mxu0 0
        %1348 = vmatprep.subr.bf16.mxu0 0
        %1349 = vmatpush2.bf16.msra.mxu0 0
        %1350 = vmatprep.subr.bf16.mxu0 0
        %1351 = vmatpush2.bf16.msra.mxu0 0
        %1352 = vmatprep.subr.bf16.mxu0 0
        %1353 = vmatpush2.bf16.msra.mxu0 0
        %1354 = vmatprep.subr.bf16.mxu0 0
        %1355 = vmatpush2.bf16.msra.mxu0 0
        %1356 = vmatprep.subr.bf16.mxu0 0
        %1357 = vmatpush2.bf16.msra.mxu0 0
        %1358 = vmatprep.subr.bf16.mxu0 0
        %1359 = vmatpush2.bf16.msra.mxu0 0
        %1360 = vmatprep.mubr.bf16.mxu0 0
        %1361 = vmatmul.mubr.bf16.gmra.mxu0 %v1322
        %v1362 = vpop.f32.mrf.mxu0
        %v1363 = vadd.f32 0.0, %v1362
        %v1364 = vpop.f32.mrf.mxu0
        %v1365 = vpop.f32.mrf.mxu0
        %v1366 = vpop.f32.mrf.mxu0
        %1367 = vdwg.mxu0
        %v1368 = vrcp.pop %v1318
        %v1369 = vmul.f32 %v1363, %v1368
        %v1370 = vpack.c.bf16 %v1369, %v1369
        %v1371 = vld [vmem:[%s8] sm:$0xf]
        %s1372 = scalar_lea.vmem %s2, 16
        %v1373 = vld [vmem:[%s1372] sm:$0xf]
        %v1374 = vld [vmem:[%s1372 + $0x4] sm:$0xf]
        %v1375 = vld [vmem:[%s1372 + $0x8] sm:$0xf]
        %v1376 = vld [vmem:[%s1372 + $0xc] sm:$0xf]
        %s1377 = scalar_lea.vmem %s3, 1
        %v1378 = vld [vmem:[%s1377] sm:$0x1]
        %v1380 = vlaneseq
        %v1381 = vshrl.u32 %v1380, 7
        %v1382 = vsub.s32 0, %v1381
        %v1383 = vrot.slane %v1378, %v1382
        %v1389 = vunpack.c.l.b16 %v1373
        %v1390 = vunpack.c.l.b16 %v1374
        %v1391 = vunpack.c.l.b16 %v1375
        %v1392 = vunpack.c.l.b16 %v1376
        %v1393 = vpack.c.b16 %v1390, %v1389
        %v1394 = vpack.c.b16 %v1392, %v1391
        %1397 = vmatprep.subr.bf16.mxu0 0
        %1398 = vmatpush1.bf16.msra.mxu0 0
        %1399 = vmatprep.subr.bf16.mxu0 0
        %1400 = vmatpush1.bf16.msra.mxu0 0
        %1401 = vmatprep.subr.bf16.mxu0 0
        %1402 = vmatpush1.bf16.msra.mxu0 0
        %1403 = vmatprep.subr.bf16.mxu0 0
        %1404 = vmatpush1.bf16.msra.mxu0 0
        %1405 = vmatprep.subr.bf16.mxu0 0
        %1406 = vmatpush1.bf16.msra.mxu0 0
        %1407 = vmatprep.subr.bf16.mxu0 0
        %1408 = vmatpush1.bf16.msra.mxu0 0
        %1409 = vmatprep.subr.bf16.mxu0 0
        %1410 = vmatpush1.bf16.msra.mxu0 %v1394
        %1411 = vmatprep.subr.bf16.mxu0 0
        %1412 = vmatpush1.bf16.msra.mxu0 %v1393
        %1413 = vmatprep.subr.bf16.mxu0 0
        %1414 = vmatpush2.bf16.msra.mxu0 0
        %1415 = vmatprep.subr.bf16.mxu0 0
        %1416 = vmatpush2.bf16.msra.mxu0 0
        %1417 = vmatprep.subr.bf16.mxu0 0
        %1418 = vmatpush2.bf16.msra.mxu0 0
        %1419 = vmatprep.subr.bf16.mxu0 0
        %1420 = vmatpush2.bf16.msra.mxu0 0
        %1421 = vmatprep.subr.bf16.mxu0 0
        %1422 = vmatpush2.bf16.msra.mxu0 0
        %1423 = vmatprep.subr.bf16.mxu0 0
        %1424 = vmatpush2.bf16.msra.mxu0 0
        %1425 = vmatprep.subr.bf16.mxu0 0
        %1426 = vmatpush2.bf16.msra.mxu0 0
        %1427 = vmatprep.subr.bf16.mxu0 0
        %1428 = vmatpush2.bf16.msra.mxu0 0
        %1429 = vmatprep.mubr.bf16.mxu0 0
        %1430 = vmatmul.mubr.bf16.gmra.mxu0 %v1213
        %v1431 = vpop.f32.mrf.mxu0
        %v1432 = vadd.f32 %v1383, %v1431
        %v1433 = vpop.f32.mrf.mxu0
        %v1434 = vpop.f32.mrf.mxu0
        %v1435 = vpop.f32.mrf.mxu0
        %1436 = vdwg.mxu0
        %v1437 = vpack.c.bf16 %v1432, %v1432
        %s1438 = scalar_lea.vmem [#allocation3], 4
        %v1439 = vld [vmem:[%s1438] sm:$0xf]
        %v1441 = vsel %vm1263, %v1437, 0
        %v1444 = vsel %vm1263, %v1439, 0
        %1446 = vmatprep.subr.bf16.mxu0 0
        %1447 = vmatpush1.bf16.xpose.msra.mxu0 0
        %1448 = vmatprep.subr.bf16.mxu0 0
        %1449 = vmatpush1.bf16.xpose.msra.mxu0 0
        %1450 = vmatprep.subr.bf16.mxu0 0
        %1451 = vmatpush1.bf16.xpose.msra.mxu0 0
        %1452 = vmatprep.subr.bf16.mxu0 0
        %1453 = vmatpush1.bf16.xpose.msra.mxu0 0
        %1454 = vmatprep.subr.bf16.mxu0 0
        %1455 = vmatpush1.bf16.xpose.msra.mxu0 0
        %1456 = vmatprep.subr.bf16.mxu0 0
        %1457 = vmatpush1.bf16.xpose.msra.mxu0 0
        %1458 = vmatprep.subr.bf16.mxu0 0
        %1459 = vmatpush1.bf16.xpose.msra.mxu0 0
        %1460 = vmatprep.subr.bf16.mxu0 0
        %1461 = vmatpush1.bf16.xpose.msra.mxu0 %v1444
        %1462 = vmatprep.subr.bf16.mxu0 0
        %1463 = vmatpush2.bf16.xpose.msra.mxu0 0
        %1464 = vmatprep.subr.bf16.mxu0 0
        %1465 = vmatpush2.bf16.xpose.msra.mxu0 0
        %1466 = vmatprep.subr.bf16.mxu0 0
        %1467 = vmatpush2.bf16.xpose.msra.mxu0 0
        %1468 = vmatprep.subr.bf16.mxu0 0
        %1469 = vmatpush2.bf16.xpose.msra.mxu0 0
        %1470 = vmatprep.subr.bf16.mxu0 0
        %1471 = vmatpush2.bf16.xpose.msra.mxu0 0
        %1472 = vmatprep.subr.bf16.mxu0 0
        %1473 = vmatpush2.bf16.xpose.msra.mxu0 0
        %1474 = vmatprep.subr.bf16.mxu0 0
        %1475 = vmatpush2.bf16.xpose.msra.mxu0 0
        %1476 = vmatprep.subr.bf16.mxu0 0
        %1477 = vmatpush2.bf16.xpose.msra.mxu0 0
        %1478 = vmatprep.mubr.bf16.mxu0 0
        %1479 = vmatmul.mubr.bf16.gmra.mxu0 %v1441
        %v1480 = vpop.f32.mrf.mxu0
        %v1481 = vadd.f32 %v1261, %v1480
        %v1482 = vpop.f32.mrf.mxu0
        %v1483 = vpop.f32.mrf.mxu0
        %v1484 = vpop.f32.mrf.mxu0
        %1485 = vdwg.mxu0
        %v1486 = vsel %vm1263, %v1481, -inf
        %1487 = vmax.xlane.f32.xlu0 %v1486
        %v1488 = vpop.xlane.xlu0 %1487
        %v1489 = vsub.f32 %v1481, %v1488
        %v1490 = vmul.f32 %v1489, 1.442695
        %v1491 = vpow.pop %v1490
        %v1492 = vsel %vm1263, %v1491, 0.0
        %1493 = vadd.xlane.f32.xlu0 %v1492
        %v1494 = vpop.xlane.xlu0 %1493
        %v1495 = vpack.c.bf16 %v1491, %v1491
        %s1496 = scalar_lea.vmem [#allocation4], 4
        %v1497 = vld [vmem:[%s1496] sm:$0xf]
        %v1499 = vsel %vm1263, %v1495, 0
        %v1502 = vsel %vm1324, %v1497, 0
        %1504 = vmatprep.subr.bf16.mxu0 0
        %1505 = vmatpush1.bf16.msra.mxu0 0
        %1506 = vmatprep.subr.bf16.mxu0 0
        %1507 = vmatpush1.bf16.msra.mxu0 0
        %1508 = vmatprep.subr.bf16.mxu0 0
        %1509 = vmatpush1.bf16.msra.mxu0 0
        %1510 = vmatprep.subr.bf16.mxu0 0
        %1511 = vmatpush1.bf16.msra.mxu0 0
        %1512 = vmatprep.subr.bf16.mxu0 0
        %1513 = vmatpush1.bf16.msra.mxu0 0
        %1514 = vmatprep.subr.bf16.mxu0 0
        %1515 = vmatpush1.bf16.msra.mxu0 0
        %1516 = vmatprep.subr.bf16.mxu0 0
        %1517 = vmatpush1.bf16.msra.mxu0 0
        %1518 = vmatprep.subr.bf16.mxu0 0
        %1519 = vmatpush1.bf16.msra.mxu0 %v1502
        %1520 = vmatprep.subr.bf16.mxu0 0
        %1521 = vmatpush2.bf16.msra.mxu0 0
        %1522 = vmatprep.subr.bf16.mxu0 0
        %1523 = vmatpush2.bf16.msra.mxu0 0
        %1524 = vmatprep.subr.bf16.mxu0 0
        %1525 = vmatpush2.bf16.msra.mxu0 0
        %1526 = vmatprep.subr.bf16.mxu0 0
        %1527 = vmatpush2.bf16.msra.mxu0 0
        %1528 = vmatprep.subr.bf16.mxu0 0
        %1529 = vmatpush2.bf16.msra.mxu0 0
        %1530 = vmatprep.subr.bf16.mxu0 0
        %1531 = vmatpush2.bf16.msra.mxu0 0
        %1532 = vmatprep.subr.bf16.mxu0 0
        %1533 = vmatpush2.bf16.msra.mxu0 0
        %1534 = vmatprep.subr.bf16.mxu0 0
        %1535 = vmatpush2.bf16.msra.mxu0 0
        %1536 = vmatprep.mubr.bf16.mxu0 0
        %1537 = vmatmul.mubr.bf16.gmra.mxu0 %v1499
        %v1538 = vpop.f32.mrf.mxu0
        %v1539 = vadd.f32 0.0, %v1538
        %v1540 = vpop.f32.mrf.mxu0
        %v1541 = vpop.f32.mrf.mxu0
        %v1542 = vpop.f32.mrf.mxu0
        %1543 = vdwg.mxu0
        %v1544 = vrcp.pop %v1494
        %v1545 = vmul.f32 %v1539, %v1544
        %v1546 = vpack.c.bf16 %v1545, %v1545
        %s1547 = scalar_lea.vmem %s8, 4
        %v1548 = vld [vmem:[%s1547] sm:$0xf]
        %v1550 = vsel %vm1263, %v1546, 0
        %v1553 = vsel %vm1324, %v1548, 0
        %1555 = vmatprep.subr.bf16.mxu0 0
        %1556 = vmatpush1.bf16.msra.mxu0 0
        %1557 = vmatprep.subr.bf16.mxu0 0
        %1558 = vmatpush1.bf16.msra.mxu0 0
        %1559 = vmatprep.subr.bf16.mxu0 0
        %1560 = vmatpush1.bf16.msra.mxu0 0
        %1561 = vmatprep.subr.bf16.mxu0 0
        %1562 = vmatpush1.bf16.msra.mxu0 0
        %1563 = vmatprep.subr.bf16.mxu0 0
        %1564 = vmatpush1.bf16.msra.mxu0 0
        %1565 = vmatprep.subr.bf16.mxu0 0
        %1566 = vmatpush1.bf16.msra.mxu0 0
        %1567 = vmatprep.subr.bf16.mxu0 0
        %1568 = vmatpush1.bf16.msra.mxu0 0
        %1569 = vmatprep.subr.bf16.mxu0 0
        %1570 = vmatpush1.bf16.msra.mxu0 %v1553
        %1571 = vmatprep.subr.bf16.mxu0 0
        %1572 = vmatpush2.bf16.msra.mxu0 0
        %1573 = vmatprep.subr.bf16.mxu0 0
        %1574 = vmatpush2.bf16.msra.mxu0 0
        %1575 = vmatprep.subr.bf16.mxu0 0
        %1576 = vmatpush2.bf16.msra.mxu0 0
        %1577 = vmatprep.subr.bf16.mxu0 0
        %1578 = vmatpush2.bf16.msra.mxu0 0
        %1579 = vmatprep.subr.bf16.mxu0 0
        %1580 = vmatpush2.bf16.msra.mxu0 0
        %1581 = vmatprep.subr.bf16.mxu0 0
        %1582 = vmatpush2.bf16.msra.mxu0 0
        %1583 = vmatprep.subr.bf16.mxu0 0
        %1584 = vmatpush2.bf16.msra.mxu0 0
        %1585 = vmatprep.subr.bf16.mxu0 0
        %1586 = vmatpush2.bf16.msra.mxu0 0
        %1587 = vmatprep.mubr.bf16.mxu0 0
        %1588 = vmatmul.mubr.bf16.gmra.mxu0 %v1550
        %v1589 = vpop.f32.mrf.mxu0
        %v1590 = vadd.f32 0.0, %v1589
        %v1591 = vpop.f32.mrf.mxu0
        %v1592 = vpop.f32.mrf.mxu0
        %v1593 = vpop.f32.mrf.mxu0
        %1594 = vdwg.mxu0
        %v1596 = vsel %vm1263, %v1370, 0
        %v1599 = vsel %vm1324, %v1371, 0
        %1601 = vmatprep.subr.bf16.mxu0 0
        %1602 = vmatpush1.bf16.msra.mxu0 0
        %1603 = vmatprep.subr.bf16.mxu0 0
        %1604 = vmatpush1.bf16.msra.mxu0 0
        %1605 = vmatprep.subr.bf16.mxu0 0
        %1606 = vmatpush1.bf16.msra.mxu0 0
        %1607 = vmatprep.subr.bf16.mxu0 0
        %1608 = vmatpush1.bf16.msra.mxu0 0
        %1609 = vmatprep.subr.bf16.mxu0 0
        %1610 = vmatpush1.bf16.msra.mxu0 0
        %1611 = vmatprep.subr.bf16.mxu0 0
        %1612 = vmatpush1.bf16.msra.mxu0 0
        %1613 = vmatprep.subr.bf16.mxu0 0
        %1614 = vmatpush1.bf16.msra.mxu0 0
        %1615 = vmatprep.subr.bf16.mxu0 0
        %1616 = vmatpush1.bf16.msra.mxu0 %v1599
        %1617 = vmatprep.subr.bf16.mxu0 0
        %1618 = vmatpush2.bf16.msra.mxu0 0
        %1619 = vmatprep.subr.bf16.mxu0 0
        %1620 = vmatpush2.bf16.msra.mxu0 0
        %1621 = vmatprep.subr.bf16.mxu0 0
        %1622 = vmatpush2.bf16.msra.mxu0 0
        %1623 = vmatprep.subr.bf16.mxu0 0
        %1624 = vmatpush2.bf16.msra.mxu0 0
        %1625 = vmatprep.subr.bf16.mxu0 0
        %1626 = vmatpush2.bf16.msra.mxu0 0
        %1627 = vmatprep.subr.bf16.mxu0 0
        %1628 = vmatpush2.bf16.msra.mxu0 0
        %1629 = vmatprep.subr.bf16.mxu0 0
        %1630 = vmatpush2.bf16.msra.mxu0 0
        %1631 = vmatprep.subr.bf16.mxu0 0
        %1632 = vmatpush2.bf16.msra.mxu0 0
        %1633 = vmatprep.mubr.bf16.mxu0 0
        %1634 = vmatmul.mubr.bf16.gmra.mxu0 %v1596
        %v1635 = vpop.f32.mrf.mxu0
        %v1636 = vadd.f32 %v1590, %v1635
        %v1637 = vpop.f32.mrf.mxu0
        %v1638 = vpop.f32.mrf.mxu0
        %v1639 = vpop.f32.mrf.mxu0
        %1640 = vdwg.mxu0
        %s1641 = scalar_lea.vmem %s2, 32
        %v1642 = vld [vmem:[%s1641] sm:$0xf]
        %v1643 = vld [vmem:[%s1641 + $0x4] sm:$0xf]
        %v1644 = vld [vmem:[%s1641 + $0x8] sm:$0xf]
        %v1645 = vld [vmem:[%s1641 + $0xc] sm:$0xf]
        %s1646 = scalar_lea.vmem %s3, 2
        %v1647 = vld [vmem:[%s1646] sm:$0x1]
        %v1649 = vlaneseq
        %v1650 = vshrl.u32 %v1649, 7
        %v1651 = vsub.s32 0, %v1650
        %v1652 = vrot.slane %v1647, %v1651
        %v1658 = vunpack.c.l.b16 %v1642
        %v1659 = vunpack.c.l.b16 %v1643
        %v1660 = vunpack.c.l.b16 %v1644
        %v1661 = vunpack.c.l.b16 %v1645
        %v1662 = vpack.c.b16 %v1659, %v1658
        %v1663 = vpack.c.b16 %v1661, %v1660
        %1666 = vmatprep.subr.bf16.mxu0 0
        %1667 = vmatpush1.bf16.msra.mxu0 0
        %1668 = vmatprep.subr.bf16.mxu0 0
        %1669 = vmatpush1.bf16.msra.mxu0 0
        %1670 = vmatprep.subr.bf16.mxu0 0
        %1671 = vmatpush1.bf16.msra.mxu0 0
        %1672 = vmatprep.subr.bf16.mxu0 0
        %1673 = vmatpush1.bf16.msra.mxu0 0
        %1674 = vmatprep.subr.bf16.mxu0 0
        %1675 = vmatpush1.bf16.msra.mxu0 0
        %1676 = vmatprep.subr.bf16.mxu0 0
        %1677 = vmatpush1.bf16.msra.mxu0 0
        %1678 = vmatprep.subr.bf16.mxu0 0
        %1679 = vmatpush1.bf16.msra.mxu0 %v1663
        %1680 = vmatprep.subr.bf16.mxu0 0
        %1681 = vmatpush1.bf16.msra.mxu0 %v1662
        %1682 = vmatprep.subr.bf16.mxu0 0
        %1683 = vmatpush2.bf16.msra.mxu0 0
        %1684 = vmatprep.subr.bf16.mxu0 0
        %1685 = vmatpush2.bf16.msra.mxu0 0
        %1686 = vmatprep.subr.bf16.mxu0 0
        %1687 = vmatpush2.bf16.msra.mxu0 0
        %1688 = vmatprep.subr.bf16.mxu0 0
        %1689 = vmatpush2.bf16.msra.mxu0 0
        %1690 = vmatprep.subr.bf16.mxu0 0
        %1691 = vmatpush2.bf16.msra.mxu0 0
        %1692 = vmatprep.subr.bf16.mxu0 0
        %1693 = vmatpush2.bf16.msra.mxu0 0
        %1694 = vmatprep.subr.bf16.mxu0 0
        %1695 = vmatpush2.bf16.msra.mxu0 0
        %1696 = vmatprep.subr.bf16.mxu0 0
        %1697 = vmatpush2.bf16.msra.mxu0 0
        %1698 = vmatprep.mubr.bf16.mxu0 0
        %1699 = vmatmul.mubr.bf16.gmra.mxu0 %v1213
        %v1700 = vpop.f32.mrf.mxu0
        %v1701 = vadd.f32 %v1652, %v1700
        %v1702 = vpop.f32.mrf.mxu0
        %v1703 = vpop.f32.mrf.mxu0
        %v1704 = vpop.f32.mrf.mxu0
        %1705 = vdwg.mxu0
        %v1706 = vpack.c.bf16 %v1701, %v1701
        %s1707 = scalar_lea.vmem [#allocation3], 8
        %v1708 = vld [vmem:[%s1707] sm:$0xf]
        %v1710 = vsel %vm1263, %v1706, 0
        %v1713 = vsel %vm1263, %v1708, 0
        %1715 = vmatprep.subr.bf16.mxu0 0
        %1716 = vmatpush1.bf16.xpose.msra.mxu0 0
        %1717 = vmatprep.subr.bf16.mxu0 0
        %1718 = vmatpush1.bf16.xpose.msra.mxu0 0
        %1719 = vmatprep.subr.bf16.mxu0 0
        %1720 = vmatpush1.bf16.xpose.msra.mxu0 0
        %1721 = vmatprep.subr.bf16.mxu0 0
        %1722 = vmatpush1.bf16.xpose.msra.mxu0 0
        %1723 = vmatprep.subr.bf16.mxu0 0
        %1724 = vmatpush1.bf16.xpose.msra.mxu0 0
        %1725 = vmatprep.subr.bf16.mxu0 0
        %1726 = vmatpush1.bf16.xpose.msra.mxu0 0
        %1727 = vmatprep.subr.bf16.mxu0 0
        %1728 = vmatpush1.bf16.xpose.msra.mxu0 0
        %1729 = vmatprep.subr.bf16.mxu0 0
        %1730 = vmatpush1.bf16.xpose.msra.mxu0 %v1713
        %1731 = vmatprep.subr.bf16.mxu0 0
        %1732 = vmatpush2.bf16.xpose.msra.mxu0 0
        %1733 = vmatprep.subr.bf16.mxu0 0
        %1734 = vmatpush2.bf16.xpose.msra.mxu0 0
        %1735 = vmatprep.subr.bf16.mxu0 0
        %1736 = vmatpush2.bf16.xpose.msra.mxu0 0
        %1737 = vmatprep.subr.bf16.mxu0 0
        %1738 = vmatpush2.bf16.xpose.msra.mxu0 0
        %1739 = vmatprep.subr.bf16.mxu0 0
        %1740 = vmatpush2.bf16.xpose.msra.mxu0 0
        %1741 = vmatprep.subr.bf16.mxu0 0
        %1742 = vmatpush2.bf16.xpose.msra.mxu0 0
        %1743 = vmatprep.subr.bf16.mxu0 0
        %1744 = vmatpush2.bf16.xpose.msra.mxu0 0
        %1745 = vmatprep.subr.bf16.mxu0 0
        %1746 = vmatpush2.bf16.xpose.msra.mxu0 0
        %1747 = vmatprep.mubr.bf16.mxu0 0
        %1748 = vmatmul.mubr.bf16.gmra.mxu0 %v1710
        %v1749 = vpop.f32.mrf.mxu0
        %v1750 = vadd.f32 %v1261, %v1749
        %v1751 = vpop.f32.mrf.mxu0
        %v1752 = vpop.f32.mrf.mxu0
        %v1753 = vpop.f32.mrf.mxu0
        %1754 = vdwg.mxu0
        %v1755 = vsel %vm1263, %v1750, -inf
        %1756 = vmax.xlane.f32.xlu0 %v1755
        %v1757 = vpop.xlane.xlu0 %1756
        %v1758 = vsub.f32 %v1750, %v1757
        %v1759 = vmul.f32 %v1758, 1.442695
        %v1760 = vpow.pop %v1759
        %v1761 = vsel %vm1263, %v1760, 0.0
        %1762 = vadd.xlane.f32.xlu0 %v1761
        %v1763 = vpop.xlane.xlu0 %1762
        %v1764 = vpack.c.bf16 %v1760, %v1760
        %s1765 = scalar_lea.vmem [#allocation4], 8
        %v1766 = vld [vmem:[%s1765] sm:$0xf]
        %v1768 = vsel %vm1263, %v1764, 0
        %v1771 = vsel %vm1324, %v1766, 0
        %1773 = vmatprep.subr.bf16.mxu0 0
        %1774 = vmatpush1.bf16.msra.mxu0 0
        %1775 = vmatprep.subr.bf16.mxu0 0
        %1776 = vmatpush1.bf16.msra.mxu0 0
        %1777 = vmatprep.subr.bf16.mxu0 0
        %1778 = vmatpush1.bf16.msra.mxu0 0
        %1779 = vmatprep.subr.bf16.mxu0 0
        %1780 = vmatpush1.bf16.msra.mxu0 0
        %1781 = vmatprep.subr.bf16.mxu0 0
        %1782 = vmatpush1.bf16.msra.mxu0 0
        %1783 = vmatprep.subr.bf16.mxu0 0
        %1784 = vmatpush1.bf16.msra.mxu0 0
        %1785 = vmatprep.subr.bf16.mxu0 0
        %1786 = vmatpush1.bf16.msra.mxu0 0
        %1787 = vmatprep.subr.bf16.mxu0 0
        %1788 = vmatpush1.bf16.msra.mxu0 %v1771
        %1789 = vmatprep.subr.bf16.mxu0 0
        %1790 = vmatpush2.bf16.msra.mxu0 0
        %1791 = vmatprep.subr.bf16.mxu0 0
        %1792 = vmatpush2.bf16.msra.mxu0 0
        %1793 = vmatprep.subr.bf16.mxu0 0
        %1794 = vmatpush2.bf16.msra.mxu0 0
        %1795 = vmatprep.subr.bf16.mxu0 0
        %1796 = vmatpush2.bf16.msra.mxu0 0
        %1797 = vmatprep.subr.bf16.mxu0 0
        %1798 = vmatpush2.bf16.msra.mxu0 0
        %1799 = vmatprep.subr.bf16.mxu0 0
        %1800 = vmatpush2.bf16.msra.mxu0 0
        %1801 = vmatprep.subr.bf16.mxu0 0
        %1802 = vmatpush2.bf16.msra.mxu0 0
        %1803 = vmatprep.subr.bf16.mxu0 0
        %1804 = vmatpush2.bf16.msra.mxu0 0
        %1805 = vmatprep.mubr.bf16.mxu0 0
        %1806 = vmatmul.mubr.bf16.gmra.mxu0 %v1768
        %v1807 = vpop.f32.mrf.mxu0
        %v1808 = vadd.f32 0.0, %v1807
        %v1809 = vpop.f32.mrf.mxu0
        %v1810 = vpop.f32.mrf.mxu0
        %v1811 = vpop.f32.mrf.mxu0
        %1812 = vdwg.mxu0
        %v1813 = vrcp.pop %v1763
        %v1814 = vmul.f32 %v1808, %v1813
        %v1815 = vpack.c.bf16 %v1814, %v1814
        %s1816 = scalar_lea.vmem %s8, 8
        %v1817 = vld [vmem:[%s1816] sm:$0xf]
        %v1819 = vsel %vm1263, %v1815, 0
        %v1822 = vsel %vm1324, %v1817, 0
        %1824 = vmatprep.subr.bf16.mxu0 0
        %1825 = vmatpush1.bf16.msra.mxu0 0
        %1826 = vmatprep.subr.bf16.mxu0 0
        %1827 = vmatpush1.bf16.msra.mxu0 0
        %1828 = vmatprep.subr.bf16.mxu0 0
        %1829 = vmatpush1.bf16.msra.mxu0 0
        %1830 = vmatprep.subr.bf16.mxu0 0
        %1831 = vmatpush1.bf16.msra.mxu0 0
        %1832 = vmatprep.subr.bf16.mxu0 0
        %1833 = vmatpush1.bf16.msra.mxu0 0
        %1834 = vmatprep.subr.bf16.mxu0 0
        %1835 = vmatpush1.bf16.msra.mxu0 0
        %1836 = vmatprep.subr.bf16.mxu0 0
        %1837 = vmatpush1.bf16.msra.mxu0 0
        %1838 = vmatprep.subr.bf16.mxu0 0
        %1839 = vmatpush1.bf16.msra.mxu0 %v1822
        %1840 = vmatprep.subr.bf16.mxu0 0
        %1841 = vmatpush2.bf16.msra.mxu0 0
        %1842 = vmatprep.subr.bf16.mxu0 0
        %1843 = vmatpush2.bf16.msra.mxu0 0
        %1844 = vmatprep.subr.bf16.mxu0 0
        %1845 = vmatpush2.bf16.msra.mxu0 0
        %1846 = vmatprep.subr.bf16.mxu0 0
        %1847 = vmatpush2.bf16.msra.mxu0 0
        %1848 = vmatprep.subr.bf16.mxu0 0
        %1849 = vmatpush2.bf16.msra.mxu0 0
        %1850 = vmatprep.subr.bf16.mxu0 0
        %1851 = vmatpush2.bf16.msra.mxu0 0
        %1852 = vmatprep.subr.bf16.mxu0 0
        %1853 = vmatpush2.bf16.msra.mxu0 0
        %1854 = vmatprep.subr.bf16.mxu0 0
        %1855 = vmatpush2.bf16.msra.mxu0 0
        %1856 = vmatprep.mubr.bf16.mxu0 0
        %1857 = vmatmul.mubr.bf16.gmra.mxu0 %v1819
        %v1858 = vpop.f32.mrf.mxu0
        %v1859 = vadd.f32 0.0, %v1858
        %v1860 = vpop.f32.mrf.mxu0
        %v1861 = vpop.f32.mrf.mxu0
        %v1862 = vpop.f32.mrf.mxu0
        %1863 = vdwg.mxu0
        %v1864 = vadd.f32 %v1636, %v1859
        %s1865 = scalar_lea.vmem %s2, 48
        %v1866 = vld [vmem:[%s1865] sm:$0xf]
        %v1867 = vld [vmem:[%s1865 + $0x4] sm:$0xf]
        %v1868 = vld [vmem:[%s1865 + $0x8] sm:$0xf]
        %v1869 = vld [vmem:[%s1865 + $0xc] sm:$0xf]
        %s1870 = scalar_lea.vmem %s3, 3
        %v1871 = vld [vmem:[%s1870] sm:$0x1]
        %v1873 = vlaneseq
        %v1874 = vshrl.u32 %v1873, 7
        %v1875 = vsub.s32 0, %v1874
        %v1876 = vrot.slane %v1871, %v1875
        %v1882 = vunpack.c.l.b16 %v1866
        %v1883 = vunpack.c.l.b16 %v1867
        %v1884 = vunpack.c.l.b16 %v1868
        %v1885 = vunpack.c.l.b16 %v1869
        %v1886 = vpack.c.b16 %v1883, %v1882
        %v1887 = vpack.c.b16 %v1885, %v1884
        %1890 = vmatprep.subr.bf16.mxu0 0
        %1891 = vmatpush1.bf16.msra.mxu0 0
        %1892 = vmatprep.subr.bf16.mxu0 0
        %1893 = vmatpush1.bf16.msra.mxu0 0
        %1894 = vmatprep.subr.bf16.mxu0 0
        %1895 = vmatpush1.bf16.msra.mxu0 0
        %1896 = vmatprep.subr.bf16.mxu0 0
        %1897 = vmatpush1.bf16.msra.mxu0 0
        %1898 = vmatprep.subr.bf16.mxu0 0
        %1899 = vmatpush1.bf16.msra.mxu0 0
        %1900 = vmatprep.subr.bf16.mxu0 0
        %1901 = vmatpush1.bf16.msra.mxu0 0
        %1902 = vmatprep.subr.bf16.mxu0 0
        %1903 = vmatpush1.bf16.msra.mxu0 %v1887
        %1904 = vmatprep.subr.bf16.mxu0 0
        %1905 = vmatpush1.bf16.msra.mxu0 %v1886
        %1906 = vmatprep.subr.bf16.mxu0 0
        %1907 = vmatpush2.bf16.msra.mxu0 0
        %1908 = vmatprep.subr.bf16.mxu0 0
        %1909 = vmatpush2.bf16.msra.mxu0 0
        %1910 = vmatprep.subr.bf16.mxu0 0
        %1911 = vmatpush2.bf16.msra.mxu0 0
        %1912 = vmatprep.subr.bf16.mxu0 0
        %1913 = vmatpush2.bf16.msra.mxu0 0
        %1914 = vmatprep.subr.bf16.mxu0 0
        %1915 = vmatpush2.bf16.msra.mxu0 0
        %1916 = vmatprep.subr.bf16.mxu0 0
        %1917 = vmatpush2.bf16.msra.mxu0 0
        %1918 = vmatprep.subr.bf16.mxu0 0
        %1919 = vmatpush2.bf16.msra.mxu0 0
        %1920 = vmatprep.subr.bf16.mxu0 0
        %1921 = vmatpush2.bf16.msra.mxu0 0
        %1922 = vmatprep.mubr.bf16.mxu0 0
        %1923 = vmatmul.mubr.bf16.gmra.mxu0 %v1213
        %v1924 = vpop.f32.mrf.mxu0
        %v1925 = vadd.f32 %v1876, %v1924
        %v1926 = vpop.f32.mrf.mxu0
        %v1927 = vpop.f32.mrf.mxu0
        %v1928 = vpop.f32.mrf.mxu0
        %1929 = vdwg.mxu0
        %v1930 = vpack.c.bf16 %v1925, %v1925
        %s1931 = scalar_lea.vmem [#allocation3], 12
        %v1932 = vld [vmem:[%s1931] sm:$0xf]
        %v1934 = vsel %vm1263, %v1930, 0
        %v1937 = vsel %vm1263, %v1932, 0
        %1939 = vmatprep.subr.bf16.mxu0 0
        %1940 = vmatpush1.bf16.xpose.msra.mxu0 0
        %1941 = vmatprep.subr.bf16.mxu0 0
        %1942 = vmatpush1.bf16.xpose.msra.mxu0 0
        %1943 = vmatprep.subr.bf16.mxu0 0
        %1944 = vmatpush1.bf16.xpose.msra.mxu0 0
        %1945 = vmatprep.subr.bf16.mxu0 0
        %1946 = vmatpush1.bf16.xpose.msra.mxu0 0
        %1947 = vmatprep.subr.bf16.mxu0 0
        %1948 = vmatpush1.bf16.xpose.msra.mxu0 0
        %1949 = vmatprep.subr.bf16.mxu0 0
        %1950 = vmatpush1.bf16.xpose.msra.mxu0 0
        %1951 = vmatprep.subr.bf16.mxu0 0
        %1952 = vmatpush1.bf16.xpose.msra.mxu0 0
        %1953 = vmatprep.subr.bf16.mxu0 0
        %1954 = vmatpush1.bf16.xpose.msra.mxu0 %v1937
        %1955 = vmatprep.subr.bf16.mxu0 0
        %1956 = vmatpush2.bf16.xpose.msra.mxu0 0
        %1957 = vmatprep.subr.bf16.mxu0 0
        %1958 = vmatpush2.bf16.xpose.msra.mxu0 0
        %1959 = vmatprep.subr.bf16.mxu0 0
        %1960 = vmatpush2.bf16.xpose.msra.mxu0 0
        %1961 = vmatprep.subr.bf16.mxu0 0
        %1962 = vmatpush2.bf16.xpose.msra.mxu0 0
        %1963 = vmatprep.subr.bf16.mxu0 0
        %1964 = vmatpush2.bf16.xpose.msra.mxu0 0
        %1965 = vmatprep.subr.bf16.mxu0 0
        %1966 = vmatpush2.bf16.xpose.msra.mxu0 0
        %1967 = vmatprep.subr.bf16.mxu0 0
        %1968 = vmatpush2.bf16.xpose.msra.mxu0 0
        %1969 = vmatprep.subr.bf16.mxu0 0
        %1970 = vmatpush2.bf16.xpose.msra.mxu0 0
        %1971 = vmatprep.mubr.bf16.mxu0 0
        %1972 = vmatmul.mubr.bf16.gmra.mxu0 %v1934
        %v1973 = vpop.f32.mrf.mxu0
        %v1974 = vadd.f32 %v1261, %v1973
        %v1975 = vpop.f32.mrf.mxu0
        %v1976 = vpop.f32.mrf.mxu0
        %v1977 = vpop.f32.mrf.mxu0
        %1978 = vdwg.mxu0
        %v1979 = vsel %vm1263, %v1974, -inf
        %1980 = vmax.xlane.f32.xlu0 %v1979
        %v1981 = vpop.xlane.xlu0 %1980
        %v1982 = vsub.f32 %v1974, %v1981
        %v1983 = vmul.f32 %v1982, 1.442695
        %v1984 = vpow.pop %v1983
        %v1985 = vsel %vm1263, %v1984, 0.0
        %1986 = vadd.xlane.f32.xlu0 %v1985
        %v1987 = vpop.xlane.xlu0 %1986
        %v1988 = vpack.c.bf16 %v1984, %v1984
        %s1989 = scalar_lea.vmem [#allocation4], 12
        %v1990 = vld [vmem:[%s1989] sm:$0xf]
        %v1992 = vsel %vm1263, %v1988, 0
        %v1995 = vsel %vm1324, %v1990, 0
        %1997 = vmatprep.subr.bf16.mxu0 0
        %1998 = vmatpush1.bf16.msra.mxu0 0
        %1999 = vmatprep.subr.bf16.mxu0 0
        %2000 = vmatpush1.bf16.msra.mxu0 0
        %2001 = vmatprep.subr.bf16.mxu0 0
        %2002 = vmatpush1.bf16.msra.mxu0 0
        %2003 = vmatprep.subr.bf16.mxu0 0
        %2004 = vmatpush1.bf16.msra.mxu0 0
        %2005 = vmatprep.subr.bf16.mxu0 0
        %2006 = vmatpush1.bf16.msra.mxu0 0
        %2007 = vmatprep.subr.bf16.mxu0 0
        %2008 = vmatpush1.bf16.msra.mxu0 0
        %2009 = vmatprep.subr.bf16.mxu0 0
        %2010 = vmatpush1.bf16.msra.mxu0 0
        %2011 = vmatprep.subr.bf16.mxu0 0
        %2012 = vmatpush1.bf16.msra.mxu0 %v1995
        %2013 = vmatprep.subr.bf16.mxu0 0
        %2014 = vmatpush2.bf16.msra.mxu0 0
        %2015 = vmatprep.subr.bf16.mxu0 0
        %2016 = vmatpush2.bf16.msra.mxu0 0
        %2017 = vmatprep.subr.bf16.mxu0 0
        %2018 = vmatpush2.bf16.msra.mxu0 0
        %2019 = vmatprep.subr.bf16.mxu0 0
        %2020 = vmatpush2.bf16.msra.mxu0 0
        %2021 = vmatprep.subr.bf16.mxu0 0
        %2022 = vmatpush2.bf16.msra.mxu0 0
        %2023 = vmatprep.subr.bf16.mxu0 0
        %2024 = vmatpush2.bf16.msra.mxu0 0
        %2025 = vmatprep.subr.bf16.mxu0 0
        %2026 = vmatpush2.bf16.msra.mxu0 0
        %2027 = vmatprep.subr.bf16.mxu0 0
        %2028 = vmatpush2.bf16.msra.mxu0 0
        %2029 = vmatprep.mubr.bf16.mxu0 0
        %2030 = vmatmul.mubr.bf16.gmra.mxu0 %v1992
        %v2031 = vpop.f32.mrf.mxu0
        %v2032 = vadd.f32 0.0, %v2031
        %v2033 = vpop.f32.mrf.mxu0
        %v2034 = vpop.f32.mrf.mxu0
        %v2035 = vpop.f32.mrf.mxu0
        %2036 = vdwg.mxu0
        %v2037 = vrcp.pop %v1987
        %v2038 = vmul.f32 %v2032, %v2037
        %v2039 = vpack.c.bf16 %v2038, %v2038
        %s2040 = scalar_lea.vmem %s8, 12
        %v2041 = vld [vmem:[%s2040] sm:$0xf]
        %v2043 = vsel %vm1263, %v2039, 0
        %v2046 = vsel %vm1324, %v2041, 0
        %2048 = vmatprep.subr.bf16.mxu0 0
        %2049 = vmatpush1.bf16.msra.mxu0 0
        %2050 = vmatprep.subr.bf16.mxu0 0
        %2051 = vmatpush1.bf16.msra.mxu0 0
        %2052 = vmatprep.subr.bf16.mxu0 0
        %2053 = vmatpush1.bf16.msra.mxu0 0
        %2054 = vmatprep.subr.bf16.mxu0 0
        %2055 = vmatpush1.bf16.msra.mxu0 0
        %2056 = vmatprep.subr.bf16.mxu0 0
        %2057 = vmatpush1.bf16.msra.mxu0 0
        %2058 = vmatprep.subr.bf16.mxu0 0
        %2059 = vmatpush1.bf16.msra.mxu0 0
        %2060 = vmatprep.subr.bf16.mxu0 0
        %2061 = vmatpush1.bf16.msra.mxu0 0
        %2062 = vmatprep.subr.bf16.mxu0 0
        %2063 = vmatpush1.bf16.msra.mxu0 %v2046
        %2064 = vmatprep.subr.bf16.mxu0 0
        %2065 = vmatpush2.bf16.msra.mxu0 0
        %2066 = vmatprep.subr.bf16.mxu0 0
        %2067 = vmatpush2.bf16.msra.mxu0 0
        %2068 = vmatprep.subr.bf16.mxu0 0
        %2069 = vmatpush2.bf16.msra.mxu0 0
        %2070 = vmatprep.subr.bf16.mxu0 0
        %2071 = vmatpush2.bf16.msra.mxu0 0
        %2072 = vmatprep.subr.bf16.mxu0 0
        %2073 = vmatpush2.bf16.msra.mxu0 0
        %2074 = vmatprep.subr.bf16.mxu0 0
        %2075 = vmatpush2.bf16.msra.mxu0 0
        %2076 = vmatprep.subr.bf16.mxu0 0
        %2077 = vmatpush2.bf16.msra.mxu0 0
        %2078 = vmatprep.subr.bf16.mxu0 0
        %2079 = vmatpush2.bf16.msra.mxu0 0
        %2080 = vmatprep.mubr.bf16.mxu0 0
        %2081 = vmatmul.mubr.bf16.gmra.mxu0 %v2043
        %v2082 = vpop.f32.mrf.mxu0
        %v2083 = vadd.f32 0.0, %v2082
        %v2084 = vpop.f32.mrf.mxu0
        %v2085 = vpop.f32.mrf.mxu0
        %v2086 = vpop.f32.mrf.mxu0
        %2087 = vdwg.mxu0
        %v2088 = vadd.f32 %v1864, %v2083
        %s2089 = scalar_lea.vmem %s595, %s600
        %v2090 = vld [vmem:[%s2089] sm:$0xff]
        %v2091 = vadd.f32 %v2090, %v2088
        %v2092 = vld [vmem:[%s9] sm:$0x1]
        %v2094 = vlaneseq
        %v2095 = vshrl.u32 %v2094, 7
        %v2096 = vsub.s32 0, %v2095
        %v2097 = vrot.slane %v2092, %v2096
        %v2099 = vadd.f32 %v2091, %v2097
        %v2100 = vsel %vm1211, %v2099, 0.0
        %2101 = vadd.xlane.f32.xlu0 %v2100
        %v2102 = vpop.xlane.xlu0 %2101
        %v2103 = vrcp.pop 32.0
        %v2104 = vmul.f32 %v2102, %v2103
        %v2105 = vsub.f32 %v2099, %v2104
        %v2106 = vmul.f32 %v2105, %v2105
        %v2107 = vsel %vm1211, %v2106, 0.0
        %2108 = vadd.xlane.f32.xlu0 %v2107
        %v2109 = vpop.xlane.xlu0 %2108
        %v2110 = vmul.f32 %v2109, %v2103
        %v2111 = vadd.f32 %v2110, 1e-05
        %v2112 = vrsqrt.pop %v2111
        %v2113 = vmul.f32 %v2105, %v2112
        %v2114 = vld [vmem:[%s12] sm:$0x1]
        %v2116 = vlaneseq
        %v2117 = vshrl.u32 %v2116, 7
        %v2118 = vsub.s32 0, %v2117
        %v2119 = vrot.slane %v2114, %v2118
        %v2121 = vmul.f32 %v2113, %v2119
        %v2122 = vld [vmem:[%s13] sm:$0x1]
        %v2124 = vlaneseq
        %v2125 = vshrl.u32 %v2124, 7
        %v2126 = vsub.s32 0, %v2125
        %v2127 = vrot.slane %v2122, %v2126
        %v2129 = vadd.f32 %v2121, %v2127
        %v2130 = vpack.c.bf16 %v2129, %v2129
        %v2131 = vld [vmem:[%s14] sm:$0xf]
        %v2132 = vld [vmem:[%s14 + $0x4] sm:$0xf]
        %v2133 = vld [vmem:[%s14 + $0x8] sm:$0xf]
        %v2134 = vld [vmem:[%s14 + $0xc] sm:$0xf]
        %v2135 = vld [vmem:[%s15] sm:$0x1]
        %v2137 = vlaneseq
        %v2138 = vshrl.u32 %v2137, 7
        %v2139 = vsub.s32 0, %v2138
        %v2140 = vrot.slane %v2135, %v2139
        %v2146 = vunpack.c.l.b16 %v2131
        %v2147 = vunpack.c.l.b16 %v2132
        %v2148 = vunpack.c.l.b16 %v2133
        %v2149 = vunpack.c.l.b16 %v2134
        %v2150 = vpack.c.b16 %v2147, %v2146
        %v2151 = vpack.c.b16 %v2149, %v2148
        %v2155 = vsel %vm1211, %v2130, 0
        %2157 = vmatprep.subr.bf16.mxu0 0
        %2158 = vmatpush1.bf16.msra.mxu0 0
        %2159 = vmatprep.subr.bf16.mxu0 0
        %2160 = vmatpush1.bf16.msra.mxu0 0
        %2161 = vmatprep.subr.bf16.mxu0 0
        %2162 = vmatpush1.bf16.msra.mxu0 0
        %2163 = vmatprep.subr.bf16.mxu0 0
        %2164 = vmatpush1.bf16.msra.mxu0 0
        %2165 = vmatprep.subr.bf16.mxu0 0
        %2166 = vmatpush1.bf16.msra.mxu0 0
        %2167 = vmatprep.subr.bf16.mxu0 0
        %2168 = vmatpush1.bf16.msra.mxu0 0
        %2169 = vmatprep.subr.bf16.mxu0 0
        %2170 = vmatpush1.bf16.msra.mxu0 %v2151
        %2171 = vmatprep.subr.bf16.mxu0 0
        %2172 = vmatpush1.bf16.msra.mxu0 %v2150
        %2173 = vmatprep.subr.bf16.mxu0 0
        %2174 = vmatpush2.bf16.msra.mxu0 0
        %2175 = vmatprep.subr.bf16.mxu0 0
        %2176 = vmatpush2.bf16.msra.mxu0 0
        %2177 = vmatprep.subr.bf16.mxu0 0
        %2178 = vmatpush2.bf16.msra.mxu0 0
        %2179 = vmatprep.subr.bf16.mxu0 0
        %2180 = vmatpush2.bf16.msra.mxu0 0
        %2181 = vmatprep.subr.bf16.mxu0 0
        %2182 = vmatpush2.bf16.msra.mxu0 0
        %2183 = vmatprep.subr.bf16.mxu0 0
        %2184 = vmatpush2.bf16.msra.mxu0 0
        %2185 = vmatprep.subr.bf16.mxu0 0
        %2186 = vmatpush2.bf16.msra.mxu0 0
        %2187 = vmatprep.subr.bf16.mxu0 0
        %2188 = vmatpush2.bf16.msra.mxu0 0
        %2189 = vmatprep.mubr.bf16.mxu0 0
        %2190 = vmatmul.mubr.bf16.gmra.mxu0 %v2155
        %v2191 = vpop.f32.mrf.mxu0
        %v2192 = vadd.f32 %v2140, %v2191
        %v2193 = vpop.f32.mrf.mxu0
        %v2194 = vpop.f32.mrf.mxu0
        %v2195 = vpop.f32.mrf.mxu0
        %2196 = vdwg.mxu0
        %v2197 = vmax.f32 %v2192, 0.0
        %v2198 = vpack.c.bf16 %v2197, %v2197
        %v2199 = vld [vmem:[%s16] sm:$0xf]
        %v2200 = vld [vmem:[%s16 + $0x4] sm:$0xf]
        %v2201 = vld [vmem:[%s16 + $0x8] sm:$0xf]
        %v2202 = vld [vmem:[%s16 + $0xc] sm:$0xf]
        %v2203 = vld [vmem:[%s16 + $0x10] sm:$0xf]
        %v2204 = vld [vmem:[%s16 + $0x14] sm:$0xf]
        %v2205 = vld [vmem:[%s16 + $0x18] sm:$0xf]
        %v2206 = vld [vmem:[%s16 + $0x1c] sm:$0xf]
        %v2207 = vld [vmem:[%s17] sm:$0x1]
        %v2209 = vlaneseq
        %v2210 = vshrl.u32 %v2209, 7
        %v2211 = vsub.s32 0, %v2210
        %v2212 = vrot.slane %v2207, %v2211
        %v2222 = vunpack.c.l.b16 %v2199
        %v2223 = vunpack.c.l.b16 %v2200
        %v2224 = vunpack.c.l.b16 %v2201
        %v2225 = vunpack.c.l.b16 %v2202
        %v2226 = vunpack.c.l.b16 %v2203
        %v2227 = vunpack.c.l.b16 %v2204
        %v2228 = vunpack.c.l.b16 %v2205
        %v2229 = vunpack.c.l.b16 %v2206
        %v2230 = vpack.c.b16 %v2223, %v2222
        %v2231 = vpack.c.b16 %v2225, %v2224
        %v2232 = vpack.c.b16 %v2227, %v2226
        %v2233 = vpack.c.b16 %v2229, %v2228
        %vm2238 = vcmask 523264
        %v2240 = vsel %vm2238, %v2198, 0
        %2242 = vmatprep.subr.bf16.mxu0 0
        %2243 = vmatpush1.bf16.msra.mxu0 0
        %2244 = vmatprep.subr.bf16.mxu0 0
        %2245 = vmatpush1.bf16.msra.mxu0 0
        %2246 = vmatprep.subr.bf16.mxu0 0
        %2247 = vmatpush1.bf16.msra.mxu0 0
        %2248 = vmatprep.subr.bf16.mxu0 0
        %2249 = vmatpush1.bf16.msra.mxu0 0
        %2250 = vmatprep.subr.bf16.mxu0 0
        %2251 = vmatpush1.bf16.msra.mxu0 %v2233
        %2252 = vmatprep.subr.bf16.mxu0 0
        %2253 = vmatpush1.bf16.msra.mxu0 %v2232
        %2254 = vmatprep.subr.bf16.mxu0 0
        %2255 = vmatpush1.bf16.msra.mxu0 %v2231
        %2256 = vmatprep.subr.bf16.mxu0 0
        %2257 = vmatpush1.bf16.msra.mxu0 %v2230
        %2258 = vmatprep.subr.bf16.mxu0 0
        %2259 = vmatpush2.bf16.msra.mxu0 0
        %2260 = vmatprep.subr.bf16.mxu0 0
        %2261 = vmatpush2.bf16.msra.mxu0 0
        %2262 = vmatprep.subr.bf16.mxu0 0
        %2263 = vmatpush2.bf16.msra.mxu0 0
        %2264 = vmatprep.subr.bf16.mxu0 0
        %2265 = vmatpush2.bf16.msra.mxu0 0
        %2266 = vmatprep.subr.bf16.mxu0 0
        %2267 = vmatpush2.bf16.msra.mxu0 0
        %2268 = vmatprep.subr.bf16.mxu0 0
        %2269 = vmatpush2.bf16.msra.mxu0 0
        %2270 = vmatprep.subr.bf16.mxu0 0
        %2271 = vmatpush2.bf16.msra.mxu0 0
        %2272 = vmatprep.subr.bf16.mxu0 0
        %2273 = vmatpush2.bf16.msra.mxu0 0
        %2274 = vmatprep.mubr.bf16.mxu0 0
        %2275 = vmatmul.mubr.bf16.gmra.mxu0 %v2240
        %v2276 = vpop.f32.mrf.mxu0
        %v2277 = vadd.f32 %v2212, %v2276
        %v2278 = vpop.f32.mrf.mxu0
        %v2279 = vpop.f32.mrf.mxu0
        %v2280 = vpop.f32.mrf.mxu0
        %2281 = vdwg.mxu0
        %v2282 = vadd.f32 %v2099, %v2277
        %2283 = vst.msk [vmem:[%s591] sm:$0xff] %vm1211, %v2282
        %s2284 = sand.u32 %s442, 1
        %s2285 = scalar_lea.sflag [#allocation6], %s2284
        %s2286 = sand.u32 %s442, 1
        %s2287 = smul.addr %s2286, 8
        %s2288 = scalar_lea.vmem [#allocation5], %s2287
        // Predicated region
        $region97: #{tpu_custom_call.1} parent=91 // pred_check
          %p2289 = pneg %p452
        $region98: #{tpu_custom_call.1} parent=91 // pred_check_branch
          %2291 = sbr.rel (%p2289) target = $region100
        $region99: #{tpu_custom_call.1} parent=91 // pred_region
          %s2293 = ssub.s32 128, 128
          %2294 = vsyncadd %s2285, %s2293
          %s2295 = sadd.s32 %s37, %s36
          %s2296 = smul.addr %s2295, 128
          %s2297 = scalar_lea.hbm %s18, %s2296
          %s2299 = sshll.u32 %s2288, 4
          %s2300 = int_to_ptr.vmem [resolvable:$true] %s2299
          %2302 = dma.vmem_to_hbm [thread:$0]  %s2300, 128, %s2297, %s2285
        $region100: #{tpu_custom_call.1} parent=91 // pred_fallthru
          _
      $region92: #{tpu_custom_call.1} parent=5 // pred_fallthru
        _
      %p2303 = scmp.le.s32.totalorder 2, %s27
      // Predicated region
      $region101: #{tpu_custom_call.1} parent=5 // pred_check
        %p2304 = pneg %p2303
      $region102: #{tpu_custom_call.1} parent=5 // pred_check_branch
        %2306 = sbr.rel (%p2304) target = $region104
      $region103: #{tpu_custom_call.1} parent=5 // pred_region
        %s2307 = ssub.s32 %s27, 2
        // Predicated region
        $region105: #{tpu_custom_call.1} parent=103 // pred_check
          %p2308 = pneg %p458
        $region106: #{tpu_custom_call.1} parent=103 // pred_check_branch
          %2310 = sbr.rel (%p2308) target = $region108
        $region107: #{tpu_custom_call.1} parent=103 // pred_region
          %s2311 = sand.u32 %s443, 1
          %s2312 = scalar_lea.sflag [#allocation6], %s2311
          %s2313 = sand.u32 %s443, 1
          %s2314 = smul.addr %s2313, 8
          %s2315 = scalar_lea.vmem [#allocation5], %s2314
          %2316 = dma.done %s2312, 128
        $region108: #{tpu_custom_call.1} parent=103 // pred_fallthru
          _
      $region104: #{tpu_custom_call.1} parent=5 // pred_fallthru
        _
    $region6: #{tpu_custom_call.1} parent=1 // loop_footer
      %s31 = sadd.s32 1, %s27
    $region7: #{tpu_custom_call.1} parent=1 // loop_footer_branch
      %26 = sbr.rel target = $region3
    $region8: #{tpu_custom_call.1} parent=1 // loop_exit
      _
    %2317 = vsyncpa [#allocation6], 1
    %s2318 = scalar_lea.sflag [#allocation6], 1
    %2319 = vsyncpa %s2318, 1

// kernel: tpu_custom_call.1
$region0: #{tpu_custom_call.1}
  #allocation0 [shape = 'u32[]', space=smem, size = 0x4, offset = 0x4, fixed_abs, tag = 'smem constant byte address 0x4 - core index']
  #allocation1 [shape = 'u32[144,128]{1,0:T(1,128)}', space=vmem, size = 0x12000, scoped, tag = 'internal scratch']
  #allocation2 [shape = 'bf16[8,32]{1,0:T(8,128)(2,1)}', space=vmem, size = 0x800, scoped, tag = 'scratch operand']
  #allocation3 [shape = 'bf16[4,8,8]{2,1,0:T(8,128)(2,1)}', space=vmem, size = 0x2000, scoped, tag = 'scratch operand']
  #allocation4 [shape = 'bf16[4,8,8]{2,1,0:T(8,128)(2,1)}', space=vmem, size = 0x2000, scoped, tag = 'scratch operand']
  %s0 = inlined_call_operand.vmem [shape: f32[2,8,32], index: 0, kind: input, shape index: {}]
  %s1 = inlined_call_operand.vmem [shape: f32[2,1,8], index: 1, kind: input, shape index: {}]
  %s2 = inlined_call_operand.vmem [shape: bf16[4,32,8], index: 2, kind: input, shape index: {}]
  %s3 = inlined_call_operand.vmem [shape: f32[4,1,8], index: 3, kind: input, shape index: {}]
  %s4 = inlined_call_operand.vmem [shape: bf16[4,32,8], index: 4, kind: input, shape index: {}]
  %s5 = inlined_call_operand.vmem [shape: f32[4,1,8], index: 5, kind: input, shape index: {}]
  %s6 = inlined_call_operand.vmem [shape: bf16[4,32,8], index: 6, kind: input, shape index: {}]
  %s7 = inlined_call_operand.vmem [shape: f32[4,1,8], index: 7, kind: input, shape index: {}]
  %s8 = inlined_call_operand.vmem [shape: bf16[4,8,32], index: 8, kind: input, shape index: {}]
  %s9 = inlined_call_operand.vmem [shape: f32[1,32], index: 9, kind: input, shape index: {}]
  %s10 = inlined_call_operand.vmem [shape: f32[1,32], index: 10, kind: input, shape index: {}]
  %s11 = inlined_call_operand.vmem [shape: f32[1,32], index: 11, kind: input, shape index: {}]
  %s12 = inlined_call_operand.vmem [shape: f32[1,32], index: 12, kind: input, shape index: {}]
  %s13 = inlined_call_operand.vmem [shape: f32[1,32], index: 13, kind: input, shape index: {}]
  %s14 = inlined_call_operand.vmem [shape: bf16[32,64], index: 14, kind: input, shape index: {}]
  %s15 = inlined_call_operand.vmem [shape: f32[1,64], index: 15, kind: input, shape index: {}]
  %s16 = inlined_call_operand.vmem [shape: bf16[64,32], index: 16, kind: input, shape index: {}]
  %s17 = inlined_call_operand.vmem [shape: f32[1,32], index: 17, kind: input, shape index: {}]
  %s18 = inlined_call_operand.hbm [shape: f32[2,8,32], index: 18, kind: output, shape index: {}]
  %s19 = sld [smem:[#allocation0]]
  $region109: #{tpu_custom_call.1} parent=0
    _
  %s21 = ssub.s32 1, %s19
  %s22 = scalar_select 0, %s21, %s19
  $region1: #{tpu_custom_call.1} parent=0
    #allocation5 [shape = 'u8[8192]{0}', space=vmem, size = 0x2000, scoped, tag = 'output window, operand 0']
    #allocation6 [shape = 's32[2]{0}', space=sflag, size = 0x8, scoped, tag = 'scoped memory for tpu_custom_call.1']
    %23 = vsyncpa [#allocation6], 0
    %s24 = scalar_lea.sflag [#allocation6], 1
    %25 = vsyncpa %s24, 0
    loop: start=0, step=1, limit=4
    $region2: #{tpu_custom_call.1} parent=1 // loop_pre_header
      _
    $region3: #{tpu_custom_call.1} parent=1 // loop_header
      %s27 = sphi 0, %s31
      %p28 = scmp.ge.s32.totalorder %s27, 4
      %s34 = sphi 0, %s46
      %s35 = sphi 0, %s42
      %s36 = sphi 0, %s34
      %s37 = sphi 0, %s35
      %s38 = sphi 0, %s36
      %s39 = sphi 0, %s37
      %s49 = sphi 0, %s51
      %s52 = sphi 0, %s49
      %s53 = sphi 0, %s52
      %s69 = sphi 0, %s53
      %s75 = sphi 0, %s77
      %s78 = sphi 0, %s75
      %s79 = sphi 0, %s78
      %s95 = sphi 0, %s79
      %s99 = sphi 0, %s99
      %s101 = sphi 0, %s99
      %s102 = sphi 0, %s101
      %s116 = sphi 0, %s102
      %s120 = sphi 0, %s120
      %s122 = sphi 0, %s120
      %s123 = sphi 0, %s122
      %s137 = sphi 0, %s123
      %s141 = sphi 0, %s141
      %s143 = sphi 0, %s141
      %s144 = sphi 0, %s143
      %s158 = sphi 0, %s144
      %s162 = sphi 0, %s162
      %s164 = sphi 0, %s162
      %s165 = sphi 0, %s164
      %s179 = sphi 0, %s165
      %s183 = sphi 0, %s183
      %s185 = sphi 0, %s183
      %s186 = sphi 0, %s185
      %s200 = sphi 0, %s186
      %s204 = sphi 0, %s204
      %s206 = sphi 0, %s204
      %s207 = sphi 0, %s206
      %s221 = sphi 0, %s207
      %s225 = sphi 0, %s225
      %s227 = sphi 0, %s225
      %s228 = sphi 0, %s227
      %s242 = sphi 0, %s228
      %s246 = sphi 0, %s246
      %s248 = sphi 0, %s246
      %s249 = sphi 0, %s248
      %s263 = sphi 0, %s249
      %s267 = sphi 0, %s267
      %s269 = sphi 0, %s267
      %s270 = sphi 0, %s269
      %s284 = sphi 0, %s270
      %s288 = sphi 0, %s288
      %s290 = sphi 0, %s288
      %s291 = sphi 0, %s290
      %s305 = sphi 0, %s291
      %s309 = sphi 0, %s309
      %s311 = sphi 0, %s309
      %s312 = sphi 0, %s311
      %s326 = sphi 0, %s312
      %s330 = sphi 0, %s330
      %s332 = sphi 0, %s330
      %s333 = sphi 0, %s332
      %s347 = sphi 0, %s333
      %s351 = sphi 0, %s351
      %s353 = sphi 0, %s351
      %s354 = sphi 0, %s353
      %s368 = sphi 0, %s354
      %s372 = sphi 0, %s372
      %s374 = sphi 0, %s372
      %s375 = sphi 0, %s374
      %s389 = sphi 0, %s375
      %s393 = sphi 0, %s393
      %s395 = sphi 0, %s393
      %s396 = sphi 0, %s395
      %s410 = sphi 0, %s396
      %s414 = sphi 0, %s414
      %s416 = sphi 0, %s414
      %s417 = sphi 0, %s416
      %s431 = sphi 0, %s417
      %s439 = sphi 0, %s441
      %s442 = sphi 0, %s439
      %s443 = sphi 0, %s442
      %s459 = sphi 0, %s443
    $region4: #{tpu_custom_call.1} parent=1 // loop_header_branch
      %30 = sbr.rel (%p28) target = $region8
    $region5: #{tpu_custom_call.1} parent=1 // loop_body
      %s32 = ssub.s32 %s27, 1
      %s33 = ssub.s32 %s27, 2
      %s40 = sadd.s32 1, %s35
      %p41 = scmp.ge.s32.totalorder %s40, 1
      %s42 = scalar_select %p41, 0, %s40
      %s43 = sadd.s32 1, %s34
      %s44 = scalar_select %p41, %s43, %s34
      %p45 = scmp.ge.s32.totalorder %s44, 2
      %s46 = scalar_select %p45, 0, %s44
      %s47 = ssub.s32 %s34, %s46
      %p48 = scmp.eq.s32.totalorder %s47, 0
      %s50 = sadd.s32 %s49, 1
      %s51 = scalar_select %p48, %s49, %s50
      %p54 = pneg %p48
      %p55 = scmp.eq.s32.totalorder %s27, 1
      %p56 = por %p54, %p55
      %p57 = scmp.ne.s32.totalorder %s49, %s52
      %p58 = scmp.eq.s32.totalorder %s27, 0
      %p59 = por %p57, %p58
      %p60 = scmp.ne.s32.totalorder %s49, %s52
      %p61 = scmp.eq.s32.totalorder %s32, 1
      %p62 = por %p60, %p61
      %p63 = scmp.ne.s32.totalorder %s52, %s53
      %p64 = scmp.eq.s32.totalorder %s32, 0
      %p65 = por %p63, %p64
      %p66 = scmp.ne.s32.totalorder %s52, %s53
      %p67 = scmp.eq.s32.totalorder %s33, 1
      %p68 = por %p66, %p67
      %p70 = scmp.ne.s32.totalorder %s53, %s69
      %p71 = scmp.eq.s32.totalorder %s33, 0
      %p72 = por %p70, %p71
      %s73 = ssub.s32 %s34, %s46
      %p74 = scmp.eq.s32.totalorder %s73, 0
      %s76 = sadd.s32 %s75, 1
      %s77 = scalar_select %p74, %s75, %s76
      %p80 = pneg %p74
      %p81 = scmp.eq.s32.totalorder %s27, 1
      %p82 = por %p80, %p81
      %p83 = scmp.ne.s32.totalorder %s75, %s78
      %p84 = scmp.eq.s32.totalorder %s27, 0
      %p85 = por %p83, %p84
      %p86 = scmp.ne.s32.totalorder %s75, %s78
      %p87 = scmp.eq.s32.totalorder %s32, 1
      %p88 = por %p86, %p87
      %p89 = scmp.ne.s32.totalorder %s78, %s79
      %p90 = scmp.eq.s32.totalorder %s32, 0
      %p91 = por %p89, %p90
      %p92 = scmp.ne.s32.totalorder %s78, %s79
      %p93 = scmp.eq.s32.totalorder %s33, 1
      %p94 = por %p92, %p93
      %p96 = scmp.ne.s32.totalorder %s79, %s95
      %p97 = scmp.eq.s32.totalorder %s33, 0
      %p98 = por %p96, %p97
      %s100 = sadd.s32 %s99, 1
      %p103 = scmp.eq.s32.totalorder %s27, 1
      %p104 = scmp.ne.s32.totalorder %s99, %s101
      %p105 = scmp.eq.s32.totalorder %s27, 0
      %p106 = por %p104, %p105
      %p107 = scmp.ne.s32.totalorder %s99, %s101
      %p108 = scmp.eq.s32.totalorder %s32, 1
      %p109 = por %p107, %p108
      %p110 = scmp.ne.s32.totalorder %s101, %s102
      %p111 = scmp.eq.s32.totalorder %s32, 0
      %p112 = por %p110, %p111
      %p113 = scmp.ne.s32.totalorder %s101, %s102
      %p114 = scmp.eq.s32.totalorder %s33, 1
      %p115 = por %p113, %p114
      %p117 = scmp.ne.s32.totalorder %s102, %s116
      %p118 = scmp.eq.s32.totalorder %s33, 0
      %p119 = por %p117, %p118
      %s121 = sadd.s32 %s120, 1
      %p124 = scmp.eq.s32.totalorder %s27, 1
      %p125 = scmp.ne.s32.totalorder %s120, %s122
      %p126 = scmp.eq.s32.totalorder %s27, 0
      %p127 = por %p125, %p126
      %p128 = scmp.ne.s32.totalorder %s120, %s122
      %p129 = scmp.eq.s32.totalorder %s32, 1
      %p130 = por %p128, %p129
      %p131 = scmp.ne.s32.totalorder %s122, %s123
      %p132 = scmp.eq.s32.totalorder %s32, 0
      %p133 = por %p131, %p132
      %p134 = scmp.ne.s32.totalorder %s122, %s123
      %p135 = scmp.eq.s32.totalorder %s33, 1
      %p136 = por %p134, %p135
      %p138 = scmp.ne.s32.totalorder %s123, %s137
      %p139 = scmp.eq.s32.totalorder %s33, 0
      %p140 = por %p138, %p139
      %s142 = sadd.s32 %s141, 1
      %p145 = scmp.eq.s32.totalorder %s27, 1
      %p146 = scmp.ne.s32.totalorder %s141, %s143
      %p147 = scmp.eq.s32.totalorder %s27, 0
      %p148 = por %p146, %p147
      %p149 = scmp.ne.s32.totalorder %s141, %s143
      %p150 = scmp.eq.s32.totalorder %s32, 1
      %p151 = por %p149, %p150
      %p152 = scmp.ne.s32.totalorder %s143, %s144
      %p153 = scmp.eq.s32.totalorder %s32, 0
      %p154 = por %p152, %p153
      %p155 = scmp.ne.s32.totalorder %s143, %s144
      %p156 = scmp.eq.s32.totalorder %s33, 1
      %p157 = por %p155, %p156
      %p159 = scmp.ne.s32.totalorder %s144, %s158
      %p160 = scmp.eq.s32.totalorder %s33, 0
      %p161 = por %p159, %p160
      %s163 = sadd.s32 %s162, 1
      %p166 = scmp.eq.s32.totalorder %s27, 1
      %p167 = scmp.ne.s32.totalorder %s162, %s164
      %p168 = scmp.eq.s32.totalorder %s27, 0
      %p169 = por %p167, %p168
      %p170 = scmp.ne.s32.totalorder %s162, %s164
      %p171 = scmp.eq.s32.totalorder %s32, 1
      %p172 = por %p170, %p171
      %p173 = scmp.ne.s32.totalorder %s164, %s165
      %p174 = scmp.eq.s32.totalorder %s32, 0
      %p175 = por %p173, %p174
      %p176 = scmp.ne.s32.totalorder %s164, %s165
      %p177 = scmp.eq.s32.totalorder %s33, 1
      %p178 = por %p176, %p177
      %p180 = scmp.ne.s32.totalorder %s165, %s179
      %p181 = scmp.eq.s32.totalorder %s33, 0
      %p182 = por %p180, %p181
      %s184 = sadd.s32 %s183, 1
      %p187 = scmp.eq.s32.totalorder %s27, 1
      %p188 = scmp.ne.s32.totalorder %s183, %s185
      %p189 = scmp.eq.s32.totalorder %s27, 0
      %p190 = por %p188, %p189
      %p191 = scmp.ne.s32.totalorder %s183, %s185
      %p192 = scmp.eq.s32.totalorder %s32, 1
      %p193 = por %p191, %p192
      %p194 = scmp.ne.s32.totalorder %s185, %s186
      %p195 = scmp.eq.s32.totalorder %s32, 0
      %p196 = por %p194, %p195
      %p197 = scmp.ne.s32.totalorder %s185, %s186
      %p198 = scmp.eq.s32.totalorder %s33, 1
      %p199 = por %p197, %p198
      %p201 = scmp.ne.s32.totalorder %s186, %s200
      %p202 = scmp.eq.s32.totalorder %s33, 0
      %p203 = por %p201, %p202
      %s205 = sadd.s32 %s204, 1
      %p208 = scmp.eq.s32.totalorder %s27, 1
      %p209 = scmp.ne.s32.totalorder %s204, %s206
      %p210 = scmp.eq.s32.totalorder %s27, 0
      %p211 = por %p209, %p210
      %p212 = scmp.ne.s32.totalorder %s204, %s206
      %p213 = scmp.eq.s32.totalorder %s32, 1
      %p214 = por %p212, %p213
      %p215 = scmp.ne.s32.totalorder %s206, %s207
      %p216 = scmp.eq.s32.totalorder %s32, 0
      %p217 = por %p215, %p216
      %p218 = scmp.ne.s32.totalorder %s206, %s207
      %p219 = scmp.eq.s32.totalorder %s33, 1
      %p220 = por %p218, %p219
      %p222 = scmp.ne.s32.totalorder %s207, %s221
      %p223 = scmp.eq.s32.totalorder %s33, 0
      %p224 = por %p222, %p223
      %s226 = sadd.s32 %s225, 1
      %p229 = scmp.eq.s32.totalorder %s27, 1
      %p230 = scmp.ne.s32.totalorder %s225, %s227
      %p231 = scmp.eq.s32.totalorder %s27, 0
      %p232 = por %p230, %p231
      %p233 = scmp.ne.s32.totalorder %s225, %s227
      %p234 = scmp.eq.s32.totalorder %s32, 1
      %p235 = por %p233, %p234
      %p236 = scmp.ne.s32.totalorder %s227, %s228
      %p237 = scmp.eq.s32.totalorder %s32, 0
      %p238 = por %p236, %p237
      %p239 = scmp.ne.s32.totalorder %s227, %s228
      %p240 = scmp.eq.s32.totalorder %s33, 1
      %p241 = por %p239, %p240
      %p243 = scmp.ne.s32.totalorder %s228, %s242
      %p244 = scmp.eq.s32.totalorder %s33, 0
      %p245 = por %p243, %p244
      %s247 = sadd.s32 %s246, 1
      %p250 = scmp.eq.s32.totalorder %s27, 1
      %p251 = scmp.ne.s32.totalorder %s246, %s248
      %p252 = scmp.eq.s32.totalorder %s27, 0
      %p253 = por %p251, %p252
      %p254 = scmp.ne.s32.totalorder %s246, %s248
      %p255 = scmp.eq.s32.totalorder %s32, 1
      %p256 = por %p254, %p255
      %p257 = scmp.ne.s32.totalorder %s248, %s249
      %p258 = scmp.eq.s32.totalorder %s32, 0
      %p259 = por %p257, %p258
      %p260 = scmp.ne.s32.totalorder %s248, %s249
      %p261 = scmp.eq.s32.totalorder %s33, 1
      %p262 = por %p260, %p261
      %p264 = scmp.ne.s32.totalorder %s249, %s263
      %p265 = scmp.eq.s32.totalorder %s33, 0
      %p266 = por %p264, %p265
      %s268 = sadd.s32 %s267, 1
      %p271 = scmp.eq.s32.totalorder %s27, 1
      %p272 = scmp.ne.s32.totalorder %s267, %s269
      %p273 = scmp.eq.s32.totalorder %s27, 0
      %p274 = por %p272, %p273
      %p275 = scmp.ne.s32.totalorder %s267, %s269
      %p276 = scmp.eq.s32.totalorder %s32, 1
      %p277 = por %p275, %p276
      %p278 = scmp.ne.s32.totalorder %s269, %s270
      %p279 = scmp.eq.s32.totalorder %s32, 0
      %p280 = por %p278, %p279
      %p281 = scmp.ne.s32.totalorder %s269, %s270
      %p282 = scmp.eq.s32.totalorder %s33, 1
      %p283 = por %p281, %p282
      %p285 = scmp.ne.s32.totalorder %s270, %s284
      %p286 = scmp.eq.s32.totalorder %s33, 0
      %p287 = por %p285, %p286
      %s289 = sadd.s32 %s288, 1
      %p292 = scmp.eq.s32.totalorder %s27, 1
      %p293 = scmp.ne.s32.totalorder %s288, %s290
      %p294 = scmp.eq.s32.totalorder %s27, 0
      %p295 = por %p293, %p294
      %p296 = scmp.ne.s32.totalorder %s288, %s290
      %p297 = scmp.eq.s32.totalorder %s32, 1
      %p298 = por %p296, %p297
      %p299 = scmp.ne.s32.totalorder %s290, %s291
      %p300 = scmp.eq.s32.totalorder %s32, 0
      %p301 = por %p299, %p300
      %p302 = scmp.ne.s32.totalorder %s290, %s291
      %p303 = scmp.eq.s32.totalorder %s33, 1
      %p304 = por %p302, %p303
      %p306 = scmp.ne.s32.totalorder %s291, %s305
      %p307 = scmp.eq.s32.totalorder %s33, 0
      %p308 = por %p306, %p307
      %s310 = sadd.s32 %s309, 1
      %p313 = scmp.eq.s32.totalorder %s27, 1
      %p314 = scmp.ne.s32.totalorder %s309, %s311
      %p315 = scmp.eq.s32.totalorder %s27, 0
      %p316 = por %p314, %p315
      %p317 = scmp.ne.s32.totalorder %s309, %s311
      %p318 = scmp.eq.s32.totalorder %s32, 1
      %p319 = por %p317, %p318
      %p320 = scmp.ne.s32.totalorder %s311, %s312
      %p321 = scmp.eq.s32.totalorder %s32, 0
      %p322 = por %p320, %p321
      %p323 = scmp.ne.s32.totalorder %s311, %s312
      %p324 = scmp.eq.s32.totalorder %s33, 1
      %p325 = por %p323, %p324
      %p327 = scmp.ne.s32.totalorder %s312, %s326
      %p328 = scmp.eq.s32.totalorder %s33, 0
      %p329 = por %p327, %p328
      %s331 = sadd.s32 %s330, 1
      %p334 = scmp.eq.s32.totalorder %s27, 1
      %p335 = scmp.ne.s32.totalorder %s330, %s332
      %p336 = scmp.eq.s32.totalorder %s27, 0
      %p337 = por %p335, %p336
      %p338 = scmp.ne.s32.totalorder %s330, %s332
      %p339 = scmp.eq.s32.totalorder %s32, 1
      %p340 = por %p338, %p339
      %p341 = scmp.ne.s32.totalorder %s332, %s333
      %p342 = scmp.eq.s32.totalorder %s32, 0
      %p343 = por %p341, %p342
      %p344 = scmp.ne.s32.totalorder %s332, %s333
      %p345 = scmp.eq.s32.totalorder %s33, 1
      %p346 = por %p344, %p345
      %p348 = scmp.ne.s32.totalorder %s333, %s347
      %p349 = scmp.eq.s32.totalorder %s33, 0
      %p350 = por %p348, %p349
      %s352 = sadd.s32 %s351, 1
      %p355 = scmp.eq.s32.totalorder %s27, 1
      %p356 = scmp.ne.s32.totalorder %s351, %s353
      %p357 = scmp.eq.s32.totalorder %s27, 0
      %p358 = por %p356, %p357
      %p359 = scmp.ne.s32.totalorder %s351, %s353
      %p360 = scmp.eq.s32.totalorder %s32, 1
      %p361 = por %p359, %p360
      %p362 = scmp.ne.s32.totalorder %s353, %s354
      %p363 = scmp.eq.s32.totalorder %s32, 0
      %p364 = por %p362, %p363
      %p365 = scmp.ne.s32.totalorder %s353, %s354
      %p366 = scmp.eq.s32.totalorder %s33, 1
      %p367 = por %p365, %p366
      %p369 = scmp.ne.s32.totalorder %s354, %s368
      %p370 = scmp.eq.s32.totalorder %s33, 0
      %p371 = por %p369, %p370
      %s373 = sadd.s32 %s372, 1
      %p376 = scmp.eq.s32.totalorder %s27, 1
      %p377 = scmp.ne.s32.totalorder %s372, %s374
      %p378 = scmp.eq.s32.totalorder %s27, 0
      %p379 = por %p377, %p378
      %p380 = scmp.ne.s32.totalorder %s372, %s374
      %p381 = scmp.eq.s32.totalorder %s32, 1
      %p382 = por %p380, %p381
      %p383 = scmp.ne.s32.totalorder %s374, %s375
      %p384 = scmp.eq.s32.totalorder %s32, 0
      %p385 = por %p383, %p384
      %p386 = scmp.ne.s32.totalorder %s374, %s375
      %p387 = scmp.eq.s32.totalorder %s33, 1
      %p388 = por %p386, %p387
      %p390 = scmp.ne.s32.totalorder %s375, %s389
      %p391 = scmp.eq.s32.totalorder %s33, 0
      %p392 = por %p390, %p391
      %s394 = sadd.s32 %s393, 1
      %p397 = scmp.eq.s32.totalorder %s27, 1
      %p398 = scmp.ne.s32.totalorder %s393, %s395
      %p399 = scmp.eq.s32.totalorder %s27, 0
      %p400 = por %p398, %p399
      %p401 = scmp.ne.s32.totalorder %s393, %s395
      %p402 = scmp.eq.s32.totalorder %s32, 1
      %p403 = por %p401, %p402
      %p404 = scmp.ne.s32.totalorder %s395, %s396
      %p405 = scmp.eq.s32.totalorder %s32, 0
      %p406 = por %p404, %p405
      %p407 = scmp.ne.s32.totalorder %s395, %s396
      %p408 = scmp.eq.s32.totalorder %s33, 1
      %p409 = por %p407, %p408
      %p411 = scmp.ne.s32.totalorder %s396, %s410
      %p412 = scmp.eq.s32.totalorder %s33, 0
      %p413 = por %p411, %p412
      %s415 = sadd.s32 %s414, 1
      %p418 = scmp.eq.s32.totalorder %s27, 1
      %p419 = scmp.ne.s32.totalorder %s414, %s416
      %p420 = scmp.eq.s32.totalorder %s27, 0
      %p421 = por %p419, %p420
      %p422 = scmp.ne.s32.totalorder %s414, %s416
      %p423 = scmp.eq.s32.totalorder %s32, 1
      %p424 = por %p422, %p423
      %p425 = scmp.ne.s32.totalorder %s416, %s417
      %p426 = scmp.eq.s32.totalorder %s32, 0
      %p427 = por %p425, %p426
      %p428 = scmp.ne.s32.totalorder %s416, %s417
      %p429 = scmp.eq.s32.totalorder %s33, 1
      %p430 = por %p428, %p429
      %p432 = scmp.ne.s32.totalorder %s417, %s431
      %p433 = scmp.eq.s32.totalorder %s33, 0
      %p434 = por %p432, %p433
      %s435 = ssub.s32 %s34, %s46
      %s436 = ssub.s32 %s35, %s42
      %s437 = sor.u32 %s435, %s436
      %p438 = scmp.eq.s32.totalorder %s437, 0
      %s440 = sadd.s32 %s439, 1
      %s441 = scalar_select %p438, %s439, %s440
      %p444 = pneg %p438
      %p445 = scmp.eq.s32.totalorder %s27, 1
      %p446 = por %p444, %p445
      %p447 = scmp.ne.s32.totalorder %s439, %s442
      %p448 = scmp.eq.s32.totalorder %s27, 0
      %p449 = por %p447, %p448
      %p450 = scmp.ne.s32.totalorder %s439, %s442
      %p451 = scmp.eq.s32.totalorder %s32, 1
      %p452 = por %p450, %p451
      %p453 = scmp.ne.s32.totalorder %s442, %s443
      %p454 = scmp.eq.s32.totalorder %s32, 0
      %p455 = por %p453, %p454
      %p456 = scmp.ne.s32.totalorder %s442, %s443
      %p457 = scmp.eq.s32.totalorder %s33, 1
      %p458 = por %p456, %p457
      %p460 = scmp.ne.s32.totalorder %s443, %s459
      %p461 = scmp.eq.s32.totalorder %s33, 0
      %p462 = por %p460, %p461
      %p463 = scmp.le.s32.totalorder 1, %s27
      %p464 = scmp.lt.s32.totalorder %s27, 3
      %p465 = pnand %p463, %p464
      %p466 = pneg %p465
      // Predicated region
      $region9: #{tpu_custom_call.1} parent=5 // pred_check
        _
      $region10: #{tpu_custom_call.1} parent=5 // pred_check_branch
        %468 = sbr.rel (%p465) target = $region12
      $region11: #{tpu_custom_call.1} parent=5 // pred_region
        %s469 = ssub.s32 %s27, 1
        // Predicated region
        $region13: #{tpu_custom_call.1} parent=11 // pred_check
          %p470 = pneg %p112
        $region14: #{tpu_custom_call.1} parent=11 // pred_check_branch
          %472 = sbr.rel (%p470) target = $region16
        $region15: #{tpu_custom_call.1} parent=11 // pred_region
          _
        $region16: #{tpu_custom_call.1} parent=11 // pred_fallthru
          _
        // Predicated region
        $region17: #{tpu_custom_call.1} parent=11 // pred_check
          %p473 = pneg %p133
        $region18: #{tpu_custom_call.1} parent=11 // pred_check_branch
          %475 = sbr.rel (%p473) target = $region20
        $region19: #{tpu_custom_call.1} parent=11 // pred_region
          _
        $region20: #{tpu_custom_call.1} parent=11 // pred_fallthru
          _
        // Predicated region
        $region21: #{tpu_custom_call.1} parent=11 // pred_check
          %p476 = pneg %p154
        $region22: #{tpu_custom_call.1} parent=11 // pred_check_branch
          %478 = sbr.rel (%p476) target = $region24
        $region23: #{tpu_custom_call.1} parent=11 // pred_region
          _
        $region24: #{tpu_custom_call.1} parent=11 // pred_fallthru
          _
        // Predicated region
        $region25: #{tpu_custom_call.1} parent=11 // pred_check
          %p479 = pneg %p175
        $region26: #{tpu_custom_call.1} parent=11 // pred_check_branch
          %481 = sbr.rel (%p479) target = $region28
        $region27: #{tpu_custom_call.1} parent=11 // pred_region
          _
        $region28: #{tpu_custom_call.1} parent=11 // pred_fallthru
          _
        // Predicated region
        $region29: #{tpu_custom_call.1} parent=11 // pred_check
          %p482 = pneg %p196
        $region30: #{tpu_custom_call.1} parent=11 // pred_check_branch
          %484 = sbr.rel (%p482) target = $region32
        $region31: #{tpu_custom_call.1} parent=11 // pred_region
          _
        $region32: #{tpu_custom_call.1} parent=11 // pred_fallthru
          _
        // Predicated region
        $region33: #{tpu_custom_call.1} parent=11 // pred_check
          %p485 = pneg %p217
        $region34: #{tpu_custom_call.1} parent=11 // pred_check_branch
          %487 = sbr.rel (%p485) target = $region36
        $region35: #{tpu_custom_call.1} parent=11 // pred_region
          _
        $region36: #{tpu_custom_call.1} parent=11 // pred_fallthru
          _
        // Predicated region
        $region37: #{tpu_custom_call.1} parent=11 // pred_check
          %p488 = pneg %p238
        $region38: #{tpu_custom_call.1} parent=11 // pred_check_branch
          %490 = sbr.rel (%p488) target = $region40
        $region39: #{tpu_custom_call.1} parent=11 // pred_region
          _
        $region40: #{tpu_custom_call.1} parent=11 // pred_fallthru
          _
        // Predicated region
        $region41: #{tpu_custom_call.1} parent=11 // pred_check
          %p491 = pneg %p259
        $region42: #{tpu_custom_call.1} parent=11 // pred_check_branch
          %493 = sbr.rel (%p491) target = $region44
        $region43: #{tpu_custom_call.1} parent=11 // pred_region
          _
        $region44: #{tpu_custom_call.1} parent=11 // pred_fallthru
          _
        // Predicated region
        $region45: #{tpu_custom_call.1} parent=11 // pred_check
          %p494 = pneg %p280
        $region46: #{tpu_custom_call.1} parent=11 // pred_check_branch
          %496 = sbr.rel (%p494) target = $region48
        $region47: #{tpu_custom_call.1} parent=11 // pred_region
          _
        $region48: #{tpu_custom_call.1} parent=11 // pred_fallthru
          _
        // Predicated region
        $region49: #{tpu_custom_call.1} parent=11 // pred_check
          %p497 = pneg %p301
        $region50: #{tpu_custom_call.1} parent=11 // pred_check_branch
          %499 = sbr.rel (%p497) target = $region52
        $region51: #{tpu_custom_call.1} parent=11 // pred_region
          _
        $region52: #{tpu_custom_call.1} parent=11 // pred_fallthru
          _
        // Predicated region
        $region53: #{tpu_custom_call.1} parent=11 // pred_check
          %p500 = pneg %p322
        $region54: #{tpu_custom_call.1} parent=11 // pred_check_branch
          %502 = sbr.rel (%p500) target = $region56
        $region55: #{tpu_custom_call.1} parent=11 // pred_region
          _
        $region56: #{tpu_custom_call.1} parent=11 // pred_fallthru
          _
        // Predicated region
        $region57: #{tpu_custom_call.1} parent=11 // pred_check
          %p503 = pneg %p343
        $region58: #{tpu_custom_call.1} parent=11 // pred_check_branch
          %505 = sbr.rel (%p503) target = $region60
        $region59: #{tpu_custom_call.1} parent=11 // pred_region
          _
        $region60: #{tpu_custom_call.1} parent=11 // pred_fallthru
          _
        // Predicated region
        $region61: #{tpu_custom_call.1} parent=11 // pred_check
          %p506 = pneg %p364
        $region62: #{tpu_custom_call.1} parent=11 // pred_check_branch
          %508 = sbr.rel (%p506) target = $region64
        $region63: #{tpu_custom_call.1} parent=11 // pred_region
          _
        $region64: #{tpu_custom_call.1} parent=11 // pred_fallthru
          _
        // Predicated region
        $region65: #{tpu_custom_call.1} parent=11 // pred_check
          %p509 = pneg %p385
        $region66: #{tpu_custom_call.1} parent=11 // pred_check_branch
          %511 = sbr.rel (%p509) target = $region68
        $region67: #{tpu_custom_call.1} parent=11 // pred_region
          _
        $region68: #{tpu_custom_call.1} parent=11 // pred_fallthru
          _
        // Predicated region
        $region69: #{tpu_custom_call.1} parent=11 // pred_check
          %p512 = pneg %p406
        $region70: #{tpu_custom_call.1} parent=11 // pred_check_branch
          %514 = sbr.rel (%p512) target = $region72
        $region71: #{tpu_custom_call.1} parent=11 // pred_region
          _
        $region72: #{tpu_custom_call.1} parent=11 // pred_fallthru
          _
        // Predicated region
        $region73: #{tpu_custom_call.1} parent=11 // pred_check
          %p515 = pneg %p427
        $region74: #{tpu_custom_call.1} parent=11 // pred_check_branch
          %517 = sbr.rel (%p515) target = $region76
        $region75: #{tpu_custom_call.1} parent=11 // pred_region
          _
        $region76: #{tpu_custom_call.1} parent=11 // pred_fallthru
          _
      $region12: #{tpu_custom_call.1} parent=5 // pred_fallthru
        _
      %p518 = scmp.lt.s32.totalorder %s27, 2
      // Predicated region
      $region77: #{tpu_custom_call.1} parent=5 // pred_check
        %p519 = pneg %p518
      $region78: #{tpu_custom_call.1} parent=5 // pred_check_branch
        %521 = sbr.rel (%p519) target = $region80
      $region79: #{tpu_custom_call.1} parent=5 // pred_region
        // Predicated region
        $region81: #{tpu_custom_call.1} parent=79 // pred_check
          %p522 = pneg %p59
        $region82: #{tpu_custom_call.1} parent=79 // pred_check_branch
          %524 = sbr.rel (%p522) target = $region84
        $region83: #{tpu_custom_call.1} parent=79 // pred_region
          %p525 = scmp.lt.s32.totalorder %s34, 1
          %s526 = scalar_select %p525, %s34, 1
          %s527 = smul.addr %s526, 8
          %s528 = scalar_lea.vmem %s0, %s527
        $region84: #{tpu_custom_call.1} parent=79 // pred_fallthru
          _
        // Predicated region
        $region85: #{tpu_custom_call.1} parent=79 // pred_check
          %p529 = pneg %p85
        $region86: #{tpu_custom_call.1} parent=79 // pred_check_branch
          %531 = sbr.rel (%p529) target = $region88
        $region87: #{tpu_custom_call.1} parent=79 // pred_region
          %p532 = scmp.lt.s32.totalorder %s34, 1
          %s533 = scalar_select %p532, %s34, 1
          %s534 = scalar_lea.vmem %s1, %s533
        $region88: #{tpu_custom_call.1} parent=79 // pred_fallthru
          _
      $region80: #{tpu_custom_call.1} parent=5 // pred_fallthru
        _
      %p535 = scmp.le.s32.totalorder 1, %s27
      %p536 = scmp.lt.s32.totalorder %s27, 3
      %p537 = pnand %p535, %p536
      %p538 = pneg %p537
      // Predicated region
      $region89: #{tpu_custom_call.1} parent=5 // pred_check
        _
      $region90: #{tpu_custom_call.1} parent=5 // pred_check_branch
        %540 = sbr.rel (%p537) target = $region92
      $region91: #{tpu_custom_call.1} parent=5 // pred_region
        %s541 = ssub.s32 %s27, 1
        %p542 = scmp.lt.s32.totalorder %s36, 1
        %s543 = scalar_select %p542, %s36, 1
        %s544 = smul.addr %s543, 8
        %s545 = scalar_lea.vmem %s0, %s544
        %p546 = pneg %p65
        %p547 = pneg %p62
        %p548 = scmp.lt.s32.totalorder %s36, 1
        %s549 = scalar_select %p548, %s36, 1
        %s550 = scalar_lea.vmem %s1, %s549
        %p551 = pneg %p91
        %p552 = pneg %p88
        %p553 = pneg %p112
        %p554 = pneg %p109
        %p555 = pneg %p133
        %p556 = pneg %p130
        %p557 = pneg %p154
        %p558 = pneg %p151
        %p559 = pneg %p175
        %p560 = pneg %p172
        %p561 = pneg %p196
        %p562 = pneg %p193
        %p563 = pneg %p217
        %p564 = pneg %p214
        %p565 = pneg %p238
        %p566 = pneg %p235
        %p567 = pneg %p259
        %p568 = pneg %p256
        %p569 = pneg %p280
        %p570 = pneg %p277
        %p571 = pneg %p301
        %p572 = pneg %p298
        %p573 = pneg %p322
        %p574 = pneg %p319
        %p575 = pneg %p343
        %p576 = pneg %p340
        %p577 = pneg %p364
        %p578 = pneg %p361
        %p579 = pneg %p385
        %p580 = pneg %p382
        %p581 = pneg %p406
        %p582 = pneg %p403
        %p583 = pneg %p427
        %p584 = pneg %p424
        %p585 = pneg %p455
        %p586 = pneg %p452
        %s587 = sand.u32 %s442, 1
        %s588 = scalar_lea.sflag [#allocation6], %s587
        %s589 = sand.u32 %s442, 1
        %s590 = smul.addr %s589, 8
        %s591 = scalar_lea.vmem [#allocation5], %s590
        %p592 = scmp.lt.s32.totalorder %s36, 1
        %s593 = scalar_select %p592, %s36, 1
        %s594 = smul.addr %s593, 8
        %s595 = scalar_lea.vmem %s0, %s594
        %p596 = scmp.lt.s32.totalorder %s36, 1
        %s597 = scalar_select %p596, %s36, 1
        %s598 = scalar_lea.vmem %s1, %s597
        %s600 = smul.u32 %s37, 8
        %p601 = scmp.eq.s32.totalorder %s37, 0
        // Predicated region
        $region93: #{tpu_custom_call.1} parent=91 // pred_check
          %p602 = pneg %p601
        $region94: #{tpu_custom_call.1} parent=91 // pred_check_branch
          %604 = sbr.rel (%p602) target = $region96
        $region95: #{tpu_custom_call.1} parent=91 // pred_region
          %v605 = vld [vmem:[%s595] sm:$0xff]
          %vm606 = vcmask 261120
          %v607 = vsel %vm606, %v605, 0.0
          %608 = vadd.xlane.f32.xlu0 %v607
          %v609 = vpop.xlane.xlu0 %608
          %v610 = vrcp.pop 32.0
          %v611 = vmul.f32 %v609, %v610
          %v612 = vsub.f32 %v605, %v611
          %v613 = vmul.f32 %v612, %v612
          %v614 = vsel %vm606, %v613, 0.0
          %615 = vadd.xlane.f32.xlu0 %v614
          %v616 = vpop.xlane.xlu0 %615
          %v617 = vmul.f32 %v616, %v610
          %v618 = vadd.f32 %v617, 1e-05
          %v619 = vrsqrt.pop %v618
          %v620 = vmul.f32 %v612, %v619
          %v621 = vld [vmem:[%s10] sm:$0x1]
          %v623 = vlaneseq
          %v624 = vshrl.u32 %v623, 7
          %v625 = vsub.s32 0, %v624
          %v626 = vrot.slane %v621, %v625
          %v628 = vmul.f32 %v620, %v626
          %v629 = vld [vmem:[%s11] sm:$0x1]
          %v631 = vlaneseq
          %v632 = vshrl.u32 %v631, 7
          %v633 = vsub.s32 0, %v632
          %v634 = vrot.slane %v629, %v633
          %v636 = vadd.f32 %v628, %v634
          %v637 = vpack.c.bf16 %v636, %v636
          %vm638 = vcmask 257024
          %639 = vst.msk [vmem:[#allocation2] sm:$0xf] %vm638, %v637
          %v640 = vld [vmem:[%s4] sm:$0xf]
          %v641 = vld [vmem:[%s4 + $0x4] sm:$0xf]
          %v642 = vld [vmem:[%s4 + $0x8] sm:$0xf]
          %v643 = vld [vmem:[%s4 + $0xc] sm:$0xf]
          %v644 = vld [vmem:[%s5] sm:$0x1]
          %v646 = vlaneseq
          %v647 = vshrl.u32 %v646, 7
          %v648 = vsub.s32 0, %v647
          %v649 = vrot.slane %v644, %v648
          %v655 = vunpack.c.l.b16 %v640
          %v656 = vunpack.c.l.b16 %v641
          %v657 = vunpack.c.l.b16 %v642
          %v658 = vunpack.c.l.b16 %v643
          %v659 = vpack.c.b16 %v656, %v655
          %v660 = vpack.c.b16 %v658, %v657
          %v664 = vsel %vm606, %v637, 0
          %666 = vmatprep.subr.bf16.mxu0 0
          %667 = vmatpush1.bf16.msra.mxu0 0
          %668 = vmatprep.subr.bf16.mxu0 0
          %669 = vmatpush1.bf16.msra.mxu0 0
          %670 = vmatprep.subr.bf16.mxu0 0
          %671 = vmatpush1.bf16.msra.mxu0 0
          %672 = vmatprep.subr.bf16.mxu0 0
          %673 = vmatpush1.bf16.msra.mxu0 0
          %674 = vmatprep.subr.bf16.mxu0 0
          %675 = vmatpush1.bf16.msra.mxu0 0
          %676 = vmatprep.subr.bf16.mxu0 0
          %677 = vmatpush1.bf16.msra.mxu0 0
          %678 = vmatprep.subr.bf16.mxu0 0
          %679 = vmatpush1.bf16.msra.mxu0 %v660
          %680 = vmatprep.subr.bf16.mxu0 0
          %681 = vmatpush1.bf16.msra.mxu0 %v659
          %682 = vmatprep.subr.bf16.mxu0 0
          %683 = vmatpush2.bf16.msra.mxu0 0
          %684 = vmatprep.subr.bf16.mxu0 0
          %685 = vmatpush2.bf16.msra.mxu0 0
          %686 = vmatprep.subr.bf16.mxu0 0
          %687 = vmatpush2.bf16.msra.mxu0 0
          %688 = vmatprep.subr.bf16.mxu0 0
          %689 = vmatpush2.bf16.msra.mxu0 0
          %690 = vmatprep.subr.bf16.mxu0 0
          %691 = vmatpush2.bf16.msra.mxu0 0
          %692 = vmatprep.subr.bf16.mxu0 0
          %693 = vmatpush2.bf16.msra.mxu0 0
          %694 = vmatprep.subr.bf16.mxu0 0
          %695 = vmatpush2.bf16.msra.mxu0 0
          %696 = vmatprep.subr.bf16.mxu0 0
          %697 = vmatpush2.bf16.msra.mxu0 0
          %698 = vmatprep.mubr.bf16.mxu0 0
          %699 = vmatmul.mubr.bf16.gmra.mxu0 %v664
          %v700 = vpop.f32.mrf.mxu0
          %v701 = vadd.f32 %v649, %v700
          %v702 = vpop.f32.mrf.mxu0
          %v703 = vpop.f32.mrf.mxu0
          %v704 = vpop.f32.mrf.mxu0
          %705 = vdwg.mxu0
          %v706 = vpack.c.bf16 %v701, %v701
          %vm707 = vcmask 60416
          %708 = vst.msk [vmem:[#allocation3] sm:$0xf] %vm707, %v706
          %v709 = vld [vmem:[%s6] sm:$0xf]
          %v710 = vld [vmem:[%s6 + $0x4] sm:$0xf]
          %v711 = vld [vmem:[%s6 + $0x8] sm:$0xf]
          %v712 = vld [vmem:[%s6 + $0xc] sm:$0xf]
          %v713 = vld [vmem:[%s7] sm:$0x1]
          %v715 = vlaneseq
          %v716 = vshrl.u32 %v715, 7
          %v717 = vsub.s32 0, %v716
          %v718 = vrot.slane %v713, %v717
          %v724 = vunpack.c.l.b16 %v709
          %v725 = vunpack.c.l.b16 %v710
          %v726 = vunpack.c.l.b16 %v711
          %v727 = vunpack.c.l.b16 %v712
          %v728 = vpack.c.b16 %v725, %v724
          %v729 = vpack.c.b16 %v727, %v726
          %732 = vmatprep.subr.bf16.mxu0 0
          %733 = vmatpush1.bf16.msra.mxu0 0
          %734 = vmatprep.subr.bf16.mxu0 0
          %735 = vmatpush1.bf16.msra.mxu0 0
          %736 = vmatprep.subr.bf16.mxu0 0
          %737 = vmatpush1.bf16.msra.mxu0 0
          %738 = vmatprep.subr.bf16.mxu0 0
          %739 = vmatpush1.bf16.msra.mxu0 0
          %740 = vmatprep.subr.bf16.mxu0 0
          %741 = vmatpush1.bf16.msra.mxu0 0
          %742 = vmatprep.subr.bf16.mxu0 0
          %743 = vmatpush1.bf16.msra.mxu0 0
          %744 = vmatprep.subr.bf16.mxu0 0
          %745 = vmatpush1.bf16.msra.mxu0 %v729
          %746 = vmatprep.subr.bf16.mxu0 0
          %747 = vmatpush1.bf16.msra.mxu0 %v728
          %748 = vmatprep.subr.bf16.mxu0 0
          %749 = vmatpush2.bf16.msra.mxu0 0
          %750 = vmatprep.subr.bf16.mxu0 0
          %751 = vmatpush2.bf16.msra.mxu0 0
          %752 = vmatprep.subr.bf16.mxu0 0
          %753 = vmatpush2.bf16.msra.mxu0 0
          %754 = vmatprep.subr.bf16.mxu0 0
          %755 = vmatpush2.bf16.msra.mxu0 0
          %756 = vmatprep.subr.bf16.mxu0 0
          %757 = vmatpush2.bf16.msra.mxu0 0
          %758 = vmatprep.subr.bf16.mxu0 0
          %759 = vmatpush2.bf16.msra.mxu0 0
          %760 = vmatprep.subr.bf16.mxu0 0
          %761 = vmatpush2.bf16.msra.mxu0 0
          %762 = vmatprep.subr.bf16.mxu0 0
          %763 = vmatpush2.bf16.msra.mxu0 0
          %764 = vmatprep.mubr.bf16.mxu0 0
          %765 = vmatmul.mubr.bf16.gmra.mxu0 %v664
          %v766 = vpop.f32.mrf.mxu0
          %v767 = vadd.f32 %v718, %v766
          %v768 = vpop.f32.mrf.mxu0
          %v769 = vpop.f32.mrf.mxu0
          %v770 = vpop.f32.mrf.mxu0
          %771 = vdwg.mxu0
          %v772 = vpack.c.bf16 %v767, %v767
          %773 = vst.msk [vmem:[#allocation4] sm:$0xf] %vm707, %v772
          %s774 = scalar_lea.vmem %s4, 16
          %v775 = vld [vmem:[%s774] sm:$0xf]
          %v776 = vld [vmem:[%s774 + $0x4] sm:$0xf]
          %v777 = vld [vmem:[%s774 + $0x8] sm:$0xf]
          %v778 = vld [vmem:[%s774 + $0xc] sm:$0xf]
          %s779 = scalar_lea.vmem %s5, 1
          %v780 = vld [vmem:[%s779] sm:$0x1]
          %v782 = vlaneseq
          %v783 = vshrl.u32 %v782, 7
          %v784 = vsub.s32 0, %v783
          %v785 = vrot.slane %v780, %v784
          %v791 = vunpack.c.l.b16 %v775
          %v792 = vunpack.c.l.b16 %v776
          %v793 = vunpack.c.l.b16 %v777
          %v794 = vunpack.c.l.b16 %v778
          %v795 = vpack.c.b16 %v792, %v791
          %v796 = vpack.c.b16 %v794, %v793
          %799 = vmatprep.subr.bf16.mxu0 0
          %800 = vmatpush1.bf16.msra.mxu0 0
          %801 = vmatprep.subr.bf16.mxu0 0
          %802 = vmatpush1.bf16.msra.mxu0 0
          %803 = vmatprep.subr.bf16.mxu0 0
          %804 = vmatpush1.bf16.msra.mxu0 0
          %805 = vmatprep.subr.bf16.mxu0 0
          %806 = vmatpush1.bf16.msra.mxu0 0
          %807 = vmatprep.subr.bf16.mxu0 0
          %808 = vmatpush1.bf16.msra.mxu0 0
          %809 = vmatprep.subr.bf16.mxu0 0
          %810 = vmatpush1.bf16.msra.mxu0 0
          %811 = vmatprep.subr.bf16.mxu0 0
          %812 = vmatpush1.bf16.msra.mxu0 %v796
          %813 = vmatprep.subr.bf16.mxu0 0
          %814 = vmatpush1.bf16.msra.mxu0 %v795
          %815 = vmatprep.subr.bf16.mxu0 0
          %816 = vmatpush2.bf16.msra.mxu0 0
          %817 = vmatprep.subr.bf16.mxu0 0
          %818 = vmatpush2.bf16.msra.mxu0 0
          %819 = vmatprep.subr.bf16.mxu0 0
          %820 = vmatpush2.bf16.msra.mxu0 0
          %821 = vmatprep.subr.bf16.mxu0 0
          %822 = vmatpush2.bf16.msra.mxu0 0
          %823 = vmatprep.subr.bf16.mxu0 0
          %824 = vmatpush2.bf16.msra.mxu0 0
          %825 = vmatprep.subr.bf16.mxu0 0
          %826 = vmatpush2.bf16.msra.mxu0 0
          %827 = vmatprep.subr.bf16.mxu0 0
          %828 = vmatpush2.bf16.msra.mxu0 0
          %829 = vmatprep.subr.bf16.mxu0 0
          %830 = vmatpush2.bf16.msra.mxu0 0
          %831 = vmatprep.mubr.bf16.mxu0 0
          %832 = vmatmul.mubr.bf16.gmra.mxu0 %v664
          %v833 = vpop.f32.mrf.mxu0
          %v834 = vadd.f32 %v785, %v833
          %v835 = vpop.f32.mrf.mxu0
          %v836 = vpop.f32.mrf.mxu0
          %v837 = vpop.f32.mrf.mxu0
          %838 = vdwg.mxu0
          %v839 = vpack.c.bf16 %v834, %v834
          %s840 = scalar_lea.vmem [#allocation3], 4
          %841 = vst.msk [vmem:[%s840] sm:$0xf] %vm707, %v839
          %s842 = scalar_lea.vmem %s6, 16
          %v843 = vld [vmem:[%s842] sm:$0xf]
          %v844 = vld [vmem:[%s842 + $0x4] sm:$0xf]
          %v845 = vld [vmem:[%s842 + $0x8] sm:$0xf]
          %v846 = vld [vmem:[%s842 + $0xc] sm:$0xf]
          %s847 = scalar_lea.vmem %s7, 1
          %v848 = vld [vmem:[%s847] sm:$0x1]
          %v850 = vlaneseq
          %v851 = vshrl.u32 %v850, 7
          %v852 = vsub.s32 0, %v851
          %v853 = vrot.slane %v848, %v852
          %v859 = vunpack.c.l.b16 %v843
          %v860 = vunpack.c.l.b16 %v844
          %v861 = vunpack.c.l.b16 %v845
          %v862 = vunpack.c.l.b16 %v846
          %v863 = vpack.c.b16 %v860, %v859
          %v864 = vpack.c.b16 %v862, %v861
          %867 = vmatprep.subr.bf16.mxu0 0
          %868 = vmatpush1.bf16.msra.mxu0 0
          %869 = vmatprep.subr.bf16.mxu0 0
          %870 = vmatpush1.bf16.msra.mxu0 0
          %871 = vmatprep.subr.bf16.mxu0 0
          %872 = vmatpush1.bf16.msra.mxu0 0
          %873 = vmatprep.subr.bf16.mxu0 0
          %874 = vmatpush1.bf16.msra.mxu0 0
          %875 = vmatprep.subr.bf16.mxu0 0
          %876 = vmatpush1.bf16.msra.mxu0 0
          %877 = vmatprep.subr.bf16.mxu0 0
          %878 = vmatpush1.bf16.msra.mxu0 0
          %879 = vmatprep.subr.bf16.mxu0 0
          %880 = vmatpush1.bf16.msra.mxu0 %v864
          %881 = vmatprep.subr.bf16.mxu0 0
          %882 = vmatpush1.bf16.msra.mxu0 %v863
          %883 = vmatprep.subr.bf16.mxu0 0
          %884 = vmatpush2.bf16.msra.mxu0 0
          %885 = vmatprep.subr.bf16.mxu0 0
          %886 = vmatpush2.bf16.msra.mxu0 0
          %887 = vmatprep.subr.bf16.mxu0 0
          %888 = vmatpush2.bf16.msra.mxu0 0
          %889 = vmatprep.subr.bf16.mxu0 0
          %890 = vmatpush2.bf16.msra.mxu0 0
          %891 = vmatprep.subr.bf16.mxu0 0
          %892 = vmatpush2.bf16.msra.mxu0 0
          %893 = vmatprep.subr.bf16.mxu0 0
          %894 = vmatpush2.bf16.msra.mxu0 0
          %895 = vmatprep.subr.bf16.mxu0 0
          %896 = vmatpush2.bf16.msra.mxu0 0
          %897 = vmatprep.subr.bf16.mxu0 0
          %898 = vmatpush2.bf16.msra.mxu0 0
          %899 = vmatprep.mubr.bf16.mxu0 0
          %900 = vmatmul.mubr.bf16.gmra.mxu0 %v664
          %v901 = vpop.f32.mrf.mxu0
          %v902 = vadd.f32 %v853, %v901
          %v903 = vpop.f32.mrf.mxu0
          %v904 = vpop.f32.mrf.mxu0
          %v905 = vpop.f32.mrf.mxu0
          %906 = vdwg.mxu0
          %v907 = vpack.c.bf16 %v902, %v902
          %s908 = scalar_lea.vmem [#allocation4], 4
          %909 = vst.msk [vmem:[%s908] sm:$0xf] %vm707, %v907
          %s910 = scalar_lea.vmem %s4, 32
          %v911 = vld [vmem:[%s910] sm:$0xf]
          %v912 = vld [vmem:[%s910 + $0x4] sm:$0xf]
          %v913 = vld [vmem:[%s910 + $0x8] sm:$0xf]
          %v914 = vld [vmem:[%s910 + $0xc] sm:$0xf]
          %s915 = scalar_lea.vmem %s5, 2
          %v916 = vld [vmem:[%s915] sm:$0x1]
          %v918 = vlaneseq
          %v919 = vshrl.u32 %v918, 7
          %v920 = vsub.s32 0, %v919
          %v921 = vrot.slane %v916, %v920
          %v927 = vunpack.c.l.b16 %v911
          %v928 = vunpack.c.l.b16 %v912
          %v929 = vunpack.c.l.b16 %v913
          %v930 = vunpack.c.l.b16 %v914
          %v931 = vpack.c.b16 %v928, %v927
          %v932 = vpack.c.b16 %v930, %v929
          %935 = vmatprep.subr.bf16.mxu0 0
          %936 = vmatpush1.bf16.msra.mxu0 0
          %937 = vmatprep.subr.bf16.mxu0 0
          %938 = vmatpush1.bf16.msra.mxu0 0
          %939 = vmatprep.subr.bf16.mxu0 0
          %940 = vmatpush1.bf16.msra.mxu0 0
          %941 = vmatprep.subr.bf16.mxu0 0
          %942 = vmatpush1.bf16.msra.mxu0 0
          %943 = vmatprep.subr.bf16.mxu0 0
          %944 = vmatpush1.bf16.msra.mxu0 0
          %945 = vmatprep.subr.bf16.mxu0 0
          %946 = vmatpush1.bf16.msra.mxu0 0
          %947 = vmatprep.subr.bf16.mxu0 0
          %948 = vmatpush1.bf16.msra.mxu0 %v932
          %949 = vmatprep.subr.bf16.mxu0 0
          %950 = vmatpush1.bf16.msra.mxu0 %v931
          %951 = vmatprep.subr.bf16.mxu0 0
          %952 = vmatpush2.bf16.msra.mxu0 0
          %953 = vmatprep.subr.bf16.mxu0 0
          %954 = vmatpush2.bf16.msra.mxu0 0
          %955 = vmatprep.subr.bf16.mxu0 0
          %956 = vmatpush2.bf16.msra.mxu0 0
          %957 = vmatprep.subr.bf16.mxu0 0
          %958 = vmatpush2.bf16.msra.mxu0 0
          %959 = vmatprep.subr.bf16.mxu0 0
          %960 = vmatpush2.bf16.msra.mxu0 0
          %961 = vmatprep.subr.bf16.mxu0 0
          %962 = vmatpush2.bf16.msra.mxu0 0
          %963 = vmatprep.subr.bf16.mxu0 0
          %964 = vmatpush2.bf16.msra.mxu0 0
          %965 = vmatprep.subr.bf16.mxu0 0
          %966 = vmatpush2.bf16.msra.mxu0 0
          %967 = vmatprep.mubr.bf16.mxu0 0
          %968 = vmatmul.mubr.bf16.gmra.mxu0 %v664
          %v969 = vpop.f32.mrf.mxu0
          %v970 = vadd.f32 %v921, %v969
          %v971 = vpop.f32.mrf.mxu0
          %v972 = vpop.f32.mrf.mxu0
          %v973 = vpop.f32.mrf.mxu0
          %974 = vdwg.mxu0
          %v975 = vpack.c.bf16 %v970, %v970
          %s976 = scalar_lea.vmem [#allocation3], 8
          %977 = vst.msk [vmem:[%s976] sm:$0xf] %vm707, %v975
          %s978 = scalar_lea.vmem %s6, 32
          %v979 = vld [vmem:[%s978] sm:$0xf]
          %v980 = vld [vmem:[%s978 + $0x4] sm:$0xf]
          %v981 = vld [vmem:[%s978 + $0x8] sm:$0xf]
          %v982 = vld [vmem:[%s978 + $0xc] sm:$0xf]
          %s983 = scalar_lea.vmem %s7, 2
          %v984 = vld [vmem:[%s983] sm:$0x1]
          %v986 = vlaneseq
          %v987 = vshrl.u32 %v986, 7
          %v988 = vsub.s32 0, %v987
          %v989 = vrot.slane %v984, %v988
          %v995 = vunpack.c.l.b16 %v979
          %v996 = vunpack.c.l.b16 %v980
          %v997 = vunpack.c.l.b16 %v981
          %v998 = vunpack.c.l.b16 %v982
          %v999 = vpack.c.b16 %v996, %v995
          %v1000 = vpack.c.b16 %v998, %v997
          %1003 = vmatprep.subr.bf16.mxu0 0
          %1004 = vmatpush1.bf16.msra.mxu0 0
          %1005 = vmatprep.subr.bf16.mxu0 0
          %1006 = vmatpush1.bf16.msra.mxu0 0
          %1007 = vmatprep.subr.bf16.mxu0 0
          %1008 = vmatpush1.bf16.msra.mxu0 0
          %1009 = vmatprep.subr.bf16.mxu0 0
          %1010 = vmatpush1.bf16.msra.mxu0 0
          %1011 = vmatprep.subr.bf16.mxu0 0
          %1012 = vmatpush1.bf16.msra.mxu0 0
          %1013 = vmatprep.subr.bf16.mxu0 0
          %1014 = vmatpush1.bf16.msra.mxu0 0
          %1015 = vmatprep.subr.bf16.mxu0 0
          %1016 = vmatpush1.bf16.msra.mxu0 %v1000
          %1017 = vmatprep.subr.bf16.mxu0 0
          %1018 = vmatpush1.bf16.msra.mxu0 %v999
          %1019 = vmatprep.subr.bf16.mxu0 0
          %1020 = vmatpush2.bf16.msra.mxu0 0
          %1021 = vmatprep.subr.bf16.mxu0 0
          %1022 = vmatpush2.bf16.msra.mxu0 0
          %1023 = vmatprep.subr.bf16.mxu0 0
          %1024 = vmatpush2.bf16.msra.mxu0 0
          %1025 = vmatprep.subr.bf16.mxu0 0
          %1026 = vmatpush2.bf16.msra.mxu0 0
          %1027 = vmatprep.subr.bf16.mxu0 0
          %1028 = vmatpush2.bf16.msra.mxu0 0
          %1029 = vmatprep.subr.bf16.mxu0 0
          %1030 = vmatpush2.bf16.msra.mxu0 0
          %1031 = vmatprep.subr.bf16.mxu0 0
          %1032 = vmatpush2.bf16.msra.mxu0 0
          %1033 = vmatprep.subr.bf16.mxu0 0
          %1034 = vmatpush2.bf16.msra.mxu0 0
          %1035 = vmatprep.mubr.bf16.mxu0 0
          %1036 = vmatmul.mubr.bf16.gmra.mxu0 %v664
          %v1037 = vpop.f32.mrf.mxu0
          %v1038 = vadd.f32 %v989, %v1037
          %v1039 = vpop.f32.mrf.mxu0
          %v1040 = vpop.f32.mrf.mxu0
          %v1041 = vpop.f32.mrf.mxu0
          %1042 = vdwg.mxu0
          %v1043 = vpack.c.bf16 %v1038, %v1038
          %s1044 = scalar_lea.vmem [#allocation4], 8
          %1045 = vst.msk [vmem:[%s1044] sm:$0xf] %vm707, %v1043
          %s1046 = scalar_lea.vmem %s4, 48
          %v1047 = vld [vmem:[%s1046] sm:$0xf]
          %v1048 = vld [vmem:[%s1046 + $0x4] sm:$0xf]
          %v1049 = vld [vmem:[%s1046 + $0x8] sm:$0xf]
          %v1050 = vld [vmem:[%s1046 + $0xc] sm:$0xf]
          %s1051 = scalar_lea.vmem %s5, 3
          %v1052 = vld [vmem:[%s1051] sm:$0x1]
          %v1054 = vlaneseq
          %v1055 = vshrl.u32 %v1054, 7
          %v1056 = vsub.s32 0, %v1055
          %v1057 = vrot.slane %v1052, %v1056
          %v1063 = vunpack.c.l.b16 %v1047
          %v1064 = vunpack.c.l.b16 %v1048
          %v1065 = vunpack.c.l.b16 %v1049
          %v1066 = vunpack.c.l.b16 %v1050
          %v1067 = vpack.c.b16 %v1064, %v1063
          %v1068 = vpack.c.b16 %v1066, %v1065
          %1071 = vmatprep.subr.bf16.mxu0 0
          %1072 = vmatpush1.bf16.msra.mxu0 0
          %1073 = vmatprep.subr.bf16.mxu0 0
          %1074 = vmatpush1.bf16.msra.mxu0 0
          %1075 = vmatprep.subr.bf16.mxu0 0
          %1076 = vmatpush1.bf16.msra.mxu0 0
          %1077 = vmatprep.subr.bf16.mxu0 0
          %1078 = vmatpush1.bf16.msra.mxu0 0
          %1079 = vmatprep.subr.bf16.mxu0 0
          %1080 = vmatpush1.bf16.msra.mxu0 0
          %1081 = vmatprep.subr.bf16.mxu0 0
          %1082 = vmatpush1.bf16.msra.mxu0 0
          %1083 = vmatprep.subr.bf16.mxu0 0
          %1084 = vmatpush1.bf16.msra.mxu0 %v1068
          %1085 = vmatprep.subr.bf16.mxu0 0
          %1086 = vmatpush1.bf16.msra.mxu0 %v1067
          %1087 = vmatprep.subr.bf16.mxu0 0
          %1088 = vmatpush2.bf16.msra.mxu0 0
          %1089 = vmatprep.subr.bf16.mxu0 0
          %1090 = vmatpush2.bf16.msra.mxu0 0
          %1091 = vmatprep.subr.bf16.mxu0 0
          %1092 = vmatpush2.bf16.msra.mxu0 0
          %1093 = vmatprep.subr.bf16.mxu0 0
          %1094 = vmatpush2.bf16.msra.mxu0 0
          %1095 = vmatprep.subr.bf16.mxu0 0
          %1096 = vmatpush2.bf16.msra.mxu0 0
          %1097 = vmatprep.subr.bf16.mxu0 0
          %1098 = vmatpush2.bf16.msra.mxu0 0
          %1099 = vmatprep.subr.bf16.mxu0 0
          %1100 = vmatpush2.bf16.msra.mxu0 0
          %1101 = vmatprep.subr.bf16.mxu0 0
          %1102 = vmatpush2.bf16.msra.mxu0 0
          %1103 = vmatprep.mubr.bf16.mxu0 0
          %1104 = vmatmul.mubr.bf16.gmra.mxu0 %v664
          %v1105 = vpop.f32.mrf.mxu0
          %v1106 = vadd.f32 %v1057, %v1105
          %v1107 = vpop.f32.mrf.mxu0
          %v1108 = vpop.f32.mrf.mxu0
          %v1109 = vpop.f32.mrf.mxu0
          %1110 = vdwg.mxu0
          %v1111 = vpack.c.bf16 %v1106, %v1106
          %s1112 = scalar_lea.vmem [#allocation3], 12
          %1113 = vst.msk [vmem:[%s1112] sm:$0xf] %vm707, %v1111
          %s1114 = scalar_lea.vmem %s6, 48
          %v1115 = vld [vmem:[%s1114] sm:$0xf]
          %v1116 = vld [vmem:[%s1114 + $0x4] sm:$0xf]
          %v1117 = vld [vmem:[%s1114 + $0x8] sm:$0xf]
          %v1118 = vld [vmem:[%s1114 + $0xc] sm:$0xf]
          %s1119 = scalar_lea.vmem %s7, 3
          %v1120 = vld [vmem:[%s1119] sm:$0x1]
          %v1122 = vlaneseq
          %v1123 = vshrl.u32 %v1122, 7
          %v1124 = vsub.s32 0, %v1123
          %v1125 = vrot.slane %v1120, %v1124
          %v1131 = vunpack.c.l.b16 %v1115
          %v1132 = vunpack.c.l.b16 %v1116
          %v1133 = vunpack.c.l.b16 %v1117
          %v1134 = vunpack.c.l.b16 %v1118
          %v1135 = vpack.c.b16 %v1132, %v1131
          %v1136 = vpack.c.b16 %v1134, %v1133
          %1139 = vmatprep.subr.bf16.mxu0 0
          %1140 = vmatpush1.bf16.msra.mxu0 0
          %1141 = vmatprep.subr.bf16.mxu0 0
          %1142 = vmatpush1.bf16.msra.mxu0 0
          %1143 = vmatprep.subr.bf16.mxu0 0
          %1144 = vmatpush1.bf16.msra.mxu0 0
          %1145 = vmatprep.subr.bf16.mxu0 0
          %1146 = vmatpush1.bf16.msra.mxu0 0
          %1147 = vmatprep.subr.bf16.mxu0 0
          %1148 = vmatpush1.bf16.msra.mxu0 0
          %1149 = vmatprep.subr.bf16.mxu0 0
          %1150 = vmatpush1.bf16.msra.mxu0 0
          %1151 = vmatprep.subr.bf16.mxu0 0
          %1152 = vmatpush1.bf16.msra.mxu0 %v1136
          %1153 = vmatprep.subr.bf16.mxu0 0
          %1154 = vmatpush1.bf16.msra.mxu0 %v1135
          %1155 = vmatprep.subr.bf16.mxu0 0
          %1156 = vmatpush2.bf16.msra.mxu0 0
          %1157 = vmatprep.subr.bf16.mxu0 0
          %1158 = vmatpush2.bf16.msra.mxu0 0
          %1159 = vmatprep.subr.bf16.mxu0 0
          %1160 = vmatpush2.bf16.msra.mxu0 0
          %1161 = vmatprep.subr.bf16.mxu0 0
          %1162 = vmatpush2.bf16.msra.mxu0 0
          %1163 = vmatprep.subr.bf16.mxu0 0
          %1164 = vmatpush2.bf16.msra.mxu0 0
          %1165 = vmatprep.subr.bf16.mxu0 0
          %1166 = vmatpush2.bf16.msra.mxu0 0
          %1167 = vmatprep.subr.bf16.mxu0 0
          %1168 = vmatpush2.bf16.msra.mxu0 0
          %1169 = vmatprep.subr.bf16.mxu0 0
          %1170 = vmatpush2.bf16.msra.mxu0 0
          %1171 = vmatprep.mubr.bf16.mxu0 0
          %1172 = vmatmul.mubr.bf16.gmra.mxu0 %v664
          %v1173 = vpop.f32.mrf.mxu0
          %v1174 = vadd.f32 %v1125, %v1173
          %v1175 = vpop.f32.mrf.mxu0
          %v1176 = vpop.f32.mrf.mxu0
          %v1177 = vpop.f32.mrf.mxu0
          %1178 = vdwg.mxu0
          %v1179 = vpack.c.bf16 %v1174, %v1174
          %s1180 = scalar_lea.vmem [#allocation4], 12
          %1181 = vst.msk [vmem:[%s1180] sm:$0xf] %vm707, %v1179
        $region96: #{tpu_custom_call.1} parent=91 // pred_fallthru
          _
        %s1182 = sshra.s32 %s600, 3
        %s1183 = sand.u32 %s600, 7
        %s1184 = smul.addr %s1182, 4
        %s1185 = scalar_lea.vmem [#allocation2], %s1184
        %v1186 = vld [vmem:[%s1185] sm:$0xf]
        %v1187 = vld [vmem:[%s598] sm:$0x1]
        %v1188 = vld [vmem:[%s2] sm:$0xf]
        %v1189 = vld [vmem:[%s2 + $0x4] sm:$0xf]
        %v1190 = vld [vmem:[%s2 + $0x8] sm:$0xf]
        %v1191 = vld [vmem:[%s2 + $0xc] sm:$0xf]
        %v1192 = vld [vmem:[%s3] sm:$0x1]
        %v1194 = vlaneseq
        %v1195 = vshrl.u32 %v1194, 7
        %v1196 = vsub.s32 0, %v1195
        %v1197 = vrot.slane %v1192, %v1196
        %v1203 = vunpack.c.l.b16 %v1188
        %v1204 = vunpack.c.l.b16 %v1189
        %v1205 = vunpack.c.l.b16 %v1190
        %v1206 = vunpack.c.l.b16 %v1191
        %v1207 = vpack.c.b16 %v1204, %v1203
        %v1208 = vpack.c.b16 %v1206, %v1205
        %vm1211 = vcmask 261120
        %v1213 = vsel %vm1211, %v1186, 0
        %1215 = vmatprep.subr.bf16.mxu0 0
        %1216 = vmatpush1.bf16.msra.mxu0 0
        %1217 = vmatprep.subr.bf16.mxu0 0
        %1218 = vmatpush1.bf16.msra.mxu0 0
        %1219 = vmatprep.subr.bf16.mxu0 0
        %1220 = vmatpush1.bf16.msra.mxu0 0
        %1221 = vmatprep.subr.bf16.mxu0 0
        %1222 = vmatpush1.bf16.msra.mxu0 0
        %1223 = vmatprep.subr.bf16.mxu0 0
        %1224 = vmatpush1.bf16.msra.mxu0 0
        %1225 = vmatprep.subr.bf16.mxu0 0
        %1226 = vmatpush1.bf16.msra.mxu0 0
        %1227 = vmatprep.subr.bf16.mxu0 0
        %1228 = vmatpush1.bf16.msra.mxu0 %v1208
        %1229 = vmatprep.subr.bf16.mxu0 0
        %1230 = vmatpush1.bf16.msra.mxu0 %v1207
        %1231 = vmatprep.subr.bf16.mxu0 0
        %1232 = vmatpush2.bf16.msra.mxu0 0
        %1233 = vmatprep.subr.bf16.mxu0 0
        %1234 = vmatpush2.bf16.msra.mxu0 0
        %1235 = vmatprep.subr.bf16.mxu0 0
        %1236 = vmatpush2.bf16.msra.mxu0 0
        %1237 = vmatprep.subr.bf16.mxu0 0
        %1238 = vmatpush2.bf16.msra.mxu0 0
        %1239 = vmatprep.subr.bf16.mxu0 0
        %1240 = vmatpush2.bf16.msra.mxu0 0
        %1241 = vmatprep.subr.bf16.mxu0 0
        %1242 = vmatpush2.bf16.msra.mxu0 0
        %1243 = vmatprep.subr.bf16.mxu0 0
        %1244 = vmatpush2.bf16.msra.mxu0 0
        %1245 = vmatprep.subr.bf16.mxu0 0
        %1246 = vmatpush2.bf16.msra.mxu0 0
        %1247 = vmatprep.mubr.bf16.mxu0 0
        %1248 = vmatmul.mubr.bf16.gmra.mxu0 %v1213
        %v1249 = vpop.f32.mrf.mxu0
        %v1250 = vadd.f32 %v1197, %v1249
        %v1251 = vpop.f32.mrf.mxu0
        %v1252 = vpop.f32.mrf.mxu0
        %v1253 = vpop.f32.mrf.mxu0
        %1254 = vdwg.mxu0
        %v1255 = vpack.c.bf16 %v1250, %v1250
        %v1256 = vld [vmem:[#allocation3] sm:$0xf]
        %v1258 = vlaneseq
        %v1259 = vshrl.u32 %v1258, 7
        %v1260 = vsub.s32 0, %v1259
        %v1261 = vrot.slane %v1187, %v1260
        %vm1263 = vcmask 64512
        %v1265 = vsel %vm1263, %v1255, 0
        %v1268 = vsel %vm1263, %v1256, 0
        %1270 = vmatprep.subr.bf16.mxu0 0
        %1271 = vmatpush1.bf16.xpose.msra.mxu0 0
        %1272 = vmatprep.subr.bf16.mxu0 0
        %1273 = vmatpush1.bf16.xpose.msra.mxu0 0
        %1274 = vmatprep.subr.bf16.mxu0 0
        %1275 = vmatpush1.bf16.xpose.msra.mxu0 0
        %1276 = vmatprep.subr.bf16.mxu0 0
        %1277 = vmatpush1.bf16.xpose.msra.mxu0 0
        %1278 = vmatprep.subr.bf16.mxu0 0
        %1279 = vmatpush1.bf16.xpose.msra.mxu0 0
        %1280 = vmatprep.subr.bf16.mxu0 0
        %1281 = vmatpush1.bf16.xpose.msra.mxu0 0
        %1282 = vmatprep.subr.bf16.mxu0 0
        %1283 = vmatpush1.bf16.xpose.msra.mxu0 0
        %1284 = vmatprep.subr.bf16.mxu0 0
        %1285 = vmatpush1.bf16.xpose.msra.mxu0 %v1268
        %1286 = vmatprep.subr.bf16.mxu0 0
        %1287 = vmatpush2.bf16.xpose.msra.mxu0 0
        %1288 = vmatprep.subr.bf16.mxu0 0
        %1289 = vmatpush2.bf16.xpose.msra.mxu0 0
        %1290 = vmatprep.subr.bf16.mxu0 0
        %1291 = vmatpush2.bf16.xpose.msra.mxu0 0
        %1292 = vmatprep.subr.bf16.mxu0 0
        %1293 = vmatpush2.bf16.xpose.msra.mxu0 0
        %1294 = vmatprep.subr.bf16.mxu0 0
        %1295 = vmatpush2.bf16.xpose.msra.mxu0 0
        %1296 = vmatprep.subr.bf16.mxu0 0
        %1297 = vmatpush2.bf16.xpose.msra.mxu0 0
        %1298 = vmatprep.subr.bf16.mxu0 0
        %1299 = vmatpush2.bf16.xpose.msra.mxu0 0
        %1300 = vmatprep.subr.bf16.mxu0 0
        %1301 = vmatpush2.bf16.xpose.msra.mxu0 0
        %1302 = vmatprep.mubr.bf16.mxu0 0
        %1303 = vmatmul.mubr.bf16.gmra.mxu0 %v1265
        %v1304 = vpop.f32.mrf.mxu0
        %v1305 = vadd.f32 %v1261, %v1304
        %v1306 = vpop.f32.mrf.mxu0
        %v1307 = vpop.f32.mrf.mxu0
        %v1308 = vpop.f32.mrf.mxu0
        %1309 = vdwg.mxu0
        %v1310 = vsel %vm1263, %v1305, -inf
        %1311 = vmax.xlane.f32.xlu0 %v1310
        %v1312 = vpop.xlane.xlu0 %1311
        %v1313 = vsub.f32 %v1305, %v1312
        %v1314 = vmul.f32 %v1313, 1.442695
        %v1315 = vpow.pop %v1314
        %v1316 = vsel %vm1263, %v1315, 0.0
        %1317 = vadd.xlane.f32.xlu0 %v1316
        %v1318 = vpop.xlane.xlu0 %1317
        %v1319 = vpack.c.bf16 %v1315, %v1315
        %v1320 = vld [vmem:[#allocation4] sm:$0xf]
        %v1322 = vsel %vm1263, %v1319, 0
        %vm1324 = vcmask 1043456
        %v1326 = vsel %vm1324, %v1320, 0
        %1328 = vmatprep.subr.bf16.mxu0 0
        %1329 = vmatpush1.bf16.msra.mxu0 0
        %1330 = vmatprep.subr.bf16.mxu0 0
        %1331 = vmatpush1.bf16.msra.mxu0 0
        %1332 = vmatprep.subr.bf16.mxu0 0
        %1333 = vmatpush1.bf16.msra.mxu0 0
        %1334 = vmatprep.subr.bf16.mxu0 0
        %1335 = vmatpush1.bf16.msra.mxu0 0
        %1336 = vmatprep.subr.bf16.mxu0 0
        %1337 = vmatpush1.bf16.msra.mxu0 0
        %1338 = vmatprep.subr.bf16.mxu0 0
        %1339 = vmatpush1.bf16.msra.mxu0 0
        %1340 = vmatprep.subr.bf16.mxu0 0
        %1341 = vmatpush1.bf16.msra.mxu0 0
        %1342 = vmatprep.subr.bf16.mxu0 0
        %1343 = vmatpush1.bf16.msra.mxu0 %v1326
        %1344 = vmatprep.subr.bf16.mxu0 0
        %1345 = vmatpush2.bf16.msra.mxu0 0
        %1346 = vmatprep.subr.bf16.mxu0 0
        %1347 = vmatpush2.bf16.msra.mxu0 0
        %1348 = vmatprep.subr.bf16.mxu0 0
        %1349 = vmatpush2.bf16.msra.mxu0 0
        %1350 = vmatprep.subr.bf16.mxu0 0
        %1351 = vmatpush2.bf16.msra.mxu0 0
        %1352 = vmatprep.subr.bf16.mxu0 0
        %1353 = vmatpush2.bf16.msra.mxu0 0
        %1354 = vmatprep.subr.bf16.mxu0 0
        %1355 = vmatpush2.bf16.msra.mxu0 0
        %1356 = vmatprep.subr.bf16.mxu0 0
        %1357 = vmatpush2.bf16.msra.mxu0 0
        %1358 = vmatprep.subr.bf16.mxu0 0
        %1359 = vmatpush2.bf16.msra.mxu0 0
        %1360 = vmatprep.mubr.bf16.mxu0 0
        %1361 = vmatmul.mubr.bf16.gmra.mxu0 %v1322
        %v1362 = vpop.f32.mrf.mxu0
        %v1363 = vadd.f32 0.0, %v1362
        %v1364 = vpop.f32.mrf.mxu0
        %v1365 = vpop.f32.mrf.mxu0
        %v1366 = vpop.f32.mrf.mxu0
        %1367 = vdwg.mxu0
        %v1368 = vrcp.pop %v1318
        %v1369 = vmul.f32 %v1363, %v1368
        %v1370 = vpack.c.bf16 %v1369, %v1369
        %v1371 = vld [vmem:[%s8] sm:$0xf]
        %s1372 = scalar_lea.vmem %s2, 16
        %v1373 = vld [vmem:[%s1372] sm:$0xf]
        %v1374 = vld [vmem:[%s1372 + $0x4] sm:$0xf]
        %v1375 = vld [vmem:[%s1372 + $0x8] sm:$0xf]
        %v1376 = vld [vmem:[%s1372 + $0xc] sm:$0xf]
        %s1377 = scalar_lea.vmem %s3, 1
        %v1378 = vld [vmem:[%s1377] sm:$0x1]
        %v1380 = vlaneseq
        %v1381 = vshrl.u32 %v1380, 7
        %v1382 = vsub.s32 0, %v1381
        %v1383 = vrot.slane %v1378, %v1382
        %v1389 = vunpack.c.l.b16 %v1373
        %v1390 = vunpack.c.l.b16 %v1374
        %v1391 = vunpack.c.l.b16 %v1375
        %v1392 = vunpack.c.l.b16 %v1376
        %v1393 = vpack.c.b16 %v1390, %v1389
        %v1394 = vpack.c.b16 %v1392, %v1391
        %1397 = vmatprep.subr.bf16.mxu0 0
        %1398 = vmatpush1.bf16.msra.mxu0 0
        %1399 = vmatprep.subr.bf16.mxu0 0
        %1400 = vmatpush1.bf16.msra.mxu0 0
        %1401 = vmatprep.subr.bf16.mxu0 0
        %1402 = vmatpush1.bf16.msra.mxu0 0
        %1403 = vmatprep.subr.bf16.mxu0 0
        %1404 = vmatpush1.bf16.msra.mxu0 0
        %1405 = vmatprep.subr.bf16.mxu0 0
        %1406 = vmatpush1.bf16.msra.mxu0 0
        %1407 = vmatprep.subr.bf16.mxu0 0
        %1408 = vmatpush1.bf16.msra.mxu0 0
        %1409 = vmatprep.subr.bf16.mxu0 0
        %1410 = vmatpush1.bf16.msra.mxu0 %v1394
        %1411 = vmatprep.subr.bf16.mxu0 0
        %1412 = vmatpush1.bf16.msra.mxu0 %v1393
        %1413 = vmatprep.subr.bf16.mxu0 0
        %1414 = vmatpush2.bf16.msra.mxu0 0
        %1415 = vmatprep.subr.bf16.mxu0 0
        %1416 = vmatpush2.bf16.msra.mxu0 0
        %1417 = vmatprep.subr.bf16.mxu0 0
        %1418 = vmatpush2.bf16.msra.mxu0 0
        %1419 = vmatprep.subr.bf16.mxu0 0
        %1420 = vmatpush2.bf16.msra.mxu0 0
        %1421 = vmatprep.subr.bf16.mxu0 0
        %1422 = vmatpush2.bf16.msra.mxu0 0
        %1423 = vmatprep.subr.bf16.mxu0 0
        %1424 = vmatpush2.bf16.msra.mxu0 0
        %1425 = vmatprep.subr.bf16.mxu0 0
        %1426 = vmatpush2.bf16.msra.mxu0 0
        %1427 = vmatprep.subr.bf16.mxu0 0
        %1428 = vmatpush2.bf16.msra.mxu0 0
        %1429 = vmatprep.mubr.bf16.mxu0 0
        %1430 = vmatmul.mubr.bf16.gmra.mxu0 %v1213
        %v1431 = vpop.f32.mrf.mxu0
        %v1432 = vadd.f32 %v1383, %v1431
        %v1433 = vpop.f32.mrf.mxu0
        %v1434 = vpop.f32.mrf.mxu0
        %v1435 = vpop.f32.mrf.mxu0
        %1436 = vdwg.mxu0
        %v1437 = vpack.c.bf16 %v1432, %v1432
        %s1438 = scalar_lea.vmem [#allocation3], 4
        %v1439 = vld [vmem:[%s1438] sm:$0xf]
        %v1441 = vsel %vm1263, %v1437, 0
        %v1444 = vsel %vm1263, %v1439, 0
        %1446 = vmatprep.subr.bf16.mxu0 0
        %1447 = vmatpush1.bf16.xpose.msra.mxu0 0
        %1448 = vmatprep.subr.bf16.mxu0 0
        %1449 = vmatpush1.bf16.xpose.msra.mxu0 0
        %1450 = vmatprep.subr.bf16.mxu0 0
        %1451 = vmatpush1.bf16.xpose.msra.mxu0 0
        %1452 = vmatprep.subr.bf16.mxu0 0
        %1453 = vmatpush1.bf16.xpose.msra.mxu0 0
        %1454 = vmatprep.subr.bf16.mxu0 0
        %1455 = vmatpush1.bf16.xpose.msra.mxu0 0
        %1456 = vmatprep.subr.bf16.mxu0 0
        %1457 = vmatpush1.bf16.xpose.msra.mxu0 0
        %1458 = vmatprep.subr.bf16.mxu0 0
        %1459 = vmatpush1.bf16.xpose.msra.mxu0 0
        %1460 = vmatprep.subr.bf16.mxu0 0
        %1461 = vmatpush1.bf16.xpose.msra.mxu0 %v1444
        %1462 = vmatprep.subr.bf16.mxu0 0
        %1463 = vmatpush2.bf16.xpose.msra.mxu0 0
        %1464 = vmatprep.subr.bf16.mxu0 0
        %1465 = vmatpush2.bf16.xpose.msra.mxu0 0
        %1466 = vmatprep.subr.bf16.mxu0 0
        %1467 = vmatpush2.bf16.xpose.msra.mxu0 0
        %1468 = vmatprep.subr.bf16.mxu0 0
        %1469 = vmatpush2.bf16.xpose.msra.mxu0 0
        %1470 = vmatprep.subr.bf16.mxu0 0
        %1471 = vmatpush2.bf16.xpose.msra.mxu0 0
        %1472 = vmatprep.subr.bf16.mxu0 0
        %1473 = vmatpush2.bf16.xpose.msra.mxu0 0
        %1474 = vmatprep.subr.bf16.mxu0 0
        %1475 = vmatpush2.bf16.xpose.msra.mxu0 0
        %1476 = vmatprep.subr.bf16.mxu0 0
        %1477 = vmatpush2.bf16.xpose.msra.mxu0 0
        %1478 = vmatprep.mubr.bf16.mxu0 0
        %1479 = vmatmul.mubr.bf16.gmra.mxu0 %v1441
        %v1480 = vpop.f32.mrf.mxu0
        %v1481 = vadd.f32 %v1261, %v1480
        %v1482 = vpop.f32.mrf.mxu0
        %v1483 = vpop.f32.mrf.mxu0
        %v1484 = vpop.f32.mrf.mxu0
        %1485 = vdwg.mxu0
        %v1486 = vsel %vm1263, %v1481, -inf
        %1487 = vmax.xlane.f32.xlu0 %v1486
        %v1488 = vpop.xlane.xlu0 %1487
        %v1489 = vsub.f32 %v1481, %v1488
        %v1490 = vmul.f32 %v1489, 1.442695
        %v1491 = vpow.pop %v1490
        %v1492 = vsel %vm1263, %v1491, 0.0
        %1493 = vadd.xlane.f32.xlu0 %v1492
        %v1494 = vpop.xlane.xlu0 %1493
        %v1495 = vpack.c.bf16 %v1491, %v1491
        %s1496 = scalar_lea.vmem [#allocation4], 4
        %v1497 = vld [vmem:[%s1496] sm:$0xf]
        %v1499 = vsel %vm1263, %v1495, 0
        %v1502 = vsel %vm1324, %v1497, 0
        %1504 = vmatprep.subr.bf16.mxu0 0
        %1505 = vmatpush1.bf16.msra.mxu0 0
        %1506 = vmatprep.subr.bf16.mxu0 0
        %1507 = vmatpush1.bf16.msra.mxu0 0
        %1508 = vmatprep.subr.bf16.mxu0 0
        %1509 = vmatpush1.bf16.msra.mxu0 0
        %1510 = vmatprep.subr.bf16.mxu0 0
        %1511 = vmatpush1.bf16.msra.mxu0 0
        %1512 = vmatprep.subr.bf16.mxu0 0
        %1513 = vmatpush1.bf16.msra.mxu0 0
        %1514 = vmatprep.subr.bf16.mxu0 0
        %1515 = vmatpush1.bf16.msra.mxu0 0
        %1516 = vmatprep.subr.bf16.mxu0 0
        %1517 = vmatpush1.bf16.msra.mxu0 0
        %1518 = vmatprep.subr.bf16.mxu0 0
        %1519 = vmatpush1.bf16.msra.mxu0 %v1502
        %1520 = vmatprep.subr.bf16.mxu0 0
        %1521 = vmatpush2.bf16.msra.mxu0 0
        %1522 = vmatprep.subr.bf16.mxu0 0
        %1523 = vmatpush2.bf16.msra.mxu0 0
        %1524 = vmatprep.subr.bf16.mxu0 0
        %1525 = vmatpush2.bf16.msra.mxu0 0
        %1526 = vmatprep.subr.bf16.mxu0 0
        %1527 = vmatpush2.bf16.msra.mxu0 0
        %1528 = vmatprep.subr.bf16.mxu0 0
        %1529 = vmatpush2.bf16.msra.mxu0 0
        %1530 = vmatprep.subr.bf16.mxu0 0
        %1531 = vmatpush2.bf16.msra.mxu0 0
        %1532 = vmatprep.subr.bf16.mxu0 0
        %1533 = vmatpush2.bf16.msra.mxu0 0
        %1534 = vmatprep.subr.bf16.mxu0 0
        %1535 = vmatpush2.bf16.msra.mxu0 0
        %1536 = vmatprep.mubr.bf16.mxu0 0
        %1537 = vmatmul.mubr.bf16.gmra.mxu0 %v1499
        %v1538 = vpop.f32.mrf.mxu0
        %v1539 = vadd.f32 0.0, %v1538
        %v1540 = vpop.f32.mrf.mxu0
        %v1541 = vpop.f32.mrf.mxu0
        %v1542 = vpop.f32.mrf.mxu0
        %1543 = vdwg.mxu0
        %v1544 = vrcp.pop %v1494
        %v1545 = vmul.f32 %v1539, %v1544
        %v1546 = vpack.c.bf16 %v1545, %v1545
        %s1547 = scalar_lea.vmem %s8, 4
        %v1548 = vld [vmem:[%s1547] sm:$0xf]
        %v1550 = vsel %vm1263, %v1546, 0
        %v1553 = vsel %vm1324, %v1548, 0
        %1555 = vmatprep.subr.bf16.mxu0 0
        %1556 = vmatpush1.bf16.msra.mxu0 0
        %1557 = vmatprep.subr.bf16.mxu0 0
        %1558 = vmatpush1.bf16.msra.mxu0 0
        %1559 = vmatprep.subr.bf16.mxu0 0
        %1560 = vmatpush1.bf16.msra.mxu0 0
        %1561 = vmatprep.subr.bf16.mxu0 0
        %1562 = vmatpush1.bf16.msra.mxu0 0
        %1563 = vmatprep.subr.bf16.mxu0 0
        %1564 = vmatpush1.bf16.msra.mxu0 0
        %1565 = vmatprep.subr.bf16.mxu0 0
        %1566 = vmatpush1.bf16.msra.mxu0 0
        %1567 = vmatprep.subr.bf16.mxu0 0
        %1568 = vmatpush1.bf16.msra.mxu0 0
        %1569 = vmatprep.subr.bf16.mxu0 0
        %1570 = vmatpush1.bf16.msra.mxu0 %v1553
        %1571 = vmatprep.subr.bf16.mxu0 0
        %1572 = vmatpush2.bf16.msra.mxu0 0
        %1573 = vmatprep.subr.bf16.mxu0 0
        %1574 = vmatpush2.bf16.msra.mxu0 0
        %1575 = vmatprep.subr.bf16.mxu0 0
        %1576 = vmatpush2.bf16.msra.mxu0 0
        %1577 = vmatprep.subr.bf16.mxu0 0
        %1578 = vmatpush2.bf16.msra.mxu0 0
        %1579 = vmatprep.subr.bf16.mxu0 0
        %1580 = vmatpush2.bf16.msra.mxu0 0
        %1581 = vmatprep.subr.bf16.mxu0 0
        %1582 = vmatpush2.bf16.msra.mxu0 0
        %1583 = vmatprep.subr.bf16.mxu0 0
        %1584 = vmatpush2.bf16.msra.mxu0 0
        %1585 = vmatprep.subr.bf16.mxu0 0
        %1586 = vmatpush2.bf16.msra.mxu0 0
        %1587 = vmatprep.mubr.bf16.mxu0 0
        %1588 = vmatmul.mubr.bf16.gmra.mxu0 %v1550
        %v1589 = vpop.f32.mrf.mxu0
        %v1590 = vadd.f32 0.0, %v1589
        %v1591 = vpop.f32.mrf.mxu0
        %v1592 = vpop.f32.mrf.mxu0
        %v1593 = vpop.f32.mrf.mxu0
        %1594 = vdwg.mxu0
        %v1596 = vsel %vm1263, %v1370, 0
        %v1599 = vsel %vm1324, %v1371, 0
        %1601 = vmatprep.subr.bf16.mxu0 0
        %1602 = vmatpush1.bf16.msra.mxu0 0
        %1603 = vmatprep.subr.bf16.mxu0 0
        %1604 = vmatpush1.bf16.msra.mxu0 0
        %1605 = vmatprep.subr.bf16.mxu0 0
        %1606 = vmatpush1.bf16.msra.mxu0 0
        %1607 = vmatprep.subr.bf16.mxu0 0
        %1608 = vmatpush1.bf16.msra.mxu0 0
        %1609 = vmatprep.subr.bf16.mxu0 0
        %1610 = vmatpush1.bf16.msra.mxu0 0
        %1611 = vmatprep.subr.bf16.mxu0 0
        %1612 = vmatpush1.bf16.msra.mxu0 0
        %1613 = vmatprep.subr.bf16.mxu0 0
        %1614 = vmatpush1.bf16.msra.mxu0 0
        %1615 = vmatprep.subr.bf16.mxu0 0
        %1616 = vmatpush1.bf16.msra.mxu0 %v1599
        %1617 = vmatprep.subr.bf16.mxu0 0
        %1618 = vmatpush2.bf16.msra.mxu0 0
        %1619 = vmatprep.subr.bf16.mxu0 0
        %1620 = vmatpush2.bf16.msra.mxu0 0
        %1621 = vmatprep.subr.bf16.mxu0 0
        %1622 = vmatpush2.bf16.msra.mxu0 0
        %1623 = vmatprep.subr.bf16.mxu0 0
        %1624 = vmatpush2.bf16.msra.mxu0 0
        %1625 = vmatprep.subr.bf16.mxu0 0
        %1626 = vmatpush2.bf16.msra.mxu0 0
        %1627 = vmatprep.subr.bf16.mxu0 0
        %1628 = vmatpush2.bf16.msra.mxu0 0
        %1629 = vmatprep.subr.bf16.mxu0 0
        %1630 = vmatpush2.bf16.msra.mxu0 0
        %1631 = vmatprep.subr.bf16.mxu0 0
        %1632 = vmatpush2.bf16.msra.mxu0 0
        %1633 = vmatprep.mubr.bf16.mxu0 0
        %1634 = vmatmul.mubr.bf16.gmra.mxu0 %v1596
        %v1635 = vpop.f32.mrf.mxu0
        %v1636 = vadd.f32 %v1590, %v1635
        %v1637 = vpop.f32.mrf.mxu0
        %v1638 = vpop.f32.mrf.mxu0
        %v1639 = vpop.f32.mrf.mxu0
        %1640 = vdwg.mxu0
        %s1641 = scalar_lea.vmem %s2, 32
        %v1642 = vld [vmem:[%s1641] sm:$0xf]
        %v1643 = vld [vmem:[%s1641 + $0x4] sm:$0xf]
        %v1644 = vld [vmem:[%s1641 + $0x8] sm:$0xf]
        %v1645 = vld [vmem:[%s1641 + $0xc] sm:$0xf]
        %s1646 = scalar_lea.vmem %s3, 2
        %v1647 = vld [vmem:[%s1646] sm:$0x1]
        %v1649 = vlaneseq
        %v1650 = vshrl.u32 %v1649, 7
        %v1651 = vsub.s32 0, %v1650
        %v1652 = vrot.slane %v1647, %v1651
        %v1658 = vunpack.c.l.b16 %v1642
        %v1659 = vunpack.c.l.b16 %v1643
        %v1660 = vunpack.c.l.b16 %v1644
        %v1661 = vunpack.c.l.b16 %v1645
        %v1662 = vpack.c.b16 %v1659, %v1658
        %v1663 = vpack.c.b16 %v1661, %v1660
        %1666 = vmatprep.subr.bf16.mxu0 0
        %1667 = vmatpush1.bf16.msra.mxu0 0
        %1668 = vmatprep.subr.bf16.mxu0 0
        %1669 = vmatpush1.bf16.msra.mxu0 0
        %1670 = vmatprep.subr.bf16.mxu0 0
        %1671 = vmatpush1.bf16.msra.mxu0 0
        %1672 = vmatprep.subr.bf16.mxu0 0
        %1673 = vmatpush1.bf16.msra.mxu0 0
        %1674 = vmatprep.subr.bf16.mxu0 0
        %1675 = vmatpush1.bf16.msra.mxu0 0
        %1676 = vmatprep.subr.bf16.mxu0 0
        %1677 = vmatpush1.bf16.msra.mxu0 0
        %1678 = vmatprep.subr.bf16.mxu0 0
        %1679 = vmatpush1.bf16.msra.mxu0 %v1663
        %1680 = vmatprep.subr.bf16.mxu0 0
        %1681 = vmatpush1.bf16.msra.mxu0 %v1662
        %1682 = vmatprep.subr.bf16.mxu0 0
        %1683 = vmatpush2.bf16.msra.mxu0 0
        %1684 = vmatprep.subr.bf16.mxu0 0
        %1685 = vmatpush2.bf16.msra.mxu0 0
        %1686 = vmatprep.subr.bf16.mxu0 0
        %1687 = vmatpush2.bf16.msra.mxu0 0
        %1688 = vmatprep.subr.bf16.mxu0 0
        %1689 = vmatpush2.bf16.msra.mxu0 0
        %1690 = vmatprep.subr.bf16.mxu0 0
        %1691 = vmatpush2.bf16.msra.mxu0 0
        %1692 = vmatprep.subr.bf16.mxu0 0
        %1693 = vmatpush2.bf16.msra.mxu0 0
        %1694 = vmatprep.subr.bf16.mxu0 0
        %1695 = vmatpush2.bf16.msra.mxu0 0
        %1696 = vmatprep.subr.bf16.mxu0 0
        %1697 = vmatpush2.bf16.msra.mxu0 0
        %1698 = vmatprep.mubr.bf16.mxu0 0
        %1699 = vmatmul.mubr.bf16.gmra.mxu0 %v1213
        %v1700 = vpop.f32.mrf.mxu0
        %v1701 = vadd.f32 %v1652, %v1700
        %v1702 = vpop.f32.mrf.mxu0
        %v1703 = vpop.f32.mrf.mxu0
        %v1704 = vpop.f32.mrf.mxu0
        %1705 = vdwg.mxu0
        %v1706 = vpack.c.bf16 %v1701, %v1701
        %s1707 = scalar_lea.vmem [#allocation3], 8
        %v1708 = vld [vmem:[%s1707] sm:$0xf]
        %v1710 = vsel %vm1263, %v1706, 0
        %v1713 = vsel %vm1263, %v1708, 0
        %1715 = vmatprep.subr.bf16.mxu0 0
        %1716 = vmatpush1.bf16.xpose.msra.mxu0 0
        %1717 = vmatprep.subr.bf16.mxu0 0
        %1718 = vmatpush1.bf16.xpose.msra.mxu0 0
        %1719 = vmatprep.subr.bf16.mxu0 0
        %1720 = vmatpush1.bf16.xpose.msra.mxu0 0
        %1721 = vmatprep.subr.bf16.mxu0 0
        %1722 = vmatpush1.bf16.xpose.msra.mxu0 0
        %1723 = vmatprep.subr.bf16.mxu0 0
        %1724 = vmatpush1.bf16.xpose.msra.mxu0 0
        %1725 = vmatprep.subr.bf16.mxu0 0
        %1726 = vmatpush1.bf16.xpose.msra.mxu0 0
        %1727 = vmatprep.subr.bf16.mxu0 0
        %1728 = vmatpush1.bf16.xpose.msra.mxu0 0
        %1729 = vmatprep.subr.bf16.mxu0 0
        %1730 = vmatpush1.bf16.xpose.msra.mxu0 %v1713
        %1731 = vmatprep.subr.bf16.mxu0 0
        %1732 = vmatpush2.bf16.xpose.msra.mxu0 0
        %1733 = vmatprep.subr.bf16.mxu0 0
        %1734 = vmatpush2.bf16.xpose.msra.mxu0 0
        %1735 = vmatprep.subr.bf16.mxu0 0
        %1736 = vmatpush2.bf16.xpose.msra.mxu0 0
        %1737 = vmatprep.subr.bf16.mxu0 0
        %1738 = vmatpush2.bf16.xpose.msra.mxu0 0
        %1739 = vmatprep.subr.bf16.mxu0 0
        %1740 = vmatpush2.bf16.xpose.msra.mxu0 0
        %1741 = vmatprep.subr.bf16.mxu0 0
        %1742 = vmatpush2.bf16.xpose.msra.mxu0 0
        %1743 = vmatprep.subr.bf16.mxu0 0
        %1744 = vmatpush2.bf16.xpose.msra.mxu0 0
        %1745 = vmatprep.subr.bf16.mxu0 0
        %1746 = vmatpush2.bf16.xpose.msra.mxu0 0
        %1747 = vmatprep.mubr.bf16.mxu0 0
        %1748 = vmatmul.mubr.bf16.gmra.mxu0 %v1710
        %v1749 = vpop.f32.mrf.mxu0
        %v1750 = vadd.f32 %v1261, %v1749
        %v1751 = vpop.f32.mrf.mxu0
        %v1752 = vpop.f32.mrf.mxu0
        %v1753 = vpop.f32.mrf.mxu0
        %1754 = vdwg.mxu0
        %v1755 = vsel %vm1263, %v1750, -inf
        %1756 = vmax.xlane.f32.xlu0 %v1755
        %v1757 = vpop.xlane.xlu0 %1756
        %v1758 = vsub.f32 %v1750, %v1757
        %v1759 = vmul.f32 %v1758, 1.442695
        %v1760 = vpow.pop %v1759
        %v1761 = vsel %vm1263, %v1760, 0.0
        %1762 = vadd.xlane.f32.xlu0 %v1761
        %v1763 = vpop.xlane.xlu0 %1762
        %v1764 = vpack.c.bf16 %v1760, %v1760
        %s1765 = scalar_lea.vmem [#allocation4], 8
        %v1766 = vld [vmem:[%s1765] sm:$0xf]
        %v1768 = vsel %vm1263, %v1764, 0
        %v1771 = vsel %vm1324, %v1766, 0
        %1773 = vmatprep.subr.bf16.mxu0 0
        %1774 = vmatpush1.bf16.msra.mxu0 0
        %1775 = vmatprep.subr.bf16.mxu0 0
        %1776 = vmatpush1.bf16.msra.mxu0 0
        %1777 = vmatprep.subr.bf16.mxu0 0
        %1778 = vmatpush1.bf16.msra.mxu0 0
        %1779 = vmatprep.subr.bf16.mxu0 0
        %1780 = vmatpush1.bf16.msra.mxu0 0
        %1781 = vmatprep.subr.bf16.mxu0 0
        %1782 = vmatpush1.bf16.msra.mxu0 0
        %1783 = vmatprep.subr.bf16.mxu0 0
        %1784 = vmatpush1.bf16.msra.mxu0 0
        %1785 = vmatprep.subr.bf16.mxu0 0
        %1786 = vmatpush1.bf16.msra.mxu0 0
        %1787 = vmatprep.subr.bf16.mxu0 0
        %1788 = vmatpush1.bf16.msra.mxu0 %v1771
        %1789 = vmatprep.subr.bf16.mxu0 0
        %1790 = vmatpush2.bf16.msra.mxu0 0
        %1791 = vmatprep.subr.bf16.mxu0 0
        %1792 = vmatpush2.bf16.msra.mxu0 0
        %1793 = vmatprep.subr.bf16.mxu0 0
        %1794 = vmatpush2.bf16.msra.mxu0 0
        %1795 = vmatprep.subr.bf16.mxu0 0
        %1796 = vmatpush2.bf16.msra.mxu0 0
        %1797 = vmatprep.subr.bf16.mxu0 0
        %1798 = vmatpush2.bf16.msra.mxu0 0
        %1799 = vmatprep.subr.bf16.mxu0 0
        %1800 = vmatpush2.bf16.msra.mxu0 0
        %1801 = vmatprep.subr.bf16.mxu0 0
        %1802 = vmatpush2.bf16.msra.mxu0 0
        %1803 = vmatprep.subr.bf16.mxu0 0
        %1804 = vmatpush2.bf16.msra.mxu0 0
        %1805 = vmatprep.mubr.bf16.mxu0 0
        %1806 = vmatmul.mubr.bf16.gmra.mxu0 %v1768
        %v1807 = vpop.f32.mrf.mxu0
        %v1808 = vadd.f32 0.0, %v1807
        %v1809 = vpop.f32.mrf.mxu0
        %v1810 = vpop.f32.mrf.mxu0
        %v1811 = vpop.f32.mrf.mxu0
        %1812 = vdwg.mxu0
        %v1813 = vrcp.pop %v1763
        %v1814 = vmul.f32 %v1808, %v1813
        %v1815 = vpack.c.bf16 %v1814, %v1814
        %s1816 = scalar_lea.vmem %s8, 8
        %v1817 = vld [vmem:[%s1816] sm:$0xf]
        %v1819 = vsel %vm1263, %v1815, 0
        %v1822 = vsel %vm1324, %v1817, 0
        %1824 = vmatprep.subr.bf16.mxu0 0
        %1825 = vmatpush1.bf16.msra.mxu0 0
        %1826 = vmatprep.subr.bf16.mxu0 0
        %1827 = vmatpush1.bf16.msra.mxu0 0
        %1828 = vmatprep.subr.bf16.mxu0 0
        %1829 = vmatpush1.bf16.msra.mxu0 0
        %1830 = vmatprep.subr.bf16.mxu0 0
        %1831 = vmatpush1.bf16.msra.mxu0 0
        %1832 = vmatprep.subr.bf16.mxu0 0
        %1833 = vmatpush1.bf16.msra.mxu0 0
        %1834 = vmatprep.subr.bf16.mxu0 0
        %1835 = vmatpush1.bf16.msra.mxu0 0
        %1836 = vmatprep.subr.bf16.mxu0 0
        %1837 = vmatpush1.bf16.msra.mxu0 0
        %1838 = vmatprep.subr.bf16.mxu0 0
        %1839 = vmatpush1.bf16.msra.mxu0 %v1822
        %1840 = vmatprep.subr.bf16.mxu0 0
        %1841 = vmatpush2.bf16.msra.mxu0 0
        %1842 = vmatprep.subr.bf16.mxu0 0
        %1843 = vmatpush2.bf16.msra.mxu0 0
        %1844 = vmatprep.subr.bf16.mxu0 0
        %1845 = vmatpush2.bf16.msra.mxu0 0
        %1846 = vmatprep.subr.bf16.mxu0 0
        %1847 = vmatpush2.bf16.msra.mxu0 0
        %1848 = vmatprep.subr.bf16.mxu0 0
        %1849 = vmatpush2.bf16.msra.mxu0 0
        %1850 = vmatprep.subr.bf16.mxu0 0
        %1851 = vmatpush2.bf16.msra.mxu0 0
        %1852 = vmatprep.subr.bf16.mxu0 0
        %1853 = vmatpush2.bf16.msra.mxu0 0
        %1854 = vmatprep.subr.bf16.mxu0 0
        %1855 = vmatpush2.bf16.msra.mxu0 0
        %1856 = vmatprep.mubr.bf16.mxu0 0
        %1857 = vmatmul.mubr.bf16.gmra.mxu0 %v1819
        %v1858 = vpop.f32.mrf.mxu0
        %v1859 = vadd.f32 0.0, %v1858
        %v1860 = vpop.f32.mrf.mxu0
        %v1861 = vpop.f32.mrf.mxu0
        %v1862 = vpop.f32.mrf.mxu0
        %1863 = vdwg.mxu0
        %v1864 = vadd.f32 %v1636, %v1859
        %s1865 = scalar_lea.vmem %s2, 48
        %v1866 = vld [vmem:[%s1865] sm:$0xf]
        %v1867 = vld [vmem:[%s1865 + $0x4] sm:$0xf]
        %v1868 = vld [vmem:[%s1865 + $0x8] sm:$0xf]
        %v1869 = vld [vmem:[%s1865 + $0xc] sm:$0xf]
        %s1870 = scalar_lea.vmem %s3, 3
        %v1871 = vld [vmem:[%s1870] sm:$0x1]
        %v1873 = vlaneseq
        %v1874 = vshrl.u32 %v1873, 7
        %v1875 = vsub.s32 0, %v1874
        %v1876 = vrot.slane %v1871, %v1875
        %v1882 = vunpack.c.l.b16 %v1866
        %v1883 = vunpack.c.l.b16 %v1867
        %v1884 = vunpack.c.l.b16 %v1868
        %v1885 = vunpack.c.l.b16 %v1869
        %v1886 = vpack.c.b16 %v1883, %v1882
        %v1887 = vpack.c.b16 %v1885, %v1884
        %1890 = vmatprep.subr.bf16.mxu0 0
        %1891 = vmatpush1.bf16.msra.mxu0 0
        %1892 = vmatprep.subr.bf16.mxu0 0
        %1893 = vmatpush1.bf16.msra.mxu0 0
        %1894 = vmatprep.subr.bf16.mxu0 0
        %1895 = vmatpush1.bf16.msra.mxu0 0
        %1896 = vmatprep.subr.bf16.mxu0 0
        %1897 = vmatpush1.bf16.msra.mxu0 0
        %1898 = vmatprep.subr.bf16.mxu0 0
        %1899 = vmatpush1.bf16.msra.mxu0 0
        %1900 = vmatprep.subr.bf16.mxu0 0
        %1901 = vmatpush1.bf16.msra.mxu0 0
        %1902 = vmatprep.subr.bf16.mxu0 0
        %1903 = vmatpush1.bf16.msra.mxu0 %v1887
        %1904 = vmatprep.subr.bf16.mxu0 0
        %1905 = vmatpush1.bf16.msra.mxu0 %v1886
        %1906 = vmatprep.subr.bf16.mxu0 0
        %1907 = vmatpush2.bf16.msra.mxu0 0
        %1908 = vmatprep.subr.bf16.mxu0 0
        %1909 = vmatpush2.bf16.msra.mxu0 0
        %1910 = vmatprep.subr.bf16.mxu0 0
        %1911 = vmatpush2.bf16.msra.mxu0 0
        %1912 = vmatprep.subr.bf16.mxu0 0
        %1913 = vmatpush2.bf16.msra.mxu0 0
        %1914 = vmatprep.subr.bf16.mxu0 0
        %1915 = vmatpush2.bf16.msra.mxu0 0
        %1916 = vmatprep.subr.bf16.mxu0 0
        %1917 = vmatpush2.bf16.msra.mxu0 0
        %1918 = vmatprep.subr.bf16.mxu0 0
        %1919 = vmatpush2.bf16.msra.mxu0 0
        %1920 = vmatprep.subr.bf16.mxu0 0
        %1921 = vmatpush2.bf16.msra.mxu0 0
        %1922 = vmatprep.mubr.bf16.mxu0 0
        %1923 = vmatmul.mubr.bf16.gmra.mxu0 %v1213
        %v1924 = vpop.f32.mrf.mxu0
        %v1925 = vadd.f32 %v1876, %v1924
        %v1926 = vpop.f32.mrf.mxu0
        %v1927 = vpop.f32.mrf.mxu0
        %v1928 = vpop.f32.mrf.mxu0
        %1929 = vdwg.mxu0
        %v1930 = vpack.c.bf16 %v1925, %v1925
        %s1931 = scalar_lea.vmem [#allocation3], 12
        %v1932 = vld [vmem:[%s1931] sm:$0xf]
        %v1934 = vsel %vm1263, %v1930, 0
        %v1937 = vsel %vm1263, %v1932, 0
        %1939 = vmatprep.subr.bf16.mxu0 0
        %1940 = vmatpush1.bf16.xpose.msra.mxu0 0
        %1941 = vmatprep.subr.bf16.mxu0 0
        %1942 = vmatpush1.bf16.xpose.msra.mxu0 0
        %1943 = vmatprep.subr.bf16.mxu0 0
        %1944 = vmatpush1.bf16.xpose.msra.mxu0 0
        %1945 = vmatprep.subr.bf16.mxu0 0
        %1946 = vmatpush1.bf16.xpose.msra.mxu0 0
        %1947 = vmatprep.subr.bf16.mxu0 0
        %1948 = vmatpush1.bf16.xpose.msra.mxu0 0
        %1949 = vmatprep.subr.bf16.mxu0 0
        %1950 = vmatpush1.bf16.xpose.msra.mxu0 0
        %1951 = vmatprep.subr.bf16.mxu0 0
        %1952 = vmatpush1.bf16.xpose.msra.mxu0 0
        %1953 = vmatprep.subr.bf16.mxu0 0
        %1954 = vmatpush1.bf16.xpose.msra.mxu0 %v1937
        %1955 = vmatprep.subr.bf16.mxu0 0
        %1956 = vmatpush2.bf16.xpose.msra.mxu0 0
        %1957 = vmatprep.subr.bf16.mxu0 0
        %1958 = vmatpush2.bf16.xpose.msra.mxu0 0
        %1959 = vmatprep.subr.bf16.mxu0 0
        %1960 = vmatpush2.bf16.xpose.msra.mxu0 0
        %1961 = vmatprep.subr.bf16.mxu0 0
        %1962 = vmatpush2.bf16.xpose.msra.mxu0 0
        %1963 = vmatprep.subr.bf16.mxu0 0
        %1964 = vmatpush2.bf16.xpose.msra.mxu0 0
        %1965 = vmatprep.subr.bf16.mxu0 0
        %1966 = vmatpush2.bf16.xpose.msra.mxu0 0
        %1967 = vmatprep.subr.bf16.mxu0 0
        %1968 = vmatpush2.bf16.xpose.msra.mxu0 0
        %1969 = vmatprep.subr.bf16.mxu0 0
        %1970 = vmatpush2.bf16.xpose.msra.mxu0 0
        %1971 = vmatprep.mubr.bf16.mxu0 0
        %1972 = vmatmul.mubr.bf16.gmra.mxu0 %v1934
        %v1973 = vpop.f32.mrf.mxu0
        %v1974 = vadd.f32 %v1261, %v1973
        %v1975 = vpop.f32.mrf.mxu0
        %v1976 = vpop.f32.mrf.mxu0
        %v1977 = vpop.f32.mrf.mxu0
        %1978 = vdwg.mxu0
        %v1979 = vsel %vm1263, %v1974, -inf
        %1980 = vmax.xlane.f32.xlu0 %v1979
        %v1981 = vpop.xlane.xlu0 %1980
        %v1982 = vsub.f32 %v1974, %v1981
        %v1983 = vmul.f32 %v1982, 1.442695
        %v1984 = vpow.pop %v1983
        %v1985 = vsel %vm1263, %v1984, 0.0
        %1986 = vadd.xlane.f32.xlu0 %v1985
        %v1987 = vpop.xlane.xlu0 %1986
        %v1988 = vpack.c.bf16 %v1984, %v1984
        %s1989 = scalar_lea.vmem [#allocation4], 12
        %v1990 = vld [vmem:[%s1989] sm:$0xf]
        %v1992 = vsel %vm1263, %v1988, 0
        %v1995 = vsel %vm1324, %v1990, 0
        %1997 = vmatprep.subr.bf16.mxu0 0
        %1998 = vmatpush1.bf16.msra.mxu0 0
        %1999 = vmatprep.subr.bf16.mxu0 0
        %2000 = vmatpush1.bf16.msra.mxu0 0
        %2001 = vmatprep.subr.bf16.mxu0 0
        %2002 = vmatpush1.bf16.msra.mxu0 0
        %2003 = vmatprep.subr.bf16.mxu0 0
        %2004 = vmatpush1.bf16.msra.mxu0 0
        %2005 = vmatprep.subr.bf16.mxu0 0
        %2006 = vmatpush1.bf16.msra.mxu0 0
        %2007 = vmatprep.subr.bf16.mxu0 0
        %2008 = vmatpush1.bf16.msra.mxu0 0
        %2009 = vmatprep.subr.bf16.mxu0 0
        %2010 = vmatpush1.bf16.msra.mxu0 0
        %2011 = vmatprep.subr.bf16.mxu0 0
        %2012 = vmatpush1.bf16.msra.mxu0 %v1995
        %2013 = vmatprep.subr.bf16.mxu0 0
        %2014 = vmatpush2.bf16.msra.mxu0 0
        %2015 = vmatprep.subr.bf16.mxu0 0
        %2016 = vmatpush2.bf16.msra.mxu0 0
        %2017 = vmatprep.subr.bf16.mxu0 0
        %2018 = vmatpush2.bf16.msra.mxu0 0
        %2019 = vmatprep.subr.bf16.mxu0 0
        %2020 = vmatpush2.bf16.msra.mxu0 0
        %2021 = vmatprep.subr.bf16.mxu0 0
        %2022 = vmatpush2.bf16.msra.mxu0 0
        %2023 = vmatprep.subr.bf16.mxu0 0
        %2024 = vmatpush2.bf16.msra.mxu0 0
        %2025 = vmatprep.subr.bf16.mxu0 0
        %2026 = vmatpush2.bf16.msra.mxu0 0
        %2027 = vmatprep.subr.bf16.mxu0 0
        %2028 = vmatpush2.bf16.msra.mxu0 0
        %2029 = vmatprep.mubr.bf16.mxu0 0
        %2030 = vmatmul.mubr.bf16.gmra.mxu0 %v1992
        %v2031 = vpop.f32.mrf.mxu0
        %v2032 = vadd.f32 0.0, %v2031
        %v2033 = vpop.f32.mrf.mxu0
        %v2034 = vpop.f32.mrf.mxu0
        %v2035 = vpop.f32.mrf.mxu0
        %2036 = vdwg.mxu0
        %v2037 = vrcp.pop %v1987
        %v2038 = vmul.f32 %v2032, %v2037
        %v2039 = vpack.c.bf16 %v2038, %v2038
        %s2040 = scalar_lea.vmem %s8, 12
        %v2041 = vld [vmem:[%s2040] sm:$0xf]
        %v2043 = vsel %vm1263, %v2039, 0
        %v2046 = vsel %vm1324, %v2041, 0
        %2048 = vmatprep.subr.bf16.mxu0 0
        %2049 = vmatpush1.bf16.msra.mxu0 0
        %2050 = vmatprep.subr.bf16.mxu0 0
        %2051 = vmatpush1.bf16.msra.mxu0 0
        %2052 = vmatprep.subr.bf16.mxu0 0
        %2053 = vmatpush1.bf16.msra.mxu0 0
        %2054 = vmatprep.subr.bf16.mxu0 0
        %2055 = vmatpush1.bf16.msra.mxu0 0
        %2056 = vmatprep.subr.bf16.mxu0 0
        %2057 = vmatpush1.bf16.msra.mxu0 0
        %2058 = vmatprep.subr.bf16.mxu0 0
        %2059 = vmatpush1.bf16.msra.mxu0 0
        %2060 = vmatprep.subr.bf16.mxu0 0
        %2061 = vmatpush1.bf16.msra.mxu0 0
        %2062 = vmatprep.subr.bf16.mxu0 0
        %2063 = vmatpush1.bf16.msra.mxu0 %v2046
        %2064 = vmatprep.subr.bf16.mxu0 0
        %2065 = vmatpush2.bf16.msra.mxu0 0
        %2066 = vmatprep.subr.bf16.mxu0 0
        %2067 = vmatpush2.bf16.msra.mxu0 0
        %2068 = vmatprep.subr.bf16.mxu0 0
        %2069 = vmatpush2.bf16.msra.mxu0 0
        %2070 = vmatprep.subr.bf16.mxu0 0
        %2071 = vmatpush2.bf16.msra.mxu0 0
        %2072 = vmatprep.subr.bf16.mxu0 0
        %2073 = vmatpush2.bf16.msra.mxu0 0
        %2074 = vmatprep.subr.bf16.mxu0 0
        %2075 = vmatpush2.bf16.msra.mxu0 0
        %2076 = vmatprep.subr.bf16.mxu0 0
        %2077 = vmatpush2.bf16.msra.mxu0 0
        %2078 = vmatprep.subr.bf16.mxu0 0
        %2079 = vmatpush2.bf16.msra.mxu0 0
        %2080 = vmatprep.mubr.bf16.mxu0 0
        %2081 = vmatmul.mubr.bf16.gmra.mxu0 %v2043
        %v2082 = vpop.f32.mrf.mxu0
        %v2083 = vadd.f32 0.0, %v2082
        %v2084 = vpop.f32.mrf.mxu0
        %v2085 = vpop.f32.mrf.mxu0
        %v2086 = vpop.f32.mrf.mxu0
        %2087 = vdwg.mxu0
        %v2088 = vadd.f32 %v1864, %v2083
        %s2089 = scalar_lea.vmem %s595, %s600
        %v2090 = vld [vmem:[%s2089] sm:$0xff]
        %v2091 = vadd.f32 %v2090, %v2088
        %v2092 = vld [vmem:[%s9] sm:$0x1]
        %v2094 = vlaneseq
        %v2095 = vshrl.u32 %v2094, 7
        %v2096 = vsub.s32 0, %v2095
        %v2097 = vrot.slane %v2092, %v2096
        %v2099 = vadd.f32 %v2091, %v2097
        %v2100 = vsel %vm1211, %v2099, 0.0
        %2101 = vadd.xlane.f32.xlu0 %v2100
        %v2102 = vpop.xlane.xlu0 %2101
        %v2103 = vrcp.pop 32.0
        %v2104 = vmul.f32 %v2102, %v2103
        %v2105 = vsub.f32 %v2099, %v2104
        %v2106 = vmul.f32 %v2105, %v2105
        %v2107 = vsel %vm1211, %v2106, 0.0
        %2108 = vadd.xlane.f32.xlu0 %v2107
        %v2109 = vpop.xlane.xlu0 %2108
        %v2110 = vmul.f32 %v2109, %v2103
        %v2111 = vadd.f32 %v2110, 1e-05
        %v2112 = vrsqrt.pop %v2111
        %v2113 = vmul.f32 %v2105, %v2112
        %v2114 = vld [vmem:[%s12] sm:$0x1]
        %v2116 = vlaneseq
        %v2117 = vshrl.u32 %v2116, 7
        %v2118 = vsub.s32 0, %v2117
        %v2119 = vrot.slane %v2114, %v2118
        %v2121 = vmul.f32 %v2113, %v2119
        %v2122 = vld [vmem:[%s13] sm:$0x1]
        %v2124 = vlaneseq
        %v2125 = vshrl.u32 %v2124, 7
        %v2126 = vsub.s32 0, %v2125
        %v2127 = vrot.slane %v2122, %v2126
        %v2129 = vadd.f32 %v2121, %v2127
        %v2130 = vpack.c.bf16 %v2129, %v2129
        %v2131 = vld [vmem:[%s14] sm:$0xf]
        %v2132 = vld [vmem:[%s14 + $0x4] sm:$0xf]
        %v2133 = vld [vmem:[%s14 + $0x8] sm:$0xf]
        %v2134 = vld [vmem:[%s14 + $0xc] sm:$0xf]
        %v2135 = vld [vmem:[%s15] sm:$0x1]
        %v2137 = vlaneseq
        %v2138 = vshrl.u32 %v2137, 7
        %v2139 = vsub.s32 0, %v2138
        %v2140 = vrot.slane %v2135, %v2139
        %v2146 = vunpack.c.l.b16 %v2131
        %v2147 = vunpack.c.l.b16 %v2132
        %v2148 = vunpack.c.l.b16 %v2133
        %v2149 = vunpack.c.l.b16 %v2134
        %v2150 = vpack.c.b16 %v2147, %v2146
        %v2151 = vpack.c.b16 %v2149, %v2148
        %v2155 = vsel %vm1211, %v2130, 0
        %2157 = vmatprep.subr.bf16.mxu0 0
        %2158 = vmatpush1.bf16.msra.mxu0 0
        %2159 = vmatprep.subr.bf16.mxu0 0
        %2160 = vmatpush1.bf16.msra.mxu0 0
        %2161 = vmatprep.subr.bf16.mxu0 0
        %2162 = vmatpush1.bf16.msra.mxu0 0
        %2163 = vmatprep.subr.bf16.mxu0 0
        %2164 = vmatpush1.bf16.msra.mxu0 0
        %2165 = vmatprep.subr.bf16.mxu0 0
        %2166 = vmatpush1.bf16.msra.mxu0 0
        %2167 = vmatprep.subr.bf16.mxu0 0
        %2168 = vmatpush1.bf16.msra.mxu0 0
        %2169 = vmatprep.subr.bf16.mxu0 0
        %2170 = vmatpush1.bf16.msra.mxu0 %v2151
        %2171 = vmatprep.subr.bf16.mxu0 0
        %2172 = vmatpush1.bf16.msra.mxu0 %v2150
        %2173 = vmatprep.subr.bf16.mxu0 0
        %2174 = vmatpush2.bf16.msra.mxu0 0
        %2175 = vmatprep.subr.bf16.mxu0 0
        %2176 = vmatpush2.bf16.msra.mxu0 0
        %2177 = vmatprep.subr.bf16.mxu0 0
        %2178 = vmatpush2.bf16.msra.mxu0 0
        %2179 = vmatprep.subr.bf16.mxu0 0
        %2180 = vmatpush2.bf16.msra.mxu0 0
        %2181 = vmatprep.subr.bf16.mxu0 0
        %2182 = vmatpush2.bf16.msra.mxu0 0
        %2183 = vmatprep.subr.bf16.mxu0 0
        %2184 = vmatpush2.bf16.msra.mxu0 0
        %2185 = vmatprep.subr.bf16.mxu0 0
        %2186 = vmatpush2.bf16.msra.mxu0 0
        %2187 = vmatprep.subr.bf16.mxu0 0
        %2188 = vmatpush2.bf16.msra.mxu0 0
        %2189 = vmatprep.mubr.bf16.mxu0 0
        %2190 = vmatmul.mubr.bf16.gmra.mxu0 %v2155
        %v2191 = vpop.f32.mrf.mxu0
        %v2192 = vadd.f32 %v2140, %v2191
        %v2193 = vpop.f32.mrf.mxu0
        %v2194 = vpop.f32.mrf.mxu0
        %v2195 = vpop.f32.mrf.mxu0
        %2196 = vdwg.mxu0
        %v2197 = vmax.f32 %v2192, 0.0
        %v2198 = vpack.c.bf16 %v2197, %v2197
        %v2199 = vld [vmem:[%s16] sm:$0xf]
        %v2200 = vld [vmem:[%s16 + $0x4] sm:$0xf]
        %v2201 = vld [vmem:[%s16 + $0x8] sm:$0xf]
        %v2202 = vld [vmem:[%s16 + $0xc] sm:$0xf]
        %v2203 = vld [vmem:[%s16 + $0x10] sm:$0xf]
        %v2204 = vld [vmem:[%s16 + $0x14] sm:$0xf]
        %v2205 = vld [vmem:[%s16 + $0x18] sm:$0xf]
        %v2206 = vld [vmem:[%s16 + $0x1c] sm:$0xf]
        %v2207 = vld [vmem:[%s17] sm:$0x1]
        %v2209 = vlaneseq
        %v2210 = vshrl.u32 %v2209, 7
        %v2211 = vsub.s32 0, %v2210
        %v2212 = vrot.slane %v2207, %v2211
        %v2222 = vunpack.c.l.b16 %v2199
        %v2223 = vunpack.c.l.b16 %v2200
        %v2224 = vunpack.c.l.b16 %v2201
        %v2225 = vunpack.c.l.b16 %v2202
        %v2226 = vunpack.c.l.b16 %v2203
        %v2227 = vunpack.c.l.b16 %v2204
        %v2228 = vunpack.c.l.b16 %v2205
        %v2229 = vunpack.c.l.b16 %v2206
        %v2230 = vpack.c.b16 %v2223, %v2222
        %v2231 = vpack.c.b16 %v2225, %v2224
        %v2232 = vpack.c.b16 %v2227, %v2226
        %v2233 = vpack.c.b16 %v2229, %v2228
        %vm2238 = vcmask 523264
        %v2240 = vsel %vm2238, %v2198, 0
        %2242 = vmatprep.subr.bf16.mxu0 0
        %2243 = vmatpush1.bf16.msra.mxu0 0
        %2244 = vmatprep.subr.bf16.mxu0 0
        %2245 = vmatpush1.bf16.msra.mxu0 0
        %2246 = vmatprep.subr.bf16.mxu0 0
        %2247 = vmatpush1.bf16.msra.mxu0 0
        %2248 = vmatprep.subr.bf16.mxu0 0
        %2249 = vmatpush1.bf16.msra.mxu0 0
        %2250 = vmatprep.subr.bf16.mxu0 0
        %2251 = vmatpush1.bf16.msra.mxu0 %v2233
        %2252 = vmatprep.subr.bf16.mxu0 0
        %2253 = vmatpush1.bf16.msra.mxu0 %v2232
        %2254 = vmatprep.subr.bf16.mxu0 0
        %2255 = vmatpush1.bf16.msra.mxu0 %v2231
        %2256 = vmatprep.subr.bf16.mxu0 0
        %2257 = vmatpush1.bf16.msra.mxu0 %v2230
        %2258 = vmatprep.subr.bf16.mxu0 0
        %2259 = vmatpush2.bf16.msra.mxu0 0
        %2260 = vmatprep.subr.bf16.mxu0 0
        %2261 = vmatpush2.bf16.msra.mxu0 0
        %2262 = vmatprep.subr.bf16.mxu0 0
        %2263 = vmatpush2.bf16.msra.mxu0 0
        %2264 = vmatprep.subr.bf16.mxu0 0
        %2265 = vmatpush2.bf16.msra.mxu0 0
        %2266 = vmatprep.subr.bf16.mxu0 0
        %2267 = vmatpush2.bf16.msra.mxu0 0
        %2268 = vmatprep.subr.bf16.mxu0 0
        %2269 = vmatpush2.bf16.msra.mxu0 0
        %2270 = vmatprep.subr.bf16.mxu0 0
        %2271 = vmatpush2.bf16.msra.mxu0 0
        %2272 = vmatprep.subr.bf16.mxu0 0
        %2273 = vmatpush2.bf16.msra.mxu0 0
        %2274 = vmatprep.mubr.bf16.mxu0 0
        %2275 = vmatmul.mubr.bf16.gmra.mxu0 %v2240
        %v2276 = vpop.f32.mrf.mxu0
        %v2277 = vadd.f32 %v2212, %v2276
        %v2278 = vpop.f32.mrf.mxu0
        %v2279 = vpop.f32.mrf.mxu0
        %v2280 = vpop.f32.mrf.mxu0
        %2281 = vdwg.mxu0
        %v2282 = vadd.f32 %v2099, %v2277
        %2283 = vst.msk [vmem:[%s591] sm:$0xff] %vm1211, %v2282
        %s2284 = sand.u32 %s442, 1
        %s2285 = scalar_lea.sflag [#allocation6], %s2284
        %s2286 = sand.u32 %s442, 1
        %s2287 = smul.addr %s2286, 8
        %s2288 = scalar_lea.vmem [#allocation5], %s2287
        // Predicated region
        $region97: #{tpu_custom_call.1} parent=91 // pred_check
          %p2289 = pneg %p452
        $region98: #{tpu_custom_call.1} parent=91 // pred_check_branch
          %2291 = sbr.rel (%p2289) target = $region100
        $region99: #{tpu_custom_call.1} parent=91 // pred_region
          %s2293 = ssub.s32 128, 128
          %2294 = vsyncadd %s2285, %s2293
          %s2295 = sadd.s32 %s37, %s36
          %s2296 = smul.addr %s2295, 128
          %s2297 = scalar_lea.hbm %s18, %s2296
          %s2299 = sshll.u32 %s2288, 4
          %s2300 = int_to_ptr.vmem [resolvable:$true] %s2299
          %2302 = dma.vmem_to_hbm [thread:$0]  %s2300, 128, %s2297, %s2285
        $region100: #{tpu_custom_call.1} parent=91 // pred_fallthru
          _
      $region92: #{tpu_custom_call.1} parent=5 // pred_fallthru
        _
      %p2303 = scmp.le.s32.totalorder 2, %s27
      // Predicated region
      $region101: #{tpu_custom_call.1} parent=5 // pred_check
        %p2304 = pneg %p2303
      $region102: #{tpu_custom_call.1} parent=5 // pred_check_branch
        %2306 = sbr.rel (%p2304) target = $region104
      $region103: #{tpu_custom_call.1} parent=5 // pred_region
        %s2307 = ssub.s32 %s27, 2
        // Predicated region
        $region105: #{tpu_custom_call.1} parent=103 // pred_check
          %p2308 = pneg %p458
        $region106: #{tpu_custom_call.1} parent=103 // pred_check_branch
          %2310 = sbr.rel (%p2308) target = $region108
        $region107: #{tpu_custom_call.1} parent=103 // pred_region
          %s2311 = sand.u32 %s443, 1
          %s2312 = scalar_lea.sflag [#allocation6], %s2311
          %s2313 = sand.u32 %s443, 1
          %s2314 = smul.addr %s2313, 8
          %s2315 = scalar_lea.vmem [#allocation5], %s2314
          %2316 = dma.done %s2312, 128
        $region108: #{tpu_custom_call.1} parent=103 // pred_fallthru
          _
      $region104: #{tpu_custom_call.1} parent=5 // pred_fallthru
        _
    $region6: #{tpu_custom_call.1} parent=1 // loop_footer
      %s31 = sadd.s32 1, %s27
    $region7: #{tpu_custom_call.1} parent=1 // loop_footer_branch
      %26 = sbr.rel target = $region3
    $region8: #{tpu_custom_call.1} parent=1 // loop_exit
      _
    %2317 = vsyncpa [#allocation6], 1
    %s2318 = scalar_lea.sflag [#allocation6], 1
    %2319 = vsyncpa %s2318, 1

</llo_original>
